<compile_context>
chip_gen: v5e
topology: v5e:2x2
jax: 0.10.0
libtpu: 0.0.40
codegen_flags: <defaults>
</compile_context>

<pallas_src>
import numpy as np
import jax
import jax.numpy as jnp
from jax import lax
from jax.experimental import pallas as pl
from jax.experimental.pallas import tpu as pltpu

C1, C2, C3 = 16, 32, 64
N_COUNT, N_BINS = 7, 8
_HIGH = lax.Precision.HIGHEST      # reference only


def _make_kernel(B, H, W):
    H2, W2 = H // 2, W // 2
    H3, W3 = H // 4, W // 4
    M1 = B * H * W
    f32, bf16 = jnp.float32, jnp.bfloat16

    def bn_relu(acc, s_ref, b_ref):
        # folded BatchNorm (eval) + ReLU; scale/bias are (1, C) f32
        return jnp.maximum(acc * s_ref[...] + b_ref[...], 0.0)

    def conv3x3(pad_ref, h, w, cin, w_ref, cout):
        """'same' 3x3 conv from a zero-padded VMEM activation buffer.

        pad_ref: (B, h+2, w+2, cin) f32 scratch with zero borders.
        w_ref:   (3, 3, cin, cout) bf16.
        Expressed as 9 shifted (B*h*w, cin) x (cin, cout) bf16 matmuls with f32
        accumulation (one MXU pass each)."""
        acc = jnp.zeros((B * h * w, cout), f32)
        for dy in range(3):
            for dx in range(3):
                patch = pad_ref[:, dy:dy + h, dx:dx + w, :].reshape(B * h * w, cin)
                acc = acc + jnp.dot(patch.astype(bf16), w_ref[dy, dx],
                                    preferred_element_type=f32)
        return acc

    def pool_rows(y, h, w, c):
        """Max over H-pairs, entirely in registers: (B*h*w, c) -> (B*h/2, w, c)."""
        yr = y.reshape(B * (h // 2), 2, w, c)
        return jnp.maximum(yr[:, 0], yr[:, 1])

    def pool_cols(buf_ref, w, c):
        """Max over W-pairs via stride-2 sublane reads of the H-pooled scratch."""
        a = buf_ref[:, pl.ds(0, w // 2, stride=2), :]
        b = buf_ref[:, pl.ds(1, w // 2, stride=2), :]
        return jnp.maximum(a, b)

    def zero_borders(pad_ref, h, w, c):
        # Only the 1-pixel border; the interior is fully overwritten each step.
        pad_ref[:, 0:1, :, :] = jnp.zeros((B, 1, w + 2, c), f32)
        pad_ref[:, h + 1:h + 2, :, :] = jnp.zeros((B, 1, w + 2, c), f32)
        pad_ref[:, :, 0:1, :] = jnp.zeros((B, h + 2, 1, c), f32)
        pad_ref[:, :, w + 1:w + 2, :] = jnp.zeros((B, h + 2, 1, c), f32)

    def kernel(xcol_ref,
               w1_ref, s1c_ref, b1c_ref,
               w2_ref, s2c_ref, b2c_ref,
               w3_ref, s3c_ref, b3c_ref,
               wc1_ref, bc1_ref, wc2_ref, bc2_ref,
               wd1_ref, bd1_ref, wd2_ref, bd2_ref,
               count_ref, dist_ref,
               s1h, p1pad, s2h, p2pad):
        # ---- stage 1: conv1 as one im2col matmul + BN + ReLU + 2x2 maxpool ----
        xc = xcol_ref[...].reshape(M1, 9)                           # bf16
        acc1 = jnp.dot(xc, w1_ref[...], preferred_element_type=f32)
        y1 = bn_relu(acc1, s1c_ref, b1c_ref)                        # (M1, C1)
        s1h[...] = pool_rows(y1, H, W, C1)                          # (B*H2, W, C1)
        zero_borders(p1pad, H2, W2, C1)
        p1pad[:, 1:H2 + 1, 1:W2 + 1, :] = (
            pool_cols(s1h, W, C1).reshape(B, H2, W2, C1))

        # ---- stage 2: conv2 + BN + ReLU + 2x2 maxpool ----
        acc2 = conv3x3(p1pad, H2, W2, C1, w2_ref, C2)               # (B*H2*W2, C2)
        y2 = bn_relu(acc2, s2c_ref, b2c_ref)
        s2h[...] = pool_rows(y2, H2, W2, C2)                        # (B*H3, W2, C2)
        zero_borders(p2pad, H3, W3, C2)
        p2pad[:, 1:H3 + 1, 1:W3 + 1, :] = (
            pool_cols(s2h, W2, C2).reshape(B, H3, W3, C2))

        # ---- stage 3: conv3 + BN + ReLU + global average pool ----
        acc3 = conv3x3(p2pad, H3, W3, C2, w3_ref, C3)               # (B*H3*W3, C3)
        y3 = bn_relu(acc3, s3c_ref, b3c_ref)
        feat = jnp.mean(y3.reshape(B, H3 * W3, C3), axis=1)         # (B, C3)
        featb = feat.astype(bf16)

        # ---- count head ----
        h = jnp.maximum(jnp.dot(featb, wc1_ref[...],
                                preferred_element_type=f32) + bc1_ref[...], 0.0)
        count_ref[...] = jnp.dot(h.astype(bf16), wc2_ref[...],
                                 preferred_element_type=f32) + bc2_ref[...]

        # ---- dist head + softmax ----
        g = jnp.maximum(jnp.dot(featb, wd1_ref[...],
                                preferred_element_type=f32) + bd1_ref[...], 0.0)
        logits = jnp.dot(g.astype(bf16), wd2_ref[...],
                         preferred_element_type=f32) + bd2_ref[...]
        m = jnp.max(logits, axis=1, keepdims=True)
        e = jnp.exp(logits - m)
        dist_ref[...] = e / jnp.sum(e, axis=1, keepdims=True)

    return kernel


def simple_vehicle_net_forward(x_nchw, P, block_n=8):
    """Forward pass.  x_nchw: (N, 1, H, W) float32.  Returns (count, dist)."""
    N, cin, H, W = x_nchw.shape
    assert cin == 1 and H % 4 == 0 and W % 4 == 0
    H2, W2, H3, W3 = H // 2, W // 2, H // 4, W // 4

    # Images per grid step (B).  Keep B a multiple of 8 (block second-minor
    # constraint) unless the whole batch fits in one step.
    if N <= block_n:
        B = N
    else:
        B = max(8, (block_n // 8) * 8)
    n_blocks = -(-N // B)
    N_pad = n_blocks * B

    # --- glue: conv1 im2col in the wrapper (layout plumbing, not compute). -----
    # Removes the lane-width-1 input block; conv1 becomes one (M, 9)@(9, 16)
    # matmul in the kernel.  Tap order t = 3*dy + dx matches w1.reshape(9, C1).
    x = x_nchw[:, 0].astype(jnp.float32)                     # (N, H, W)
    xp = jnp.pad(x, ((0, 0), (1, 1), (1, 1)))
    taps = [xp[:, dy:dy + H, dx:dx + W] for dy in range(3) for dx in range(3)]
    x_col = jnp.stack(taps, axis=-1).reshape(N, H * W, 9).astype(jnp.bfloat16)
    if N_pad != N:
        x_col = jnp.pad(x_col, ((0, N_pad - N), (0, 0), (0, 0)))

    bf16 = jnp.bfloat16
    params = [
        P["w1"].reshape(9, C1).astype(bf16), P["s1"], P["b1"],
        P["w2"].astype(bf16), P["s2"], P["b2"],
        P["w3"].astype(bf16), P["s3"], P["b3"],
        P["wc1"].astype(bf16), P["bc1"], P["wc2"].astype(bf16), P["bc2"],
        P["wd1"].astype(bf16), P["bd1"], P["wd2"].astype(bf16), P["bd2"],
    ]

    def const_spec(a):
        nd = a.ndim
        return pl.BlockSpec(a.shape, lambda n, _nd=nd: (0,) * _nd)

    in_specs = [pl.BlockSpec((B, H * W, 9), lambda n: (n, 0, 0))]
    in_specs += [const_spec(a) for a in params]

    out_shape = (jax.ShapeDtypeStruct((N_pad, N_COUNT), jnp.float32),
                 jax.ShapeDtypeStruct((N_pad, N_BINS), jnp.float32))
    out_specs = (pl.BlockSpec((B, N_COUNT), lambda n: (n, 0)),
                 pl.BlockSpec((B, N_BINS), lambda n: (n, 0)))

    scratch_shapes = [
        pltpu.VMEM((B * H2, W, C1), jnp.float32),             # s1h : H-pooled conv1
        pltpu.VMEM((B, H2 + 2, W2 + 2, C1), jnp.float32),     # p1pad: pooled + pad
        pltpu.VMEM((B * H3, W2, C2), jnp.float32),            # s2h : H-pooled conv2
        pltpu.VMEM((B, H3 + 2, W3 + 2, C2), jnp.float32),     # p2pad: pooled + pad
    ]

    count, dist = pl.pallas_call(
        _make_kernel(B, H, W),
        out_shape=out_shape,
        grid_spec=pltpu.PrefetchScalarGridSpec(
            num_scalar_prefetch=0,
            grid=(n_blocks,),
            in_specs=in_specs,
            out_specs=out_specs,
            scratch_shapes=scratch_shapes),
        compiler_params=pltpu.CompilerParams(
            dimension_semantics=("parallel",)),
    )(x_col, *params)

    return count[:N], dist[:N]


def init_params(key):
    """Deterministic parameter init mirroring the PyTorch module's shapes."""
    eps = 1e-5
    ks = jax.random.split(key, 14)

    def conv_params(kw, kb, cin, cout):
        fan_in = cin * 9
        bound = 1.0 / float(fan_in) ** 0.5
        w = jax.random.uniform(kw, (cout, cin, 3, 3), jnp.float32, -bound, bound)  # OIHW
        b = jax.random.uniform(kb, (cout,), jnp.float32, -bound, bound)
        return jnp.transpose(w, (2, 3, 1, 0)), b   # -> HWIO, (cout,)

    def bn_fold(conv_bias, c):
        # PyTorch BatchNorm2d defaults (eval mode): gamma=1, beta=0, mean=0, var=1
        gamma = jnp.ones((c,), jnp.float32)
        beta = jnp.zeros((c,), jnp.float32)
        mean = jnp.zeros((c,), jnp.float32)
        var = jnp.ones((c,), jnp.float32)
        scale = gamma / jnp.sqrt(var + eps)
        bias = beta - mean * scale + scale * conv_bias   # conv bias folded in
        return scale.reshape(1, c), bias.reshape(1, c)

    def linear_params(kw, kb, in_f, out_f):
        bound = 1.0 / float(in_f) ** 0.5
        w = jax.random.uniform(kw, (out_f, in_f), jnp.float32, -bound, bound)  # (out,in)
        b = jax.random.uniform(kb, (out_f,), jnp.float32, -bound, bound)
        return jnp.transpose(w), b.reshape(1, out_f)     # -> (in,out), (1,out)

    w1, cb1 = conv_params(ks[0], ks[1], 1, C1)
    w2, cb2 = conv_params(ks[2], ks[3], C1, C2)
    w3, cb3 = conv_params(ks[4], ks[5], C2, C3)
    s1, b1 = bn_fold(cb1, C1)
    s2, b2 = bn_fold(cb2, C2)
    s3, b3 = bn_fold(cb3, C3)
    wc1, bc1 = linear_params(ks[6], ks[7], C3, 32)
    wc2, bc2 = linear_params(ks[8], ks[9], 32, N_COUNT)
    wd1, bd1 = linear_params(ks[10], ks[11], C3, C3)
    wd2, bd2 = linear_params(ks[12], ks[13], C3, N_BINS)

    return dict(w1=w1, s1=s1, b1=b1, w2=w2, s2=s2, b2=b2, w3=w3, s3=s3, b3=b3,
                wc1=wc1, bc1=bc1, wc2=wc2, bc2=bc2,
                wd1=wd1, bd1=bd1, wd2=wd2, bd2=bd2)


def reference_forward(x_nchw, P):
    """Pure-JAX/XLA reference with identical semantics (f32 HIGHEST)."""
    def conv_bn_relu(x, w_hwio, scale, bias):
        y = lax.conv_general_dilated(
            x, w_hwio, window_strides=(1, 1), padding=((1, 1), (1, 1)),
            dimension_numbers=("NCHW", "HWIO", "NCHW"), precision=_HIGH)
        y = y * scale.reshape(1, -1, 1, 1) + bias.reshape(1, -1, 1, 1)
        return jnp.maximum(y, 0.0)

    def maxpool2(x):
        return lax.reduce_window(x, -jnp.inf, lax.max,
                                 (1, 1, 2, 2), (1, 1, 2, 2), "VALID")

    x = maxpool2(conv_bn_relu(x_nchw, P["w1"], P["s1"], P["b1"]))
    x = maxpool2(conv_bn_relu(x, P["w2"], P["s2"], P["b2"]))
    x = conv_bn_relu(x, P["w3"], P["s3"], P["b3"])
    feat = jnp.mean(x, axis=(2, 3))                                   # (N, 64)
    h = jnp.maximum(jnp.dot(feat, P["wc1"], precision=_HIGH) + P["bc1"], 0.0)
    count = jnp.dot(h, P["wc2"], precision=_HIGH) + P["bc2"]
    g = jnp.maximum(jnp.dot(feat, P["wd1"], precision=_HIGH) + P["bd1"], 0.0)
    dist = jax.nn.softmax(jnp.dot(g, P["wd2"], precision=_HIGH) + P["bd2"], axis=1)
    return count, dist


if __name__ == "__main__":
    key = jax.random.PRNGKey(0)
    kx, kp = jax.random.split(key)
    N, H, W = 16, 16, 16                    # 2 grid steps of 8 images each
    x = jax.random.normal(kx, (N, 1, H, W), jnp.float32)   # NCHW, as in PyTorch
    params = init_params(kp)

    count, dist = simple_vehicle_net_forward(x, params)
    count, dist = jax.block_until_ready((count, dist))

    count_r, dist_r = reference_forward(x, params)
    # Kernel uses single-pass bf16 MXU matmuls (f32 accumulation); the reference
    # is f32 HIGHEST, so validate at a bf16-appropriate tolerance.
    np.testing.assert_allclose(np.asarray(count), np.asarray(count_r),
                               rtol=2e-2, atol=2e-2)
    np.testing.assert_allclose(np.asarray(dist), np.asarray(dist_r),
                               rtol=2e-2, atol=2e-2)
    assert count.shape == (N, N_COUNT) and dist.shape == (N, N_BINS)

    print("KERNEL_OK")
</pallas_src>

<mosaic_0001>
module attributes {stable_mosaic.version = 11 : i64} {
  func.func @kernel(%arg0: i32, %arg1: memref<8x256x9xbf16, #tpu.memory_space<vmem>>, %arg2: memref<9x16xbf16, #tpu.memory_space<vmem>>, %arg3: memref<1x16xf32, #tpu.memory_space<vmem>>, %arg4: memref<1x16xf32, #tpu.memory_space<vmem>>, %arg5: memref<3x3x16x32xbf16, #tpu.memory_space<vmem>>, %arg6: memref<1x32xf32, #tpu.memory_space<vmem>>, %arg7: memref<1x32xf32, #tpu.memory_space<vmem>>, %arg8: memref<3x3x32x64xbf16, #tpu.memory_space<vmem>>, %arg9: memref<1x64xf32, #tpu.memory_space<vmem>>, %arg10: memref<1x64xf32, #tpu.memory_space<vmem>>, %arg11: memref<64x32xbf16, #tpu.memory_space<vmem>>, %arg12: memref<1x32xf32, #tpu.memory_space<vmem>>, %arg13: memref<32x7xbf16, #tpu.memory_space<vmem>>, %arg14: memref<1x7xf32, #tpu.memory_space<vmem>>, %arg15: memref<64x64xbf16, #tpu.memory_space<vmem>>, %arg16: memref<1x64xf32, #tpu.memory_space<vmem>>, %arg17: memref<64x8xbf16, #tpu.memory_space<vmem>>, %arg18: memref<1x8xf32, #tpu.memory_space<vmem>>, %arg19: memref<8x7xf32, #tpu.memory_space<vmem>>, %arg20: memref<8x8xf32, #tpu.memory_space<vmem>>, %arg21: memref<64x16x16xf32, #tpu.memory_space<vmem>>, %arg22: memref<8x10x10x16xf32, #tpu.memory_space<vmem>>, %arg23: memref<32x8x32xf32, #tpu.memory_space<vmem>>, %arg24: memref<8x6x6x32xf32, #tpu.memory_space<vmem>>) attributes {dimension_semantics = [#tpu.dimension_semantics<parallel>], iteration_bounds = array<i64: 2>, scalar_prefetch = 0 : i64, scratch_operands = 4 : i64, tpu.core_type = #tpu.core_type<tc>, window_params = [{transform_indices = @transform_0, window_bounds = array<i64: 8, 256, 9>}, {pipeline_mode = #tpu.pipeline_mode<synchronous>, transform_indices = @transform_1, window_bounds = array<i64: 9, 16>}, {pipeline_mode = #tpu.pipeline_mode<synchronous>, transform_indices = @transform_2, window_bounds = array<i64: 1, 16>}, {pipeline_mode = #tpu.pipeline_mode<synchronous>, transform_indices = @transform_3, window_bounds = array<i64: 1, 16>}, {pipeline_mode = #tpu.pipeline_mode<synchronous>, transform_indices = @transform_4, window_bounds = array<i64: 3, 3, 16, 32>}, {pipeline_mode = #tpu.pipeline_mode<synchronous>, transform_indices = @transform_5, window_bounds = array<i64: 1, 32>}, {pipeline_mode = #tpu.pipeline_mode<synchronous>, transform_indices = @transform_6, window_bounds = array<i64: 1, 32>}, {pipeline_mode = #tpu.pipeline_mode<synchronous>, transform_indices = @transform_7, window_bounds = array<i64: 3, 3, 32, 64>}, {pipeline_mode = #tpu.pipeline_mode<synchronous>, transform_indices = @transform_8, window_bounds = array<i64: 1, 64>}, {pipeline_mode = #tpu.pipeline_mode<synchronous>, transform_indices = @transform_9, window_bounds = array<i64: 1, 64>}, {pipeline_mode = #tpu.pipeline_mode<synchronous>, transform_indices = @transform_10, window_bounds = array<i64: 64, 32>}, {pipeline_mode = #tpu.pipeline_mode<synchronous>, transform_indices = @transform_11, window_bounds = array<i64: 1, 32>}, {pipeline_mode = #tpu.pipeline_mode<synchronous>, transform_indices = @transform_12, window_bounds = array<i64: 32, 7>}, {pipeline_mode = #tpu.pipeline_mode<synchronous>, transform_indices = @transform_13, window_bounds = array<i64: 1, 7>}, {pipeline_mode = #tpu.pipeline_mode<synchronous>, transform_indices = @transform_14, window_bounds = array<i64: 64, 64>}, {pipeline_mode = #tpu.pipeline_mode<synchronous>, transform_indices = @transform_15, window_bounds = array<i64: 1, 64>}, {pipeline_mode = #tpu.pipeline_mode<synchronous>, transform_indices = @transform_16, window_bounds = array<i64: 64, 8>}, {pipeline_mode = #tpu.pipeline_mode<synchronous>, transform_indices = @transform_17, window_bounds = array<i64: 1, 8>}, {transform_indices = @transform_18, window_bounds = array<i64: 8, 7>}, {transform_indices = @transform_19, window_bounds = array<i64: 8, 8>}]} {
    %c0 = arith.constant 0 : index
    %c0_0 = arith.constant 0 : index
    %c0_1 = arith.constant 0 : index
    %0 = vector.load %arg1[%c0, %c0_0, %c0_1] : memref<8x256x9xbf16, #tpu.memory_space<vmem>>, vector<8x256x9xbf16>
    %1 = vector.shape_cast %0 : vector<8x256x9xbf16> to vector<2048x9xbf16>
    %c0_2 = arith.constant 0 : index
    %c0_3 = arith.constant 0 : index
    %2 = vector.load %arg2[%c0_2, %c0_3] : memref<9x16xbf16, #tpu.memory_space<vmem>>, vector<9x16xbf16>
    %cst = arith.constant dense<0.000000e+00> : vector<2048x16xf32>
    %3 = tpu.matmul %1, %2, %cst {dimension_numbers = #tpu.dot_dimension_numbers<[1], [0], [0], [1], [0, 0, 1, 1], [], []>} : vector<2048x9xbf16>, vector<9x16xbf16>, vector<2048x16xf32> -> vector<2048x16xf32>
    %c0_4 = arith.constant 0 : index
    %c0_5 = arith.constant 0 : index
    %4 = vector.load %arg3[%c0_4, %c0_5] : memref<1x16xf32, #tpu.memory_space<vmem>>, vector<1x16xf32>
    %5 = vector.broadcast %4 : vector<1x16xf32> to vector<2048x16xf32>
    %6 = arith.mulf %3, %5 : vector<2048x16xf32>
    %c0_6 = arith.constant 0 : index
    %c0_7 = arith.constant 0 : index
    %7 = vector.load %arg4[%c0_6, %c0_7] : memref<1x16xf32, #tpu.memory_space<vmem>>, vector<1x16xf32>
    %8 = vector.broadcast %7 : vector<1x16xf32> to vector<2048x16xf32>
    %9 = arith.addf %6, %8 : vector<2048x16xf32>
    %cst_8 = arith.constant 0.000000e+00 : f32
    %10 = vector.broadcast %cst_8 : f32 to vector<2048x16xf32>
    %11 = arith.maximumf %9, %10 : vector<2048x16xf32>
    %12 = vector.shape_cast %11 : vector<2048x16xf32> to vector<64x2x16x16xf32>
    %13 = vector.extract_strided_slice %12 {offsets = [0, 0, 0, 0], sizes = [64, 1, 16, 16], strides = [1, 1, 1, 1]} : vector<64x2x16x16xf32> to vector<64x1x16x16xf32>
    %14 = vector.shape_cast %13 : vector<64x1x16x16xf32> to vector<64x16x16xf32>
    %15 = vector.extract_strided_slice %12 {offsets = [0, 1, 0, 0], sizes = [64, 1, 16, 16], strides = [1, 1, 1, 1]} : vector<64x2x16x16xf32> to vector<64x1x16x16xf32>
    %16 = vector.shape_cast %15 : vector<64x1x16x16xf32> to vector<64x16x16xf32>
    %17 = arith.maximumf %14, %16 : vector<64x16x16xf32>
    %c0_9 = arith.constant 0 : index
    %c0_10 = arith.constant 0 : index
    %c0_11 = arith.constant 0 : index
    %18 = vector.load %arg21[%c0_9, %c0_10, %c0_11] : memref<64x16x16xf32, #tpu.memory_space<vmem>>, vector<64x16x16xf32>
    tpu.vector_store %arg21[%c0_9, %c0_10, %c0_11], %17 {strides = array<i32>} : memref<64x16x16xf32, #tpu.memory_space<vmem>>, vector<64x16x16xf32>,
    %cst_12 = arith.constant 0.000000e+00 : f32
    %19 = vector.broadcast %cst_12 : f32 to vector<8x1x10x16xf32>
    %c0_13 = arith.constant 0 : index
    %c0_14 = arith.constant 0 : index
    %c0_15 = arith.constant 0 : index
    %c0_16 = arith.constant 0 : index
    %20 = vector.load %arg22[%c0_13, %c0_14, %c0_15, %c0_16] : memref<8x10x10x16xf32, #tpu.memory_space<vmem>>, vector<8x1x10x16xf32>
    tpu.vector_store %arg22[%c0_13, %c0_14, %c0_15, %c0_16], %19 {strides = array<i32>} : memref<8x10x10x16xf32, #tpu.memory_space<vmem>>, vector<8x1x10x16xf32>,
    %cst_17 = arith.constant 0.000000e+00 : f32
    %21 = vector.broadcast %cst_17 : f32 to vector<8x1x10x16xf32>
    %c0_18 = arith.constant 0 : index
    %c9 = arith.constant 9 : index
    %c0_19 = arith.constant 0 : index
    %c0_20 = arith.constant 0 : index
    %22 = vector.load %arg22[%c0_18, %c9, %c0_19, %c0_20] : memref<8x10x10x16xf32, #tpu.memory_space<vmem>>, vector<8x1x10x16xf32>
    tpu.vector_store %arg22[%c0_18, %c9, %c0_19, %c0_20], %21 {strides = array<i32>} : memref<8x10x10x16xf32, #tpu.memory_space<vmem>>, vector<8x1x10x16xf32>,
    %cst_21 = arith.constant 0.000000e+00 : f32
    %23 = vector.broadcast %cst_21 : f32 to vector<8x10x1x16xf32>
    %c0_22 = arith.constant 0 : index
    %c0_23 = arith.constant 0 : index
    %c0_24 = arith.constant 0 : index
    %c0_25 = arith.constant 0 : index
    %24 = vector.load %arg22[%c0_22, %c0_23, %c0_24, %c0_25] : memref<8x10x10x16xf32, #tpu.memory_space<vmem>>, vector<8x10x1x16xf32>
    tpu.vector_store %arg22[%c0_22, %c0_23, %c0_24, %c0_25], %23 {strides = array<i32>} : memref<8x10x10x16xf32, #tpu.memory_space<vmem>>, vector<8x10x1x16xf32>,
    %cst_26 = arith.constant 0.000000e+00 : f32
    %25 = vector.broadcast %cst_26 : f32 to vector<8x10x1x16xf32>
    %c0_27 = arith.constant 0 : index
    %c0_28 = arith.constant 0 : index
    %c9_29 = arith.constant 9 : index
    %c0_30 = arith.constant 0 : index
    %26 = vector.load %arg22[%c0_27, %c0_28, %c9_29, %c0_30] : memref<8x10x10x16xf32, #tpu.memory_space<vmem>>, vector<8x10x1x16xf32>
    tpu.vector_store %arg22[%c0_27, %c0_28, %c9_29, %c0_30], %25 {strides = array<i32>} : memref<8x10x10x16xf32, #tpu.memory_space<vmem>>, vector<8x10x1x16xf32>,
    %c0_31 = arith.constant 0 : index
    %c0_32 = arith.constant 0 : index
    %c0_33 = arith.constant 0 : index
    %27 = tpu.strided_load %arg21[%c0_31, %c0_32, %c0_33] {strides = array<i32: 1, 2, 1>} : memref<64x16x16xf32, #tpu.memory_space<vmem>>, vector<64x8x16xf32>
    %c0_34 = arith.constant 0 : index
    %c1 = arith.constant 1 : index
    %c0_35 = arith.constant 0 : index
    %28 = tpu.strided_load %arg21[%c0_34, %c1, %c0_35] {strides = array<i32: 1, 2, 1>} : memref<64x16x16xf32, #tpu.memory_space<vmem>>, vector<64x8x16xf32>
    %29 = arith.maximumf %27, %28 : vector<64x8x16xf32>
    %30 = vector.shape_cast %29 : vector<64x8x16xf32> to vector<8x8x8x16xf32>
    %c0_36 = arith.constant 0 : index
    %c1_37 = arith.constant 1 : index
    %c1_38 = arith.constant 1 : index
    %c0_39 = arith.constant 0 : index
    %31 = vector.load %arg22[%c0_36, %c1_37, %c1_38, %c0_39] : memref<8x10x10x16xf32, #tpu.memory_space<vmem>>, vector<8x8x8x16xf32>
    tpu.vector_store %arg22[%c0_36, %c1_37, %c1_38, %c0_39], %30 {strides = array<i32>} : memref<8x10x10x16xf32, #tpu.memory_space<vmem>>, vector<8x8x8x16xf32>,
    %cst_40 = arith.constant 0.000000e+00 : f32
    %32 = vector.broadcast %cst_40 : f32 to vector<512x32xf32>
    %c0_41 = arith.constant 0 : index
    %c0_42 = arith.constant 0 : index
    %c0_43 = arith.constant 0 : index
    %c0_44 = arith.constant 0 : index
    %33 = vector.load %arg22[%c0_41, %c0_42, %c0_43, %c0_44] : memref<8x10x10x16xf32, #tpu.memory_space<vmem>>, vector<8x8x8x16xf32>
    %34 = vector.shape_cast %33 : vector<8x8x8x16xf32> to vector<512x16xf32>
    %35 = arith.truncf %34 : vector<512x16xf32> to vector<512x16xbf16>
    %c0_45 = arith.constant 0 : index
    %c0_46 = arith.constant 0 : index
    %c0_47 = arith.constant 0 : index
    %c0_48 = arith.constant 0 : index
    %36 = vector.load %arg5[%c0_45, %c0_46, %c0_47, %c0_48] : memref<3x3x16x32xbf16, #tpu.memory_space<vmem>>, vector<1x1x16x32xbf16>
    %37 = vector.shape_cast %36 : vector<1x1x16x32xbf16> to vector<16x32xbf16>
    %cst_49 = arith.constant dense<0.000000e+00> : vector<512x32xf32>
    %38 = tpu.matmul %35, %37, %cst_49 {dimension_numbers = #tpu.dot_dimension_numbers<[1], [0], [0], [1], [0, 0, 1, 1], [], []>} : vector<512x16xbf16>, vector<16x32xbf16>, vector<512x32xf32> -> vector<512x32xf32>
    %39 = arith.addf %32, %38 : vector<512x32xf32>
    %c0_50 = arith.constant 0 : index
    %c0_51 = arith.constant 0 : index
    %c1_52 = arith.constant 1 : index
    %c0_53 = arith.constant 0 : index
    %40 = vector.load %arg22[%c0_50, %c0_51, %c1_52, %c0_53] : memref<8x10x10x16xf32, #tpu.memory_space<vmem>>, vector<8x8x8x16xf32>
    %41 = vector.shape_cast %40 : vector<8x8x8x16xf32> to vector<512x16xf32>
    %42 = arith.truncf %41 : vector<512x16xf32> to vector<512x16xbf16>
    %c0_54 = arith.constant 0 : index
    %c1_55 = arith.constant 1 : index
    %c0_56 = arith.constant 0 : index
    %c0_57 = arith.constant 0 : index
    %43 = vector.load %arg5[%c0_54, %c1_55, %c0_56, %c0_57] : memref<3x3x16x32xbf16, #tpu.memory_space<vmem>>, vector<1x1x16x32xbf16>
    %44 = vector.shape_cast %43 : vector<1x1x16x32xbf16> to vector<16x32xbf16>
    %cst_58 = arith.constant dense<0.000000e+00> : vector<512x32xf32>
    %45 = tpu.matmul %42, %44, %cst_58 {dimension_numbers = #tpu.dot_dimension_numbers<[1], [0], [0], [1], [0, 0, 1, 1], [], []>} : vector<512x16xbf16>, vector<16x32xbf16>, vector<512x32xf32> -> vector<512x32xf32>
    %46 = arith.addf %39, %45 : vector<512x32xf32>
    %c0_59 = arith.constant 0 : index
    %c0_60 = arith.constant 0 : index
    %c2 = arith.constant 2 : index
    %c0_61 = arith.constant 0 : index
    %47 = vector.load %arg22[%c0_59, %c0_60, %c2, %c0_61] : memref<8x10x10x16xf32, #tpu.memory_space<vmem>>, vector<8x8x8x16xf32>
    %48 = vector.shape_cast %47 : vector<8x8x8x16xf32> to vector<512x16xf32>
    %49 = arith.truncf %48 : vector<512x16xf32> to vector<512x16xbf16>
    %c0_62 = arith.constant 0 : index
    %c2_63 = arith.constant 2 : index
    %c0_64 = arith.constant 0 : index
    %c0_65 = arith.constant 0 : index
    %50 = vector.load %arg5[%c0_62, %c2_63, %c0_64, %c0_65] : memref<3x3x16x32xbf16, #tpu.memory_space<vmem>>, vector<1x1x16x32xbf16>
    %51 = vector.shape_cast %50 : vector<1x1x16x32xbf16> to vector<16x32xbf16>
    %cst_66 = arith.constant dense<0.000000e+00> : vector<512x32xf32>
    %52 = tpu.matmul %49, %51, %cst_66 {dimension_numbers = #tpu.dot_dimension_numbers<[1], [0], [0], [1], [0, 0, 1, 1], [], []>} : vector<512x16xbf16>, vector<16x32xbf16>, vector<512x32xf32> -> vector<512x32xf32>
    %53 = arith.addf %46, %52 : vector<512x32xf32>
    %c0_67 = arith.constant 0 : index
    %c1_68 = arith.constant 1 : index
    %c0_69 = arith.constant 0 : index
    %c0_70 = arith.constant 0 : index
    %54 = vector.load %arg22[%c0_67, %c1_68, %c0_69, %c0_70] : memref<8x10x10x16xf32, #tpu.memory_space<vmem>>, vector<8x8x8x16xf32>
    %55 = vector.shape_cast %54 : vector<8x8x8x16xf32> to vector<512x16xf32>
    %56 = arith.truncf %55 : vector<512x16xf32> to vector<512x16xbf16>
    %c1_71 = arith.constant 1 : index
    %c0_72 = arith.constant 0 : index
    %c0_73 = arith.constant 0 : index
    %c0_74 = arith.constant 0 : index
    %57 = vector.load %arg5[%c1_71, %c0_72, %c0_73, %c0_74] : memref<3x3x16x32xbf16, #tpu.memory_space<vmem>>, vector<1x1x16x32xbf16>
    %58 = vector.shape_cast %57 : vector<1x1x16x32xbf16> to vector<16x32xbf16>
    %cst_75 = arith.constant dense<0.000000e+00> : vector<512x32xf32>
    %59 = tpu.matmul %56, %58, %cst_75 {dimension_numbers = #tpu.dot_dimension_numbers<[1], [0], [0], [1], [0, 0, 1, 1], [], []>} : vector<512x16xbf16>, vector<16x32xbf16>, vector<512x32xf32> -> vector<512x32xf32>
    %60 = arith.addf %53, %59 : vector<512x32xf32>
    %c0_76 = arith.constant 0 : index
    %c1_77 = arith.constant 1 : index
    %c1_78 = arith.constant 1 : index
    %c0_79 = arith.constant 0 : index
    %61 = vector.load %arg22[%c0_76, %c1_77, %c1_78, %c0_79] : memref<8x10x10x16xf32, #tpu.memory_space<vmem>>, vector<8x8x8x16xf32>
    %62 = vector.shape_cast %61 : vector<8x8x8x16xf32> to vector<512x16xf32>
    %63 = arith.truncf %62 : vector<512x16xf32> to vector<512x16xbf16>
    %c1_80 = arith.constant 1 : index
    %c1_81 = arith.constant 1 : index
    %c0_82 = arith.constant 0 : index
    %c0_83 = arith.constant 0 : index
    %64 = vector.load %arg5[%c1_80, %c1_81, %c0_82, %c0_83] : memref<3x3x16x32xbf16, #tpu.memory_space<vmem>>, vector<1x1x16x32xbf16>
    %65 = vector.shape_cast %64 : vector<1x1x16x32xbf16> to vector<16x32xbf16>
    %cst_84 = arith.constant dense<0.000000e+00> : vector<512x32xf32>
    %66 = tpu.matmul %63, %65, %cst_84 {dimension_numbers = #tpu.dot_dimension_numbers<[1], [0], [0], [1], [0, 0, 1, 1], [], []>} : vector<512x16xbf16>, vector<16x32xbf16>, vector<512x32xf32> -> vector<512x32xf32>
    %67 = arith.addf %60, %66 : vector<512x32xf32>
    %c0_85 = arith.constant 0 : index
    %c1_86 = arith.constant 1 : index
    %c2_87 = arith.constant 2 : index
    %c0_88 = arith.constant 0 : index
    %68 = vector.load %arg22[%c0_85, %c1_86, %c2_87, %c0_88] : memref<8x10x10x16xf32, #tpu.memory_space<vmem>>, vector<8x8x8x16xf32>
    %69 = vector.shape_cast %68 : vector<8x8x8x16xf32> to vector<512x16xf32>
    %70 = arith.truncf %69 : vector<512x16xf32> to vector<512x16xbf16>
    %c1_89 = arith.constant 1 : index
    %c2_90 = arith.constant 2 : index
    %c0_91 = arith.constant 0 : index
    %c0_92 = arith.constant 0 : index
    %71 = vector.load %arg5[%c1_89, %c2_90, %c0_91, %c0_92] : memref<3x3x16x32xbf16, #tpu.memory_space<vmem>>, vector<1x1x16x32xbf16>
    %72 = vector.shape_cast %71 : vector<1x1x16x32xbf16> to vector<16x32xbf16>
    %cst_93 = arith.constant dense<0.000000e+00> : vector<512x32xf32>
    %73 = tpu.matmul %70, %72, %cst_93 {dimension_numbers = #tpu.dot_dimension_numbers<[1], [0], [0], [1], [0, 0, 1, 1], [], []>} : vector<512x16xbf16>, vector<16x32xbf16>, vector<512x32xf32> -> vector<512x32xf32>
    %74 = arith.addf %67, %73 : vector<512x32xf32>
    %c0_94 = arith.constant 0 : index
    %c2_95 = arith.constant 2 : index
    %c0_96 = arith.constant 0 : index
    %c0_97 = arith.constant 0 : index
    %75 = vector.load %arg22[%c0_94, %c2_95, %c0_96, %c0_97] : memref<8x10x10x16xf32, #tpu.memory_space<vmem>>, vector<8x8x8x16xf32>
    %76 = vector.shape_cast %75 : vector<8x8x8x16xf32> to vector<512x16xf32>
    %77 = arith.truncf %76 : vector<512x16xf32> to vector<512x16xbf16>
    %c2_98 = arith.constant 2 : index
    %c0_99 = arith.constant 0 : index
    %c0_100 = arith.constant 0 : index
    %c0_101 = arith.constant 0 : index
    %78 = vector.load %arg5[%c2_98, %c0_99, %c0_100, %c0_101] : memref<3x3x16x32xbf16, #tpu.memory_space<vmem>>, vector<1x1x16x32xbf16>
    %79 = vector.shape_cast %78 : vector<1x1x16x32xbf16> to vector<16x32xbf16>
    %cst_102 = arith.constant dense<0.000000e+00> : vector<512x32xf32>
    %80 = tpu.matmul %77, %79, %cst_102 {dimension_numbers = #tpu.dot_dimension_numbers<[1], [0], [0], [1], [0, 0, 1, 1], [], []>} : vector<512x16xbf16>, vector<16x32xbf16>, vector<512x32xf32> -> vector<512x32xf32>
    %81 = arith.addf %74, %80 : vector<512x32xf32>
    %c0_103 = arith.constant 0 : index
    %c2_104 = arith.constant 2 : index
    %c1_105 = arith.constant 1 : index
    %c0_106 = arith.constant 0 : index
    %82 = vector.load %arg22[%c0_103, %c2_104, %c1_105, %c0_106] : memref<8x10x10x16xf32, #tpu.memory_space<vmem>>, vector<8x8x8x16xf32>
    %83 = vector.shape_cast %82 : vector<8x8x8x16xf32> to vector<512x16xf32>
    %84 = arith.truncf %83 : vector<512x16xf32> to vector<512x16xbf16>
    %c2_107 = arith.constant 2 : index
    %c1_108 = arith.constant 1 : index
    %c0_109 = arith.constant 0 : index
    %c0_110 = arith.constant 0 : index
    %85 = vector.load %arg5[%c2_107, %c1_108, %c0_109, %c0_110] : memref<3x3x16x32xbf16, #tpu.memory_space<vmem>>, vector<1x1x16x32xbf16>
    %86 = vector.shape_cast %85 : vector<1x1x16x32xbf16> to vector<16x32xbf16>
    %cst_111 = arith.constant dense<0.000000e+00> : vector<512x32xf32>
    %87 = tpu.matmul %84, %86, %cst_111 {dimension_numbers = #tpu.dot_dimension_numbers<[1], [0], [0], [1], [0, 0, 1, 1], [], []>} : vector<512x16xbf16>, vector<16x32xbf16>, vector<512x32xf32> -> vector<512x32xf32>
    %88 = arith.addf %81, %87 : vector<512x32xf32>
    %c0_112 = arith.constant 0 : index
    %c2_113 = arith.constant 2 : index
    %c2_114 = arith.constant 2 : index
    %c0_115 = arith.constant 0 : index
    %89 = vector.load %arg22[%c0_112, %c2_113, %c2_114, %c0_115] : memref<8x10x10x16xf32, #tpu.memory_space<vmem>>, vector<8x8x8x16xf32>
    %90 = vector.shape_cast %89 : vector<8x8x8x16xf32> to vector<512x16xf32>
    %91 = arith.truncf %90 : vector<512x16xf32> to vector<512x16xbf16>
    %c2_116 = arith.constant 2 : index
    %c2_117 = arith.constant 2 : index
    %c0_118 = arith.constant 0 : index
    %c0_119 = arith.constant 0 : index
    %92 = vector.load %arg5[%c2_116, %c2_117, %c0_118, %c0_119] : memref<3x3x16x32xbf16, #tpu.memory_space<vmem>>, vector<1x1x16x32xbf16>
    %93 = vector.shape_cast %92 : vector<1x1x16x32xbf16> to vector<16x32xbf16>
    %cst_120 = arith.constant dense<0.000000e+00> : vector<512x32xf32>
    %94 = tpu.matmul %91, %93, %cst_120 {dimension_numbers = #tpu.dot_dimension_numbers<[1], [0], [0], [1], [0, 0, 1, 1], [], []>} : vector<512x16xbf16>, vector<16x32xbf16>, vector<512x32xf32> -> vector<512x32xf32>
    %95 = arith.addf %88, %94 : vector<512x32xf32>
    %c0_121 = arith.constant 0 : index
    %c0_122 = arith.constant 0 : index
    %96 = vector.load %arg6[%c0_121, %c0_122] : memref<1x32xf32, #tpu.memory_space<vmem>>, vector<1x32xf32>
    %97 = vector.broadcast %96 : vector<1x32xf32> to vector<512x32xf32>
    %98 = arith.mulf %95, %97 : vector<512x32xf32>
    %c0_123 = arith.constant 0 : index
    %c0_124 = arith.constant 0 : index
    %99 = vector.load %arg7[%c0_123, %c0_124] : memref<1x32xf32, #tpu.memory_space<vmem>>, vector<1x32xf32>
    %100 = vector.broadcast %99 : vector<1x32xf32> to vector<512x32xf32>
    %101 = arith.addf %98, %100 : vector<512x32xf32>
    %cst_125 = arith.constant 0.000000e+00 : f32
    %102 = vector.broadcast %cst_125 : f32 to vector<512x32xf32>
    %103 = arith.maximumf %101, %102 : vector<512x32xf32>
    %104 = vector.shape_cast %103 : vector<512x32xf32> to vector<32x2x8x32xf32>
    %105 = vector.extract_strided_slice %104 {offsets = [0, 0, 0, 0], sizes = [32, 1, 8, 32], strides = [1, 1, 1, 1]} : vector<32x2x8x32xf32> to vector<32x1x8x32xf32>
    %106 = vector.shape_cast %105 : vector<32x1x8x32xf32> to vector<32x8x32xf32>
    %107 = vector.extract_strided_slice %104 {offsets = [0, 1, 0, 0], sizes = [32, 1, 8, 32], strides = [1, 1, 1, 1]} : vector<32x2x8x32xf32> to vector<32x1x8x32xf32>
    %108 = vector.shape_cast %107 : vector<32x1x8x32xf32> to vector<32x8x32xf32>
    %109 = arith.maximumf %106, %108 : vector<32x8x32xf32>
    %c0_126 = arith.constant 0 : index
    %c0_127 = arith.constant 0 : index
    %c0_128 = arith.constant 0 : index
    %110 = vector.load %arg23[%c0_126, %c0_127, %c0_128] : memref<32x8x32xf32, #tpu.memory_space<vmem>>, vector<32x8x32xf32>
    tpu.vector_store %arg23[%c0_126, %c0_127, %c0_128], %109 {strides = array<i32>} : memref<32x8x32xf32, #tpu.memory_space<vmem>>, vector<32x8x32xf32>,
    %cst_129 = arith.constant 0.000000e+00 : f32
    %111 = vector.broadcast %cst_129 : f32 to vector<8x1x6x32xf32>
    %c0_130 = arith.constant 0 : index
    %c0_131 = arith.constant 0 : index
    %c0_132 = arith.constant 0 : index
    %c0_133 = arith.constant 0 : index
    %112 = vector.load %arg24[%c0_130, %c0_131, %c0_132, %c0_133] : memref<8x6x6x32xf32, #tpu.memory_space<vmem>>, vector<8x1x6x32xf32>
    tpu.vector_store %arg24[%c0_130, %c0_131, %c0_132, %c0_133], %111 {strides = array<i32>} : memref<8x6x6x32xf32, #tpu.memory_space<vmem>>, vector<8x1x6x32xf32>,
    %cst_134 = arith.constant 0.000000e+00 : f32
    %113 = vector.broadcast %cst_134 : f32 to vector<8x1x6x32xf32>
    %c0_135 = arith.constant 0 : index
    %c5 = arith.constant 5 : index
    %c0_136 = arith.constant 0 : index
    %c0_137 = arith.constant 0 : index
    %114 = vector.load %arg24[%c0_135, %c5, %c0_136, %c0_137] : memref<8x6x6x32xf32, #tpu.memory_space<vmem>>, vector<8x1x6x32xf32>
    tpu.vector_store %arg24[%c0_135, %c5, %c0_136, %c0_137], %113 {strides = array<i32>} : memref<8x6x6x32xf32, #tpu.memory_space<vmem>>, vector<8x1x6x32xf32>,
    %cst_138 = arith.constant 0.000000e+00 : f32
    %115 = vector.broadcast %cst_138 : f32 to vector<8x6x1x32xf32>
    %c0_139 = arith.constant 0 : index
    %c0_140 = arith.constant 0 : index
    %c0_141 = arith.constant 0 : index
    %c0_142 = arith.constant 0 : index
    %116 = vector.load %arg24[%c0_139, %c0_140, %c0_141, %c0_142] : memref<8x6x6x32xf32, #tpu.memory_space<vmem>>, vector<8x6x1x32xf32>
    tpu.vector_store %arg24[%c0_139, %c0_140, %c0_141, %c0_142], %115 {strides = array<i32>} : memref<8x6x6x32xf32, #tpu.memory_space<vmem>>, vector<8x6x1x32xf32>,
    %cst_143 = arith.constant 0.000000e+00 : f32
    %117 = vector.broadcast %cst_143 : f32 to vector<8x6x1x32xf32>
    %c0_144 = arith.constant 0 : index
    %c0_145 = arith.constant 0 : index
    %c5_146 = arith.constant 5 : index
    %c0_147 = arith.constant 0 : index
    %118 = vector.load %arg24[%c0_144, %c0_145, %c5_146, %c0_147] : memref<8x6x6x32xf32, #tpu.memory_space<vmem>>, vector<8x6x1x32xf32>
    tpu.vector_store %arg24[%c0_144, %c0_145, %c5_146, %c0_147], %117 {strides = array<i32>} : memref<8x6x6x32xf32, #tpu.memory_space<vmem>>, vector<8x6x1x32xf32>,
    %c0_148 = arith.constant 0 : index
    %c0_149 = arith.constant 0 : index
    %c0_150 = arith.constant 0 : index
    %119 = tpu.strided_load %arg23[%c0_148, %c0_149, %c0_150] {strides = array<i32: 1, 2, 1>} : memref<32x8x32xf32, #tpu.memory_space<vmem>>, vector<32x4x32xf32>
    %c0_151 = arith.constant 0 : index
    %c1_152 = arith.constant 1 : index
    %c0_153 = arith.constant 0 : index
    %120 = tpu.strided_load %arg23[%c0_151, %c1_152, %c0_153] {strides = array<i32: 1, 2, 1>} : memref<32x8x32xf32, #tpu.memory_space<vmem>>, vector<32x4x32xf32>
    %121 = arith.maximumf %119, %120 : vector<32x4x32xf32>
    %122 = vector.shape_cast %121 : vector<32x4x32xf32> to vector<8x4x4x32xf32>
    %c0_154 = arith.constant 0 : index
    %c1_155 = arith.constant 1 : index
    %c1_156 = arith.constant 1 : index
    %c0_157 = arith.constant 0 : index
    %123 = vector.load %arg24[%c0_154, %c1_155, %c1_156, %c0_157] : memref<8x6x6x32xf32, #tpu.memory_space<vmem>>, vector<8x4x4x32xf32>
    tpu.vector_store %arg24[%c0_154, %c1_155, %c1_156, %c0_157], %122 {strides = array<i32>} : memref<8x6x6x32xf32, #tpu.memory_space<vmem>>, vector<8x4x4x32xf32>,
    %cst_158 = arith.constant 0.000000e+00 : f32
    %124 = vector.broadcast %cst_158 : f32 to vector<128x64xf32>
    %c0_159 = arith.constant 0 : index
    %c0_160 = arith.constant 0 : index
    %c0_161 = arith.constant 0 : index
    %c0_162 = arith.constant 0 : index
    %125 = vector.load %arg24[%c0_159, %c0_160, %c0_161, %c0_162] : memref<8x6x6x32xf32, #tpu.memory_space<vmem>>, vector<8x4x4x32xf32>
    %126 = vector.shape_cast %125 : vector<8x4x4x32xf32> to vector<128x32xf32>
    %127 = arith.truncf %126 : vector<128x32xf32> to vector<128x32xbf16>
    %c0_163 = arith.constant 0 : index
    %c0_164 = arith.constant 0 : index
    %c0_165 = arith.constant 0 : index
    %c0_166 = arith.constant 0 : index
    %128 = vector.load %arg8[%c0_163, %c0_164, %c0_165, %c0_166] : memref<3x3x32x64xbf16, #tpu.memory_space<vmem>>, vector<1x1x32x64xbf16>
    %129 = vector.shape_cast %128 : vector<1x1x32x64xbf16> to vector<32x64xbf16>
    %cst_167 = arith.constant dense<0.000000e+00> : vector<128x64xf32>
    %130 = tpu.matmul %127, %129, %cst_167 {dimension_numbers = #tpu.dot_dimension_numbers<[1], [0], [0], [1], [0, 0, 1, 1], [], []>} : vector<128x32xbf16>, vector<32x64xbf16>, vector<128x64xf32> -> vector<128x64xf32>
    %131 = arith.addf %124, %130 : vector<128x64xf32>
    %c0_168 = arith.constant 0 : index
    %c0_169 = arith.constant 0 : index
    %c1_170 = arith.constant 1 : index
    %c0_171 = arith.constant 0 : index
    %132 = vector.load %arg24[%c0_168, %c0_169, %c1_170, %c0_171] : memref<8x6x6x32xf32, #tpu.memory_space<vmem>>, vector<8x4x4x32xf32>
    %133 = vector.shape_cast %132 : vector<8x4x4x32xf32> to vector<128x32xf32>
    %134 = arith.truncf %133 : vector<128x32xf32> to vector<128x32xbf16>
    %c0_172 = arith.constant 0 : index
    %c1_173 = arith.constant 1 : index
    %c0_174 = arith.constant 0 : index
    %c0_175 = arith.constant 0 : index
    %135 = vector.load %arg8[%c0_172, %c1_173, %c0_174, %c0_175] : memref<3x3x32x64xbf16, #tpu.memory_space<vmem>>, vector<1x1x32x64xbf16>
    %136 = vector.shape_cast %135 : vector<1x1x32x64xbf16> to vector<32x64xbf16>
    %cst_176 = arith.constant dense<0.000000e+00> : vector<128x64xf32>
    %137 = tpu.matmul %134, %136, %cst_176 {dimension_numbers = #tpu.dot_dimension_numbers<[1], [0], [0], [1], [0, 0, 1, 1], [], []>} : vector<128x32xbf16>, vector<32x64xbf16>, vector<128x64xf32> -> vector<128x64xf32>
    %138 = arith.addf %131, %137 : vector<128x64xf32>
    %c0_177 = arith.constant 0 : index
    %c0_178 = arith.constant 0 : index
    %c2_179 = arith.constant 2 : index
    %c0_180 = arith.constant 0 : index
    %139 = vector.load %arg24[%c0_177, %c0_178, %c2_179, %c0_180] : memref<8x6x6x32xf32, #tpu.memory_space<vmem>>, vector<8x4x4x32xf32>
    %140 = vector.shape_cast %139 : vector<8x4x4x32xf32> to vector<128x32xf32>
    %141 = arith.truncf %140 : vector<128x32xf32> to vector<128x32xbf16>
    %c0_181 = arith.constant 0 : index
    %c2_182 = arith.constant 2 : index
    %c0_183 = arith.constant 0 : index
    %c0_184 = arith.constant 0 : index
    %142 = vector.load %arg8[%c0_181, %c2_182, %c0_183, %c0_184] : memref<3x3x32x64xbf16, #tpu.memory_space<vmem>>, vector<1x1x32x64xbf16>
    %143 = vector.shape_cast %142 : vector<1x1x32x64xbf16> to vector<32x64xbf16>
    %cst_185 = arith.constant dense<0.000000e+00> : vector<128x64xf32>
    %144 = tpu.matmul %141, %143, %cst_185 {dimension_numbers = #tpu.dot_dimension_numbers<[1], [0], [0], [1], [0, 0, 1, 1], [], []>} : vector<128x32xbf16>, vector<32x64xbf16>, vector<128x64xf32> -> vector<128x64xf32>
    %145 = arith.addf %138, %144 : vector<128x64xf32>
    %c0_186 = arith.constant 0 : index
    %c1_187 = arith.constant 1 : index
    %c0_188 = arith.constant 0 : index
    %c0_189 = arith.constant 0 : index
    %146 = vector.load %arg24[%c0_186, %c1_187, %c0_188, %c0_189] : memref<8x6x6x32xf32, #tpu.memory_space<vmem>>, vector<8x4x4x32xf32>
    %147 = vector.shape_cast %146 : vector<8x4x4x32xf32> to vector<128x32xf32>
    %148 = arith.truncf %147 : vector<128x32xf32> to vector<128x32xbf16>
    %c1_190 = arith.constant 1 : index
    %c0_191 = arith.constant 0 : index
    %c0_192 = arith.constant 0 : index
    %c0_193 = arith.constant 0 : index
    %149 = vector.load %arg8[%c1_190, %c0_191, %c0_192, %c0_193] : memref<3x3x32x64xbf16, #tpu.memory_space<vmem>>, vector<1x1x32x64xbf16>
    %150 = vector.shape_cast %149 : vector<1x1x32x64xbf16> to vector<32x64xbf16>
    %cst_194 = arith.constant dense<0.000000e+00> : vector<128x64xf32>
    %151 = tpu.matmul %148, %150, %cst_194 {dimension_numbers = #tpu.dot_dimension_numbers<[1], [0], [0], [1], [0, 0, 1, 1], [], []>} : vector<128x32xbf16>, vector<32x64xbf16>, vector<128x64xf32> -> vector<128x64xf32>
    %152 = arith.addf %145, %151 : vector<128x64xf32>
    %c0_195 = arith.constant 0 : index
    %c1_196 = arith.constant 1 : index
    %c1_197 = arith.constant 1 : index
    %c0_198 = arith.constant 0 : index
    %153 = vector.load %arg24[%c0_195, %c1_196, %c1_197, %c0_198] : memref<8x6x6x32xf32, #tpu.memory_space<vmem>>, vector<8x4x4x32xf32>
    %154 = vector.shape_cast %153 : vector<8x4x4x32xf32> to vector<128x32xf32>
    %155 = arith.truncf %154 : vector<128x32xf32> to vector<128x32xbf16>
    %c1_199 = arith.constant 1 : index
    %c1_200 = arith.constant 1 : index
    %c0_201 = arith.constant 0 : index
    %c0_202 = arith.constant 0 : index
    %156 = vector.load %arg8[%c1_199, %c1_200, %c0_201, %c0_202] : memref<3x3x32x64xbf16, #tpu.memory_space<vmem>>, vector<1x1x32x64xbf16>
    %157 = vector.shape_cast %156 : vector<1x1x32x64xbf16> to vector<32x64xbf16>
    %cst_203 = arith.constant dense<0.000000e+00> : vector<128x64xf32>
    %158 = tpu.matmul %155, %157, %cst_203 {dimension_numbers = #tpu.dot_dimension_numbers<[1], [0], [0], [1], [0, 0, 1, 1], [], []>} : vector<128x32xbf16>, vector<32x64xbf16>, vector<128x64xf32> -> vector<128x64xf32>
    %159 = arith.addf %152, %158 : vector<128x64xf32>
    %c0_204 = arith.constant 0 : index
    %c1_205 = arith.constant 1 : index
    %c2_206 = arith.constant 2 : index
    %c0_207 = arith.constant 0 : index
    %160 = vector.load %arg24[%c0_204, %c1_205, %c2_206, %c0_207] : memref<8x6x6x32xf32, #tpu.memory_space<vmem>>, vector<8x4x4x32xf32>
    %161 = vector.shape_cast %160 : vector<8x4x4x32xf32> to vector<128x32xf32>
    %162 = arith.truncf %161 : vector<128x32xf32> to vector<128x32xbf16>
    %c1_208 = arith.constant 1 : index
    %c2_209 = arith.constant 2 : index
    %c0_210 = arith.constant 0 : index
    %c0_211 = arith.constant 0 : index
    %163 = vector.load %arg8[%c1_208, %c2_209, %c0_210, %c0_211] : memref<3x3x32x64xbf16, #tpu.memory_space<vmem>>, vector<1x1x32x64xbf16>
    %164 = vector.shape_cast %163 : vector<1x1x32x64xbf16> to vector<32x64xbf16>
    %cst_212 = arith.constant dense<0.000000e+00> : vector<128x64xf32>
    %165 = tpu.matmul %162, %164, %cst_212 {dimension_numbers = #tpu.dot_dimension_numbers<[1], [0], [0], [1], [0, 0, 1, 1], [], []>} : vector<128x32xbf16>, vector<32x64xbf16>, vector<128x64xf32> -> vector<128x64xf32>
    %166 = arith.addf %159, %165 : vector<128x64xf32>
    %c0_213 = arith.constant 0 : index
    %c2_214 = arith.constant 2 : index
    %c0_215 = arith.constant 0 : index
    %c0_216 = arith.constant 0 : index
    %167 = vector.load %arg24[%c0_213, %c2_214, %c0_215, %c0_216] : memref<8x6x6x32xf32, #tpu.memory_space<vmem>>, vector<8x4x4x32xf32>
    %168 = vector.shape_cast %167 : vector<8x4x4x32xf32> to vector<128x32xf32>
    %169 = arith.truncf %168 : vector<128x32xf32> to vector<128x32xbf16>
    %c2_217 = arith.constant 2 : index
    %c0_218 = arith.constant 0 : index
    %c0_219 = arith.constant 0 : index
    %c0_220 = arith.constant 0 : index
    %170 = vector.load %arg8[%c2_217, %c0_218, %c0_219, %c0_220] : memref<3x3x32x64xbf16, #tpu.memory_space<vmem>>, vector<1x1x32x64xbf16>
    %171 = vector.shape_cast %170 : vector<1x1x32x64xbf16> to vector<32x64xbf16>
    %cst_221 = arith.constant dense<0.000000e+00> : vector<128x64xf32>
    %172 = tpu.matmul %169, %171, %cst_221 {dimension_numbers = #tpu.dot_dimension_numbers<[1], [0], [0], [1], [0, 0, 1, 1], [], []>} : vector<128x32xbf16>, vector<32x64xbf16>, vector<128x64xf32> -> vector<128x64xf32>
    %173 = arith.addf %166, %172 : vector<128x64xf32>
    %c0_222 = arith.constant 0 : index
    %c2_223 = arith.constant 2 : index
    %c1_224 = arith.constant 1 : index
    %c0_225 = arith.constant 0 : index
    %174 = vector.load %arg24[%c0_222, %c2_223, %c1_224, %c0_225] : memref<8x6x6x32xf32, #tpu.memory_space<vmem>>, vector<8x4x4x32xf32>
    %175 = vector.shape_cast %174 : vector<8x4x4x32xf32> to vector<128x32xf32>
    %176 = arith.truncf %175 : vector<128x32xf32> to vector<128x32xbf16>
    %c2_226 = arith.constant 2 : index
    %c1_227 = arith.constant 1 : index
    %c0_228 = arith.constant 0 : index
    %c0_229 = arith.constant 0 : index
    %177 = vector.load %arg8[%c2_226, %c1_227, %c0_228, %c0_229] : memref<3x3x32x64xbf16, #tpu.memory_space<vmem>>, vector<1x1x32x64xbf16>
    %178 = vector.shape_cast %177 : vector<1x1x32x64xbf16> to vector<32x64xbf16>
    %cst_230 = arith.constant dense<0.000000e+00> : vector<128x64xf32>
    %179 = tpu.matmul %176, %178, %cst_230 {dimension_numbers = #tpu.dot_dimension_numbers<[1], [0], [0], [1], [0, 0, 1, 1], [], []>} : vector<128x32xbf16>, vector<32x64xbf16>, vector<128x64xf32> -> vector<128x64xf32>
    %180 = arith.addf %173, %179 : vector<128x64xf32>
    %c0_231 = arith.constant 0 : index
    %c2_232 = arith.constant 2 : index
    %c2_233 = arith.constant 2 : index
    %c0_234 = arith.constant 0 : index
    %181 = vector.load %arg24[%c0_231, %c2_232, %c2_233, %c0_234] : memref<8x6x6x32xf32, #tpu.memory_space<vmem>>, vector<8x4x4x32xf32>
    %182 = vector.shape_cast %181 : vector<8x4x4x32xf32> to vector<128x32xf32>
    %183 = arith.truncf %182 : vector<128x32xf32> to vector<128x32xbf16>
    %c2_235 = arith.constant 2 : index
    %c2_236 = arith.constant 2 : index
    %c0_237 = arith.constant 0 : index
    %c0_238 = arith.constant 0 : index
    %184 = vector.load %arg8[%c2_235, %c2_236, %c0_237, %c0_238] : memref<3x3x32x64xbf16, #tpu.memory_space<vmem>>, vector<1x1x32x64xbf16>
    %185 = vector.shape_cast %184 : vector<1x1x32x64xbf16> to vector<32x64xbf16>
    %cst_239 = arith.constant dense<0.000000e+00> : vector<128x64xf32>
    %186 = tpu.matmul %183, %185, %cst_239 {dimension_numbers = #tpu.dot_dimension_numbers<[1], [0], [0], [1], [0, 0, 1, 1], [], []>} : vector<128x32xbf16>, vector<32x64xbf16>, vector<128x64xf32> -> vector<128x64xf32>
    %187 = arith.addf %180, %186 : vector<128x64xf32>
    %c0_240 = arith.constant 0 : index
    %c0_241 = arith.constant 0 : index
    %188 = vector.load %arg9[%c0_240, %c0_241] : memref<1x64xf32, #tpu.memory_space<vmem>>, vector<1x64xf32>
    %189 = vector.broadcast %188 : vector<1x64xf32> to vector<128x64xf32>
    %190 = arith.mulf %187, %189 : vector<128x64xf32>
    %c0_242 = arith.constant 0 : index
    %c0_243 = arith.constant 0 : index
    %191 = vector.load %arg10[%c0_242, %c0_243] : memref<1x64xf32, #tpu.memory_space<vmem>>, vector<1x64xf32>
    %192 = vector.broadcast %191 : vector<1x64xf32> to vector<128x64xf32>
    %193 = arith.addf %190, %192 : vector<128x64xf32>
    %cst_244 = arith.constant 0.000000e+00 : f32
    %194 = vector.broadcast %cst_244 : f32 to vector<128x64xf32>
    %195 = arith.maximumf %193, %194 : vector<128x64xf32>
    %196 = vector.shape_cast %195 : vector<128x64xf32> to vector<8x16x64xf32>
    %cst_245 = arith.constant dense<0.000000e+00> : vector<8x64xf32>
    %197 = vector.multi_reduction <add>, %196, %cst_245 [1] : vector<8x16x64xf32> to vector<8x64xf32>
    %cst_246 = arith.constant 1.600000e+01 : f32
    %198 = vector.broadcast %cst_246 : f32 to vector<8x64xf32>
    %199 = arith.divf %197, %198 : vector<8x64xf32>
    %200 = arith.truncf %199 : vector<8x64xf32> to vector<8x64xbf16>
    %c0_247 = arith.constant 0 : index
    %c0_248 = arith.constant 0 : index
    %201 = vector.load %arg11[%c0_247, %c0_248] : memref<64x32xbf16, #tpu.memory_space<vmem>>, vector<64x32xbf16>
    %cst_249 = arith.constant dense<0.000000e+00> : vector<8x32xf32>
    %202 = tpu.matmul %200, %201, %cst_249 {dimension_numbers = #tpu.dot_dimension_numbers<[1], [0], [0], [1], [0, 0, 1, 1], [], []>} : vector<8x64xbf16>, vector<64x32xbf16>, vector<8x32xf32> -> vector<8x32xf32>
    %c0_250 = arith.constant 0 : index
    %c0_251 = arith.constant 0 : index
    %203 = vector.load %arg12[%c0_250, %c0_251] : memref<1x32xf32, #tpu.memory_space<vmem>>, vector<1x32xf32>
    %204 = vector.broadcast %203 : vector<1x32xf32> to vector<8x32xf32>
    %205 = arith.addf %202, %204 : vector<8x32xf32>
    %cst_252 = arith.constant 0.000000e+00 : f32
    %206 = vector.broadcast %cst_252 : f32 to vector<8x32xf32>
    %207 = arith.maximumf %205, %206 : vector<8x32xf32>
    %208 = arith.truncf %207 : vector<8x32xf32> to vector<8x32xbf16>
    %c0_253 = arith.constant 0 : index
    %c0_254 = arith.constant 0 : index
    %209 = vector.load %arg13[%c0_253, %c0_254] : memref<32x7xbf16, #tpu.memory_space<vmem>>, vector<32x7xbf16>
    %cst_255 = arith.constant dense<0.000000e+00> : vector<8x7xf32>
    %210 = tpu.matmul %208, %209, %cst_255 {dimension_numbers = #tpu.dot_dimension_numbers<[1], [0], [0], [1], [0, 0, 1, 1], [], []>} : vector<8x32xbf16>, vector<32x7xbf16>, vector<8x7xf32> -> vector<8x7xf32>
    %c0_256 = arith.constant 0 : index
    %c0_257 = arith.constant 0 : index
    %211 = vector.load %arg14[%c0_256, %c0_257] : memref<1x7xf32, #tpu.memory_space<vmem>>, vector<1x7xf32>
    %212 = vector.broadcast %211 : vector<1x7xf32> to vector<8x7xf32>
    %213 = arith.addf %210, %212 : vector<8x7xf32>
    %c0_258 = arith.constant 0 : index
    %c0_259 = arith.constant 0 : index
    %214 = vector.load %arg19[%c0_258, %c0_259] : memref<8x7xf32, #tpu.memory_space<vmem>>, vector<8x7xf32>
    tpu.vector_store %arg19[%c0_258, %c0_259], %213 {strides = array<i32>} : memref<8x7xf32, #tpu.memory_space<vmem>>, vector<8x7xf32>,
    %c0_260 = arith.constant 0 : index
    %c0_261 = arith.constant 0 : index
    %215 = vector.load %arg15[%c0_260, %c0_261] : memref<64x64xbf16, #tpu.memory_space<vmem>>, vector<64x64xbf16>
    %cst_262 = arith.constant dense<0.000000e+00> : vector<8x64xf32>
    %216 = tpu.matmul %200, %215, %cst_262 {dimension_numbers = #tpu.dot_dimension_numbers<[1], [0], [0], [1], [0, 0, 1, 1], [], []>} : vector<8x64xbf16>, vector<64x64xbf16>, vector<8x64xf32> -> vector<8x64xf32>
    %c0_263 = arith.constant 0 : index
    %c0_264 = arith.constant 0 : index
    %217 = vector.load %arg16[%c0_263, %c0_264] : memref<1x64xf32, #tpu.memory_space<vmem>>, vector<1x64xf32>
    %218 = vector.broadcast %217 : vector<1x64xf32> to vector<8x64xf32>
    %219 = arith.addf %216, %218 : vector<8x64xf32>
    %cst_265 = arith.constant 0.000000e+00 : f32
    %220 = vector.broadcast %cst_265 : f32 to vector<8x64xf32>
    %221 = arith.maximumf %219, %220 : vector<8x64xf32>
    %222 = arith.truncf %221 : vector<8x64xf32> to vector<8x64xbf16>
    %c0_266 = arith.constant 0 : index
    %c0_267 = arith.constant 0 : index
    %223 = vector.load %arg17[%c0_266, %c0_267] : memref<64x8xbf16, #tpu.memory_space<vmem>>, vector<64x8xbf16>
    %cst_268 = arith.constant dense<0.000000e+00> : vector<8x8xf32>
    %224 = tpu.matmul %222, %223, %cst_268 {dimension_numbers = #tpu.dot_dimension_numbers<[1], [0], [0], [1], [0, 0, 1, 1], [], []>} : vector<8x64xbf16>, vector<64x8xbf16>, vector<8x8xf32> -> vector<8x8xf32>
    %c0_269 = arith.constant 0 : index
    %c0_270 = arith.constant 0 : index
    %225 = vector.load %arg18[%c0_269, %c0_270] : memref<1x8xf32, #tpu.memory_space<vmem>>, vector<1x8xf32>
    %226 = vector.broadcast %225 : vector<1x8xf32> to vector<8x8xf32>
    %227 = arith.addf %224, %226 : vector<8x8xf32>
    %cst_271 = arith.constant dense<0xFF800000> : vector<8xf32>
    %228 = vector.multi_reduction <maximumf>, %227, %cst_271 [1] : vector<8x8xf32> to vector<8xf32>
    %229 = vector.shape_cast %228 : vector<8xf32> to vector<8x1xf32>
    %230 = vector.broadcast %229 : vector<8x1xf32> to vector<8x8xf32>
    %231 = arith.subf %227, %230 : vector<8x8xf32>
    %232 = math.exp %231 : vector<8x8xf32>
    %cst_272 = arith.constant dense<0.000000e+00> : vector<8xf32>
    %233 = vector.multi_reduction <add>, %232, %cst_272 [1] : vector<8x8xf32> to vector<8xf32>
    %234 = vector.shape_cast %233 : vector<8xf32> to vector<8x1xf32>
    %235 = vector.broadcast %234 : vector<8x1xf32> to vector<8x8xf32>
    %236 = arith.divf %232, %235 : vector<8x8xf32>
    %c0_273 = arith.constant 0 : index
    %c0_274 = arith.constant 0 : index
    %237 = vector.load %arg20[%c0_273, %c0_274] : memref<8x8xf32, #tpu.memory_space<vmem>>, vector<8x8xf32>
    tpu.vector_store %arg20[%c0_273, %c0_274], %236 {strides = array<i32>} : memref<8x8xf32, #tpu.memory_space<vmem>>, vector<8x8xf32>,
    return
  }
  func.func @transform_0(%arg0: i32) -> (i32, i32, i32) {
    %c0_i32 = arith.constant 0 : i32
    %c0_i32_0 = arith.constant 0 : i32
    %c0_i32_1 = arith.constant 0 : i32
    return %arg0, %c0_i32, %c0_i32_0 : i32, i32, i32
  }
  func.func @transform_1(%arg0: i32) -> (i32, i32) {
    %c0_i32 = arith.constant 0 : i32
    %c0_i32_0 = arith.constant 0 : i32
    %c0_i32_1 = arith.constant 0 : i32
    return %c0_i32, %c0_i32_0 : i32, i32
  }
  func.func @transform_2(%arg0: i32) -> (i32, i32) {
    %c0_i32 = arith.constant 0 : i32
    %c0_i32_0 = arith.constant 0 : i32
    %c0_i32_1 = arith.constant 0 : i32
    return %c0_i32, %c0_i32_0 : i32, i32
  }
  func.func @transform_3(%arg0: i32) -> (i32, i32) {
    %c0_i32 = arith.constant 0 : i32
    %c0_i32_0 = arith.constant 0 : i32
    %c0_i32_1 = arith.constant 0 : i32
    return %c0_i32, %c0_i32_0 : i32, i32
  }
  func.func @transform_4(%arg0: i32) -> (i32, i32, i32, i32) {
    %c0_i32 = arith.constant 0 : i32
    %c0_i32_0 = arith.constant 0 : i32
    %c0_i32_1 = arith.constant 0 : i32
    %c0_i32_2 = arith.constant 0 : i32
    %c0_i32_3 = arith.constant 0 : i32
    return %c0_i32, %c0_i32_0, %c0_i32_1, %c0_i32_2 : i32, i32, i32, i32
  }
  func.func @transform_5(%arg0: i32) -> (i32, i32) {
    %c0_i32 = arith.constant 0 : i32
    %c0_i32_0 = arith.constant 0 : i32
    %c0_i32_1 = arith.constant 0 : i32
    return %c0_i32, %c0_i32_0 : i32, i32
  }
  func.func @transform_6(%arg0: i32) -> (i32, i32) {
    %c0_i32 = arith.constant 0 : i32
    %c0_i32_0 = arith.constant 0 : i32
    %c0_i32_1 = arith.constant 0 : i32
    return %c0_i32, %c0_i32_0 : i32, i32
  }
  func.func @transform_7(%arg0: i32) -> (i32, i32, i32, i32) {
    %c0_i32 = arith.constant 0 : i32
    %c0_i32_0 = arith.constant 0 : i32
    %c0_i32_1 = arith.constant 0 : i32
    %c0_i32_2 = arith.constant 0 : i32
    %c0_i32_3 = arith.constant 0 : i32
    return %c0_i32, %c0_i32_0, %c0_i32_1, %c0_i32_2 : i32, i32, i32, i32
  }
  func.func @transform_8(%arg0: i32) -> (i32, i32) {
    %c0_i32 = arith.constant 0 : i32
    %c0_i32_0 = arith.constant 0 : i32
    %c0_i32_1 = arith.constant 0 : i32
    return %c0_i32, %c0_i32_0 : i32, i32
  }
  func.func @transform_9(%arg0: i32) -> (i32, i32) {
    %c0_i32 = arith.constant 0 : i32
    %c0_i32_0 = arith.constant 0 : i32
    %c0_i32_1 = arith.constant 0 : i32
    return %c0_i32, %c0_i32_0 : i32, i32
  }
  func.func @transform_10(%arg0: i32) -> (i32, i32) {
    %c0_i32 = arith.constant 0 : i32
    %c0_i32_0 = arith.constant 0 : i32
    %c0_i32_1 = arith.constant 0 : i32
    return %c0_i32, %c0_i32_0 : i32, i32
  }
  func.func @transform_11(%arg0: i32) -> (i32, i32) {
    %c0_i32 = arith.constant 0 : i32
    %c0_i32_0 = arith.constant 0 : i32
    %c0_i32_1 = arith.constant 0 : i32
    return %c0_i32, %c0_i32_0 : i32, i32
  }
  func.func @transform_12(%arg0: i32) -> (i32, i32) {
    %c0_i32 = arith.constant 0 : i32
    %c0_i32_0 = arith.constant 0 : i32
    %c0_i32_1 = arith.constant 0 : i32
    return %c0_i32, %c0_i32_0 : i32, i32
  }
  func.func @transform_13(%arg0: i32) -> (i32, i32) {
    %c0_i32 = arith.constant 0 : i32
    %c0_i32_0 = arith.constant 0 : i32
    %c0_i32_1 = arith.constant 0 : i32
    return %c0_i32, %c0_i32_0 : i32, i32
  }
  func.func @transform_14(%arg0: i32) -> (i32, i32) {
    %c0_i32 = arith.constant 0 : i32
    %c0_i32_0 = arith.constant 0 : i32
    %c0_i32_1 = arith.constant 0 : i32
    return %c0_i32, %c0_i32_0 : i32, i32
  }
  func.func @transform_15(%arg0: i32) -> (i32, i32) {
    %c0_i32 = arith.constant 0 : i32
    %c0_i32_0 = arith.constant 0 : i32
    %c0_i32_1 = arith.constant 0 : i32
    return %c0_i32, %c0_i32_0 : i32, i32
  }
  func.func @transform_16(%arg0: i32) -> (i32, i32) {
    %c0_i32 = arith.constant 0 : i32
    %c0_i32_0 = arith.constant 0 : i32
    %c0_i32_1 = arith.constant 0 : i32
    return %c0_i32, %c0_i32_0 : i32, i32
  }
  func.func @transform_17(%arg0: i32) -> (i32, i32) {
    %c0_i32 = arith.constant 0 : i32
    %c0_i32_0 = arith.constant 0 : i32
    %c0_i32_1 = arith.constant 0 : i32
    return %c0_i32, %c0_i32_0 : i32, i32
  }
  func.func @transform_18(%arg0: i32) -> (i32, i32) {
    %c0_i32 = arith.constant 0 : i32
    %c0_i32_0 = arith.constant 0 : i32
    return %arg0, %c0_i32 : i32, i32
  }
  func.func @transform_19(%arg0: i32) -> (i32, i32) {
    %c0_i32 = arith.constant 0 : i32
    %c0_i32_0 = arith.constant 0 : i32
    return %arg0, %c0_i32 : i32, i32
  }
}

</mosaic_0001>

<llo_original>
// kernel: tpu_custom_call.1
$region0: #{tpu_custom_call.1}
  #allocation0 [shape = 'u32[]', space=smem, size = 0x4, offset = 0x4, fixed_abs, tag = 'smem constant byte address 0x4 - core index']
  #allocation1 [shape = 'u32[72,128]{1,0:T(1,128)}', space=vmem, size = 0x9000, scoped, tag = 'internal scratch']
  #allocation2 [shape = 'f32[64,16,16]{2,1,0:T(8,128)}', space=vmem, size = 0x80000, scoped, tag = 'scratch operand']
  #allocation3 [shape = 'f32[8,10,10,16]{3,2,1,0:T(8,128)}', space=vmem, size = 0xa0000, scoped, tag = 'scratch operand']
  #allocation4 [shape = 'f32[32,8,32]{2,1,0:T(8,128)}', space=vmem, size = 0x20000, scoped, tag = 'scratch operand']
  #allocation5 [shape = 'f32[8,6,6,32]{3,2,1,0:T(8,128)}', space=vmem, size = 0x30000, scoped, tag = 'scratch operand']
  %s0 = inlined_call_operand.vmem [shape: bf16[16,256,9], index: 0, kind: input, shape index: {}]
  %s1 = inlined_call_operand.vmem [shape: bf16[9,16], index: 1, kind: input, shape index: {}]
  %s2 = inlined_call_operand.vmem [shape: f32[1,16], index: 2, kind: input, shape index: {}]
  %s3 = inlined_call_operand.vmem [shape: f32[1,16], index: 3, kind: input, shape index: {}]
  %s4 = inlined_call_operand.vmem [shape: bf16[3,3,16,32], index: 4, kind: input, shape index: {}]
  %s5 = inlined_call_operand.vmem [shape: f32[1,32], index: 5, kind: input, shape index: {}]
  %s6 = inlined_call_operand.vmem [shape: f32[1,32], index: 6, kind: input, shape index: {}]
  %s7 = inlined_call_operand.vmem [shape: bf16[3,3,32,64], index: 7, kind: input, shape index: {}]
  %s8 = inlined_call_operand.vmem [shape: f32[1,64], index: 8, kind: input, shape index: {}]
  %s9 = inlined_call_operand.vmem [shape: f32[1,64], index: 9, kind: input, shape index: {}]
  %s10 = inlined_call_operand.vmem [shape: bf16[64,32], index: 10, kind: input, shape index: {}]
  %s11 = inlined_call_operand.vmem [shape: f32[1,32], index: 11, kind: input, shape index: {}]
  %s12 = inlined_call_operand.vmem [shape: bf16[32,7], index: 12, kind: input, shape index: {}]
  %s13 = inlined_call_operand.vmem [shape: f32[1,7], index: 13, kind: input, shape index: {}]
  %s14 = inlined_call_operand.vmem [shape: bf16[64,64], index: 14, kind: input, shape index: {}]
  %s15 = inlined_call_operand.vmem [shape: f32[1,64], index: 15, kind: input, shape index: {}]
  %s16 = inlined_call_operand.vmem [shape: bf16[64,8], index: 16, kind: input, shape index: {}]
  %s17 = inlined_call_operand.vmem [shape: f32[1,8], index: 17, kind: input, shape index: {}]
  %s18 = inlined_call_operand.vmem [shape: f32[16,7], index: 18, kind: output, shape index: {0}]
  %s19 = inlined_call_operand.vmem [shape: f32[16,8], index: 19, kind: output, shape index: {1}]
  %20 = xla_tuple %s18, %s19
  %s21 = sld [smem:[#allocation0]]
  $region113: #{tpu_custom_call.1} parent=0
    _
  %s23 = ssub.s32 1, %s21
  %s24 = scalar_select 0, %s23, %s21
  loop: start=0, step=1, limit=4
  $region2: #{tpu_custom_call.1} parent=0 // loop_pre_header
    _
  $region3: #{tpu_custom_call.1} parent=0 // loop_header
    %s26 = sphi 0, %s30
    %p27 = scmp.ge.s32.totalorder %s26, 4
    %s36 = sphi 0, %s38
    %s39 = sphi 0, %s36
    %s40 = sphi 0, %s39
    %s56 = sphi 0, %s40
    %s60 = sphi 0, %s60
    %s62 = sphi 0, %s60
    %s63 = sphi 0, %s62
    %s77 = sphi 0, %s63
    %s81 = sphi 0, %s81
    %s83 = sphi 0, %s81
    %s84 = sphi 0, %s83
    %s98 = sphi 0, %s84
    %s102 = sphi 0, %s102
    %s104 = sphi 0, %s102
    %s105 = sphi 0, %s104
    %s119 = sphi 0, %s105
    %s123 = sphi 0, %s123
    %s125 = sphi 0, %s123
    %s126 = sphi 0, %s125
    %s140 = sphi 0, %s126
    %s144 = sphi 0, %s144
    %s146 = sphi 0, %s144
    %s147 = sphi 0, %s146
    %s161 = sphi 0, %s147
    %s165 = sphi 0, %s165
    %s167 = sphi 0, %s165
    %s168 = sphi 0, %s167
    %s182 = sphi 0, %s168
    %s186 = sphi 0, %s186
    %s188 = sphi 0, %s186
    %s189 = sphi 0, %s188
    %s203 = sphi 0, %s189
    %s207 = sphi 0, %s207
    %s209 = sphi 0, %s207
    %s210 = sphi 0, %s209
    %s224 = sphi 0, %s210
    %s228 = sphi 0, %s228
    %s230 = sphi 0, %s228
    %s231 = sphi 0, %s230
    %s245 = sphi 0, %s231
    %s249 = sphi 0, %s249
    %s251 = sphi 0, %s249
    %s252 = sphi 0, %s251
    %s266 = sphi 0, %s252
    %s270 = sphi 0, %s270
    %s272 = sphi 0, %s270
    %s273 = sphi 0, %s272
    %s287 = sphi 0, %s273
    %s291 = sphi 0, %s291
    %s293 = sphi 0, %s291
    %s294 = sphi 0, %s293
    %s308 = sphi 0, %s294
    %s312 = sphi 0, %s312
    %s314 = sphi 0, %s312
    %s315 = sphi 0, %s314
    %s329 = sphi 0, %s315
    %s333 = sphi 0, %s333
    %s335 = sphi 0, %s333
    %s336 = sphi 0, %s335
    %s350 = sphi 0, %s336
    %s354 = sphi 0, %s354
    %s356 = sphi 0, %s354
    %s357 = sphi 0, %s356
    %s371 = sphi 0, %s357
    %s375 = sphi 0, %s375
    %s377 = sphi 0, %s375
    %s378 = sphi 0, %s377
    %s392 = sphi 0, %s378
    %s396 = sphi 0, %s396
    %s398 = sphi 0, %s396
    %s399 = sphi 0, %s398
    %s413 = sphi 0, %s399
    %s419 = sphi 0, %s421
    %s422 = sphi 0, %s419
    %s423 = sphi 0, %s422
    %s439 = sphi 0, %s423
    %s445 = sphi 0, %s447
    %s448 = sphi 0, %s445
    %s449 = sphi 0, %s448
    %s465 = sphi 0, %s449
  $region4: #{tpu_custom_call.1} parent=0 // loop_header_branch
    %29 = sbr.rel (%p27) target = $region8
  $region5: #{tpu_custom_call.1} parent=0 // loop_body
    %s31 = ssub.s32 %s26, 1
    %s32 = ssub.s32 %s26, 2
    %s33 = sadd.s32 %s26, 1
    %s34 = ssub.s32 %s26, %s33
    %p35 = scmp.eq.s32.totalorder %s34, 0
    %s37 = sadd.s32 %s36, 1
    %s38 = scalar_select %p35, %s36, %s37
    %p41 = pneg %p35
    %p42 = scmp.eq.s32.totalorder %s26, 1
    %p43 = por %p41, %p42
    %p44 = scmp.ne.s32.totalorder %s36, %s39
    %p45 = scmp.eq.s32.totalorder %s26, 0
    %p46 = por %p44, %p45
    %p47 = scmp.ne.s32.totalorder %s36, %s39
    %p48 = scmp.eq.s32.totalorder %s31, 1
    %p49 = por %p47, %p48
    %p50 = scmp.ne.s32.totalorder %s39, %s40
    %p51 = scmp.eq.s32.totalorder %s31, 0
    %p52 = por %p50, %p51
    %p53 = scmp.ne.s32.totalorder %s39, %s40
    %p54 = scmp.eq.s32.totalorder %s32, 1
    %p55 = por %p53, %p54
    %p57 = scmp.ne.s32.totalorder %s40, %s56
    %p58 = scmp.eq.s32.totalorder %s32, 0
    %p59 = por %p57, %p58
    %s61 = sadd.s32 %s60, 1
    %p64 = scmp.eq.s32.totalorder %s26, 1
    %p65 = scmp.ne.s32.totalorder %s60, %s62
    %p66 = scmp.eq.s32.totalorder %s26, 0
    %p67 = por %p65, %p66
    %p68 = scmp.ne.s32.totalorder %s60, %s62
    %p69 = scmp.eq.s32.totalorder %s31, 1
    %p70 = por %p68, %p69
    %p71 = scmp.ne.s32.totalorder %s62, %s63
    %p72 = scmp.eq.s32.totalorder %s31, 0
    %p73 = por %p71, %p72
    %p74 = scmp.ne.s32.totalorder %s62, %s63
    %p75 = scmp.eq.s32.totalorder %s32, 1
    %p76 = por %p74, %p75
    %p78 = scmp.ne.s32.totalorder %s63, %s77
    %p79 = scmp.eq.s32.totalorder %s32, 0
    %p80 = por %p78, %p79
    %s82 = sadd.s32 %s81, 1
    %p85 = scmp.eq.s32.totalorder %s26, 1
    %p86 = scmp.ne.s32.totalorder %s81, %s83
    %p87 = scmp.eq.s32.totalorder %s26, 0
    %p88 = por %p86, %p87
    %p89 = scmp.ne.s32.totalorder %s81, %s83
    %p90 = scmp.eq.s32.totalorder %s31, 1
    %p91 = por %p89, %p90
    %p92 = scmp.ne.s32.totalorder %s83, %s84
    %p93 = scmp.eq.s32.totalorder %s31, 0
    %p94 = por %p92, %p93
    %p95 = scmp.ne.s32.totalorder %s83, %s84
    %p96 = scmp.eq.s32.totalorder %s32, 1
    %p97 = por %p95, %p96
    %p99 = scmp.ne.s32.totalorder %s84, %s98
    %p100 = scmp.eq.s32.totalorder %s32, 0
    %p101 = por %p99, %p100
    %s103 = sadd.s32 %s102, 1
    %p106 = scmp.eq.s32.totalorder %s26, 1
    %p107 = scmp.ne.s32.totalorder %s102, %s104
    %p108 = scmp.eq.s32.totalorder %s26, 0
    %p109 = por %p107, %p108
    %p110 = scmp.ne.s32.totalorder %s102, %s104
    %p111 = scmp.eq.s32.totalorder %s31, 1
    %p112 = por %p110, %p111
    %p113 = scmp.ne.s32.totalorder %s104, %s105
    %p114 = scmp.eq.s32.totalorder %s31, 0
    %p115 = por %p113, %p114
    %p116 = scmp.ne.s32.totalorder %s104, %s105
    %p117 = scmp.eq.s32.totalorder %s32, 1
    %p118 = por %p116, %p117
    %p120 = scmp.ne.s32.totalorder %s105, %s119
    %p121 = scmp.eq.s32.totalorder %s32, 0
    %p122 = por %p120, %p121
    %s124 = sadd.s32 %s123, 1
    %p127 = scmp.eq.s32.totalorder %s26, 1
    %p128 = scmp.ne.s32.totalorder %s123, %s125
    %p129 = scmp.eq.s32.totalorder %s26, 0
    %p130 = por %p128, %p129
    %p131 = scmp.ne.s32.totalorder %s123, %s125
    %p132 = scmp.eq.s32.totalorder %s31, 1
    %p133 = por %p131, %p132
    %p134 = scmp.ne.s32.totalorder %s125, %s126
    %p135 = scmp.eq.s32.totalorder %s31, 0
    %p136 = por %p134, %p135
    %p137 = scmp.ne.s32.totalorder %s125, %s126
    %p138 = scmp.eq.s32.totalorder %s32, 1
    %p139 = por %p137, %p138
    %p141 = scmp.ne.s32.totalorder %s126, %s140
    %p142 = scmp.eq.s32.totalorder %s32, 0
    %p143 = por %p141, %p142
    %s145 = sadd.s32 %s144, 1
    %p148 = scmp.eq.s32.totalorder %s26, 1
    %p149 = scmp.ne.s32.totalorder %s144, %s146
    %p150 = scmp.eq.s32.totalorder %s26, 0
    %p151 = por %p149, %p150
    %p152 = scmp.ne.s32.totalorder %s144, %s146
    %p153 = scmp.eq.s32.totalorder %s31, 1
    %p154 = por %p152, %p153
    %p155 = scmp.ne.s32.totalorder %s146, %s147
    %p156 = scmp.eq.s32.totalorder %s31, 0
    %p157 = por %p155, %p156
    %p158 = scmp.ne.s32.totalorder %s146, %s147
    %p159 = scmp.eq.s32.totalorder %s32, 1
    %p160 = por %p158, %p159
    %p162 = scmp.ne.s32.totalorder %s147, %s161
    %p163 = scmp.eq.s32.totalorder %s32, 0
    %p164 = por %p162, %p163
    %s166 = sadd.s32 %s165, 1
    %p169 = scmp.eq.s32.totalorder %s26, 1
    %p170 = scmp.ne.s32.totalorder %s165, %s167
    %p171 = scmp.eq.s32.totalorder %s26, 0
    %p172 = por %p170, %p171
    %p173 = scmp.ne.s32.totalorder %s165, %s167
    %p174 = scmp.eq.s32.totalorder %s31, 1
    %p175 = por %p173, %p174
    %p176 = scmp.ne.s32.totalorder %s167, %s168
    %p177 = scmp.eq.s32.totalorder %s31, 0
    %p178 = por %p176, %p177
    %p179 = scmp.ne.s32.totalorder %s167, %s168
    %p180 = scmp.eq.s32.totalorder %s32, 1
    %p181 = por %p179, %p180
    %p183 = scmp.ne.s32.totalorder %s168, %s182
    %p184 = scmp.eq.s32.totalorder %s32, 0
    %p185 = por %p183, %p184
    %s187 = sadd.s32 %s186, 1
    %p190 = scmp.eq.s32.totalorder %s26, 1
    %p191 = scmp.ne.s32.totalorder %s186, %s188
    %p192 = scmp.eq.s32.totalorder %s26, 0
    %p193 = por %p191, %p192
    %p194 = scmp.ne.s32.totalorder %s186, %s188
    %p195 = scmp.eq.s32.totalorder %s31, 1
    %p196 = por %p194, %p195
    %p197 = scmp.ne.s32.totalorder %s188, %s189
    %p198 = scmp.eq.s32.totalorder %s31, 0
    %p199 = por %p197, %p198
    %p200 = scmp.ne.s32.totalorder %s188, %s189
    %p201 = scmp.eq.s32.totalorder %s32, 1
    %p202 = por %p200, %p201
    %p204 = scmp.ne.s32.totalorder %s189, %s203
    %p205 = scmp.eq.s32.totalorder %s32, 0
    %p206 = por %p204, %p205
    %s208 = sadd.s32 %s207, 1
    %p211 = scmp.eq.s32.totalorder %s26, 1
    %p212 = scmp.ne.s32.totalorder %s207, %s209
    %p213 = scmp.eq.s32.totalorder %s26, 0
    %p214 = por %p212, %p213
    %p215 = scmp.ne.s32.totalorder %s207, %s209
    %p216 = scmp.eq.s32.totalorder %s31, 1
    %p217 = por %p215, %p216
    %p218 = scmp.ne.s32.totalorder %s209, %s210
    %p219 = scmp.eq.s32.totalorder %s31, 0
    %p220 = por %p218, %p219
    %p221 = scmp.ne.s32.totalorder %s209, %s210
    %p222 = scmp.eq.s32.totalorder %s32, 1
    %p223 = por %p221, %p222
    %p225 = scmp.ne.s32.totalorder %s210, %s224
    %p226 = scmp.eq.s32.totalorder %s32, 0
    %p227 = por %p225, %p226
    %s229 = sadd.s32 %s228, 1
    %p232 = scmp.eq.s32.totalorder %s26, 1
    %p233 = scmp.ne.s32.totalorder %s228, %s230
    %p234 = scmp.eq.s32.totalorder %s26, 0
    %p235 = por %p233, %p234
    %p236 = scmp.ne.s32.totalorder %s228, %s230
    %p237 = scmp.eq.s32.totalorder %s31, 1
    %p238 = por %p236, %p237
    %p239 = scmp.ne.s32.totalorder %s230, %s231
    %p240 = scmp.eq.s32.totalorder %s31, 0
    %p241 = por %p239, %p240
    %p242 = scmp.ne.s32.totalorder %s230, %s231
    %p243 = scmp.eq.s32.totalorder %s32, 1
    %p244 = por %p242, %p243
    %p246 = scmp.ne.s32.totalorder %s231, %s245
    %p247 = scmp.eq.s32.totalorder %s32, 0
    %p248 = por %p246, %p247
    %s250 = sadd.s32 %s249, 1
    %p253 = scmp.eq.s32.totalorder %s26, 1
    %p254 = scmp.ne.s32.totalorder %s249, %s251
    %p255 = scmp.eq.s32.totalorder %s26, 0
    %p256 = por %p254, %p255
    %p257 = scmp.ne.s32.totalorder %s249, %s251
    %p258 = scmp.eq.s32.totalorder %s31, 1
    %p259 = por %p257, %p258
    %p260 = scmp.ne.s32.totalorder %s251, %s252
    %p261 = scmp.eq.s32.totalorder %s31, 0
    %p262 = por %p260, %p261
    %p263 = scmp.ne.s32.totalorder %s251, %s252
    %p264 = scmp.eq.s32.totalorder %s32, 1
    %p265 = por %p263, %p264
    %p267 = scmp.ne.s32.totalorder %s252, %s266
    %p268 = scmp.eq.s32.totalorder %s32, 0
    %p269 = por %p267, %p268
    %s271 = sadd.s32 %s270, 1
    %p274 = scmp.eq.s32.totalorder %s26, 1
    %p275 = scmp.ne.s32.totalorder %s270, %s272
    %p276 = scmp.eq.s32.totalorder %s26, 0
    %p277 = por %p275, %p276
    %p278 = scmp.ne.s32.totalorder %s270, %s272
    %p279 = scmp.eq.s32.totalorder %s31, 1
    %p280 = por %p278, %p279
    %p281 = scmp.ne.s32.totalorder %s272, %s273
    %p282 = scmp.eq.s32.totalorder %s31, 0
    %p283 = por %p281, %p282
    %p284 = scmp.ne.s32.totalorder %s272, %s273
    %p285 = scmp.eq.s32.totalorder %s32, 1
    %p286 = por %p284, %p285
    %p288 = scmp.ne.s32.totalorder %s273, %s287
    %p289 = scmp.eq.s32.totalorder %s32, 0
    %p290 = por %p288, %p289
    %s292 = sadd.s32 %s291, 1
    %p295 = scmp.eq.s32.totalorder %s26, 1
    %p296 = scmp.ne.s32.totalorder %s291, %s293
    %p297 = scmp.eq.s32.totalorder %s26, 0
    %p298 = por %p296, %p297
    %p299 = scmp.ne.s32.totalorder %s291, %s293
    %p300 = scmp.eq.s32.totalorder %s31, 1
    %p301 = por %p299, %p300
    %p302 = scmp.ne.s32.totalorder %s293, %s294
    %p303 = scmp.eq.s32.totalorder %s31, 0
    %p304 = por %p302, %p303
    %p305 = scmp.ne.s32.totalorder %s293, %s294
    %p306 = scmp.eq.s32.totalorder %s32, 1
    %p307 = por %p305, %p306
    %p309 = scmp.ne.s32.totalorder %s294, %s308
    %p310 = scmp.eq.s32.totalorder %s32, 0
    %p311 = por %p309, %p310
    %s313 = sadd.s32 %s312, 1
    %p316 = scmp.eq.s32.totalorder %s26, 1
    %p317 = scmp.ne.s32.totalorder %s312, %s314
    %p318 = scmp.eq.s32.totalorder %s26, 0
    %p319 = por %p317, %p318
    %p320 = scmp.ne.s32.totalorder %s312, %s314
    %p321 = scmp.eq.s32.totalorder %s31, 1
    %p322 = por %p320, %p321
    %p323 = scmp.ne.s32.totalorder %s314, %s315
    %p324 = scmp.eq.s32.totalorder %s31, 0
    %p325 = por %p323, %p324
    %p326 = scmp.ne.s32.totalorder %s314, %s315
    %p327 = scmp.eq.s32.totalorder %s32, 1
    %p328 = por %p326, %p327
    %p330 = scmp.ne.s32.totalorder %s315, %s329
    %p331 = scmp.eq.s32.totalorder %s32, 0
    %p332 = por %p330, %p331
    %s334 = sadd.s32 %s333, 1
    %p337 = scmp.eq.s32.totalorder %s26, 1
    %p338 = scmp.ne.s32.totalorder %s333, %s335
    %p339 = scmp.eq.s32.totalorder %s26, 0
    %p340 = por %p338, %p339
    %p341 = scmp.ne.s32.totalorder %s333, %s335
    %p342 = scmp.eq.s32.totalorder %s31, 1
    %p343 = por %p341, %p342
    %p344 = scmp.ne.s32.totalorder %s335, %s336
    %p345 = scmp.eq.s32.totalorder %s31, 0
    %p346 = por %p344, %p345
    %p347 = scmp.ne.s32.totalorder %s335, %s336
    %p348 = scmp.eq.s32.totalorder %s32, 1
    %p349 = por %p347, %p348
    %p351 = scmp.ne.s32.totalorder %s336, %s350
    %p352 = scmp.eq.s32.totalorder %s32, 0
    %p353 = por %p351, %p352
    %s355 = sadd.s32 %s354, 1
    %p358 = scmp.eq.s32.totalorder %s26, 1
    %p359 = scmp.ne.s32.totalorder %s354, %s356
    %p360 = scmp.eq.s32.totalorder %s26, 0
    %p361 = por %p359, %p360
    %p362 = scmp.ne.s32.totalorder %s354, %s356
    %p363 = scmp.eq.s32.totalorder %s31, 1
    %p364 = por %p362, %p363
    %p365 = scmp.ne.s32.totalorder %s356, %s357
    %p366 = scmp.eq.s32.totalorder %s31, 0
    %p367 = por %p365, %p366
    %p368 = scmp.ne.s32.totalorder %s356, %s357
    %p369 = scmp.eq.s32.totalorder %s32, 1
    %p370 = por %p368, %p369
    %p372 = scmp.ne.s32.totalorder %s357, %s371
    %p373 = scmp.eq.s32.totalorder %s32, 0
    %p374 = por %p372, %p373
    %s376 = sadd.s32 %s375, 1
    %p379 = scmp.eq.s32.totalorder %s26, 1
    %p380 = scmp.ne.s32.totalorder %s375, %s377
    %p381 = scmp.eq.s32.totalorder %s26, 0
    %p382 = por %p380, %p381
    %p383 = scmp.ne.s32.totalorder %s375, %s377
    %p384 = scmp.eq.s32.totalorder %s31, 1
    %p385 = por %p383, %p384
    %p386 = scmp.ne.s32.totalorder %s377, %s378
    %p387 = scmp.eq.s32.totalorder %s31, 0
    %p388 = por %p386, %p387
    %p389 = scmp.ne.s32.totalorder %s377, %s378
    %p390 = scmp.eq.s32.totalorder %s32, 1
    %p391 = por %p389, %p390
    %p393 = scmp.ne.s32.totalorder %s378, %s392
    %p394 = scmp.eq.s32.totalorder %s32, 0
    %p395 = por %p393, %p394
    %s397 = sadd.s32 %s396, 1
    %p400 = scmp.eq.s32.totalorder %s26, 1
    %p401 = scmp.ne.s32.totalorder %s396, %s398
    %p402 = scmp.eq.s32.totalorder %s26, 0
    %p403 = por %p401, %p402
    %p404 = scmp.ne.s32.totalorder %s396, %s398
    %p405 = scmp.eq.s32.totalorder %s31, 1
    %p406 = por %p404, %p405
    %p407 = scmp.ne.s32.totalorder %s398, %s399
    %p408 = scmp.eq.s32.totalorder %s31, 0
    %p409 = por %p407, %p408
    %p410 = scmp.ne.s32.totalorder %s398, %s399
    %p411 = scmp.eq.s32.totalorder %s32, 1
    %p412 = por %p410, %p411
    %p414 = scmp.ne.s32.totalorder %s399, %s413
    %p415 = scmp.eq.s32.totalorder %s32, 0
    %p416 = por %p414, %p415
    %s417 = ssub.s32 %s26, %s33
    %p418 = scmp.eq.s32.totalorder %s417, 0
    %s420 = sadd.s32 %s419, 1
    %s421 = scalar_select %p418, %s419, %s420
    %p424 = pneg %p418
    %p425 = scmp.eq.s32.totalorder %s26, 1
    %p426 = por %p424, %p425
    %p427 = scmp.ne.s32.totalorder %s419, %s422
    %p428 = scmp.eq.s32.totalorder %s26, 0
    %p429 = por %p427, %p428
    %p430 = scmp.ne.s32.totalorder %s419, %s422
    %p431 = scmp.eq.s32.totalorder %s31, 1
    %p432 = por %p430, %p431
    %p433 = scmp.ne.s32.totalorder %s422, %s423
    %p434 = scmp.eq.s32.totalorder %s31, 0
    %p435 = por %p433, %p434
    %p436 = scmp.ne.s32.totalorder %s422, %s423
    %p437 = scmp.eq.s32.totalorder %s32, 1
    %p438 = por %p436, %p437
    %p440 = scmp.ne.s32.totalorder %s423, %s439
    %p441 = scmp.eq.s32.totalorder %s32, 0
    %p442 = por %p440, %p441
    %s443 = ssub.s32 %s26, %s33
    %p444 = scmp.eq.s32.totalorder %s443, 0
    %s446 = sadd.s32 %s445, 1
    %s447 = scalar_select %p444, %s445, %s446
    %p450 = pneg %p444
    %p451 = scmp.eq.s32.totalorder %s26, 1
    %p452 = por %p450, %p451
    %p453 = scmp.ne.s32.totalorder %s445, %s448
    %p454 = scmp.eq.s32.totalorder %s26, 0
    %p455 = por %p453, %p454
    %p456 = scmp.ne.s32.totalorder %s445, %s448
    %p457 = scmp.eq.s32.totalorder %s31, 1
    %p458 = por %p456, %p457
    %p459 = scmp.ne.s32.totalorder %s448, %s449
    %p460 = scmp.eq.s32.totalorder %s31, 0
    %p461 = por %p459, %p460
    %p462 = scmp.ne.s32.totalorder %s448, %s449
    %p463 = scmp.eq.s32.totalorder %s32, 1
    %p464 = por %p462, %p463
    %p466 = scmp.ne.s32.totalorder %s449, %s465
    %p467 = scmp.eq.s32.totalorder %s32, 0
    %p468 = por %p466, %p467
    %p469 = scmp.le.s32.totalorder 1, %s26
    %p470 = scmp.lt.s32.totalorder %s26, 3
    %p471 = pnand %p469, %p470
    %p472 = pneg %p471
    // Predicated region
    $region9: #{tpu_custom_call.1} parent=5 // pred_check
      _
    $region10: #{tpu_custom_call.1} parent=5 // pred_check_branch
      %474 = sbr.rel (%p471) target = $region12
    $region11: #{tpu_custom_call.1} parent=5 // pred_region
      %s475 = ssub.s32 %s26, 1
      // Predicated region
      $region13: #{tpu_custom_call.1} parent=11 // pred_check
        %p476 = pneg %p73
      $region14: #{tpu_custom_call.1} parent=11 // pred_check_branch
        %478 = sbr.rel (%p476) target = $region16
      $region15: #{tpu_custom_call.1} parent=11 // pred_region
        _
      $region16: #{tpu_custom_call.1} parent=11 // pred_fallthru
        _
      // Predicated region
      $region17: #{tpu_custom_call.1} parent=11 // pred_check
        %p479 = pneg %p94
      $region18: #{tpu_custom_call.1} parent=11 // pred_check_branch
        %481 = sbr.rel (%p479) target = $region20
      $region19: #{tpu_custom_call.1} parent=11 // pred_region
        _
      $region20: #{tpu_custom_call.1} parent=11 // pred_fallthru
        _
      // Predicated region
      $region21: #{tpu_custom_call.1} parent=11 // pred_check
        %p482 = pneg %p115
      $region22: #{tpu_custom_call.1} parent=11 // pred_check_branch
        %484 = sbr.rel (%p482) target = $region24
      $region23: #{tpu_custom_call.1} parent=11 // pred_region
        _
      $region24: #{tpu_custom_call.1} parent=11 // pred_fallthru
        _
      // Predicated region
      $region25: #{tpu_custom_call.1} parent=11 // pred_check
        %p485 = pneg %p136
      $region26: #{tpu_custom_call.1} parent=11 // pred_check_branch
        %487 = sbr.rel (%p485) target = $region28
      $region27: #{tpu_custom_call.1} parent=11 // pred_region
        _
      $region28: #{tpu_custom_call.1} parent=11 // pred_fallthru
        _
      // Predicated region
      $region29: #{tpu_custom_call.1} parent=11 // pred_check
        %p488 = pneg %p157
      $region30: #{tpu_custom_call.1} parent=11 // pred_check_branch
        %490 = sbr.rel (%p488) target = $region32
      $region31: #{tpu_custom_call.1} parent=11 // pred_region
        _
      $region32: #{tpu_custom_call.1} parent=11 // pred_fallthru
        _
      // Predicated region
      $region33: #{tpu_custom_call.1} parent=11 // pred_check
        %p491 = pneg %p178
      $region34: #{tpu_custom_call.1} parent=11 // pred_check_branch
        %493 = sbr.rel (%p491) target = $region36
      $region35: #{tpu_custom_call.1} parent=11 // pred_region
        _
      $region36: #{tpu_custom_call.1} parent=11 // pred_fallthru
        _
      // Predicated region
      $region37: #{tpu_custom_call.1} parent=11 // pred_check
        %p494 = pneg %p199
      $region38: #{tpu_custom_call.1} parent=11 // pred_check_branch
        %496 = sbr.rel (%p494) target = $region40
      $region39: #{tpu_custom_call.1} parent=11 // pred_region
        _
      $region40: #{tpu_custom_call.1} parent=11 // pred_fallthru
        _
      // Predicated region
      $region41: #{tpu_custom_call.1} parent=11 // pred_check
        %p497 = pneg %p220
      $region42: #{tpu_custom_call.1} parent=11 // pred_check_branch
        %499 = sbr.rel (%p497) target = $region44
      $region43: #{tpu_custom_call.1} parent=11 // pred_region
        _
      $region44: #{tpu_custom_call.1} parent=11 // pred_fallthru
        _
      // Predicated region
      $region45: #{tpu_custom_call.1} parent=11 // pred_check
        %p500 = pneg %p241
      $region46: #{tpu_custom_call.1} parent=11 // pred_check_branch
        %502 = sbr.rel (%p500) target = $region48
      $region47: #{tpu_custom_call.1} parent=11 // pred_region
        _
      $region48: #{tpu_custom_call.1} parent=11 // pred_fallthru
        _
      // Predicated region
      $region49: #{tpu_custom_call.1} parent=11 // pred_check
        %p503 = pneg %p262
      $region50: #{tpu_custom_call.1} parent=11 // pred_check_branch
        %505 = sbr.rel (%p503) target = $region52
      $region51: #{tpu_custom_call.1} parent=11 // pred_region
        _
      $region52: #{tpu_custom_call.1} parent=11 // pred_fallthru
        _
      // Predicated region
      $region53: #{tpu_custom_call.1} parent=11 // pred_check
        %p506 = pneg %p283
      $region54: #{tpu_custom_call.1} parent=11 // pred_check_branch
        %508 = sbr.rel (%p506) target = $region56
      $region55: #{tpu_custom_call.1} parent=11 // pred_region
        _
      $region56: #{tpu_custom_call.1} parent=11 // pred_fallthru
        _
      // Predicated region
      $region57: #{tpu_custom_call.1} parent=11 // pred_check
        %p509 = pneg %p304
      $region58: #{tpu_custom_call.1} parent=11 // pred_check_branch
        %511 = sbr.rel (%p509) target = $region60
      $region59: #{tpu_custom_call.1} parent=11 // pred_region
        _
      $region60: #{tpu_custom_call.1} parent=11 // pred_fallthru
        _
      // Predicated region
      $region61: #{tpu_custom_call.1} parent=11 // pred_check
        %p512 = pneg %p325
      $region62: #{tpu_custom_call.1} parent=11 // pred_check_branch
        %514 = sbr.rel (%p512) target = $region64
      $region63: #{tpu_custom_call.1} parent=11 // pred_region
        _
      $region64: #{tpu_custom_call.1} parent=11 // pred_fallthru
        _
      // Predicated region
      $region65: #{tpu_custom_call.1} parent=11 // pred_check
        %p515 = pneg %p346
      $region66: #{tpu_custom_call.1} parent=11 // pred_check_branch
        %517 = sbr.rel (%p515) target = $region68
      $region67: #{tpu_custom_call.1} parent=11 // pred_region
        _
      $region68: #{tpu_custom_call.1} parent=11 // pred_fallthru
        _
      // Predicated region
      $region69: #{tpu_custom_call.1} parent=11 // pred_check
        %p518 = pneg %p367
      $region70: #{tpu_custom_call.1} parent=11 // pred_check_branch
        %520 = sbr.rel (%p518) target = $region72
      $region71: #{tpu_custom_call.1} parent=11 // pred_region
        _
      $region72: #{tpu_custom_call.1} parent=11 // pred_fallthru
        _
      // Predicated region
      $region73: #{tpu_custom_call.1} parent=11 // pred_check
        %p521 = pneg %p388
      $region74: #{tpu_custom_call.1} parent=11 // pred_check_branch
        %523 = sbr.rel (%p521) target = $region76
      $region75: #{tpu_custom_call.1} parent=11 // pred_region
        _
      $region76: #{tpu_custom_call.1} parent=11 // pred_fallthru
        _
      // Predicated region
      $region77: #{tpu_custom_call.1} parent=11 // pred_check
        %p524 = pneg %p409
      $region78: #{tpu_custom_call.1} parent=11 // pred_check_branch
        %526 = sbr.rel (%p524) target = $region80
      $region79: #{tpu_custom_call.1} parent=11 // pred_region
        _
      $region80: #{tpu_custom_call.1} parent=11 // pred_fallthru
        _
    $region12: #{tpu_custom_call.1} parent=5 // pred_fallthru
      _
    %p527 = scmp.lt.s32.totalorder %s26, 2
    // Predicated region
    $region81: #{tpu_custom_call.1} parent=5 // pred_check
      %p528 = pneg %p527
    $region82: #{tpu_custom_call.1} parent=5 // pred_check_branch
      %530 = sbr.rel (%p528) target = $region84
    $region83: #{tpu_custom_call.1} parent=5 // pred_region
      // Predicated region
      $region85: #{tpu_custom_call.1} parent=83 // pred_check
        %p531 = pneg %p46
      $region86: #{tpu_custom_call.1} parent=83 // pred_check_branch
        %533 = sbr.rel (%p531) target = $region88
      $region87: #{tpu_custom_call.1} parent=83 // pred_region
        %s534 = smul.u32 8, %s26
        %p535 = scmp.lt.s32.totalorder %s534, 15
        %s536 = scalar_select %p535, %s534, 15
        %s537 = smul.addr %s536, 32
        %s538 = smul.addr %s537, 4
        %s539 = scalar_lea.vmem %s0, %s538
        %s540 = smul.u32 8, %s26
      $region88: #{tpu_custom_call.1} parent=83 // pred_fallthru
        _
    $region84: #{tpu_custom_call.1} parent=5 // pred_fallthru
      _
    %p541 = scmp.le.s32.totalorder 1, %s26
    %p542 = scmp.lt.s32.totalorder %s26, 3
    %p543 = pnand %p541, %p542
    %p544 = pneg %p543
    // Predicated region
    $region89: #{tpu_custom_call.1} parent=5 // pred_check
      _
    $region90: #{tpu_custom_call.1} parent=5 // pred_check_branch
      %546 = sbr.rel (%p543) target = $region92
    $region91: #{tpu_custom_call.1} parent=5 // pred_region
      %s547 = ssub.s32 %s26, 1
      %s548 = smul.u32 8, %s31
      %p549 = scmp.lt.s32.totalorder %s548, 15
      %s550 = scalar_select %p549, %s548, 15
      %s551 = smul.addr %s550, 32
      %s552 = smul.addr %s551, 4
      %s553 = scalar_lea.vmem %s0, %s552
      %p554 = pneg %p52
      %p555 = pneg %p49
      %p556 = pneg %p73
      %p557 = pneg %p70
      %p558 = pneg %p94
      %p559 = pneg %p91
      %p560 = pneg %p115
      %p561 = pneg %p112
      %p562 = pneg %p136
      %p563 = pneg %p133
      %p564 = pneg %p157
      %p565 = pneg %p154
      %p566 = pneg %p178
      %p567 = pneg %p175
      %p568 = pneg %p199
      %p569 = pneg %p196
      %p570 = pneg %p220
      %p571 = pneg %p217
      %p572 = pneg %p241
      %p573 = pneg %p238
      %p574 = pneg %p262
      %p575 = pneg %p259
      %p576 = pneg %p283
      %p577 = pneg %p280
      %p578 = pneg %p304
      %p579 = pneg %p301
      %p580 = pneg %p325
      %p581 = pneg %p322
      %p582 = pneg %p346
      %p583 = pneg %p343
      %p584 = pneg %p367
      %p585 = pneg %p364
      %p586 = pneg %p388
      %p587 = pneg %p385
      %p588 = pneg %p409
      %p589 = pneg %p406
      %p590 = pneg %p435
      %p591 = pneg %p432
      %p592 = scmp.lt.s32.totalorder %s31, 1
      %s593 = scalar_select %p592, %s31, 1
      %s594 = smul.addr %s593, 8
      %s595 = scalar_lea.vmem %s18, %s594
      %p596 = pneg %p461
      %p597 = pneg %p458
      %p598 = scmp.lt.s32.totalorder %s31, 1
      %s599 = scalar_select %p598, %s31, 1
      %s600 = smul.addr %s599, 8
      %s601 = scalar_lea.vmem %s19, %s600
      %s602 = smul.u32 8, %s31
      %p603 = scmp.lt.s32.totalorder %s602, 15
      %s604 = scalar_select %p603, %s602, 15
      %s605 = smul.addr %s604, 32
      %s606 = smul.addr %s605, 4
      %s607 = scalar_lea.vmem %s0, %s606
      %s608 = smul.u32 8, %s31
      %p609 = scmp.lt.s32.totalorder %s31, 1
      %s610 = scalar_select %p609, %s31, 1
      %s611 = smul.addr %s610, 8
      %s612 = scalar_lea.vmem %s18, %s611
      %p613 = scmp.lt.s32.totalorder %s31, 1
      %s614 = scalar_select %p613, %s31, 1
      %s615 = smul.addr %s614, 8
      %s616 = scalar_lea.vmem %s19, %s615
      %v618 = vld [vmem:[%s607] sm:$0xf]
      %v619 = vld [vmem:[%s607 + $0x4] sm:$0xf]
      %v620 = vld [vmem:[%s607 + $0x8] sm:$0xf]
      %v621 = vld [vmem:[%s607 + $0xc] sm:$0xf]
      %v622 = vld [vmem:[%s607 + $0x10] sm:$0xf]
      %v623 = vld [vmem:[%s607 + $0x14] sm:$0xf]
      %v624 = vld [vmem:[%s607 + $0x18] sm:$0xf]
      %v625 = vld [vmem:[%s607 + $0x1c] sm:$0xf]
      %v626 = vld [vmem:[%s607 + $0x20] sm:$0xf]
      %v627 = vld [vmem:[%s607 + $0x24] sm:$0xf]
      %v628 = vld [vmem:[%s607 + $0x28] sm:$0xf]
      %v629 = vld [vmem:[%s607 + $0x2c] sm:$0xf]
      %v630 = vld [vmem:[%s607 + $0x30] sm:$0xf]
      %v631 = vld [vmem:[%s607 + $0x34] sm:$0xf]
      %v632 = vld [vmem:[%s607 + $0x38] sm:$0xf]
      %v633 = vld [vmem:[%s607 + $0x3c] sm:$0xf]
      %v634 = vld [vmem:[%s607 + $0x40] sm:$0xf]
      %v635 = vld [vmem:[%s607 + $0x44] sm:$0xf]
      %v636 = vld [vmem:[%s607 + $0x48] sm:$0xf]
      %v637 = vld [vmem:[%s607 + $0x4c] sm:$0xf]
      %v638 = vld [vmem:[%s607 + $0x50] sm:$0xf]
      %v639 = vld [vmem:[%s607 + $0x54] sm:$0xf]
      %v640 = vld [vmem:[%s607 + $0x58] sm:$0xf]
      %v641 = vld [vmem:[%s607 + $0x5c] sm:$0xf]
      %v642 = vld [vmem:[%s607 + $0x60] sm:$0xf]
      %v643 = vld [vmem:[%s607 + $0x64] sm:$0xf]
      %v644 = vld [vmem:[%s607 + $0x68] sm:$0xf]
      %v645 = vld [vmem:[%s607 + $0x6c] sm:$0xf]
      %v646 = vld [vmem:[%s607 + $0x70] sm:$0xf]
      %v647 = vld [vmem:[%s607 + $0x74] sm:$0xf]
      %v648 = vld [vmem:[%s607 + $0x78] sm:$0xf]
      %v649 = vld [vmem:[%s607 + $0x7c] sm:$0xf]
      %v650 = vld [vmem:[%s607 + $0x80] sm:$0xf]
      %v651 = vld [vmem:[%s607 + $0x84] sm:$0xf]
      %v652 = vld [vmem:[%s607 + $0x88] sm:$0xf]
      %v653 = vld [vmem:[%s607 + $0x8c] sm:$0xf]
      %v654 = vld [vmem:[%s607 + $0x90] sm:$0xf]
      %v655 = vld [vmem:[%s607 + $0x94] sm:$0xf]
      %v656 = vld [vmem:[%s607 + $0x98] sm:$0xf]
      %v657 = vld [vmem:[%s607 + $0x9c] sm:$0xf]
      %v658 = vld [vmem:[%s607 + $0xa0] sm:$0xf]
      %v659 = vld [vmem:[%s607 + $0xa4] sm:$0xf]
      %v660 = vld [vmem:[%s607 + $0xa8] sm:$0xf]
      %v661 = vld [vmem:[%s607 + $0xac] sm:$0xf]
      %v662 = vld [vmem:[%s607 + $0xb0] sm:$0xf]
      %v663 = vld [vmem:[%s607 + $0xb4] sm:$0xf]
      %v664 = vld [vmem:[%s607 + $0xb8] sm:$0xf]
      %v665 = vld [vmem:[%s607 + $0xbc] sm:$0xf]
      %v666 = vld [vmem:[%s607 + $0xc0] sm:$0xf]
      %v667 = vld [vmem:[%s607 + $0xc4] sm:$0xf]
      %v668 = vld [vmem:[%s607 + $0xc8] sm:$0xf]
      %v669 = vld [vmem:[%s607 + $0xcc] sm:$0xf]
      %v670 = vld [vmem:[%s607 + $0xd0] sm:$0xf]
      %v671 = vld [vmem:[%s607 + $0xd4] sm:$0xf]
      %v672 = vld [vmem:[%s607 + $0xd8] sm:$0xf]
      %v673 = vld [vmem:[%s607 + $0xdc] sm:$0xf]
      %v674 = vld [vmem:[%s607 + $0xe0] sm:$0xf]
      %v675 = vld [vmem:[%s607 + $0xe4] sm:$0xf]
      %v676 = vld [vmem:[%s607 + $0xe8] sm:$0xf]
      %v677 = vld [vmem:[%s607 + $0xec] sm:$0xf]
      %v678 = vld [vmem:[%s607 + $0xf0] sm:$0xf]
      %v679 = vld [vmem:[%s607 + $0xf4] sm:$0xf]
      %v680 = vld [vmem:[%s607 + $0xf8] sm:$0xf]
      %v681 = vld [vmem:[%s607 + $0xfc] sm:$0xf]
      %v682 = vld [vmem:[%s607 + $0x100] sm:$0xf]
      %v683 = vld [vmem:[%s607 + $0x104] sm:$0xf]
      %v684 = vld [vmem:[%s607 + $0x108] sm:$0xf]
      %v685 = vld [vmem:[%s607 + $0x10c] sm:$0xf]
      %v686 = vld [vmem:[%s607 + $0x110] sm:$0xf]
      %v687 = vld [vmem:[%s607 + $0x114] sm:$0xf]
      %v688 = vld [vmem:[%s607 + $0x118] sm:$0xf]
      %v689 = vld [vmem:[%s607 + $0x11c] sm:$0xf]
      %v690 = vld [vmem:[%s607 + $0x120] sm:$0xf]
      %v691 = vld [vmem:[%s607 + $0x124] sm:$0xf]
      %v692 = vld [vmem:[%s607 + $0x128] sm:$0xf]
      %v693 = vld [vmem:[%s607 + $0x12c] sm:$0xf]
      %v694 = vld [vmem:[%s607 + $0x130] sm:$0xf]
      %v695 = vld [vmem:[%s607 + $0x134] sm:$0xf]
      %v696 = vld [vmem:[%s607 + $0x138] sm:$0xf]
      %v697 = vld [vmem:[%s607 + $0x13c] sm:$0xf]
      %v698 = vld [vmem:[%s607 + $0x140] sm:$0xf]
      %v699 = vld [vmem:[%s607 + $0x144] sm:$0xf]
      %v700 = vld [vmem:[%s607 + $0x148] sm:$0xf]
      %v701 = vld [vmem:[%s607 + $0x14c] sm:$0xf]
      %v702 = vld [vmem:[%s607 + $0x150] sm:$0xf]
      %v703 = vld [vmem:[%s607 + $0x154] sm:$0xf]
      %v704 = vld [vmem:[%s607 + $0x158] sm:$0xf]
      %v705 = vld [vmem:[%s607 + $0x15c] sm:$0xf]
      %v706 = vld [vmem:[%s607 + $0x160] sm:$0xf]
      %v707 = vld [vmem:[%s607 + $0x164] sm:$0xf]
      %v708 = vld [vmem:[%s607 + $0x168] sm:$0xf]
      %v709 = vld [vmem:[%s607 + $0x16c] sm:$0xf]
      %v710 = vld [vmem:[%s607 + $0x170] sm:$0xf]
      %v711 = vld [vmem:[%s607 + $0x174] sm:$0xf]
      %v712 = vld [vmem:[%s607 + $0x178] sm:$0xf]
      %v713 = vld [vmem:[%s607 + $0x17c] sm:$0xf]
      %v714 = vld [vmem:[%s607 + $0x180] sm:$0xf]
      %v715 = vld [vmem:[%s607 + $0x184] sm:$0xf]
      %v716 = vld [vmem:[%s607 + $0x188] sm:$0xf]
      %v717 = vld [vmem:[%s607 + $0x18c] sm:$0xf]
      %v718 = vld [vmem:[%s607 + $0x190] sm:$0xf]
      %v719 = vld [vmem:[%s607 + $0x194] sm:$0xf]
      %v720 = vld [vmem:[%s607 + $0x198] sm:$0xf]
      %v721 = vld [vmem:[%s607 + $0x19c] sm:$0xf]
      %v722 = vld [vmem:[%s607 + $0x1a0] sm:$0xf]
      %v723 = vld [vmem:[%s607 + $0x1a4] sm:$0xf]
      %v724 = vld [vmem:[%s607 + $0x1a8] sm:$0xf]
      %v725 = vld [vmem:[%s607 + $0x1ac] sm:$0xf]
      %v726 = vld [vmem:[%s607 + $0x1b0] sm:$0xf]
      %v727 = vld [vmem:[%s607 + $0x1b4] sm:$0xf]
      %v728 = vld [vmem:[%s607 + $0x1b8] sm:$0xf]
      %v729 = vld [vmem:[%s607 + $0x1bc] sm:$0xf]
      %v730 = vld [vmem:[%s607 + $0x1c0] sm:$0xf]
      %v731 = vld [vmem:[%s607 + $0x1c4] sm:$0xf]
      %v732 = vld [vmem:[%s607 + $0x1c8] sm:$0xf]
      %v733 = vld [vmem:[%s607 + $0x1cc] sm:$0xf]
      %v734 = vld [vmem:[%s607 + $0x1d0] sm:$0xf]
      %v735 = vld [vmem:[%s607 + $0x1d4] sm:$0xf]
      %v736 = vld [vmem:[%s607 + $0x1d8] sm:$0xf]
      %v737 = vld [vmem:[%s607 + $0x1dc] sm:$0xf]
      %v738 = vld [vmem:[%s607 + $0x1e0] sm:$0xf]
      %v739 = vld [vmem:[%s607 + $0x1e4] sm:$0xf]
      %v740 = vld [vmem:[%s607 + $0x1e8] sm:$0xf]
      %v741 = vld [vmem:[%s607 + $0x1ec] sm:$0xf]
      %v742 = vld [vmem:[%s607 + $0x1f0] sm:$0xf]
      %v743 = vld [vmem:[%s607 + $0x1f4] sm:$0xf]
      %v744 = vld [vmem:[%s607 + $0x1f8] sm:$0xf]
      %v745 = vld [vmem:[%s607 + $0x1fc] sm:$0xf]
      %v746 = vld [vmem:[%s607 + $0x200] sm:$0xf]
      %v747 = vld [vmem:[%s607 + $0x204] sm:$0xf]
      %v748 = vld [vmem:[%s607 + $0x208] sm:$0xf]
      %v749 = vld [vmem:[%s607 + $0x20c] sm:$0xf]
      %v750 = vld [vmem:[%s607 + $0x210] sm:$0xf]
      %v751 = vld [vmem:[%s607 + $0x214] sm:$0xf]
      %v752 = vld [vmem:[%s607 + $0x218] sm:$0xf]
      %v753 = vld [vmem:[%s607 + $0x21c] sm:$0xf]
      %v754 = vld [vmem:[%s607 + $0x220] sm:$0xf]
      %v755 = vld [vmem:[%s607 + $0x224] sm:$0xf]
      %v756 = vld [vmem:[%s607 + $0x228] sm:$0xf]
      %v757 = vld [vmem:[%s607 + $0x22c] sm:$0xf]
      %v758 = vld [vmem:[%s607 + $0x230] sm:$0xf]
      %v759 = vld [vmem:[%s607 + $0x234] sm:$0xf]
      %v760 = vld [vmem:[%s607 + $0x238] sm:$0xf]
      %v761 = vld [vmem:[%s607 + $0x23c] sm:$0xf]
      %v762 = vld [vmem:[%s607 + $0x240] sm:$0xf]
      %v763 = vld [vmem:[%s607 + $0x244] sm:$0xf]
      %v764 = vld [vmem:[%s607 + $0x248] sm:$0xf]
      %v765 = vld [vmem:[%s607 + $0x24c] sm:$0xf]
      %v766 = vld [vmem:[%s607 + $0x250] sm:$0xf]
      %v767 = vld [vmem:[%s607 + $0x254] sm:$0xf]
      %v768 = vld [vmem:[%s607 + $0x258] sm:$0xf]
      %v769 = vld [vmem:[%s607 + $0x25c] sm:$0xf]
      %v770 = vld [vmem:[%s607 + $0x260] sm:$0xf]
      %v771 = vld [vmem:[%s607 + $0x264] sm:$0xf]
      %v772 = vld [vmem:[%s607 + $0x268] sm:$0xf]
      %v773 = vld [vmem:[%s607 + $0x26c] sm:$0xf]
      %v774 = vld [vmem:[%s607 + $0x270] sm:$0xf]
      %v775 = vld [vmem:[%s607 + $0x274] sm:$0xf]
      %v776 = vld [vmem:[%s607 + $0x278] sm:$0xf]
      %v777 = vld [vmem:[%s607 + $0x27c] sm:$0xf]
      %v778 = vld [vmem:[%s607 + $0x280] sm:$0xf]
      %v779 = vld [vmem:[%s607 + $0x284] sm:$0xf]
      %v780 = vld [vmem:[%s607 + $0x288] sm:$0xf]
      %v781 = vld [vmem:[%s607 + $0x28c] sm:$0xf]
      %v782 = vld [vmem:[%s607 + $0x290] sm:$0xf]
      %v783 = vld [vmem:[%s607 + $0x294] sm:$0xf]
      %v784 = vld [vmem:[%s607 + $0x298] sm:$0xf]
      %v785 = vld [vmem:[%s607 + $0x29c] sm:$0xf]
      %v786 = vld [vmem:[%s607 + $0x2a0] sm:$0xf]
      %v787 = vld [vmem:[%s607 + $0x2a4] sm:$0xf]
      %v788 = vld [vmem:[%s607 + $0x2a8] sm:$0xf]
      %v789 = vld [vmem:[%s607 + $0x2ac] sm:$0xf]
      %v790 = vld [vmem:[%s607 + $0x2b0] sm:$0xf]
      %v791 = vld [vmem:[%s607 + $0x2b4] sm:$0xf]
      %v792 = vld [vmem:[%s607 + $0x2b8] sm:$0xf]
      %v793 = vld [vmem:[%s607 + $0x2bc] sm:$0xf]
      %v794 = vld [vmem:[%s607 + $0x2c0] sm:$0xf]
      %v795 = vld [vmem:[%s607 + $0x2c4] sm:$0xf]
      %v796 = vld [vmem:[%s607 + $0x2c8] sm:$0xf]
      %v797 = vld [vmem:[%s607 + $0x2cc] sm:$0xf]
      %v798 = vld [vmem:[%s607 + $0x2d0] sm:$0xf]
      %v799 = vld [vmem:[%s607 + $0x2d4] sm:$0xf]
      %v800 = vld [vmem:[%s607 + $0x2d8] sm:$0xf]
      %v801 = vld [vmem:[%s607 + $0x2dc] sm:$0xf]
      %v802 = vld [vmem:[%s607 + $0x2e0] sm:$0xf]
      %v803 = vld [vmem:[%s607 + $0x2e4] sm:$0xf]
      %v804 = vld [vmem:[%s607 + $0x2e8] sm:$0xf]
      %v805 = vld [vmem:[%s607 + $0x2ec] sm:$0xf]
      %v806 = vld [vmem:[%s607 + $0x2f0] sm:$0xf]
      %v807 = vld [vmem:[%s607 + $0x2f4] sm:$0xf]
      %v808 = vld [vmem:[%s607 + $0x2f8] sm:$0xf]
      %v809 = vld [vmem:[%s607 + $0x2fc] sm:$0xf]
      %v810 = vld [vmem:[%s607 + $0x300] sm:$0xf]
      %v811 = vld [vmem:[%s607 + $0x304] sm:$0xf]
      %v812 = vld [vmem:[%s607 + $0x308] sm:$0xf]
      %v813 = vld [vmem:[%s607 + $0x30c] sm:$0xf]
      %v814 = vld [vmem:[%s607 + $0x310] sm:$0xf]
      %v815 = vld [vmem:[%s607 + $0x314] sm:$0xf]
      %v816 = vld [vmem:[%s607 + $0x318] sm:$0xf]
      %v817 = vld [vmem:[%s607 + $0x31c] sm:$0xf]
      %v818 = vld [vmem:[%s607 + $0x320] sm:$0xf]
      %v819 = vld [vmem:[%s607 + $0x324] sm:$0xf]
      %v820 = vld [vmem:[%s607 + $0x328] sm:$0xf]
      %v821 = vld [vmem:[%s607 + $0x32c] sm:$0xf]
      %v822 = vld [vmem:[%s607 + $0x330] sm:$0xf]
      %v823 = vld [vmem:[%s607 + $0x334] sm:$0xf]
      %v824 = vld [vmem:[%s607 + $0x338] sm:$0xf]
      %v825 = vld [vmem:[%s607 + $0x33c] sm:$0xf]
      %v826 = vld [vmem:[%s607 + $0x340] sm:$0xf]
      %v827 = vld [vmem:[%s607 + $0x344] sm:$0xf]
      %v828 = vld [vmem:[%s607 + $0x348] sm:$0xf]
      %v829 = vld [vmem:[%s607 + $0x34c] sm:$0xf]
      %v830 = vld [vmem:[%s607 + $0x350] sm:$0xf]
      %v831 = vld [vmem:[%s607 + $0x354] sm:$0xf]
      %v832 = vld [vmem:[%s607 + $0x358] sm:$0xf]
      %v833 = vld [vmem:[%s607 + $0x35c] sm:$0xf]
      %v834 = vld [vmem:[%s607 + $0x360] sm:$0xf]
      %v835 = vld [vmem:[%s607 + $0x364] sm:$0xf]
      %v836 = vld [vmem:[%s607 + $0x368] sm:$0xf]
      %v837 = vld [vmem:[%s607 + $0x36c] sm:$0xf]
      %v838 = vld [vmem:[%s607 + $0x370] sm:$0xf]
      %v839 = vld [vmem:[%s607 + $0x374] sm:$0xf]
      %v840 = vld [vmem:[%s607 + $0x378] sm:$0xf]
      %v841 = vld [vmem:[%s607 + $0x37c] sm:$0xf]
      %v842 = vld [vmem:[%s607 + $0x380] sm:$0xf]
      %v843 = vld [vmem:[%s607 + $0x384] sm:$0xf]
      %v844 = vld [vmem:[%s607 + $0x388] sm:$0xf]
      %v845 = vld [vmem:[%s607 + $0x38c] sm:$0xf]
      %v846 = vld [vmem:[%s607 + $0x390] sm:$0xf]
      %v847 = vld [vmem:[%s607 + $0x394] sm:$0xf]
      %v848 = vld [vmem:[%s607 + $0x398] sm:$0xf]
      %v849 = vld [vmem:[%s607 + $0x39c] sm:$0xf]
      %v850 = vld [vmem:[%s607 + $0x3a0] sm:$0xf]
      %v851 = vld [vmem:[%s607 + $0x3a4] sm:$0xf]
      %v852 = vld [vmem:[%s607 + $0x3a8] sm:$0xf]
      %v853 = vld [vmem:[%s607 + $0x3ac] sm:$0xf]
      %v854 = vld [vmem:[%s607 + $0x3b0] sm:$0xf]
      %v855 = vld [vmem:[%s607 + $0x3b4] sm:$0xf]
      %v856 = vld [vmem:[%s607 + $0x3b8] sm:$0xf]
      %v857 = vld [vmem:[%s607 + $0x3bc] sm:$0xf]
      %v858 = vld [vmem:[%s607 + $0x3c0] sm:$0xf]
      %v859 = vld [vmem:[%s607 + $0x3c4] sm:$0xf]
      %v860 = vld [vmem:[%s607 + $0x3c8] sm:$0xf]
      %v861 = vld [vmem:[%s607 + $0x3cc] sm:$0xf]
      %v862 = vld [vmem:[%s607 + $0x3d0] sm:$0xf]
      %v863 = vld [vmem:[%s607 + $0x3d4] sm:$0xf]
      %v864 = vld [vmem:[%s607 + $0x3d8] sm:$0xf]
      %v865 = vld [vmem:[%s607 + $0x3dc] sm:$0xf]
      %v866 = vld [vmem:[%s607 + $0x3e0] sm:$0xf]
      %v867 = vld [vmem:[%s607 + $0x3e4] sm:$0xf]
      %v868 = vld [vmem:[%s607 + $0x3e8] sm:$0xf]
      %v869 = vld [vmem:[%s607 + $0x3ec] sm:$0xf]
      %v870 = vld [vmem:[%s607 + $0x3f0] sm:$0xf]
      %v871 = vld [vmem:[%s607 + $0x3f4] sm:$0xf]
      %v872 = vld [vmem:[%s607 + $0x3f8] sm:$0xf]
      %v873 = vld [vmem:[%s607 + $0x3fc] sm:$0xf]
      %v874 = vld [vmem:[%s1] sm:$0xf]
      %v875 = vld [vmem:[%s1 + $0x4] sm:$0x1]
      %v1132 = vunpack.c.l.b16 %v618
      %v1133 = vunpack.c.l.b16 %v619
      %v1134 = vunpack.c.l.b16 %v620
      %v1135 = vunpack.c.l.b16 %v621
      %v1136 = vunpack.c.l.b16 %v622
      %v1137 = vunpack.c.l.b16 %v623
      %v1138 = vunpack.c.l.b16 %v624
      %v1139 = vunpack.c.l.b16 %v625
      %v1140 = vunpack.c.l.b16 %v626
      %v1141 = vunpack.c.l.b16 %v627
      %v1142 = vunpack.c.l.b16 %v628
      %v1143 = vunpack.c.l.b16 %v629
      %v1144 = vunpack.c.l.b16 %v630
      %v1145 = vunpack.c.l.b16 %v631
      %v1146 = vunpack.c.l.b16 %v632
      %v1147 = vunpack.c.l.b16 %v633
      %v1148 = vunpack.c.l.b16 %v634
      %v1149 = vunpack.c.l.b16 %v635
      %v1150 = vunpack.c.l.b16 %v636
      %v1151 = vunpack.c.l.b16 %v637
      %v1152 = vunpack.c.l.b16 %v638
      %v1153 = vunpack.c.l.b16 %v639
      %v1154 = vunpack.c.l.b16 %v640
      %v1155 = vunpack.c.l.b16 %v641
      %v1156 = vunpack.c.l.b16 %v642
      %v1157 = vunpack.c.l.b16 %v643
      %v1158 = vunpack.c.l.b16 %v644
      %v1159 = vunpack.c.l.b16 %v645
      %v1160 = vunpack.c.l.b16 %v646
      %v1161 = vunpack.c.l.b16 %v647
      %v1162 = vunpack.c.l.b16 %v648
      %v1163 = vunpack.c.l.b16 %v649
      %v1164 = vunpack.c.l.b16 %v650
      %v1165 = vunpack.c.l.b16 %v651
      %v1166 = vunpack.c.l.b16 %v652
      %v1167 = vunpack.c.l.b16 %v653
      %v1168 = vunpack.c.l.b16 %v654
      %v1169 = vunpack.c.l.b16 %v655
      %v1170 = vunpack.c.l.b16 %v656
      %v1171 = vunpack.c.l.b16 %v657
      %v1172 = vunpack.c.l.b16 %v658
      %v1173 = vunpack.c.l.b16 %v659
      %v1174 = vunpack.c.l.b16 %v660
      %v1175 = vunpack.c.l.b16 %v661
      %v1176 = vunpack.c.l.b16 %v662
      %v1177 = vunpack.c.l.b16 %v663
      %v1178 = vunpack.c.l.b16 %v664
      %v1179 = vunpack.c.l.b16 %v665
      %v1180 = vunpack.c.l.b16 %v666
      %v1181 = vunpack.c.l.b16 %v667
      %v1182 = vunpack.c.l.b16 %v668
      %v1183 = vunpack.c.l.b16 %v669
      %v1184 = vunpack.c.l.b16 %v670
      %v1185 = vunpack.c.l.b16 %v671
      %v1186 = vunpack.c.l.b16 %v672
      %v1187 = vunpack.c.l.b16 %v673
      %v1188 = vunpack.c.l.b16 %v674
      %v1189 = vunpack.c.l.b16 %v675
      %v1190 = vunpack.c.l.b16 %v676
      %v1191 = vunpack.c.l.b16 %v677
      %v1192 = vunpack.c.l.b16 %v678
      %v1193 = vunpack.c.l.b16 %v679
      %v1194 = vunpack.c.l.b16 %v680
      %v1195 = vunpack.c.l.b16 %v681
      %v1196 = vunpack.c.l.b16 %v682
      %v1197 = vunpack.c.l.b16 %v683
      %v1198 = vunpack.c.l.b16 %v684
      %v1199 = vunpack.c.l.b16 %v685
      %v1200 = vunpack.c.l.b16 %v686
      %v1201 = vunpack.c.l.b16 %v687
      %v1202 = vunpack.c.l.b16 %v688
      %v1203 = vunpack.c.l.b16 %v689
      %v1204 = vunpack.c.l.b16 %v690
      %v1205 = vunpack.c.l.b16 %v691
      %v1206 = vunpack.c.l.b16 %v692
      %v1207 = vunpack.c.l.b16 %v693
      %v1208 = vunpack.c.l.b16 %v694
      %v1209 = vunpack.c.l.b16 %v695
      %v1210 = vunpack.c.l.b16 %v696
      %v1211 = vunpack.c.l.b16 %v697
      %v1212 = vunpack.c.l.b16 %v698
      %v1213 = vunpack.c.l.b16 %v699
      %v1214 = vunpack.c.l.b16 %v700
      %v1215 = vunpack.c.l.b16 %v701
      %v1216 = vunpack.c.l.b16 %v702
      %v1217 = vunpack.c.l.b16 %v703
      %v1218 = vunpack.c.l.b16 %v704
      %v1219 = vunpack.c.l.b16 %v705
      %v1220 = vunpack.c.l.b16 %v706
      %v1221 = vunpack.c.l.b16 %v707
      %v1222 = vunpack.c.l.b16 %v708
      %v1223 = vunpack.c.l.b16 %v709
      %v1224 = vunpack.c.l.b16 %v710
      %v1225 = vunpack.c.l.b16 %v711
      %v1226 = vunpack.c.l.b16 %v712
      %v1227 = vunpack.c.l.b16 %v713
      %v1228 = vunpack.c.l.b16 %v714
      %v1229 = vunpack.c.l.b16 %v715
      %v1230 = vunpack.c.l.b16 %v716
      %v1231 = vunpack.c.l.b16 %v717
      %v1232 = vunpack.c.l.b16 %v718
      %v1233 = vunpack.c.l.b16 %v719
      %v1234 = vunpack.c.l.b16 %v720
      %v1235 = vunpack.c.l.b16 %v721
      %v1236 = vunpack.c.l.b16 %v722
      %v1237 = vunpack.c.l.b16 %v723
      %v1238 = vunpack.c.l.b16 %v724
      %v1239 = vunpack.c.l.b16 %v725
      %v1240 = vunpack.c.l.b16 %v726
      %v1241 = vunpack.c.l.b16 %v727
      %v1242 = vunpack.c.l.b16 %v728
      %v1243 = vunpack.c.l.b16 %v729
      %v1244 = vunpack.c.l.b16 %v730
      %v1245 = vunpack.c.l.b16 %v731
      %v1246 = vunpack.c.l.b16 %v732
      %v1247 = vunpack.c.l.b16 %v733
      %v1248 = vunpack.c.l.b16 %v734
      %v1249 = vunpack.c.l.b16 %v735
      %v1250 = vunpack.c.l.b16 %v736
      %v1251 = vunpack.c.l.b16 %v737
      %v1252 = vunpack.c.l.b16 %v738
      %v1253 = vunpack.c.l.b16 %v739
      %v1254 = vunpack.c.l.b16 %v740
      %v1255 = vunpack.c.l.b16 %v741
      %v1256 = vunpack.c.l.b16 %v742
      %v1257 = vunpack.c.l.b16 %v743
      %v1258 = vunpack.c.l.b16 %v744
      %v1259 = vunpack.c.l.b16 %v745
      %v1260 = vunpack.c.l.b16 %v746
      %v1261 = vunpack.c.l.b16 %v747
      %v1262 = vunpack.c.l.b16 %v748
      %v1263 = vunpack.c.l.b16 %v749
      %v1264 = vunpack.c.l.b16 %v750
      %v1265 = vunpack.c.l.b16 %v751
      %v1266 = vunpack.c.l.b16 %v752
      %v1267 = vunpack.c.l.b16 %v753
      %v1268 = vunpack.c.l.b16 %v754
      %v1269 = vunpack.c.l.b16 %v755
      %v1270 = vunpack.c.l.b16 %v756
      %v1271 = vunpack.c.l.b16 %v757
      %v1272 = vunpack.c.l.b16 %v758
      %v1273 = vunpack.c.l.b16 %v759
      %v1274 = vunpack.c.l.b16 %v760
      %v1275 = vunpack.c.l.b16 %v761
      %v1276 = vunpack.c.l.b16 %v762
      %v1277 = vunpack.c.l.b16 %v763
      %v1278 = vunpack.c.l.b16 %v764
      %v1279 = vunpack.c.l.b16 %v765
      %v1280 = vunpack.c.l.b16 %v766
      %v1281 = vunpack.c.l.b16 %v767
      %v1282 = vunpack.c.l.b16 %v768
      %v1283 = vunpack.c.l.b16 %v769
      %v1284 = vunpack.c.l.b16 %v770
      %v1285 = vunpack.c.l.b16 %v771
      %v1286 = vunpack.c.l.b16 %v772
      %v1287 = vunpack.c.l.b16 %v773
      %v1288 = vunpack.c.l.b16 %v774
      %v1289 = vunpack.c.l.b16 %v775
      %v1290 = vunpack.c.l.b16 %v776
      %v1291 = vunpack.c.l.b16 %v777
      %v1292 = vunpack.c.l.b16 %v778
      %v1293 = vunpack.c.l.b16 %v779
      %v1294 = vunpack.c.l.b16 %v780
      %v1295 = vunpack.c.l.b16 %v781
      %v1296 = vunpack.c.l.b16 %v782
      %v1297 = vunpack.c.l.b16 %v783
      %v1298 = vunpack.c.l.b16 %v784
      %v1299 = vunpack.c.l.b16 %v785
      %v1300 = vunpack.c.l.b16 %v786
      %v1301 = vunpack.c.l.b16 %v787
      %v1302 = vunpack.c.l.b16 %v788
      %v1303 = vunpack.c.l.b16 %v789
      %v1304 = vunpack.c.l.b16 %v790
      %v1305 = vunpack.c.l.b16 %v791
      %v1306 = vunpack.c.l.b16 %v792
      %v1307 = vunpack.c.l.b16 %v793
      %v1308 = vunpack.c.l.b16 %v794
      %v1309 = vunpack.c.l.b16 %v795
      %v1310 = vunpack.c.l.b16 %v796
      %v1311 = vunpack.c.l.b16 %v797
      %v1312 = vunpack.c.l.b16 %v798
      %v1313 = vunpack.c.l.b16 %v799
      %v1314 = vunpack.c.l.b16 %v800
      %v1315 = vunpack.c.l.b16 %v801
      %v1316 = vunpack.c.l.b16 %v802
      %v1317 = vunpack.c.l.b16 %v803
      %v1318 = vunpack.c.l.b16 %v804
      %v1319 = vunpack.c.l.b16 %v805
      %v1320 = vunpack.c.l.b16 %v806
      %v1321 = vunpack.c.l.b16 %v807
      %v1322 = vunpack.c.l.b16 %v808
      %v1323 = vunpack.c.l.b16 %v809
      %v1324 = vunpack.c.l.b16 %v810
      %v1325 = vunpack.c.l.b16 %v811
      %v1326 = vunpack.c.l.b16 %v812
      %v1327 = vunpack.c.l.b16 %v813
      %v1328 = vunpack.c.l.b16 %v814
      %v1329 = vunpack.c.l.b16 %v815
      %v1330 = vunpack.c.l.b16 %v816
      %v1331 = vunpack.c.l.b16 %v817
      %v1332 = vunpack.c.l.b16 %v818
      %v1333 = vunpack.c.l.b16 %v819
      %v1334 = vunpack.c.l.b16 %v820
      %v1335 = vunpack.c.l.b16 %v821
      %v1336 = vunpack.c.l.b16 %v822
      %v1337 = vunpack.c.l.b16 %v823
      %v1338 = vunpack.c.l.b16 %v824
      %v1339 = vunpack.c.l.b16 %v825
      %v1340 = vunpack.c.l.b16 %v826
      %v1341 = vunpack.c.l.b16 %v827
      %v1342 = vunpack.c.l.b16 %v828
      %v1343 = vunpack.c.l.b16 %v829
      %v1344 = vunpack.c.l.b16 %v830
      %v1345 = vunpack.c.l.b16 %v831
      %v1346 = vunpack.c.l.b16 %v832
      %v1347 = vunpack.c.l.b16 %v833
      %v1348 = vunpack.c.l.b16 %v834
      %v1349 = vunpack.c.l.b16 %v835
      %v1350 = vunpack.c.l.b16 %v836
      %v1351 = vunpack.c.l.b16 %v837
      %v1352 = vunpack.c.l.b16 %v838
      %v1353 = vunpack.c.l.b16 %v839
      %v1354 = vunpack.c.l.b16 %v840
      %v1355 = vunpack.c.l.b16 %v841
      %v1356 = vunpack.c.l.b16 %v842
      %v1357 = vunpack.c.l.b16 %v843
      %v1358 = vunpack.c.l.b16 %v844
      %v1359 = vunpack.c.l.b16 %v845
      %v1360 = vunpack.c.l.b16 %v846
      %v1361 = vunpack.c.l.b16 %v847
      %v1362 = vunpack.c.l.b16 %v848
      %v1363 = vunpack.c.l.b16 %v849
      %v1364 = vunpack.c.l.b16 %v850
      %v1365 = vunpack.c.l.b16 %v851
      %v1366 = vunpack.c.l.b16 %v852
      %v1367 = vunpack.c.l.b16 %v853
      %v1368 = vunpack.c.l.b16 %v854
      %v1369 = vunpack.c.l.b16 %v855
      %v1370 = vunpack.c.l.b16 %v856
      %v1371 = vunpack.c.l.b16 %v857
      %v1372 = vunpack.c.l.b16 %v858
      %v1373 = vunpack.c.l.b16 %v859
      %v1374 = vunpack.c.l.b16 %v860
      %v1375 = vunpack.c.l.b16 %v861
      %v1376 = vunpack.c.l.b16 %v862
      %v1377 = vunpack.c.l.b16 %v863
      %v1378 = vunpack.c.l.b16 %v864
      %v1379 = vunpack.c.l.b16 %v865
      %v1380 = vunpack.c.l.b16 %v866
      %v1381 = vunpack.c.l.b16 %v867
      %v1382 = vunpack.c.l.b16 %v868
      %v1383 = vunpack.c.l.b16 %v869
      %v1384 = vunpack.c.l.b16 %v870
      %v1385 = vunpack.c.l.b16 %v871
      %v1386 = vunpack.c.l.b16 %v872
      %v1387 = vunpack.c.l.b16 %v873
      %v1388 = vpack.c.b16 %v1133, %v1132
      %v1389 = vpack.c.b16 %v1135, %v1134
      %v1390 = vpack.c.b16 %v1137, %v1136
      %v1391 = vpack.c.b16 %v1139, %v1138
      %v1392 = vpack.c.b16 %v1141, %v1140
      %v1393 = vpack.c.b16 %v1143, %v1142
      %v1394 = vpack.c.b16 %v1145, %v1144
      %v1395 = vpack.c.b16 %v1147, %v1146
      %v1396 = vpack.c.b16 %v1149, %v1148
      %v1397 = vpack.c.b16 %v1151, %v1150
      %v1398 = vpack.c.b16 %v1153, %v1152
      %v1399 = vpack.c.b16 %v1155, %v1154
      %v1400 = vpack.c.b16 %v1157, %v1156
      %v1401 = vpack.c.b16 %v1159, %v1158
      %v1402 = vpack.c.b16 %v1161, %v1160
      %v1403 = vpack.c.b16 %v1163, %v1162
      %v1404 = vpack.c.b16 %v1165, %v1164
      %v1405 = vpack.c.b16 %v1167, %v1166
      %v1406 = vpack.c.b16 %v1169, %v1168
      %v1407 = vpack.c.b16 %v1171, %v1170
      %v1408 = vpack.c.b16 %v1173, %v1172
      %v1409 = vpack.c.b16 %v1175, %v1174
      %v1410 = vpack.c.b16 %v1177, %v1176
      %v1411 = vpack.c.b16 %v1179, %v1178
      %v1412 = vpack.c.b16 %v1181, %v1180
      %v1413 = vpack.c.b16 %v1183, %v1182
      %v1414 = vpack.c.b16 %v1185, %v1184
      %v1415 = vpack.c.b16 %v1187, %v1186
      %v1416 = vpack.c.b16 %v1189, %v1188
      %v1417 = vpack.c.b16 %v1191, %v1190
      %v1418 = vpack.c.b16 %v1193, %v1192
      %v1419 = vpack.c.b16 %v1195, %v1194
      %v1420 = vpack.c.b16 %v1197, %v1196
      %v1421 = vpack.c.b16 %v1199, %v1198
      %v1422 = vpack.c.b16 %v1201, %v1200
      %v1423 = vpack.c.b16 %v1203, %v1202
      %v1424 = vpack.c.b16 %v1205, %v1204
      %v1425 = vpack.c.b16 %v1207, %v1206
      %v1426 = vpack.c.b16 %v1209, %v1208
      %v1427 = vpack.c.b16 %v1211, %v1210
      %v1428 = vpack.c.b16 %v1213, %v1212
      %v1429 = vpack.c.b16 %v1215, %v1214
      %v1430 = vpack.c.b16 %v1217, %v1216
      %v1431 = vpack.c.b16 %v1219, %v1218
      %v1432 = vpack.c.b16 %v1221, %v1220
      %v1433 = vpack.c.b16 %v1223, %v1222
      %v1434 = vpack.c.b16 %v1225, %v1224
      %v1435 = vpack.c.b16 %v1227, %v1226
      %v1436 = vpack.c.b16 %v1229, %v1228
      %v1437 = vpack.c.b16 %v1231, %v1230
      %v1438 = vpack.c.b16 %v1233, %v1232
      %v1439 = vpack.c.b16 %v1235, %v1234
      %v1440 = vpack.c.b16 %v1237, %v1236
      %v1441 = vpack.c.b16 %v1239, %v1238
      %v1442 = vpack.c.b16 %v1241, %v1240
      %v1443 = vpack.c.b16 %v1243, %v1242
      %v1444 = vpack.c.b16 %v1245, %v1244
      %v1445 = vpack.c.b16 %v1247, %v1246
      %v1446 = vpack.c.b16 %v1249, %v1248
      %v1447 = vpack.c.b16 %v1251, %v1250
      %v1448 = vpack.c.b16 %v1253, %v1252
      %v1449 = vpack.c.b16 %v1255, %v1254
      %v1450 = vpack.c.b16 %v1257, %v1256
      %v1451 = vpack.c.b16 %v1259, %v1258
      %v1452 = vpack.c.b16 %v1261, %v1260
      %v1453 = vpack.c.b16 %v1263, %v1262
      %v1454 = vpack.c.b16 %v1265, %v1264
      %v1455 = vpack.c.b16 %v1267, %v1266
      %v1456 = vpack.c.b16 %v1269, %v1268
      %v1457 = vpack.c.b16 %v1271, %v1270
      %v1458 = vpack.c.b16 %v1273, %v1272
      %v1459 = vpack.c.b16 %v1275, %v1274
      %v1460 = vpack.c.b16 %v1277, %v1276
      %v1461 = vpack.c.b16 %v1279, %v1278
      %v1462 = vpack.c.b16 %v1281, %v1280
      %v1463 = vpack.c.b16 %v1283, %v1282
      %v1464 = vpack.c.b16 %v1285, %v1284
      %v1465 = vpack.c.b16 %v1287, %v1286
      %v1466 = vpack.c.b16 %v1289, %v1288
      %v1467 = vpack.c.b16 %v1291, %v1290
      %v1468 = vpack.c.b16 %v1293, %v1292
      %v1469 = vpack.c.b16 %v1295, %v1294
      %v1470 = vpack.c.b16 %v1297, %v1296
      %v1471 = vpack.c.b16 %v1299, %v1298
      %v1472 = vpack.c.b16 %v1301, %v1300
      %v1473 = vpack.c.b16 %v1303, %v1302
      %v1474 = vpack.c.b16 %v1305, %v1304
      %v1475 = vpack.c.b16 %v1307, %v1306
      %v1476 = vpack.c.b16 %v1309, %v1308
      %v1477 = vpack.c.b16 %v1311, %v1310
      %v1478 = vpack.c.b16 %v1313, %v1312
      %v1479 = vpack.c.b16 %v1315, %v1314
      %v1480 = vpack.c.b16 %v1317, %v1316
      %v1481 = vpack.c.b16 %v1319, %v1318
      %v1482 = vpack.c.b16 %v1321, %v1320
      %v1483 = vpack.c.b16 %v1323, %v1322
      %v1484 = vpack.c.b16 %v1325, %v1324
      %v1485 = vpack.c.b16 %v1327, %v1326
      %v1486 = vpack.c.b16 %v1329, %v1328
      %v1487 = vpack.c.b16 %v1331, %v1330
      %v1488 = vpack.c.b16 %v1333, %v1332
      %v1489 = vpack.c.b16 %v1335, %v1334
      %v1490 = vpack.c.b16 %v1337, %v1336
      %v1491 = vpack.c.b16 %v1339, %v1338
      %v1492 = vpack.c.b16 %v1341, %v1340
      %v1493 = vpack.c.b16 %v1343, %v1342
      %v1494 = vpack.c.b16 %v1345, %v1344
      %v1495 = vpack.c.b16 %v1347, %v1346
      %v1496 = vpack.c.b16 %v1349, %v1348
      %v1497 = vpack.c.b16 %v1351, %v1350
      %v1498 = vpack.c.b16 %v1353, %v1352
      %v1499 = vpack.c.b16 %v1355, %v1354
      %v1500 = vpack.c.b16 %v1357, %v1356
      %v1501 = vpack.c.b16 %v1359, %v1358
      %v1502 = vpack.c.b16 %v1361, %v1360
      %v1503 = vpack.c.b16 %v1363, %v1362
      %v1504 = vpack.c.b16 %v1365, %v1364
      %v1505 = vpack.c.b16 %v1367, %v1366
      %v1506 = vpack.c.b16 %v1369, %v1368
      %v1507 = vpack.c.b16 %v1371, %v1370
      %v1508 = vpack.c.b16 %v1373, %v1372
      %v1509 = vpack.c.b16 %v1375, %v1374
      %v1510 = vpack.c.b16 %v1377, %v1376
      %v1511 = vpack.c.b16 %v1379, %v1378
      %v1512 = vpack.c.b16 %v1381, %v1380
      %v1513 = vpack.c.b16 %v1383, %v1382
      %v1514 = vpack.c.b16 %v1385, %v1384
      %v1515 = vpack.c.b16 %v1387, %v1386
      %v1518 = vunpack.c.l.b16 %v874
      %v1519 = vunpack.c.l.b16 %v875
      %v1520 = vpack.c.b16 %v1519, %v1518
      %vm1521 = vcmask 72704
      %v1523 = vsel %vm1521, %v1388, 0
      %v1526 = vsel %vm1521, %v1389, 0
      %v1529 = vsel %vm1521, %v1390, 0
      %v1532 = vsel %vm1521, %v1391, 0
      %v1535 = vsel %vm1521, %v1392, 0
      %v1538 = vsel %vm1521, %v1393, 0
      %v1541 = vsel %vm1521, %v1394, 0
      %v1544 = vsel %vm1521, %v1395, 0
      %v1547 = vsel %vm1521, %v1396, 0
      %v1550 = vsel %vm1521, %v1397, 0
      %v1553 = vsel %vm1521, %v1398, 0
      %v1556 = vsel %vm1521, %v1399, 0
      %v1559 = vsel %vm1521, %v1400, 0
      %v1562 = vsel %vm1521, %v1401, 0
      %v1565 = vsel %vm1521, %v1402, 0
      %v1568 = vsel %vm1521, %v1403, 0
      %v1571 = vsel %vm1521, %v1404, 0
      %v1574 = vsel %vm1521, %v1405, 0
      %v1577 = vsel %vm1521, %v1406, 0
      %v1580 = vsel %vm1521, %v1407, 0
      %v1583 = vsel %vm1521, %v1408, 0
      %v1586 = vsel %vm1521, %v1409, 0
      %v1589 = vsel %vm1521, %v1410, 0
      %v1592 = vsel %vm1521, %v1411, 0
      %v1595 = vsel %vm1521, %v1412, 0
      %v1598 = vsel %vm1521, %v1413, 0
      %v1601 = vsel %vm1521, %v1414, 0
      %v1604 = vsel %vm1521, %v1415, 0
      %v1607 = vsel %vm1521, %v1416, 0
      %v1610 = vsel %vm1521, %v1417, 0
      %v1613 = vsel %vm1521, %v1418, 0
      %v1616 = vsel %vm1521, %v1419, 0
      %v1619 = vsel %vm1521, %v1420, 0
      %v1622 = vsel %vm1521, %v1421, 0
      %v1625 = vsel %vm1521, %v1422, 0
      %v1628 = vsel %vm1521, %v1423, 0
      %v1631 = vsel %vm1521, %v1424, 0
      %v1634 = vsel %vm1521, %v1425, 0
      %v1637 = vsel %vm1521, %v1426, 0
      %v1640 = vsel %vm1521, %v1427, 0
      %v1643 = vsel %vm1521, %v1428, 0
      %v1646 = vsel %vm1521, %v1429, 0
      %v1649 = vsel %vm1521, %v1430, 0
      %v1652 = vsel %vm1521, %v1431, 0
      %v1655 = vsel %vm1521, %v1432, 0
      %v1658 = vsel %vm1521, %v1433, 0
      %v1661 = vsel %vm1521, %v1434, 0
      %v1664 = vsel %vm1521, %v1435, 0
      %v1667 = vsel %vm1521, %v1436, 0
      %v1670 = vsel %vm1521, %v1437, 0
      %v1673 = vsel %vm1521, %v1438, 0
      %v1676 = vsel %vm1521, %v1439, 0
      %v1679 = vsel %vm1521, %v1440, 0
      %v1682 = vsel %vm1521, %v1441, 0
      %v1685 = vsel %vm1521, %v1442, 0
      %v1688 = vsel %vm1521, %v1443, 0
      %v1691 = vsel %vm1521, %v1444, 0
      %v1694 = vsel %vm1521, %v1445, 0
      %v1697 = vsel %vm1521, %v1446, 0
      %v1700 = vsel %vm1521, %v1447, 0
      %v1703 = vsel %vm1521, %v1448, 0
      %v1706 = vsel %vm1521, %v1449, 0
      %v1709 = vsel %vm1521, %v1450, 0
      %v1712 = vsel %vm1521, %v1451, 0
      %v1715 = vsel %vm1521, %v1452, 0
      %v1718 = vsel %vm1521, %v1453, 0
      %v1721 = vsel %vm1521, %v1454, 0
      %v1724 = vsel %vm1521, %v1455, 0
      %v1727 = vsel %vm1521, %v1456, 0
      %v1730 = vsel %vm1521, %v1457, 0
      %v1733 = vsel %vm1521, %v1458, 0
      %v1736 = vsel %vm1521, %v1459, 0
      %v1739 = vsel %vm1521, %v1460, 0
      %v1742 = vsel %vm1521, %v1461, 0
      %v1745 = vsel %vm1521, %v1462, 0
      %v1748 = vsel %vm1521, %v1463, 0
      %v1751 = vsel %vm1521, %v1464, 0
      %v1754 = vsel %vm1521, %v1465, 0
      %v1757 = vsel %vm1521, %v1466, 0
      %v1760 = vsel %vm1521, %v1467, 0
      %v1763 = vsel %vm1521, %v1468, 0
      %v1766 = vsel %vm1521, %v1469, 0
      %v1769 = vsel %vm1521, %v1470, 0
      %v1772 = vsel %vm1521, %v1471, 0
      %v1775 = vsel %vm1521, %v1472, 0
      %v1778 = vsel %vm1521, %v1473, 0
      %v1781 = vsel %vm1521, %v1474, 0
      %v1784 = vsel %vm1521, %v1475, 0
      %v1787 = vsel %vm1521, %v1476, 0
      %v1790 = vsel %vm1521, %v1477, 0
      %v1793 = vsel %vm1521, %v1478, 0
      %v1796 = vsel %vm1521, %v1479, 0
      %v1799 = vsel %vm1521, %v1480, 0
      %v1802 = vsel %vm1521, %v1481, 0
      %v1805 = vsel %vm1521, %v1482, 0
      %v1808 = vsel %vm1521, %v1483, 0
      %v1811 = vsel %vm1521, %v1484, 0
      %v1814 = vsel %vm1521, %v1485, 0
      %v1817 = vsel %vm1521, %v1486, 0
      %v1820 = vsel %vm1521, %v1487, 0
      %v1823 = vsel %vm1521, %v1488, 0
      %v1826 = vsel %vm1521, %v1489, 0
      %v1829 = vsel %vm1521, %v1490, 0
      %v1832 = vsel %vm1521, %v1491, 0
      %v1835 = vsel %vm1521, %v1492, 0
      %v1838 = vsel %vm1521, %v1493, 0
      %v1841 = vsel %vm1521, %v1494, 0
      %v1844 = vsel %vm1521, %v1495, 0
      %v1847 = vsel %vm1521, %v1496, 0
      %v1850 = vsel %vm1521, %v1497, 0
      %v1853 = vsel %vm1521, %v1498, 0
      %v1856 = vsel %vm1521, %v1499, 0
      %v1859 = vsel %vm1521, %v1500, 0
      %v1862 = vsel %vm1521, %v1501, 0
      %v1865 = vsel %vm1521, %v1502, 0
      %v1868 = vsel %vm1521, %v1503, 0
      %v1871 = vsel %vm1521, %v1504, 0
      %v1874 = vsel %vm1521, %v1505, 0
      %v1877 = vsel %vm1521, %v1506, 0
      %v1880 = vsel %vm1521, %v1507, 0
      %v1883 = vsel %vm1521, %v1508, 0
      %v1886 = vsel %vm1521, %v1509, 0
      %v1889 = vsel %vm1521, %v1510, 0
      %v1892 = vsel %vm1521, %v1511, 0
      %v1895 = vsel %vm1521, %v1512, 0
      %v1898 = vsel %vm1521, %v1513, 0
      %v1901 = vsel %vm1521, %v1514, 0
      %v1904 = vsel %vm1521, %v1515, 0
      %vm1906 = vcmask 1043456
      %vm1907 = vcmask 1044480
      %v1908 = vsel %vm1906, 4294967295, 65535
      %v1909 = vsel %vm1907, %v1908, 0
      %v1911 = vand.u32 %v1520, %v1909
      %1913 = vmatpush.bf16.msra.mxu0 0
      %1914 = vmatpush.bf16.msra.mxu0 0
      %1915 = vmatpush.bf16.msra.mxu0 0
      %1916 = vmatpush.bf16.msra.mxu0 0
      %1917 = vmatpush.bf16.msra.mxu0 0
      %1918 = vmatpush.bf16.msra.mxu0 0
      %1919 = vmatpush.bf16.msra.mxu0 0
      %1920 = vmatpush.bf16.msra.mxu0 %v1911
      %1921 = vmatmul.bf16.gmra.mxu0 %v1523
      %v1922 = vpop.f32.mrf.mxu0
      %v1923 = vadd.f32 0.0, %v1922
      %v1924 = vpop.f32.mrf.mxu0
      %v1925 = vadd.f32 0.0, %v1924
      %1926 = vmatmul.bf16.gmra.mxu0 %v1526
      %v1927 = vpop.f32.mrf.mxu0
      %v1928 = vadd.f32 0.0, %v1927
      %v1929 = vpop.f32.mrf.mxu0
      %v1930 = vadd.f32 0.0, %v1929
      %1931 = vmatmul.bf16.gmra.mxu0 %v1529
      %v1932 = vpop.f32.mrf.mxu0
      %v1933 = vadd.f32 0.0, %v1932
      %v1934 = vpop.f32.mrf.mxu0
      %v1935 = vadd.f32 0.0, %v1934
      %1936 = vmatmul.bf16.gmra.mxu0 %v1532
      %v1937 = vpop.f32.mrf.mxu0
      %v1938 = vadd.f32 0.0, %v1937
      %v1939 = vpop.f32.mrf.mxu0
      %v1940 = vadd.f32 0.0, %v1939
      %1941 = vmatmul.bf16.gmra.mxu0 %v1535
      %v1942 = vpop.f32.mrf.mxu0
      %v1943 = vadd.f32 0.0, %v1942
      %v1944 = vpop.f32.mrf.mxu0
      %v1945 = vadd.f32 0.0, %v1944
      %1946 = vmatmul.bf16.gmra.mxu0 %v1538
      %v1947 = vpop.f32.mrf.mxu0
      %v1948 = vadd.f32 0.0, %v1947
      %v1949 = vpop.f32.mrf.mxu0
      %v1950 = vadd.f32 0.0, %v1949
      %1951 = vmatmul.bf16.gmra.mxu0 %v1541
      %v1952 = vpop.f32.mrf.mxu0
      %v1953 = vadd.f32 0.0, %v1952
      %v1954 = vpop.f32.mrf.mxu0
      %v1955 = vadd.f32 0.0, %v1954
      %1956 = vmatmul.bf16.gmra.mxu0 %v1544
      %v1957 = vpop.f32.mrf.mxu0
      %v1958 = vadd.f32 0.0, %v1957
      %v1959 = vpop.f32.mrf.mxu0
      %v1960 = vadd.f32 0.0, %v1959
      %1961 = vmatmul.bf16.gmra.mxu0 %v1547
      %v1962 = vpop.f32.mrf.mxu0
      %v1963 = vadd.f32 0.0, %v1962
      %v1964 = vpop.f32.mrf.mxu0
      %v1965 = vadd.f32 0.0, %v1964
      %1966 = vmatmul.bf16.gmra.mxu0 %v1550
      %v1967 = vpop.f32.mrf.mxu0
      %v1968 = vadd.f32 0.0, %v1967
      %v1969 = vpop.f32.mrf.mxu0
      %v1970 = vadd.f32 0.0, %v1969
      %1971 = vmatmul.bf16.gmra.mxu0 %v1553
      %v1972 = vpop.f32.mrf.mxu0
      %v1973 = vadd.f32 0.0, %v1972
      %v1974 = vpop.f32.mrf.mxu0
      %v1975 = vadd.f32 0.0, %v1974
      %1976 = vmatmul.bf16.gmra.mxu0 %v1556
      %v1977 = vpop.f32.mrf.mxu0
      %v1978 = vadd.f32 0.0, %v1977
      %v1979 = vpop.f32.mrf.mxu0
      %v1980 = vadd.f32 0.0, %v1979
      %1981 = vmatmul.bf16.gmra.mxu0 %v1559
      %v1982 = vpop.f32.mrf.mxu0
      %v1983 = vadd.f32 0.0, %v1982
      %v1984 = vpop.f32.mrf.mxu0
      %v1985 = vadd.f32 0.0, %v1984
      %1986 = vmatmul.bf16.gmra.mxu0 %v1562
      %v1987 = vpop.f32.mrf.mxu0
      %v1988 = vadd.f32 0.0, %v1987
      %v1989 = vpop.f32.mrf.mxu0
      %v1990 = vadd.f32 0.0, %v1989
      %1991 = vmatmul.bf16.gmra.mxu0 %v1565
      %v1992 = vpop.f32.mrf.mxu0
      %v1993 = vadd.f32 0.0, %v1992
      %v1994 = vpop.f32.mrf.mxu0
      %v1995 = vadd.f32 0.0, %v1994
      %1996 = vmatmul.bf16.gmra.mxu0 %v1568
      %v1997 = vpop.f32.mrf.mxu0
      %v1998 = vadd.f32 0.0, %v1997
      %v1999 = vpop.f32.mrf.mxu0
      %v2000 = vadd.f32 0.0, %v1999
      %2001 = vmatmul.bf16.gmra.mxu0 %v1571
      %v2002 = vpop.f32.mrf.mxu0
      %v2003 = vadd.f32 0.0, %v2002
      %v2004 = vpop.f32.mrf.mxu0
      %v2005 = vadd.f32 0.0, %v2004
      %2006 = vmatmul.bf16.gmra.mxu0 %v1574
      %v2007 = vpop.f32.mrf.mxu0
      %v2008 = vadd.f32 0.0, %v2007
      %v2009 = vpop.f32.mrf.mxu0
      %v2010 = vadd.f32 0.0, %v2009
      %2011 = vmatmul.bf16.gmra.mxu0 %v1577
      %v2012 = vpop.f32.mrf.mxu0
      %v2013 = vadd.f32 0.0, %v2012
      %v2014 = vpop.f32.mrf.mxu0
      %v2015 = vadd.f32 0.0, %v2014
      %2016 = vmatmul.bf16.gmra.mxu0 %v1580
      %v2017 = vpop.f32.mrf.mxu0
      %v2018 = vadd.f32 0.0, %v2017
      %v2019 = vpop.f32.mrf.mxu0
      %v2020 = vadd.f32 0.0, %v2019
      %2021 = vmatmul.bf16.gmra.mxu0 %v1583
      %v2022 = vpop.f32.mrf.mxu0
      %v2023 = vadd.f32 0.0, %v2022
      %v2024 = vpop.f32.mrf.mxu0
      %v2025 = vadd.f32 0.0, %v2024
      %2026 = vmatmul.bf16.gmra.mxu0 %v1586
      %v2027 = vpop.f32.mrf.mxu0
      %v2028 = vadd.f32 0.0, %v2027
      %v2029 = vpop.f32.mrf.mxu0
      %v2030 = vadd.f32 0.0, %v2029
      %2031 = vmatmul.bf16.gmra.mxu0 %v1589
      %v2032 = vpop.f32.mrf.mxu0
      %v2033 = vadd.f32 0.0, %v2032
      %v2034 = vpop.f32.mrf.mxu0
      %v2035 = vadd.f32 0.0, %v2034
      %2036 = vmatmul.bf16.gmra.mxu0 %v1592
      %v2037 = vpop.f32.mrf.mxu0
      %v2038 = vadd.f32 0.0, %v2037
      %v2039 = vpop.f32.mrf.mxu0
      %v2040 = vadd.f32 0.0, %v2039
      %2041 = vmatmul.bf16.gmra.mxu0 %v1595
      %v2042 = vpop.f32.mrf.mxu0
      %v2043 = vadd.f32 0.0, %v2042
      %v2044 = vpop.f32.mrf.mxu0
      %v2045 = vadd.f32 0.0, %v2044
      %2046 = vmatmul.bf16.gmra.mxu0 %v1598
      %v2047 = vpop.f32.mrf.mxu0
      %v2048 = vadd.f32 0.0, %v2047
      %v2049 = vpop.f32.mrf.mxu0
      %v2050 = vadd.f32 0.0, %v2049
      %2051 = vmatmul.bf16.gmra.mxu0 %v1601
      %v2052 = vpop.f32.mrf.mxu0
      %v2053 = vadd.f32 0.0, %v2052
      %v2054 = vpop.f32.mrf.mxu0
      %v2055 = vadd.f32 0.0, %v2054
      %2056 = vmatmul.bf16.gmra.mxu0 %v1604
      %v2057 = vpop.f32.mrf.mxu0
      %v2058 = vadd.f32 0.0, %v2057
      %v2059 = vpop.f32.mrf.mxu0
      %v2060 = vadd.f32 0.0, %v2059
      %2061 = vmatmul.bf16.gmra.mxu0 %v1607
      %v2062 = vpop.f32.mrf.mxu0
      %v2063 = vadd.f32 0.0, %v2062
      %v2064 = vpop.f32.mrf.mxu0
      %v2065 = vadd.f32 0.0, %v2064
      %2066 = vmatmul.bf16.gmra.mxu0 %v1610
      %v2067 = vpop.f32.mrf.mxu0
      %v2068 = vadd.f32 0.0, %v2067
      %v2069 = vpop.f32.mrf.mxu0
      %v2070 = vadd.f32 0.0, %v2069
      %2071 = vmatmul.bf16.gmra.mxu0 %v1613
      %v2072 = vpop.f32.mrf.mxu0
      %v2073 = vadd.f32 0.0, %v2072
      %v2074 = vpop.f32.mrf.mxu0
      %v2075 = vadd.f32 0.0, %v2074
      %2076 = vmatmul.bf16.gmra.mxu0 %v1616
      %v2077 = vpop.f32.mrf.mxu0
      %v2078 = vadd.f32 0.0, %v2077
      %v2079 = vpop.f32.mrf.mxu0
      %v2080 = vadd.f32 0.0, %v2079
      %2081 = vmatmul.bf16.gmra.mxu0 %v1619
      %v2082 = vpop.f32.mrf.mxu0
      %v2083 = vadd.f32 0.0, %v2082
      %v2084 = vpop.f32.mrf.mxu0
      %v2085 = vadd.f32 0.0, %v2084
      %2086 = vmatmul.bf16.gmra.mxu0 %v1622
      %v2087 = vpop.f32.mrf.mxu0
      %v2088 = vadd.f32 0.0, %v2087
      %v2089 = vpop.f32.mrf.mxu0
      %v2090 = vadd.f32 0.0, %v2089
      %2091 = vmatmul.bf16.gmra.mxu0 %v1625
      %v2092 = vpop.f32.mrf.mxu0
      %v2093 = vadd.f32 0.0, %v2092
      %v2094 = vpop.f32.mrf.mxu0
      %v2095 = vadd.f32 0.0, %v2094
      %2096 = vmatmul.bf16.gmra.mxu0 %v1628
      %v2097 = vpop.f32.mrf.mxu0
      %v2098 = vadd.f32 0.0, %v2097
      %v2099 = vpop.f32.mrf.mxu0
      %v2100 = vadd.f32 0.0, %v2099
      %2101 = vmatmul.bf16.gmra.mxu0 %v1631
      %v2102 = vpop.f32.mrf.mxu0
      %v2103 = vadd.f32 0.0, %v2102
      %v2104 = vpop.f32.mrf.mxu0
      %v2105 = vadd.f32 0.0, %v2104
      %2106 = vmatmul.bf16.gmra.mxu0 %v1634
      %v2107 = vpop.f32.mrf.mxu0
      %v2108 = vadd.f32 0.0, %v2107
      %v2109 = vpop.f32.mrf.mxu0
      %v2110 = vadd.f32 0.0, %v2109
      %2111 = vmatmul.bf16.gmra.mxu0 %v1637
      %v2112 = vpop.f32.mrf.mxu0
      %v2113 = vadd.f32 0.0, %v2112
      %v2114 = vpop.f32.mrf.mxu0
      %v2115 = vadd.f32 0.0, %v2114
      %2116 = vmatmul.bf16.gmra.mxu0 %v1640
      %v2117 = vpop.f32.mrf.mxu0
      %v2118 = vadd.f32 0.0, %v2117
      %v2119 = vpop.f32.mrf.mxu0
      %v2120 = vadd.f32 0.0, %v2119
      %2121 = vmatmul.bf16.gmra.mxu0 %v1643
      %v2122 = vpop.f32.mrf.mxu0
      %v2123 = vadd.f32 0.0, %v2122
      %v2124 = vpop.f32.mrf.mxu0
      %v2125 = vadd.f32 0.0, %v2124
      %2126 = vmatmul.bf16.gmra.mxu0 %v1646
      %v2127 = vpop.f32.mrf.mxu0
      %v2128 = vadd.f32 0.0, %v2127
      %v2129 = vpop.f32.mrf.mxu0
      %v2130 = vadd.f32 0.0, %v2129
      %2131 = vmatmul.bf16.gmra.mxu0 %v1649
      %v2132 = vpop.f32.mrf.mxu0
      %v2133 = vadd.f32 0.0, %v2132
      %v2134 = vpop.f32.mrf.mxu0
      %v2135 = vadd.f32 0.0, %v2134
      %2136 = vmatmul.bf16.gmra.mxu0 %v1652
      %v2137 = vpop.f32.mrf.mxu0
      %v2138 = vadd.f32 0.0, %v2137
      %v2139 = vpop.f32.mrf.mxu0
      %v2140 = vadd.f32 0.0, %v2139
      %2141 = vmatmul.bf16.gmra.mxu0 %v1655
      %v2142 = vpop.f32.mrf.mxu0
      %v2143 = vadd.f32 0.0, %v2142
      %v2144 = vpop.f32.mrf.mxu0
      %v2145 = vadd.f32 0.0, %v2144
      %2146 = vmatmul.bf16.gmra.mxu0 %v1658
      %v2147 = vpop.f32.mrf.mxu0
      %v2148 = vadd.f32 0.0, %v2147
      %v2149 = vpop.f32.mrf.mxu0
      %v2150 = vadd.f32 0.0, %v2149
      %2151 = vmatmul.bf16.gmra.mxu0 %v1661
      %v2152 = vpop.f32.mrf.mxu0
      %v2153 = vadd.f32 0.0, %v2152
      %v2154 = vpop.f32.mrf.mxu0
      %v2155 = vadd.f32 0.0, %v2154
      %2156 = vmatmul.bf16.gmra.mxu0 %v1664
      %v2157 = vpop.f32.mrf.mxu0
      %v2158 = vadd.f32 0.0, %v2157
      %v2159 = vpop.f32.mrf.mxu0
      %v2160 = vadd.f32 0.0, %v2159
      %2161 = vmatmul.bf16.gmra.mxu0 %v1667
      %v2162 = vpop.f32.mrf.mxu0
      %v2163 = vadd.f32 0.0, %v2162
      %v2164 = vpop.f32.mrf.mxu0
      %v2165 = vadd.f32 0.0, %v2164
      %2166 = vmatmul.bf16.gmra.mxu0 %v1670
      %v2167 = vpop.f32.mrf.mxu0
      %v2168 = vadd.f32 0.0, %v2167
      %v2169 = vpop.f32.mrf.mxu0
      %v2170 = vadd.f32 0.0, %v2169
      %2171 = vmatmul.bf16.gmra.mxu0 %v1673
      %v2172 = vpop.f32.mrf.mxu0
      %v2173 = vadd.f32 0.0, %v2172
      %v2174 = vpop.f32.mrf.mxu0
      %v2175 = vadd.f32 0.0, %v2174
      %2176 = vmatmul.bf16.gmra.mxu0 %v1676
      %v2177 = vpop.f32.mrf.mxu0
      %v2178 = vadd.f32 0.0, %v2177
      %v2179 = vpop.f32.mrf.mxu0
      %v2180 = vadd.f32 0.0, %v2179
      %2181 = vmatmul.bf16.gmra.mxu0 %v1679
      %v2182 = vpop.f32.mrf.mxu0
      %v2183 = vadd.f32 0.0, %v2182
      %v2184 = vpop.f32.mrf.mxu0
      %v2185 = vadd.f32 0.0, %v2184
      %2186 = vmatmul.bf16.gmra.mxu0 %v1682
      %v2187 = vpop.f32.mrf.mxu0
      %v2188 = vadd.f32 0.0, %v2187
      %v2189 = vpop.f32.mrf.mxu0
      %v2190 = vadd.f32 0.0, %v2189
      %2191 = vmatmul.bf16.gmra.mxu0 %v1685
      %v2192 = vpop.f32.mrf.mxu0
      %v2193 = vadd.f32 0.0, %v2192
      %v2194 = vpop.f32.mrf.mxu0
      %v2195 = vadd.f32 0.0, %v2194
      %2196 = vmatmul.bf16.gmra.mxu0 %v1688
      %v2197 = vpop.f32.mrf.mxu0
      %v2198 = vadd.f32 0.0, %v2197
      %v2199 = vpop.f32.mrf.mxu0
      %v2200 = vadd.f32 0.0, %v2199
      %2201 = vmatmul.bf16.gmra.mxu0 %v1691
      %v2202 = vpop.f32.mrf.mxu0
      %v2203 = vadd.f32 0.0, %v2202
      %v2204 = vpop.f32.mrf.mxu0
      %v2205 = vadd.f32 0.0, %v2204
      %2206 = vmatmul.bf16.gmra.mxu0 %v1694
      %v2207 = vpop.f32.mrf.mxu0
      %v2208 = vadd.f32 0.0, %v2207
      %v2209 = vpop.f32.mrf.mxu0
      %v2210 = vadd.f32 0.0, %v2209
      %2211 = vmatmul.bf16.gmra.mxu0 %v1697
      %v2212 = vpop.f32.mrf.mxu0
      %v2213 = vadd.f32 0.0, %v2212
      %v2214 = vpop.f32.mrf.mxu0
      %v2215 = vadd.f32 0.0, %v2214
      %2216 = vmatmul.bf16.gmra.mxu0 %v1700
      %v2217 = vpop.f32.mrf.mxu0
      %v2218 = vadd.f32 0.0, %v2217
      %v2219 = vpop.f32.mrf.mxu0
      %v2220 = vadd.f32 0.0, %v2219
      %2221 = vmatmul.bf16.gmra.mxu0 %v1703
      %v2222 = vpop.f32.mrf.mxu0
      %v2223 = vadd.f32 0.0, %v2222
      %v2224 = vpop.f32.mrf.mxu0
      %v2225 = vadd.f32 0.0, %v2224
      %2226 = vmatmul.bf16.gmra.mxu0 %v1706
      %v2227 = vpop.f32.mrf.mxu0
      %v2228 = vadd.f32 0.0, %v2227
      %v2229 = vpop.f32.mrf.mxu0
      %v2230 = vadd.f32 0.0, %v2229
      %2231 = vmatmul.bf16.gmra.mxu0 %v1709
      %v2232 = vpop.f32.mrf.mxu0
      %v2233 = vadd.f32 0.0, %v2232
      %v2234 = vpop.f32.mrf.mxu0
      %v2235 = vadd.f32 0.0, %v2234
      %2236 = vmatmul.bf16.gmra.mxu0 %v1712
      %v2237 = vpop.f32.mrf.mxu0
      %v2238 = vadd.f32 0.0, %v2237
      %v2239 = vpop.f32.mrf.mxu0
      %v2240 = vadd.f32 0.0, %v2239
      %2241 = vmatmul.bf16.gmra.mxu0 %v1715
      %v2242 = vpop.f32.mrf.mxu0
      %v2243 = vadd.f32 0.0, %v2242
      %v2244 = vpop.f32.mrf.mxu0
      %v2245 = vadd.f32 0.0, %v2244
      %2246 = vmatmul.bf16.gmra.mxu0 %v1718
      %v2247 = vpop.f32.mrf.mxu0
      %v2248 = vadd.f32 0.0, %v2247
      %v2249 = vpop.f32.mrf.mxu0
      %v2250 = vadd.f32 0.0, %v2249
      %2251 = vmatmul.bf16.gmra.mxu0 %v1721
      %v2252 = vpop.f32.mrf.mxu0
      %v2253 = vadd.f32 0.0, %v2252
      %v2254 = vpop.f32.mrf.mxu0
      %v2255 = vadd.f32 0.0, %v2254
      %2256 = vmatmul.bf16.gmra.mxu0 %v1724
      %v2257 = vpop.f32.mrf.mxu0
      %v2258 = vadd.f32 0.0, %v2257
      %v2259 = vpop.f32.mrf.mxu0
      %v2260 = vadd.f32 0.0, %v2259
      %2261 = vmatmul.bf16.gmra.mxu0 %v1727
      %v2262 = vpop.f32.mrf.mxu0
      %v2263 = vadd.f32 0.0, %v2262
      %v2264 = vpop.f32.mrf.mxu0
      %v2265 = vadd.f32 0.0, %v2264
      %2266 = vmatmul.bf16.gmra.mxu0 %v1730
      %v2267 = vpop.f32.mrf.mxu0
      %v2268 = vadd.f32 0.0, %v2267
      %v2269 = vpop.f32.mrf.mxu0
      %v2270 = vadd.f32 0.0, %v2269
      %2271 = vmatmul.bf16.gmra.mxu0 %v1733
      %v2272 = vpop.f32.mrf.mxu0
      %v2273 = vadd.f32 0.0, %v2272
      %v2274 = vpop.f32.mrf.mxu0
      %v2275 = vadd.f32 0.0, %v2274
      %2276 = vmatmul.bf16.gmra.mxu0 %v1736
      %v2277 = vpop.f32.mrf.mxu0
      %v2278 = vadd.f32 0.0, %v2277
      %v2279 = vpop.f32.mrf.mxu0
      %v2280 = vadd.f32 0.0, %v2279
      %2281 = vmatmul.bf16.gmra.mxu0 %v1739
      %v2282 = vpop.f32.mrf.mxu0
      %v2283 = vadd.f32 0.0, %v2282
      %v2284 = vpop.f32.mrf.mxu0
      %v2285 = vadd.f32 0.0, %v2284
      %2286 = vmatmul.bf16.gmra.mxu0 %v1742
      %v2287 = vpop.f32.mrf.mxu0
      %v2288 = vadd.f32 0.0, %v2287
      %v2289 = vpop.f32.mrf.mxu0
      %v2290 = vadd.f32 0.0, %v2289
      %2291 = vmatmul.bf16.gmra.mxu0 %v1745
      %v2292 = vpop.f32.mrf.mxu0
      %v2293 = vadd.f32 0.0, %v2292
      %v2294 = vpop.f32.mrf.mxu0
      %v2295 = vadd.f32 0.0, %v2294
      %2296 = vmatmul.bf16.gmra.mxu0 %v1748
      %v2297 = vpop.f32.mrf.mxu0
      %v2298 = vadd.f32 0.0, %v2297
      %v2299 = vpop.f32.mrf.mxu0
      %v2300 = vadd.f32 0.0, %v2299
      %2301 = vmatmul.bf16.gmra.mxu0 %v1751
      %v2302 = vpop.f32.mrf.mxu0
      %v2303 = vadd.f32 0.0, %v2302
      %v2304 = vpop.f32.mrf.mxu0
      %v2305 = vadd.f32 0.0, %v2304
      %2306 = vmatmul.bf16.gmra.mxu0 %v1754
      %v2307 = vpop.f32.mrf.mxu0
      %v2308 = vadd.f32 0.0, %v2307
      %v2309 = vpop.f32.mrf.mxu0
      %v2310 = vadd.f32 0.0, %v2309
      %2311 = vmatmul.bf16.gmra.mxu0 %v1757
      %v2312 = vpop.f32.mrf.mxu0
      %v2313 = vadd.f32 0.0, %v2312
      %v2314 = vpop.f32.mrf.mxu0
      %v2315 = vadd.f32 0.0, %v2314
      %2316 = vmatmul.bf16.gmra.mxu0 %v1760
      %v2317 = vpop.f32.mrf.mxu0
      %v2318 = vadd.f32 0.0, %v2317
      %v2319 = vpop.f32.mrf.mxu0
      %v2320 = vadd.f32 0.0, %v2319
      %2321 = vmatmul.bf16.gmra.mxu0 %v1763
      %v2322 = vpop.f32.mrf.mxu0
      %v2323 = vadd.f32 0.0, %v2322
      %v2324 = vpop.f32.mrf.mxu0
      %v2325 = vadd.f32 0.0, %v2324
      %2326 = vmatmul.bf16.gmra.mxu0 %v1766
      %v2327 = vpop.f32.mrf.mxu0
      %v2328 = vadd.f32 0.0, %v2327
      %v2329 = vpop.f32.mrf.mxu0
      %v2330 = vadd.f32 0.0, %v2329
      %2331 = vmatmul.bf16.gmra.mxu0 %v1769
      %v2332 = vpop.f32.mrf.mxu0
      %v2333 = vadd.f32 0.0, %v2332
      %v2334 = vpop.f32.mrf.mxu0
      %v2335 = vadd.f32 0.0, %v2334
      %2336 = vmatmul.bf16.gmra.mxu0 %v1772
      %v2337 = vpop.f32.mrf.mxu0
      %v2338 = vadd.f32 0.0, %v2337
      %v2339 = vpop.f32.mrf.mxu0
      %v2340 = vadd.f32 0.0, %v2339
      %2341 = vmatmul.bf16.gmra.mxu0 %v1775
      %v2342 = vpop.f32.mrf.mxu0
      %v2343 = vadd.f32 0.0, %v2342
      %v2344 = vpop.f32.mrf.mxu0
      %v2345 = vadd.f32 0.0, %v2344
      %2346 = vmatmul.bf16.gmra.mxu0 %v1778
      %v2347 = vpop.f32.mrf.mxu0
      %v2348 = vadd.f32 0.0, %v2347
      %v2349 = vpop.f32.mrf.mxu0
      %v2350 = vadd.f32 0.0, %v2349
      %2351 = vmatmul.bf16.gmra.mxu0 %v1781
      %v2352 = vpop.f32.mrf.mxu0
      %v2353 = vadd.f32 0.0, %v2352
      %v2354 = vpop.f32.mrf.mxu0
      %v2355 = vadd.f32 0.0, %v2354
      %2356 = vmatmul.bf16.gmra.mxu0 %v1784
      %v2357 = vpop.f32.mrf.mxu0
      %v2358 = vadd.f32 0.0, %v2357
      %v2359 = vpop.f32.mrf.mxu0
      %v2360 = vadd.f32 0.0, %v2359
      %2361 = vmatmul.bf16.gmra.mxu0 %v1787
      %v2362 = vpop.f32.mrf.mxu0
      %v2363 = vadd.f32 0.0, %v2362
      %v2364 = vpop.f32.mrf.mxu0
      %v2365 = vadd.f32 0.0, %v2364
      %2366 = vmatmul.bf16.gmra.mxu0 %v1790
      %v2367 = vpop.f32.mrf.mxu0
      %v2368 = vadd.f32 0.0, %v2367
      %v2369 = vpop.f32.mrf.mxu0
      %v2370 = vadd.f32 0.0, %v2369
      %2371 = vmatmul.bf16.gmra.mxu0 %v1793
      %v2372 = vpop.f32.mrf.mxu0
      %v2373 = vadd.f32 0.0, %v2372
      %v2374 = vpop.f32.mrf.mxu0
      %v2375 = vadd.f32 0.0, %v2374
      %2376 = vmatmul.bf16.gmra.mxu0 %v1796
      %v2377 = vpop.f32.mrf.mxu0
      %v2378 = vadd.f32 0.0, %v2377
      %v2379 = vpop.f32.mrf.mxu0
      %v2380 = vadd.f32 0.0, %v2379
      %2381 = vmatmul.bf16.gmra.mxu0 %v1799
      %v2382 = vpop.f32.mrf.mxu0
      %v2383 = vadd.f32 0.0, %v2382
      %v2384 = vpop.f32.mrf.mxu0
      %v2385 = vadd.f32 0.0, %v2384
      %2386 = vmatmul.bf16.gmra.mxu0 %v1802
      %v2387 = vpop.f32.mrf.mxu0
      %v2388 = vadd.f32 0.0, %v2387
      %v2389 = vpop.f32.mrf.mxu0
      %v2390 = vadd.f32 0.0, %v2389
      %2391 = vmatmul.bf16.gmra.mxu0 %v1805
      %v2392 = vpop.f32.mrf.mxu0
      %v2393 = vadd.f32 0.0, %v2392
      %v2394 = vpop.f32.mrf.mxu0
      %v2395 = vadd.f32 0.0, %v2394
      %2396 = vmatmul.bf16.gmra.mxu0 %v1808
      %v2397 = vpop.f32.mrf.mxu0
      %v2398 = vadd.f32 0.0, %v2397
      %v2399 = vpop.f32.mrf.mxu0
      %v2400 = vadd.f32 0.0, %v2399
      %2401 = vmatmul.bf16.gmra.mxu0 %v1811
      %v2402 = vpop.f32.mrf.mxu0
      %v2403 = vadd.f32 0.0, %v2402
      %v2404 = vpop.f32.mrf.mxu0
      %v2405 = vadd.f32 0.0, %v2404
      %2406 = vmatmul.bf16.gmra.mxu0 %v1814
      %v2407 = vpop.f32.mrf.mxu0
      %v2408 = vadd.f32 0.0, %v2407
      %v2409 = vpop.f32.mrf.mxu0
      %v2410 = vadd.f32 0.0, %v2409
      %2411 = vmatmul.bf16.gmra.mxu0 %v1817
      %v2412 = vpop.f32.mrf.mxu0
      %v2413 = vadd.f32 0.0, %v2412
      %v2414 = vpop.f32.mrf.mxu0
      %v2415 = vadd.f32 0.0, %v2414
      %2416 = vmatmul.bf16.gmra.mxu0 %v1820
      %v2417 = vpop.f32.mrf.mxu0
      %v2418 = vadd.f32 0.0, %v2417
      %v2419 = vpop.f32.mrf.mxu0
      %v2420 = vadd.f32 0.0, %v2419
      %2421 = vmatmul.bf16.gmra.mxu0 %v1823
      %v2422 = vpop.f32.mrf.mxu0
      %v2423 = vadd.f32 0.0, %v2422
      %v2424 = vpop.f32.mrf.mxu0
      %v2425 = vadd.f32 0.0, %v2424
      %2426 = vmatmul.bf16.gmra.mxu0 %v1826
      %v2427 = vpop.f32.mrf.mxu0
      %v2428 = vadd.f32 0.0, %v2427
      %v2429 = vpop.f32.mrf.mxu0
      %v2430 = vadd.f32 0.0, %v2429
      %2431 = vmatmul.bf16.gmra.mxu0 %v1829
      %v2432 = vpop.f32.mrf.mxu0
      %v2433 = vadd.f32 0.0, %v2432
      %v2434 = vpop.f32.mrf.mxu0
      %v2435 = vadd.f32 0.0, %v2434
      %2436 = vmatmul.bf16.gmra.mxu0 %v1832
      %v2437 = vpop.f32.mrf.mxu0
      %v2438 = vadd.f32 0.0, %v2437
      %v2439 = vpop.f32.mrf.mxu0
      %v2440 = vadd.f32 0.0, %v2439
      %2441 = vmatmul.bf16.gmra.mxu0 %v1835
      %v2442 = vpop.f32.mrf.mxu0
      %v2443 = vadd.f32 0.0, %v2442
      %v2444 = vpop.f32.mrf.mxu0
      %v2445 = vadd.f32 0.0, %v2444
      %2446 = vmatmul.bf16.gmra.mxu0 %v1838
      %v2447 = vpop.f32.mrf.mxu0
      %v2448 = vadd.f32 0.0, %v2447
      %v2449 = vpop.f32.mrf.mxu0
      %v2450 = vadd.f32 0.0, %v2449
      %2451 = vmatmul.bf16.gmra.mxu0 %v1841
      %v2452 = vpop.f32.mrf.mxu0
      %v2453 = vadd.f32 0.0, %v2452
      %v2454 = vpop.f32.mrf.mxu0
      %v2455 = vadd.f32 0.0, %v2454
      %2456 = vmatmul.bf16.gmra.mxu0 %v1844
      %v2457 = vpop.f32.mrf.mxu0
      %v2458 = vadd.f32 0.0, %v2457
      %v2459 = vpop.f32.mrf.mxu0
      %v2460 = vadd.f32 0.0, %v2459
      %2461 = vmatmul.bf16.gmra.mxu0 %v1847
      %v2462 = vpop.f32.mrf.mxu0
      %v2463 = vadd.f32 0.0, %v2462
      %v2464 = vpop.f32.mrf.mxu0
      %v2465 = vadd.f32 0.0, %v2464
      %2466 = vmatmul.bf16.gmra.mxu0 %v1850
      %v2467 = vpop.f32.mrf.mxu0
      %v2468 = vadd.f32 0.0, %v2467
      %v2469 = vpop.f32.mrf.mxu0
      %v2470 = vadd.f32 0.0, %v2469
      %2471 = vmatmul.bf16.gmra.mxu0 %v1853
      %v2472 = vpop.f32.mrf.mxu0
      %v2473 = vadd.f32 0.0, %v2472
      %v2474 = vpop.f32.mrf.mxu0
      %v2475 = vadd.f32 0.0, %v2474
      %2476 = vmatmul.bf16.gmra.mxu0 %v1856
      %v2477 = vpop.f32.mrf.mxu0
      %v2478 = vadd.f32 0.0, %v2477
      %v2479 = vpop.f32.mrf.mxu0
      %v2480 = vadd.f32 0.0, %v2479
      %2481 = vmatmul.bf16.gmra.mxu0 %v1859
      %v2482 = vpop.f32.mrf.mxu0
      %v2483 = vadd.f32 0.0, %v2482
      %v2484 = vpop.f32.mrf.mxu0
      %v2485 = vadd.f32 0.0, %v2484
      %2486 = vmatmul.bf16.gmra.mxu0 %v1862
      %v2487 = vpop.f32.mrf.mxu0
      %v2488 = vadd.f32 0.0, %v2487
      %v2489 = vpop.f32.mrf.mxu0
      %v2490 = vadd.f32 0.0, %v2489
      %2491 = vmatmul.bf16.gmra.mxu0 %v1865
      %v2492 = vpop.f32.mrf.mxu0
      %v2493 = vadd.f32 0.0, %v2492
      %v2494 = vpop.f32.mrf.mxu0
      %v2495 = vadd.f32 0.0, %v2494
      %2496 = vmatmul.bf16.gmra.mxu0 %v1868
      %v2497 = vpop.f32.mrf.mxu0
      %v2498 = vadd.f32 0.0, %v2497
      %v2499 = vpop.f32.mrf.mxu0
      %v2500 = vadd.f32 0.0, %v2499
      %2501 = vmatmul.bf16.gmra.mxu0 %v1871
      %v2502 = vpop.f32.mrf.mxu0
      %v2503 = vadd.f32 0.0, %v2502
      %v2504 = vpop.f32.mrf.mxu0
      %v2505 = vadd.f32 0.0, %v2504
      %2506 = vmatmul.bf16.gmra.mxu0 %v1874
      %v2507 = vpop.f32.mrf.mxu0
      %v2508 = vadd.f32 0.0, %v2507
      %v2509 = vpop.f32.mrf.mxu0
      %v2510 = vadd.f32 0.0, %v2509
      %2511 = vmatmul.bf16.gmra.mxu0 %v1877
      %v2512 = vpop.f32.mrf.mxu0
      %v2513 = vadd.f32 0.0, %v2512
      %v2514 = vpop.f32.mrf.mxu0
      %v2515 = vadd.f32 0.0, %v2514
      %2516 = vmatmul.bf16.gmra.mxu0 %v1880
      %v2517 = vpop.f32.mrf.mxu0
      %v2518 = vadd.f32 0.0, %v2517
      %v2519 = vpop.f32.mrf.mxu0
      %v2520 = vadd.f32 0.0, %v2519
      %2521 = vmatmul.bf16.gmra.mxu0 %v1883
      %v2522 = vpop.f32.mrf.mxu0
      %v2523 = vadd.f32 0.0, %v2522
      %v2524 = vpop.f32.mrf.mxu0
      %v2525 = vadd.f32 0.0, %v2524
      %2526 = vmatmul.bf16.gmra.mxu0 %v1886
      %v2527 = vpop.f32.mrf.mxu0
      %v2528 = vadd.f32 0.0, %v2527
      %v2529 = vpop.f32.mrf.mxu0
      %v2530 = vadd.f32 0.0, %v2529
      %2531 = vmatmul.bf16.gmra.mxu0 %v1889
      %v2532 = vpop.f32.mrf.mxu0
      %v2533 = vadd.f32 0.0, %v2532
      %v2534 = vpop.f32.mrf.mxu0
      %v2535 = vadd.f32 0.0, %v2534
      %2536 = vmatmul.bf16.gmra.mxu0 %v1892
      %v2537 = vpop.f32.mrf.mxu0
      %v2538 = vadd.f32 0.0, %v2537
      %v2539 = vpop.f32.mrf.mxu0
      %v2540 = vadd.f32 0.0, %v2539
      %2541 = vmatmul.bf16.gmra.mxu0 %v1895
      %v2542 = vpop.f32.mrf.mxu0
      %v2543 = vadd.f32 0.0, %v2542
      %v2544 = vpop.f32.mrf.mxu0
      %v2545 = vadd.f32 0.0, %v2544
      %2546 = vmatmul.bf16.gmra.mxu0 %v1898
      %v2547 = vpop.f32.mrf.mxu0
      %v2548 = vadd.f32 0.0, %v2547
      %v2549 = vpop.f32.mrf.mxu0
      %v2550 = vadd.f32 0.0, %v2549
      %2551 = vmatmul.bf16.gmra.mxu0 %v1901
      %v2552 = vpop.f32.mrf.mxu0
      %v2553 = vadd.f32 0.0, %v2552
      %v2554 = vpop.f32.mrf.mxu0
      %v2555 = vadd.f32 0.0, %v2554
      %2556 = vmatmul.bf16.gmra.mxu0 %v1904
      %v2557 = vpop.f32.mrf.mxu0
      %v2558 = vadd.f32 0.0, %v2557
      %v2559 = vpop.f32.mrf.mxu0
      %v2560 = vadd.f32 0.0, %v2559
      %2561 = vdwg.mxu0
      %v2562 = vld [vmem:[%s2] sm:$0x1]
      %v2564 = vperm.slane %v2562, 0
      %v2566 = vmul.f32 %v1923, %v2564
      %v2567 = vmul.f32 %v1925, %v2564
      %v2568 = vmul.f32 %v1928, %v2564
      %v2569 = vmul.f32 %v1930, %v2564
      %v2570 = vmul.f32 %v1933, %v2564
      %v2571 = vmul.f32 %v1935, %v2564
      %v2572 = vmul.f32 %v1938, %v2564
      %v2573 = vmul.f32 %v1940, %v2564
      %v2574 = vmul.f32 %v1943, %v2564
      %v2575 = vmul.f32 %v1945, %v2564
      %v2576 = vmul.f32 %v1948, %v2564
      %v2577 = vmul.f32 %v1950, %v2564
      %v2578 = vmul.f32 %v1953, %v2564
      %v2579 = vmul.f32 %v1955, %v2564
      %v2580 = vmul.f32 %v1958, %v2564
      %v2581 = vmul.f32 %v1960, %v2564
      %v2582 = vmul.f32 %v1963, %v2564
      %v2583 = vmul.f32 %v1965, %v2564
      %v2584 = vmul.f32 %v1968, %v2564
      %v2585 = vmul.f32 %v1970, %v2564
      %v2586 = vmul.f32 %v1973, %v2564
      %v2587 = vmul.f32 %v1975, %v2564
      %v2588 = vmul.f32 %v1978, %v2564
      %v2589 = vmul.f32 %v1980, %v2564
      %v2590 = vmul.f32 %v1983, %v2564
      %v2591 = vmul.f32 %v1985, %v2564
      %v2592 = vmul.f32 %v1988, %v2564
      %v2593 = vmul.f32 %v1990, %v2564
      %v2594 = vmul.f32 %v1993, %v2564
      %v2595 = vmul.f32 %v1995, %v2564
      %v2596 = vmul.f32 %v1998, %v2564
      %v2597 = vmul.f32 %v2000, %v2564
      %v2598 = vmul.f32 %v2003, %v2564
      %v2599 = vmul.f32 %v2005, %v2564
      %v2600 = vmul.f32 %v2008, %v2564
      %v2601 = vmul.f32 %v2010, %v2564
      %v2602 = vmul.f32 %v2013, %v2564
      %v2603 = vmul.f32 %v2015, %v2564
      %v2604 = vmul.f32 %v2018, %v2564
      %v2605 = vmul.f32 %v2020, %v2564
      %v2606 = vmul.f32 %v2023, %v2564
      %v2607 = vmul.f32 %v2025, %v2564
      %v2608 = vmul.f32 %v2028, %v2564
      %v2609 = vmul.f32 %v2030, %v2564
      %v2610 = vmul.f32 %v2033, %v2564
      %v2611 = vmul.f32 %v2035, %v2564
      %v2612 = vmul.f32 %v2038, %v2564
      %v2613 = vmul.f32 %v2040, %v2564
      %v2614 = vmul.f32 %v2043, %v2564
      %v2615 = vmul.f32 %v2045, %v2564
      %v2616 = vmul.f32 %v2048, %v2564
      %v2617 = vmul.f32 %v2050, %v2564
      %v2618 = vmul.f32 %v2053, %v2564
      %v2619 = vmul.f32 %v2055, %v2564
      %v2620 = vmul.f32 %v2058, %v2564
      %v2621 = vmul.f32 %v2060, %v2564
      %v2622 = vmul.f32 %v2063, %v2564
      %v2623 = vmul.f32 %v2065, %v2564
      %v2624 = vmul.f32 %v2068, %v2564
      %v2625 = vmul.f32 %v2070, %v2564
      %v2626 = vmul.f32 %v2073, %v2564
      %v2627 = vmul.f32 %v2075, %v2564
      %v2628 = vmul.f32 %v2078, %v2564
      %v2629 = vmul.f32 %v2080, %v2564
      %v2630 = vmul.f32 %v2083, %v2564
      %v2631 = vmul.f32 %v2085, %v2564
      %v2632 = vmul.f32 %v2088, %v2564
      %v2633 = vmul.f32 %v2090, %v2564
      %v2634 = vmul.f32 %v2093, %v2564
      %v2635 = vmul.f32 %v2095, %v2564
      %v2636 = vmul.f32 %v2098, %v2564
      %v2637 = vmul.f32 %v2100, %v2564
      %v2638 = vmul.f32 %v2103, %v2564
      %v2639 = vmul.f32 %v2105, %v2564
      %v2640 = vmul.f32 %v2108, %v2564
      %v2641 = vmul.f32 %v2110, %v2564
      %v2642 = vmul.f32 %v2113, %v2564
      %v2643 = vmul.f32 %v2115, %v2564
      %v2644 = vmul.f32 %v2118, %v2564
      %v2645 = vmul.f32 %v2120, %v2564
      %v2646 = vmul.f32 %v2123, %v2564
      %v2647 = vmul.f32 %v2125, %v2564
      %v2648 = vmul.f32 %v2128, %v2564
      %v2649 = vmul.f32 %v2130, %v2564
      %v2650 = vmul.f32 %v2133, %v2564
      %v2651 = vmul.f32 %v2135, %v2564
      %v2652 = vmul.f32 %v2138, %v2564
      %v2653 = vmul.f32 %v2140, %v2564
      %v2654 = vmul.f32 %v2143, %v2564
      %v2655 = vmul.f32 %v2145, %v2564
      %v2656 = vmul.f32 %v2148, %v2564
      %v2657 = vmul.f32 %v2150, %v2564
      %v2658 = vmul.f32 %v2153, %v2564
      %v2659 = vmul.f32 %v2155, %v2564
      %v2660 = vmul.f32 %v2158, %v2564
      %v2661 = vmul.f32 %v2160, %v2564
      %v2662 = vmul.f32 %v2163, %v2564
      %v2663 = vmul.f32 %v2165, %v2564
      %v2664 = vmul.f32 %v2168, %v2564
      %v2665 = vmul.f32 %v2170, %v2564
      %v2666 = vmul.f32 %v2173, %v2564
      %v2667 = vmul.f32 %v2175, %v2564
      %v2668 = vmul.f32 %v2178, %v2564
      %v2669 = vmul.f32 %v2180, %v2564
      %v2670 = vmul.f32 %v2183, %v2564
      %v2671 = vmul.f32 %v2185, %v2564
      %v2672 = vmul.f32 %v2188, %v2564
      %v2673 = vmul.f32 %v2190, %v2564
      %v2674 = vmul.f32 %v2193, %v2564
      %v2675 = vmul.f32 %v2195, %v2564
      %v2676 = vmul.f32 %v2198, %v2564
      %v2677 = vmul.f32 %v2200, %v2564
      %v2678 = vmul.f32 %v2203, %v2564
      %v2679 = vmul.f32 %v2205, %v2564
      %v2680 = vmul.f32 %v2208, %v2564
      %v2681 = vmul.f32 %v2210, %v2564
      %v2682 = vmul.f32 %v2213, %v2564
      %v2683 = vmul.f32 %v2215, %v2564
      %v2684 = vmul.f32 %v2218, %v2564
      %v2685 = vmul.f32 %v2220, %v2564
      %v2686 = vmul.f32 %v2223, %v2564
      %v2687 = vmul.f32 %v2225, %v2564
      %v2688 = vmul.f32 %v2228, %v2564
      %v2689 = vmul.f32 %v2230, %v2564
      %v2690 = vmul.f32 %v2233, %v2564
      %v2691 = vmul.f32 %v2235, %v2564
      %v2692 = vmul.f32 %v2238, %v2564
      %v2693 = vmul.f32 %v2240, %v2564
      %v2694 = vmul.f32 %v2243, %v2564
      %v2695 = vmul.f32 %v2245, %v2564
      %v2696 = vmul.f32 %v2248, %v2564
      %v2697 = vmul.f32 %v2250, %v2564
      %v2698 = vmul.f32 %v2253, %v2564
      %v2699 = vmul.f32 %v2255, %v2564
      %v2700 = vmul.f32 %v2258, %v2564
      %v2701 = vmul.f32 %v2260, %v2564
      %v2702 = vmul.f32 %v2263, %v2564
      %v2703 = vmul.f32 %v2265, %v2564
      %v2704 = vmul.f32 %v2268, %v2564
      %v2705 = vmul.f32 %v2270, %v2564
      %v2706 = vmul.f32 %v2273, %v2564
      %v2707 = vmul.f32 %v2275, %v2564
      %v2708 = vmul.f32 %v2278, %v2564
      %v2709 = vmul.f32 %v2280, %v2564
      %v2710 = vmul.f32 %v2283, %v2564
      %v2711 = vmul.f32 %v2285, %v2564
      %v2712 = vmul.f32 %v2288, %v2564
      %v2713 = vmul.f32 %v2290, %v2564
      %v2714 = vmul.f32 %v2293, %v2564
      %v2715 = vmul.f32 %v2295, %v2564
      %v2716 = vmul.f32 %v2298, %v2564
      %v2717 = vmul.f32 %v2300, %v2564
      %v2718 = vmul.f32 %v2303, %v2564
      %v2719 = vmul.f32 %v2305, %v2564
      %v2720 = vmul.f32 %v2308, %v2564
      %v2721 = vmul.f32 %v2310, %v2564
      %v2722 = vmul.f32 %v2313, %v2564
      %v2723 = vmul.f32 %v2315, %v2564
      %v2724 = vmul.f32 %v2318, %v2564
      %v2725 = vmul.f32 %v2320, %v2564
      %v2726 = vmul.f32 %v2323, %v2564
      %v2727 = vmul.f32 %v2325, %v2564
      %v2728 = vmul.f32 %v2328, %v2564
      %v2729 = vmul.f32 %v2330, %v2564
      %v2730 = vmul.f32 %v2333, %v2564
      %v2731 = vmul.f32 %v2335, %v2564
      %v2732 = vmul.f32 %v2338, %v2564
      %v2733 = vmul.f32 %v2340, %v2564
      %v2734 = vmul.f32 %v2343, %v2564
      %v2735 = vmul.f32 %v2345, %v2564
      %v2736 = vmul.f32 %v2348, %v2564
      %v2737 = vmul.f32 %v2350, %v2564
      %v2738 = vmul.f32 %v2353, %v2564
      %v2739 = vmul.f32 %v2355, %v2564
      %v2740 = vmul.f32 %v2358, %v2564
      %v2741 = vmul.f32 %v2360, %v2564
      %v2742 = vmul.f32 %v2363, %v2564
      %v2743 = vmul.f32 %v2365, %v2564
      %v2744 = vmul.f32 %v2368, %v2564
      %v2745 = vmul.f32 %v2370, %v2564
      %v2746 = vmul.f32 %v2373, %v2564
      %v2747 = vmul.f32 %v2375, %v2564
      %v2748 = vmul.f32 %v2378, %v2564
      %v2749 = vmul.f32 %v2380, %v2564
      %v2750 = vmul.f32 %v2383, %v2564
      %v2751 = vmul.f32 %v2385, %v2564
      %v2752 = vmul.f32 %v2388, %v2564
      %v2753 = vmul.f32 %v2390, %v2564
      %v2754 = vmul.f32 %v2393, %v2564
      %v2755 = vmul.f32 %v2395, %v2564
      %v2756 = vmul.f32 %v2398, %v2564
      %v2757 = vmul.f32 %v2400, %v2564
      %v2758 = vmul.f32 %v2403, %v2564
      %v2759 = vmul.f32 %v2405, %v2564
      %v2760 = vmul.f32 %v2408, %v2564
      %v2761 = vmul.f32 %v2410, %v2564
      %v2762 = vmul.f32 %v2413, %v2564
      %v2763 = vmul.f32 %v2415, %v2564
      %v2764 = vmul.f32 %v2418, %v2564
      %v2765 = vmul.f32 %v2420, %v2564
      %v2766 = vmul.f32 %v2423, %v2564
      %v2767 = vmul.f32 %v2425, %v2564
      %v2768 = vmul.f32 %v2428, %v2564
      %v2769 = vmul.f32 %v2430, %v2564
      %v2770 = vmul.f32 %v2433, %v2564
      %v2771 = vmul.f32 %v2435, %v2564
      %v2772 = vmul.f32 %v2438, %v2564
      %v2773 = vmul.f32 %v2440, %v2564
      %v2774 = vmul.f32 %v2443, %v2564
      %v2775 = vmul.f32 %v2445, %v2564
      %v2776 = vmul.f32 %v2448, %v2564
      %v2777 = vmul.f32 %v2450, %v2564
      %v2778 = vmul.f32 %v2453, %v2564
      %v2779 = vmul.f32 %v2455, %v2564
      %v2780 = vmul.f32 %v2458, %v2564
      %v2781 = vmul.f32 %v2460, %v2564
      %v2782 = vmul.f32 %v2463, %v2564
      %v2783 = vmul.f32 %v2465, %v2564
      %v2784 = vmul.f32 %v2468, %v2564
      %v2785 = vmul.f32 %v2470, %v2564
      %v2786 = vmul.f32 %v2473, %v2564
      %v2787 = vmul.f32 %v2475, %v2564
      %v2788 = vmul.f32 %v2478, %v2564
      %v2789 = vmul.f32 %v2480, %v2564
      %v2790 = vmul.f32 %v2483, %v2564
      %v2791 = vmul.f32 %v2485, %v2564
      %v2792 = vmul.f32 %v2488, %v2564
      %v2793 = vmul.f32 %v2490, %v2564
      %v2794 = vmul.f32 %v2493, %v2564
      %v2795 = vmul.f32 %v2495, %v2564
      %v2796 = vmul.f32 %v2498, %v2564
      %v2797 = vmul.f32 %v2500, %v2564
      %v2798 = vmul.f32 %v2503, %v2564
      %v2799 = vmul.f32 %v2505, %v2564
      %v2800 = vmul.f32 %v2508, %v2564
      %v2801 = vmul.f32 %v2510, %v2564
      %v2802 = vmul.f32 %v2513, %v2564
      %v2803 = vmul.f32 %v2515, %v2564
      %v2804 = vmul.f32 %v2518, %v2564
      %v2805 = vmul.f32 %v2520, %v2564
      %v2806 = vmul.f32 %v2523, %v2564
      %v2807 = vmul.f32 %v2525, %v2564
      %v2808 = vmul.f32 %v2528, %v2564
      %v2809 = vmul.f32 %v2530, %v2564
      %v2810 = vmul.f32 %v2533, %v2564
      %v2811 = vmul.f32 %v2535, %v2564
      %v2812 = vmul.f32 %v2538, %v2564
      %v2813 = vmul.f32 %v2540, %v2564
      %v2814 = vmul.f32 %v2543, %v2564
      %v2815 = vmul.f32 %v2545, %v2564
      %v2816 = vmul.f32 %v2548, %v2564
      %v2817 = vmul.f32 %v2550, %v2564
      %v2818 = vmul.f32 %v2553, %v2564
      %v2819 = vmul.f32 %v2555, %v2564
      %v2820 = vmul.f32 %v2558, %v2564
      %v2821 = vmul.f32 %v2560, %v2564
      %v2822 = vld [vmem:[%s3] sm:$0x1]
      %v2824 = vperm.slane %v2822, 0
      %v2826 = vadd.f32 %v2566, %v2824
      %v2827 = vadd.f32 %v2567, %v2824
      %v2828 = vadd.f32 %v2568, %v2824
      %v2829 = vadd.f32 %v2569, %v2824
      %v2830 = vadd.f32 %v2570, %v2824
      %v2831 = vadd.f32 %v2571, %v2824
      %v2832 = vadd.f32 %v2572, %v2824
      %v2833 = vadd.f32 %v2573, %v2824
      %v2834 = vadd.f32 %v2574, %v2824
      %v2835 = vadd.f32 %v2575, %v2824
      %v2836 = vadd.f32 %v2576, %v2824
      %v2837 = vadd.f32 %v2577, %v2824
      %v2838 = vadd.f32 %v2578, %v2824
      %v2839 = vadd.f32 %v2579, %v2824
      %v2840 = vadd.f32 %v2580, %v2824
      %v2841 = vadd.f32 %v2581, %v2824
      %v2842 = vadd.f32 %v2582, %v2824
      %v2843 = vadd.f32 %v2583, %v2824
      %v2844 = vadd.f32 %v2584, %v2824
      %v2845 = vadd.f32 %v2585, %v2824
      %v2846 = vadd.f32 %v2586, %v2824
      %v2847 = vadd.f32 %v2587, %v2824
      %v2848 = vadd.f32 %v2588, %v2824
      %v2849 = vadd.f32 %v2589, %v2824
      %v2850 = vadd.f32 %v2590, %v2824
      %v2851 = vadd.f32 %v2591, %v2824
      %v2852 = vadd.f32 %v2592, %v2824
      %v2853 = vadd.f32 %v2593, %v2824
      %v2854 = vadd.f32 %v2594, %v2824
      %v2855 = vadd.f32 %v2595, %v2824
      %v2856 = vadd.f32 %v2596, %v2824
      %v2857 = vadd.f32 %v2597, %v2824
      %v2858 = vadd.f32 %v2598, %v2824
      %v2859 = vadd.f32 %v2599, %v2824
      %v2860 = vadd.f32 %v2600, %v2824
      %v2861 = vadd.f32 %v2601, %v2824
      %v2862 = vadd.f32 %v2602, %v2824
      %v2863 = vadd.f32 %v2603, %v2824
      %v2864 = vadd.f32 %v2604, %v2824
      %v2865 = vadd.f32 %v2605, %v2824
      %v2866 = vadd.f32 %v2606, %v2824
      %v2867 = vadd.f32 %v2607, %v2824
      %v2868 = vadd.f32 %v2608, %v2824
      %v2869 = vadd.f32 %v2609, %v2824
      %v2870 = vadd.f32 %v2610, %v2824
      %v2871 = vadd.f32 %v2611, %v2824
      %v2872 = vadd.f32 %v2612, %v2824
      %v2873 = vadd.f32 %v2613, %v2824
      %v2874 = vadd.f32 %v2614, %v2824
      %v2875 = vadd.f32 %v2615, %v2824
      %v2876 = vadd.f32 %v2616, %v2824
      %v2877 = vadd.f32 %v2617, %v2824
      %v2878 = vadd.f32 %v2618, %v2824
      %v2879 = vadd.f32 %v2619, %v2824
      %v2880 = vadd.f32 %v2620, %v2824
      %v2881 = vadd.f32 %v2621, %v2824
      %v2882 = vadd.f32 %v2622, %v2824
      %v2883 = vadd.f32 %v2623, %v2824
      %v2884 = vadd.f32 %v2624, %v2824
      %v2885 = vadd.f32 %v2625, %v2824
      %v2886 = vadd.f32 %v2626, %v2824
      %v2887 = vadd.f32 %v2627, %v2824
      %v2888 = vadd.f32 %v2628, %v2824
      %v2889 = vadd.f32 %v2629, %v2824
      %v2890 = vadd.f32 %v2630, %v2824
      %v2891 = vadd.f32 %v2631, %v2824
      %v2892 = vadd.f32 %v2632, %v2824
      %v2893 = vadd.f32 %v2633, %v2824
      %v2894 = vadd.f32 %v2634, %v2824
      %v2895 = vadd.f32 %v2635, %v2824
      %v2896 = vadd.f32 %v2636, %v2824
      %v2897 = vadd.f32 %v2637, %v2824
      %v2898 = vadd.f32 %v2638, %v2824
      %v2899 = vadd.f32 %v2639, %v2824
      %v2900 = vadd.f32 %v2640, %v2824
      %v2901 = vadd.f32 %v2641, %v2824
      %v2902 = vadd.f32 %v2642, %v2824
      %v2903 = vadd.f32 %v2643, %v2824
      %v2904 = vadd.f32 %v2644, %v2824
      %v2905 = vadd.f32 %v2645, %v2824
      %v2906 = vadd.f32 %v2646, %v2824
      %v2907 = vadd.f32 %v2647, %v2824
      %v2908 = vadd.f32 %v2648, %v2824
      %v2909 = vadd.f32 %v2649, %v2824
      %v2910 = vadd.f32 %v2650, %v2824
      %v2911 = vadd.f32 %v2651, %v2824
      %v2912 = vadd.f32 %v2652, %v2824
      %v2913 = vadd.f32 %v2653, %v2824
      %v2914 = vadd.f32 %v2654, %v2824
      %v2915 = vadd.f32 %v2655, %v2824
      %v2916 = vadd.f32 %v2656, %v2824
      %v2917 = vadd.f32 %v2657, %v2824
      %v2918 = vadd.f32 %v2658, %v2824
      %v2919 = vadd.f32 %v2659, %v2824
      %v2920 = vadd.f32 %v2660, %v2824
      %v2921 = vadd.f32 %v2661, %v2824
      %v2922 = vadd.f32 %v2662, %v2824
      %v2923 = vadd.f32 %v2663, %v2824
      %v2924 = vadd.f32 %v2664, %v2824
      %v2925 = vadd.f32 %v2665, %v2824
      %v2926 = vadd.f32 %v2666, %v2824
      %v2927 = vadd.f32 %v2667, %v2824
      %v2928 = vadd.f32 %v2668, %v2824
      %v2929 = vadd.f32 %v2669, %v2824
      %v2930 = vadd.f32 %v2670, %v2824
      %v2931 = vadd.f32 %v2671, %v2824
      %v2932 = vadd.f32 %v2672, %v2824
      %v2933 = vadd.f32 %v2673, %v2824
      %v2934 = vadd.f32 %v2674, %v2824
      %v2935 = vadd.f32 %v2675, %v2824
      %v2936 = vadd.f32 %v2676, %v2824
      %v2937 = vadd.f32 %v2677, %v2824
      %v2938 = vadd.f32 %v2678, %v2824
      %v2939 = vadd.f32 %v2679, %v2824
      %v2940 = vadd.f32 %v2680, %v2824
      %v2941 = vadd.f32 %v2681, %v2824
      %v2942 = vadd.f32 %v2682, %v2824
      %v2943 = vadd.f32 %v2683, %v2824
      %v2944 = vadd.f32 %v2684, %v2824
      %v2945 = vadd.f32 %v2685, %v2824
      %v2946 = vadd.f32 %v2686, %v2824
      %v2947 = vadd.f32 %v2687, %v2824
      %v2948 = vadd.f32 %v2688, %v2824
      %v2949 = vadd.f32 %v2689, %v2824
      %v2950 = vadd.f32 %v2690, %v2824
      %v2951 = vadd.f32 %v2691, %v2824
      %v2952 = vadd.f32 %v2692, %v2824
      %v2953 = vadd.f32 %v2693, %v2824
      %v2954 = vadd.f32 %v2694, %v2824
      %v2955 = vadd.f32 %v2695, %v2824
      %v2956 = vadd.f32 %v2696, %v2824
      %v2957 = vadd.f32 %v2697, %v2824
      %v2958 = vadd.f32 %v2698, %v2824
      %v2959 = vadd.f32 %v2699, %v2824
      %v2960 = vadd.f32 %v2700, %v2824
      %v2961 = vadd.f32 %v2701, %v2824
      %v2962 = vadd.f32 %v2702, %v2824
      %v2963 = vadd.f32 %v2703, %v2824
      %v2964 = vadd.f32 %v2704, %v2824
      %v2965 = vadd.f32 %v2705, %v2824
      %v2966 = vadd.f32 %v2706, %v2824
      %v2967 = vadd.f32 %v2707, %v2824
      %v2968 = vadd.f32 %v2708, %v2824
      %v2969 = vadd.f32 %v2709, %v2824
      %v2970 = vadd.f32 %v2710, %v2824
      %v2971 = vadd.f32 %v2711, %v2824
      %v2972 = vadd.f32 %v2712, %v2824
      %v2973 = vadd.f32 %v2713, %v2824
      %v2974 = vadd.f32 %v2714, %v2824
      %v2975 = vadd.f32 %v2715, %v2824
      %v2976 = vadd.f32 %v2716, %v2824
      %v2977 = vadd.f32 %v2717, %v2824
      %v2978 = vadd.f32 %v2718, %v2824
      %v2979 = vadd.f32 %v2719, %v2824
      %v2980 = vadd.f32 %v2720, %v2824
      %v2981 = vadd.f32 %v2721, %v2824
      %v2982 = vadd.f32 %v2722, %v2824
      %v2983 = vadd.f32 %v2723, %v2824
      %v2984 = vadd.f32 %v2724, %v2824
      %v2985 = vadd.f32 %v2725, %v2824
      %v2986 = vadd.f32 %v2726, %v2824
      %v2987 = vadd.f32 %v2727, %v2824
      %v2988 = vadd.f32 %v2728, %v2824
      %v2989 = vadd.f32 %v2729, %v2824
      %v2990 = vadd.f32 %v2730, %v2824
      %v2991 = vadd.f32 %v2731, %v2824
      %v2992 = vadd.f32 %v2732, %v2824
      %v2993 = vadd.f32 %v2733, %v2824
      %v2994 = vadd.f32 %v2734, %v2824
      %v2995 = vadd.f32 %v2735, %v2824
      %v2996 = vadd.f32 %v2736, %v2824
      %v2997 = vadd.f32 %v2737, %v2824
      %v2998 = vadd.f32 %v2738, %v2824
      %v2999 = vadd.f32 %v2739, %v2824
      %v3000 = vadd.f32 %v2740, %v2824
      %v3001 = vadd.f32 %v2741, %v2824
      %v3002 = vadd.f32 %v2742, %v2824
      %v3003 = vadd.f32 %v2743, %v2824
      %v3004 = vadd.f32 %v2744, %v2824
      %v3005 = vadd.f32 %v2745, %v2824
      %v3006 = vadd.f32 %v2746, %v2824
      %v3007 = vadd.f32 %v2747, %v2824
      %v3008 = vadd.f32 %v2748, %v2824
      %v3009 = vadd.f32 %v2749, %v2824
      %v3010 = vadd.f32 %v2750, %v2824
      %v3011 = vadd.f32 %v2751, %v2824
      %v3012 = vadd.f32 %v2752, %v2824
      %v3013 = vadd.f32 %v2753, %v2824
      %v3014 = vadd.f32 %v2754, %v2824
      %v3015 = vadd.f32 %v2755, %v2824
      %v3016 = vadd.f32 %v2756, %v2824
      %v3017 = vadd.f32 %v2757, %v2824
      %v3018 = vadd.f32 %v2758, %v2824
      %v3019 = vadd.f32 %v2759, %v2824
      %v3020 = vadd.f32 %v2760, %v2824
      %v3021 = vadd.f32 %v2761, %v2824
      %v3022 = vadd.f32 %v2762, %v2824
      %v3023 = vadd.f32 %v2763, %v2824
      %v3024 = vadd.f32 %v2764, %v2824
      %v3025 = vadd.f32 %v2765, %v2824
      %v3026 = vadd.f32 %v2766, %v2824
      %v3027 = vadd.f32 %v2767, %v2824
      %v3028 = vadd.f32 %v2768, %v2824
      %v3029 = vadd.f32 %v2769, %v2824
      %v3030 = vadd.f32 %v2770, %v2824
      %v3031 = vadd.f32 %v2771, %v2824
      %v3032 = vadd.f32 %v2772, %v2824
      %v3033 = vadd.f32 %v2773, %v2824
      %v3034 = vadd.f32 %v2774, %v2824
      %v3035 = vadd.f32 %v2775, %v2824
      %v3036 = vadd.f32 %v2776, %v2824
      %v3037 = vadd.f32 %v2777, %v2824
      %v3038 = vadd.f32 %v2778, %v2824
      %v3039 = vadd.f32 %v2779, %v2824
      %v3040 = vadd.f32 %v2780, %v2824
      %v3041 = vadd.f32 %v2781, %v2824
      %v3042 = vadd.f32 %v2782, %v2824
      %v3043 = vadd.f32 %v2783, %v2824
      %v3044 = vadd.f32 %v2784, %v2824
      %v3045 = vadd.f32 %v2785, %v2824
      %v3046 = vadd.f32 %v2786, %v2824
      %v3047 = vadd.f32 %v2787, %v2824
      %v3048 = vadd.f32 %v2788, %v2824
      %v3049 = vadd.f32 %v2789, %v2824
      %v3050 = vadd.f32 %v2790, %v2824
      %v3051 = vadd.f32 %v2791, %v2824
      %v3052 = vadd.f32 %v2792, %v2824
      %v3053 = vadd.f32 %v2793, %v2824
      %v3054 = vadd.f32 %v2794, %v2824
      %v3055 = vadd.f32 %v2795, %v2824
      %v3056 = vadd.f32 %v2796, %v2824
      %v3057 = vadd.f32 %v2797, %v2824
      %v3058 = vadd.f32 %v2798, %v2824
      %v3059 = vadd.f32 %v2799, %v2824
      %v3060 = vadd.f32 %v2800, %v2824
      %v3061 = vadd.f32 %v2801, %v2824
      %v3062 = vadd.f32 %v2802, %v2824
      %v3063 = vadd.f32 %v2803, %v2824
      %v3064 = vadd.f32 %v2804, %v2824
      %v3065 = vadd.f32 %v2805, %v2824
      %v3066 = vadd.f32 %v2806, %v2824
      %v3067 = vadd.f32 %v2807, %v2824
      %v3068 = vadd.f32 %v2808, %v2824
      %v3069 = vadd.f32 %v2809, %v2824
      %v3070 = vadd.f32 %v2810, %v2824
      %v3071 = vadd.f32 %v2811, %v2824
      %v3072 = vadd.f32 %v2812, %v2824
      %v3073 = vadd.f32 %v2813, %v2824
      %v3074 = vadd.f32 %v2814, %v2824
      %v3075 = vadd.f32 %v2815, %v2824
      %v3076 = vadd.f32 %v2816, %v2824
      %v3077 = vadd.f32 %v2817, %v2824
      %v3078 = vadd.f32 %v2818, %v2824
      %v3079 = vadd.f32 %v2819, %v2824
      %v3080 = vadd.f32 %v2820, %v2824
      %v3081 = vadd.f32 %v2821, %v2824
      %v3082 = vmax.f32 %v2826, 0.0
      %v3083 = vmax.f32 %v2827, 0.0
      %v3084 = vmax.f32 %v2828, 0.0
      %v3085 = vmax.f32 %v2829, 0.0
      %v3086 = vmax.f32 %v2830, 0.0
      %v3087 = vmax.f32 %v2831, 0.0
      %v3088 = vmax.f32 %v2832, 0.0
      %v3089 = vmax.f32 %v2833, 0.0
      %v3090 = vmax.f32 %v2834, 0.0
      %v3091 = vmax.f32 %v2835, 0.0
      %v3092 = vmax.f32 %v2836, 0.0
      %v3093 = vmax.f32 %v2837, 0.0
      %v3094 = vmax.f32 %v2838, 0.0
      %v3095 = vmax.f32 %v2839, 0.0
      %v3096 = vmax.f32 %v2840, 0.0
      %v3097 = vmax.f32 %v2841, 0.0
      %v3098 = vmax.f32 %v2842, 0.0
      %v3099 = vmax.f32 %v2843, 0.0
      %v3100 = vmax.f32 %v2844, 0.0
      %v3101 = vmax.f32 %v2845, 0.0
      %v3102 = vmax.f32 %v2846, 0.0
      %v3103 = vmax.f32 %v2847, 0.0
      %v3104 = vmax.f32 %v2848, 0.0
      %v3105 = vmax.f32 %v2849, 0.0
      %v3106 = vmax.f32 %v2850, 0.0
      %v3107 = vmax.f32 %v2851, 0.0
      %v3108 = vmax.f32 %v2852, 0.0
      %v3109 = vmax.f32 %v2853, 0.0
      %v3110 = vmax.f32 %v2854, 0.0
      %v3111 = vmax.f32 %v2855, 0.0
      %v3112 = vmax.f32 %v2856, 0.0
      %v3113 = vmax.f32 %v2857, 0.0
      %v3114 = vmax.f32 %v2858, 0.0
      %v3115 = vmax.f32 %v2859, 0.0
      %v3116 = vmax.f32 %v2860, 0.0
      %v3117 = vmax.f32 %v2861, 0.0
      %v3118 = vmax.f32 %v2862, 0.0
      %v3119 = vmax.f32 %v2863, 0.0
      %v3120 = vmax.f32 %v2864, 0.0
      %v3121 = vmax.f32 %v2865, 0.0
      %v3122 = vmax.f32 %v2866, 0.0
      %v3123 = vmax.f32 %v2867, 0.0
      %v3124 = vmax.f32 %v2868, 0.0
      %v3125 = vmax.f32 %v2869, 0.0
      %v3126 = vmax.f32 %v2870, 0.0
      %v3127 = vmax.f32 %v2871, 0.0
      %v3128 = vmax.f32 %v2872, 0.0
      %v3129 = vmax.f32 %v2873, 0.0
      %v3130 = vmax.f32 %v2874, 0.0
      %v3131 = vmax.f32 %v2875, 0.0
      %v3132 = vmax.f32 %v2876, 0.0
      %v3133 = vmax.f32 %v2877, 0.0
      %v3134 = vmax.f32 %v2878, 0.0
      %v3135 = vmax.f32 %v2879, 0.0
      %v3136 = vmax.f32 %v2880, 0.0
      %v3137 = vmax.f32 %v2881, 0.0
      %v3138 = vmax.f32 %v2882, 0.0
      %v3139 = vmax.f32 %v2883, 0.0
      %v3140 = vmax.f32 %v2884, 0.0
      %v3141 = vmax.f32 %v2885, 0.0
      %v3142 = vmax.f32 %v2886, 0.0
      %v3143 = vmax.f32 %v2887, 0.0
      %v3144 = vmax.f32 %v2888, 0.0
      %v3145 = vmax.f32 %v2889, 0.0
      %v3146 = vmax.f32 %v2890, 0.0
      %v3147 = vmax.f32 %v2891, 0.0
      %v3148 = vmax.f32 %v2892, 0.0
      %v3149 = vmax.f32 %v2893, 0.0
      %v3150 = vmax.f32 %v2894, 0.0
      %v3151 = vmax.f32 %v2895, 0.0
      %v3152 = vmax.f32 %v2896, 0.0
      %v3153 = vmax.f32 %v2897, 0.0
      %v3154 = vmax.f32 %v2898, 0.0
      %v3155 = vmax.f32 %v2899, 0.0
      %v3156 = vmax.f32 %v2900, 0.0
      %v3157 = vmax.f32 %v2901, 0.0
      %v3158 = vmax.f32 %v2902, 0.0
      %v3159 = vmax.f32 %v2903, 0.0
      %v3160 = vmax.f32 %v2904, 0.0
      %v3161 = vmax.f32 %v2905, 0.0
      %v3162 = vmax.f32 %v2906, 0.0
      %v3163 = vmax.f32 %v2907, 0.0
      %v3164 = vmax.f32 %v2908, 0.0
      %v3165 = vmax.f32 %v2909, 0.0
      %v3166 = vmax.f32 %v2910, 0.0
      %v3167 = vmax.f32 %v2911, 0.0
      %v3168 = vmax.f32 %v2912, 0.0
      %v3169 = vmax.f32 %v2913, 0.0
      %v3170 = vmax.f32 %v2914, 0.0
      %v3171 = vmax.f32 %v2915, 0.0
      %v3172 = vmax.f32 %v2916, 0.0
      %v3173 = vmax.f32 %v2917, 0.0
      %v3174 = vmax.f32 %v2918, 0.0
      %v3175 = vmax.f32 %v2919, 0.0
      %v3176 = vmax.f32 %v2920, 0.0
      %v3177 = vmax.f32 %v2921, 0.0
      %v3178 = vmax.f32 %v2922, 0.0
      %v3179 = vmax.f32 %v2923, 0.0
      %v3180 = vmax.f32 %v2924, 0.0
      %v3181 = vmax.f32 %v2925, 0.0
      %v3182 = vmax.f32 %v2926, 0.0
      %v3183 = vmax.f32 %v2927, 0.0
      %v3184 = vmax.f32 %v2928, 0.0
      %v3185 = vmax.f32 %v2929, 0.0
      %v3186 = vmax.f32 %v2930, 0.0
      %v3187 = vmax.f32 %v2931, 0.0
      %v3188 = vmax.f32 %v2932, 0.0
      %v3189 = vmax.f32 %v2933, 0.0
      %v3190 = vmax.f32 %v2934, 0.0
      %v3191 = vmax.f32 %v2935, 0.0
      %v3192 = vmax.f32 %v2936, 0.0
      %v3193 = vmax.f32 %v2937, 0.0
      %v3194 = vmax.f32 %v2938, 0.0
      %v3195 = vmax.f32 %v2939, 0.0
      %v3196 = vmax.f32 %v2940, 0.0
      %v3197 = vmax.f32 %v2941, 0.0
      %v3198 = vmax.f32 %v2942, 0.0
      %v3199 = vmax.f32 %v2943, 0.0
      %v3200 = vmax.f32 %v2944, 0.0
      %v3201 = vmax.f32 %v2945, 0.0
      %v3202 = vmax.f32 %v2946, 0.0
      %v3203 = vmax.f32 %v2947, 0.0
      %v3204 = vmax.f32 %v2948, 0.0
      %v3205 = vmax.f32 %v2949, 0.0
      %v3206 = vmax.f32 %v2950, 0.0
      %v3207 = vmax.f32 %v2951, 0.0
      %v3208 = vmax.f32 %v2952, 0.0
      %v3209 = vmax.f32 %v2953, 0.0
      %v3210 = vmax.f32 %v2954, 0.0
      %v3211 = vmax.f32 %v2955, 0.0
      %v3212 = vmax.f32 %v2956, 0.0
      %v3213 = vmax.f32 %v2957, 0.0
      %v3214 = vmax.f32 %v2958, 0.0
      %v3215 = vmax.f32 %v2959, 0.0
      %v3216 = vmax.f32 %v2960, 0.0
      %v3217 = vmax.f32 %v2961, 0.0
      %v3218 = vmax.f32 %v2962, 0.0
      %v3219 = vmax.f32 %v2963, 0.0
      %v3220 = vmax.f32 %v2964, 0.0
      %v3221 = vmax.f32 %v2965, 0.0
      %v3222 = vmax.f32 %v2966, 0.0
      %v3223 = vmax.f32 %v2967, 0.0
      %v3224 = vmax.f32 %v2968, 0.0
      %v3225 = vmax.f32 %v2969, 0.0
      %v3226 = vmax.f32 %v2970, 0.0
      %v3227 = vmax.f32 %v2971, 0.0
      %v3228 = vmax.f32 %v2972, 0.0
      %v3229 = vmax.f32 %v2973, 0.0
      %v3230 = vmax.f32 %v2974, 0.0
      %v3231 = vmax.f32 %v2975, 0.0
      %v3232 = vmax.f32 %v2976, 0.0
      %v3233 = vmax.f32 %v2977, 0.0
      %v3234 = vmax.f32 %v2978, 0.0
      %v3235 = vmax.f32 %v2979, 0.0
      %v3236 = vmax.f32 %v2980, 0.0
      %v3237 = vmax.f32 %v2981, 0.0
      %v3238 = vmax.f32 %v2982, 0.0
      %v3239 = vmax.f32 %v2983, 0.0
      %v3240 = vmax.f32 %v2984, 0.0
      %v3241 = vmax.f32 %v2985, 0.0
      %v3242 = vmax.f32 %v2986, 0.0
      %v3243 = vmax.f32 %v2987, 0.0
      %v3244 = vmax.f32 %v2988, 0.0
      %v3245 = vmax.f32 %v2989, 0.0
      %v3246 = vmax.f32 %v2990, 0.0
      %v3247 = vmax.f32 %v2991, 0.0
      %v3248 = vmax.f32 %v2992, 0.0
      %v3249 = vmax.f32 %v2993, 0.0
      %v3250 = vmax.f32 %v2994, 0.0
      %v3251 = vmax.f32 %v2995, 0.0
      %v3252 = vmax.f32 %v2996, 0.0
      %v3253 = vmax.f32 %v2997, 0.0
      %v3254 = vmax.f32 %v2998, 0.0
      %v3255 = vmax.f32 %v2999, 0.0
      %v3256 = vmax.f32 %v3000, 0.0
      %v3257 = vmax.f32 %v3001, 0.0
      %v3258 = vmax.f32 %v3002, 0.0
      %v3259 = vmax.f32 %v3003, 0.0
      %v3260 = vmax.f32 %v3004, 0.0
      %v3261 = vmax.f32 %v3005, 0.0
      %v3262 = vmax.f32 %v3006, 0.0
      %v3263 = vmax.f32 %v3007, 0.0
      %v3264 = vmax.f32 %v3008, 0.0
      %v3265 = vmax.f32 %v3009, 0.0
      %v3266 = vmax.f32 %v3010, 0.0
      %v3267 = vmax.f32 %v3011, 0.0
      %v3268 = vmax.f32 %v3012, 0.0
      %v3269 = vmax.f32 %v3013, 0.0
      %v3270 = vmax.f32 %v3014, 0.0
      %v3271 = vmax.f32 %v3015, 0.0
      %v3272 = vmax.f32 %v3016, 0.0
      %v3273 = vmax.f32 %v3017, 0.0
      %v3274 = vmax.f32 %v3018, 0.0
      %v3275 = vmax.f32 %v3019, 0.0
      %v3276 = vmax.f32 %v3020, 0.0
      %v3277 = vmax.f32 %v3021, 0.0
      %v3278 = vmax.f32 %v3022, 0.0
      %v3279 = vmax.f32 %v3023, 0.0
      %v3280 = vmax.f32 %v3024, 0.0
      %v3281 = vmax.f32 %v3025, 0.0
      %v3282 = vmax.f32 %v3026, 0.0
      %v3283 = vmax.f32 %v3027, 0.0
      %v3284 = vmax.f32 %v3028, 0.0
      %v3285 = vmax.f32 %v3029, 0.0
      %v3286 = vmax.f32 %v3030, 0.0
      %v3287 = vmax.f32 %v3031, 0.0
      %v3288 = vmax.f32 %v3032, 0.0
      %v3289 = vmax.f32 %v3033, 0.0
      %v3290 = vmax.f32 %v3034, 0.0
      %v3291 = vmax.f32 %v3035, 0.0
      %v3292 = vmax.f32 %v3036, 0.0
      %v3293 = vmax.f32 %v3037, 0.0
      %v3294 = vmax.f32 %v3038, 0.0
      %v3295 = vmax.f32 %v3039, 0.0
      %v3296 = vmax.f32 %v3040, 0.0
      %v3297 = vmax.f32 %v3041, 0.0
      %v3298 = vmax.f32 %v3042, 0.0
      %v3299 = vmax.f32 %v3043, 0.0
      %v3300 = vmax.f32 %v3044, 0.0
      %v3301 = vmax.f32 %v3045, 0.0
      %v3302 = vmax.f32 %v3046, 0.0
      %v3303 = vmax.f32 %v3047, 0.0
      %v3304 = vmax.f32 %v3048, 0.0
      %v3305 = vmax.f32 %v3049, 0.0
      %v3306 = vmax.f32 %v3050, 0.0
      %v3307 = vmax.f32 %v3051, 0.0
      %v3308 = vmax.f32 %v3052, 0.0
      %v3309 = vmax.f32 %v3053, 0.0
      %v3310 = vmax.f32 %v3054, 0.0
      %v3311 = vmax.f32 %v3055, 0.0
      %v3312 = vmax.f32 %v3056, 0.0
      %v3313 = vmax.f32 %v3057, 0.0
      %v3314 = vmax.f32 %v3058, 0.0
      %v3315 = vmax.f32 %v3059, 0.0
      %v3316 = vmax.f32 %v3060, 0.0
      %v3317 = vmax.f32 %v3061, 0.0
      %v3318 = vmax.f32 %v3062, 0.0
      %v3319 = vmax.f32 %v3063, 0.0
      %v3320 = vmax.f32 %v3064, 0.0
      %v3321 = vmax.f32 %v3065, 0.0
      %v3322 = vmax.f32 %v3066, 0.0
      %v3323 = vmax.f32 %v3067, 0.0
      %v3324 = vmax.f32 %v3068, 0.0
      %v3325 = vmax.f32 %v3069, 0.0
      %v3326 = vmax.f32 %v3070, 0.0
      %v3327 = vmax.f32 %v3071, 0.0
      %v3328 = vmax.f32 %v3072, 0.0
      %v3329 = vmax.f32 %v3073, 0.0
      %v3330 = vmax.f32 %v3074, 0.0
      %v3331 = vmax.f32 %v3075, 0.0
      %v3332 = vmax.f32 %v3076, 0.0
      %v3333 = vmax.f32 %v3077, 0.0
      %v3334 = vmax.f32 %v3078, 0.0
      %v3335 = vmax.f32 %v3079, 0.0
      %v3336 = vmax.f32 %v3080, 0.0
      %v3337 = vmax.f32 %v3081, 0.0
      %v3338 = vmax.f32 %v3082, %v3084
      %v3339 = vmax.f32 %v3083, %v3085
      %v3340 = vmax.f32 %v3086, %v3088
      %v3341 = vmax.f32 %v3087, %v3089
      %v3342 = vmax.f32 %v3090, %v3092
      %v3343 = vmax.f32 %v3091, %v3093
      %v3344 = vmax.f32 %v3094, %v3096
      %v3345 = vmax.f32 %v3095, %v3097
      %v3346 = vmax.f32 %v3098, %v3100
      %v3347 = vmax.f32 %v3099, %v3101
      %v3348 = vmax.f32 %v3102, %v3104
      %v3349 = vmax.f32 %v3103, %v3105
      %v3350 = vmax.f32 %v3106, %v3108
      %v3351 = vmax.f32 %v3107, %v3109
      %v3352 = vmax.f32 %v3110, %v3112
      %v3353 = vmax.f32 %v3111, %v3113
      %v3354 = vmax.f32 %v3114, %v3116
      %v3355 = vmax.f32 %v3115, %v3117
      %v3356 = vmax.f32 %v3118, %v3120
      %v3357 = vmax.f32 %v3119, %v3121
      %v3358 = vmax.f32 %v3122, %v3124
      %v3359 = vmax.f32 %v3123, %v3125
      %v3360 = vmax.f32 %v3126, %v3128
      %v3361 = vmax.f32 %v3127, %v3129
      %v3362 = vmax.f32 %v3130, %v3132
      %v3363 = vmax.f32 %v3131, %v3133
      %v3364 = vmax.f32 %v3134, %v3136
      %v3365 = vmax.f32 %v3135, %v3137
      %v3366 = vmax.f32 %v3138, %v3140
      %v3367 = vmax.f32 %v3139, %v3141
      %v3368 = vmax.f32 %v3142, %v3144
      %v3369 = vmax.f32 %v3143, %v3145
      %v3370 = vmax.f32 %v3146, %v3148
      %v3371 = vmax.f32 %v3147, %v3149
      %v3372 = vmax.f32 %v3150, %v3152
      %v3373 = vmax.f32 %v3151, %v3153
      %v3374 = vmax.f32 %v3154, %v3156
      %v3375 = vmax.f32 %v3155, %v3157
      %v3376 = vmax.f32 %v3158, %v3160
      %v3377 = vmax.f32 %v3159, %v3161
      %v3378 = vmax.f32 %v3162, %v3164
      %v3379 = vmax.f32 %v3163, %v3165
      %v3380 = vmax.f32 %v3166, %v3168
      %v3381 = vmax.f32 %v3167, %v3169
      %v3382 = vmax.f32 %v3170, %v3172
      %v3383 = vmax.f32 %v3171, %v3173
      %v3384 = vmax.f32 %v3174, %v3176
      %v3385 = vmax.f32 %v3175, %v3177
      %v3386 = vmax.f32 %v3178, %v3180
      %v3387 = vmax.f32 %v3179, %v3181
      %v3388 = vmax.f32 %v3182, %v3184
      %v3389 = vmax.f32 %v3183, %v3185
      %v3390 = vmax.f32 %v3186, %v3188
      %v3391 = vmax.f32 %v3187, %v3189
      %v3392 = vmax.f32 %v3190, %v3192
      %v3393 = vmax.f32 %v3191, %v3193
      %v3394 = vmax.f32 %v3194, %v3196
      %v3395 = vmax.f32 %v3195, %v3197
      %v3396 = vmax.f32 %v3198, %v3200
      %v3397 = vmax.f32 %v3199, %v3201
      %v3398 = vmax.f32 %v3202, %v3204
      %v3399 = vmax.f32 %v3203, %v3205
      %v3400 = vmax.f32 %v3206, %v3208
      %v3401 = vmax.f32 %v3207, %v3209
      %v3402 = vmax.f32 %v3210, %v3212
      %v3403 = vmax.f32 %v3211, %v3213
      %v3404 = vmax.f32 %v3214, %v3216
      %v3405 = vmax.f32 %v3215, %v3217
      %v3406 = vmax.f32 %v3218, %v3220
      %v3407 = vmax.f32 %v3219, %v3221
      %v3408 = vmax.f32 %v3222, %v3224
      %v3409 = vmax.f32 %v3223, %v3225
      %v3410 = vmax.f32 %v3226, %v3228
      %v3411 = vmax.f32 %v3227, %v3229
      %v3412 = vmax.f32 %v3230, %v3232
      %v3413 = vmax.f32 %v3231, %v3233
      %v3414 = vmax.f32 %v3234, %v3236
      %v3415 = vmax.f32 %v3235, %v3237
      %v3416 = vmax.f32 %v3238, %v3240
      %v3417 = vmax.f32 %v3239, %v3241
      %v3418 = vmax.f32 %v3242, %v3244
      %v3419 = vmax.f32 %v3243, %v3245
      %v3420 = vmax.f32 %v3246, %v3248
      %v3421 = vmax.f32 %v3247, %v3249
      %v3422 = vmax.f32 %v3250, %v3252
      %v3423 = vmax.f32 %v3251, %v3253
      %v3424 = vmax.f32 %v3254, %v3256
      %v3425 = vmax.f32 %v3255, %v3257
      %v3426 = vmax.f32 %v3258, %v3260
      %v3427 = vmax.f32 %v3259, %v3261
      %v3428 = vmax.f32 %v3262, %v3264
      %v3429 = vmax.f32 %v3263, %v3265
      %v3430 = vmax.f32 %v3266, %v3268
      %v3431 = vmax.f32 %v3267, %v3269
      %v3432 = vmax.f32 %v3270, %v3272
      %v3433 = vmax.f32 %v3271, %v3273
      %v3434 = vmax.f32 %v3274, %v3276
      %v3435 = vmax.f32 %v3275, %v3277
      %v3436 = vmax.f32 %v3278, %v3280
      %v3437 = vmax.f32 %v3279, %v3281
      %v3438 = vmax.f32 %v3282, %v3284
      %v3439 = vmax.f32 %v3283, %v3285
      %v3440 = vmax.f32 %v3286, %v3288
      %v3441 = vmax.f32 %v3287, %v3289
      %v3442 = vmax.f32 %v3290, %v3292
      %v3443 = vmax.f32 %v3291, %v3293
      %v3444 = vmax.f32 %v3294, %v3296
      %v3445 = vmax.f32 %v3295, %v3297
      %v3446 = vmax.f32 %v3298, %v3300
      %v3447 = vmax.f32 %v3299, %v3301
      %v3448 = vmax.f32 %v3302, %v3304
      %v3449 = vmax.f32 %v3303, %v3305
      %v3450 = vmax.f32 %v3306, %v3308
      %v3451 = vmax.f32 %v3307, %v3309
      %v3452 = vmax.f32 %v3310, %v3312
      %v3453 = vmax.f32 %v3311, %v3313
      %v3454 = vmax.f32 %v3314, %v3316
      %v3455 = vmax.f32 %v3315, %v3317
      %v3456 = vmax.f32 %v3318, %v3320
      %v3457 = vmax.f32 %v3319, %v3321
      %v3458 = vmax.f32 %v3322, %v3324
      %v3459 = vmax.f32 %v3323, %v3325
      %v3460 = vmax.f32 %v3326, %v3328
      %v3461 = vmax.f32 %v3327, %v3329
      %v3462 = vmax.f32 %v3330, %v3332
      %v3463 = vmax.f32 %v3331, %v3333
      %v3464 = vmax.f32 %v3334, %v3336
      %v3465 = vmax.f32 %v3335, %v3337
      %vm3466 = vcmask 130048
      %3467 = vst.msk [vmem:[#allocation2] sm:$0xff] %vm3466, %v3338
      %3468 = vst.msk [vmem:[#allocation2 + $0x8] sm:$0xff] %vm3466, %v3339
      %3469 = vst.msk [vmem:[#allocation2 + $0x10] sm:$0xff] %vm3466, %v3340
      %3470 = vst.msk [vmem:[#allocation2 + $0x18] sm:$0xff] %vm3466, %v3341
      %3471 = vst.msk [vmem:[#allocation2 + $0x20] sm:$0xff] %vm3466, %v3342
      %3472 = vst.msk [vmem:[#allocation2 + $0x28] sm:$0xff] %vm3466, %v3343
      %3473 = vst.msk [vmem:[#allocation2 + $0x30] sm:$0xff] %vm3466, %v3344
      %3474 = vst.msk [vmem:[#allocation2 + $0x38] sm:$0xff] %vm3466, %v3345
      %3475 = vst.msk [vmem:[#allocation2 + $0x40] sm:$0xff] %vm3466, %v3346
      %3476 = vst.msk [vmem:[#allocation2 + $0x48] sm:$0xff] %vm3466, %v3347
      %3477 = vst.msk [vmem:[#allocation2 + $0x50] sm:$0xff] %vm3466, %v3348
      %3478 = vst.msk [vmem:[#allocation2 + $0x58] sm:$0xff] %vm3466, %v3349
      %3479 = vst.msk [vmem:[#allocation2 + $0x60] sm:$0xff] %vm3466, %v3350
      %3480 = vst.msk [vmem:[#allocation2 + $0x68] sm:$0xff] %vm3466, %v3351
      %3481 = vst.msk [vmem:[#allocation2 + $0x70] sm:$0xff] %vm3466, %v3352
      %3482 = vst.msk [vmem:[#allocation2 + $0x78] sm:$0xff] %vm3466, %v3353
      %3483 = vst.msk [vmem:[#allocation2 + $0x80] sm:$0xff] %vm3466, %v3354
      %3484 = vst.msk [vmem:[#allocation2 + $0x88] sm:$0xff] %vm3466, %v3355
      %3485 = vst.msk [vmem:[#allocation2 + $0x90] sm:$0xff] %vm3466, %v3356
      %3486 = vst.msk [vmem:[#allocation2 + $0x98] sm:$0xff] %vm3466, %v3357
      %3487 = vst.msk [vmem:[#allocation2 + $0xa0] sm:$0xff] %vm3466, %v3358
      %3488 = vst.msk [vmem:[#allocation2 + $0xa8] sm:$0xff] %vm3466, %v3359
      %3489 = vst.msk [vmem:[#allocation2 + $0xb0] sm:$0xff] %vm3466, %v3360
      %3490 = vst.msk [vmem:[#allocation2 + $0xb8] sm:$0xff] %vm3466, %v3361
      %3491 = vst.msk [vmem:[#allocation2 + $0xc0] sm:$0xff] %vm3466, %v3362
      %3492 = vst.msk [vmem:[#allocation2 + $0xc8] sm:$0xff] %vm3466, %v3363
      %3493 = vst.msk [vmem:[#allocation2 + $0xd0] sm:$0xff] %vm3466, %v3364
      %3494 = vst.msk [vmem:[#allocation2 + $0xd8] sm:$0xff] %vm3466, %v3365
      %3495 = vst.msk [vmem:[#allocation2 + $0xe0] sm:$0xff] %vm3466, %v3366
      %3496 = vst.msk [vmem:[#allocation2 + $0xe8] sm:$0xff] %vm3466, %v3367
      %3497 = vst.msk [vmem:[#allocation2 + $0xf0] sm:$0xff] %vm3466, %v3368
      %3498 = vst.msk [vmem:[#allocation2 + $0xf8] sm:$0xff] %vm3466, %v3369
      %3499 = vst.msk [vmem:[#allocation2 + $0x100] sm:$0xff] %vm3466, %v3370
      %3500 = vst.msk [vmem:[#allocation2 + $0x108] sm:$0xff] %vm3466, %v3371
      %3501 = vst.msk [vmem:[#allocation2 + $0x110] sm:$0xff] %vm3466, %v3372
      %3502 = vst.msk [vmem:[#allocation2 + $0x118] sm:$0xff] %vm3466, %v3373
      %3503 = vst.msk [vmem:[#allocation2 + $0x120] sm:$0xff] %vm3466, %v3374
      %3504 = vst.msk [vmem:[#allocation2 + $0x128] sm:$0xff] %vm3466, %v3375
      %3505 = vst.msk [vmem:[#allocation2 + $0x130] sm:$0xff] %vm3466, %v3376
      %3506 = vst.msk [vmem:[#allocation2 + $0x138] sm:$0xff] %vm3466, %v3377
      %3507 = vst.msk [vmem:[#allocation2 + $0x140] sm:$0xff] %vm3466, %v3378
      %3508 = vst.msk [vmem:[#allocation2 + $0x148] sm:$0xff] %vm3466, %v3379
      %3509 = vst.msk [vmem:[#allocation2 + $0x150] sm:$0xff] %vm3466, %v3380
      %3510 = vst.msk [vmem:[#allocation2 + $0x158] sm:$0xff] %vm3466, %v3381
      %3511 = vst.msk [vmem:[#allocation2 + $0x160] sm:$0xff] %vm3466, %v3382
      %3512 = vst.msk [vmem:[#allocation2 + $0x168] sm:$0xff] %vm3466, %v3383
      %3513 = vst.msk [vmem:[#allocation2 + $0x170] sm:$0xff] %vm3466, %v3384
      %3514 = vst.msk [vmem:[#allocation2 + $0x178] sm:$0xff] %vm3466, %v3385
      %3515 = vst.msk [vmem:[#allocation2 + $0x180] sm:$0xff] %vm3466, %v3386
      %3516 = vst.msk [vmem:[#allocation2 + $0x188] sm:$0xff] %vm3466, %v3387
      %3517 = vst.msk [vmem:[#allocation2 + $0x190] sm:$0xff] %vm3466, %v3388
      %3518 = vst.msk [vmem:[#allocation2 + $0x198] sm:$0xff] %vm3466, %v3389
      %3519 = vst.msk [vmem:[#allocation2 + $0x1a0] sm:$0xff] %vm3466, %v3390
      %3520 = vst.msk [vmem:[#allocation2 + $0x1a8] sm:$0xff] %vm3466, %v3391
      %3521 = vst.msk [vmem:[#allocation2 + $0x1b0] sm:$0xff] %vm3466, %v3392
      %3522 = vst.msk [vmem:[#allocation2 + $0x1b8] sm:$0xff] %vm3466, %v3393
      %3523 = vst.msk [vmem:[#allocation2 + $0x1c0] sm:$0xff] %vm3466, %v3394
      %3524 = vst.msk [vmem:[#allocation2 + $0x1c8] sm:$0xff] %vm3466, %v3395
      %3525 = vst.msk [vmem:[#allocation2 + $0x1d0] sm:$0xff] %vm3466, %v3396
      %3526 = vst.msk [vmem:[#allocation2 + $0x1d8] sm:$0xff] %vm3466, %v3397
      %3527 = vst.msk [vmem:[#allocation2 + $0x1e0] sm:$0xff] %vm3466, %v3398
      %3528 = vst.msk [vmem:[#allocation2 + $0x1e8] sm:$0xff] %vm3466, %v3399
      %3529 = vst.msk [vmem:[#allocation2 + $0x1f0] sm:$0xff] %vm3466, %v3400
      %3530 = vst.msk [vmem:[#allocation2 + $0x1f8] sm:$0xff] %vm3466, %v3401
      %3531 = vst.msk [vmem:[#allocation2 + $0x200] sm:$0xff] %vm3466, %v3402
      %3532 = vst.msk [vmem:[#allocation2 + $0x208] sm:$0xff] %vm3466, %v3403
      %3533 = vst.msk [vmem:[#allocation2 + $0x210] sm:$0xff] %vm3466, %v3404
      %3534 = vst.msk [vmem:[#allocation2 + $0x218] sm:$0xff] %vm3466, %v3405
      %3535 = vst.msk [vmem:[#allocation2 + $0x220] sm:$0xff] %vm3466, %v3406
      %3536 = vst.msk [vmem:[#allocation2 + $0x228] sm:$0xff] %vm3466, %v3407
      %3537 = vst.msk [vmem:[#allocation2 + $0x230] sm:$0xff] %vm3466, %v3408
      %3538 = vst.msk [vmem:[#allocation2 + $0x238] sm:$0xff] %vm3466, %v3409
      %3539 = vst.msk [vmem:[#allocation2 + $0x240] sm:$0xff] %vm3466, %v3410
      %3540 = vst.msk [vmem:[#allocation2 + $0x248] sm:$0xff] %vm3466, %v3411
      %3541 = vst.msk [vmem:[#allocation2 + $0x250] sm:$0xff] %vm3466, %v3412
      %3542 = vst.msk [vmem:[#allocation2 + $0x258] sm:$0xff] %vm3466, %v3413
      %3543 = vst.msk [vmem:[#allocation2 + $0x260] sm:$0xff] %vm3466, %v3414
      %3544 = vst.msk [vmem:[#allocation2 + $0x268] sm:$0xff] %vm3466, %v3415
      %3545 = vst.msk [vmem:[#allocation2 + $0x270] sm:$0xff] %vm3466, %v3416
      %3546 = vst.msk [vmem:[#allocation2 + $0x278] sm:$0xff] %vm3466, %v3417
      %3547 = vst.msk [vmem:[#allocation2 + $0x280] sm:$0xff] %vm3466, %v3418
      %3548 = vst.msk [vmem:[#allocation2 + $0x288] sm:$0xff] %vm3466, %v3419
      %3549 = vst.msk [vmem:[#allocation2 + $0x290] sm:$0xff] %vm3466, %v3420
      %3550 = vst.msk [vmem:[#allocation2 + $0x298] sm:$0xff] %vm3466, %v3421
      %3551 = vst.msk [vmem:[#allocation2 + $0x2a0] sm:$0xff] %vm3466, %v3422
      %3552 = vst.msk [vmem:[#allocation2 + $0x2a8] sm:$0xff] %vm3466, %v3423
      %3553 = vst.msk [vmem:[#allocation2 + $0x2b0] sm:$0xff] %vm3466, %v3424
      %3554 = vst.msk [vmem:[#allocation2 + $0x2b8] sm:$0xff] %vm3466, %v3425
      %3555 = vst.msk [vmem:[#allocation2 + $0x2c0] sm:$0xff] %vm3466, %v3426
      %3556 = vst.msk [vmem:[#allocation2 + $0x2c8] sm:$0xff] %vm3466, %v3427
      %3557 = vst.msk [vmem:[#allocation2 + $0x2d0] sm:$0xff] %vm3466, %v3428
      %3558 = vst.msk [vmem:[#allocation2 + $0x2d8] sm:$0xff] %vm3466, %v3429
      %3559 = vst.msk [vmem:[#allocation2 + $0x2e0] sm:$0xff] %vm3466, %v3430
      %3560 = vst.msk [vmem:[#allocation2 + $0x2e8] sm:$0xff] %vm3466, %v3431
      %3561 = vst.msk [vmem:[#allocation2 + $0x2f0] sm:$0xff] %vm3466, %v3432
      %3562 = vst.msk [vmem:[#allocation2 + $0x2f8] sm:$0xff] %vm3466, %v3433
      %3563 = vst.msk [vmem:[#allocation2 + $0x300] sm:$0xff] %vm3466, %v3434
      %3564 = vst.msk [vmem:[#allocation2 + $0x308] sm:$0xff] %vm3466, %v3435
      %3565 = vst.msk [vmem:[#allocation2 + $0x310] sm:$0xff] %vm3466, %v3436
      %3566 = vst.msk [vmem:[#allocation2 + $0x318] sm:$0xff] %vm3466, %v3437
      %3567 = vst.msk [vmem:[#allocation2 + $0x320] sm:$0xff] %vm3466, %v3438
      %3568 = vst.msk [vmem:[#allocation2 + $0x328] sm:$0xff] %vm3466, %v3439
      %3569 = vst.msk [vmem:[#allocation2 + $0x330] sm:$0xff] %vm3466, %v3440
      %3570 = vst.msk [vmem:[#allocation2 + $0x338] sm:$0xff] %vm3466, %v3441
      %3571 = vst.msk [vmem:[#allocation2 + $0x340] sm:$0xff] %vm3466, %v3442
      %3572 = vst.msk [vmem:[#allocation2 + $0x348] sm:$0xff] %vm3466, %v3443
      %3573 = vst.msk [vmem:[#allocation2 + $0x350] sm:$0xff] %vm3466, %v3444
      %3574 = vst.msk [vmem:[#allocation2 + $0x358] sm:$0xff] %vm3466, %v3445
      %3575 = vst.msk [vmem:[#allocation2 + $0x360] sm:$0xff] %vm3466, %v3446
      %3576 = vst.msk [vmem:[#allocation2 + $0x368] sm:$0xff] %vm3466, %v3447
      %3577 = vst.msk [vmem:[#allocation2 + $0x370] sm:$0xff] %vm3466, %v3448
      %3578 = vst.msk [vmem:[#allocation2 + $0x378] sm:$0xff] %vm3466, %v3449
      %3579 = vst.msk [vmem:[#allocation2 + $0x380] sm:$0xff] %vm3466, %v3450
      %3580 = vst.msk [vmem:[#allocation2 + $0x388] sm:$0xff] %vm3466, %v3451
      %3581 = vst.msk [vmem:[#allocation2 + $0x390] sm:$0xff] %vm3466, %v3452
      %3582 = vst.msk [vmem:[#allocation2 + $0x398] sm:$0xff] %vm3466, %v3453
      %3583 = vst.msk [vmem:[#allocation2 + $0x3a0] sm:$0xff] %vm3466, %v3454
      %3584 = vst.msk [vmem:[#allocation2 + $0x3a8] sm:$0xff] %vm3466, %v3455
      %3585 = vst.msk [vmem:[#allocation2 + $0x3b0] sm:$0xff] %vm3466, %v3456
      %3586 = vst.msk [vmem:[#allocation2 + $0x3b8] sm:$0xff] %vm3466, %v3457
      %3587 = vst.msk [vmem:[#allocation2 + $0x3c0] sm:$0xff] %vm3466, %v3458
      %3588 = vst.msk [vmem:[#allocation2 + $0x3c8] sm:$0xff] %vm3466, %v3459
      %3589 = vst.msk [vmem:[#allocation2 + $0x3d0] sm:$0xff] %vm3466, %v3460
      %3590 = vst.msk [vmem:[#allocation2 + $0x3d8] sm:$0xff] %vm3466, %v3461
      %3591 = vst.msk [vmem:[#allocation2 + $0x3e0] sm:$0xff] %vm3466, %v3462
      %3592 = vst.msk [vmem:[#allocation2 + $0x3e8] sm:$0xff] %vm3466, %v3463
      %3593 = vst.msk [vmem:[#allocation2 + $0x3f0] sm:$0xff] %vm3466, %v3464
      %3594 = vst.msk [vmem:[#allocation2 + $0x3f8] sm:$0xff] %vm3466, %v3465
      %3595 = vst.msk [vmem:[#allocation3] sm:$0xff] %vm3466, 0.0
      %vm3596 = vcmask 123904
      %3597 = vst.msk [vmem:[#allocation3 + $0x8] sm:$0x3] %vm3596, 0.0
      %3598 = vst.msk [vmem:[#allocation3 + $0xa0] sm:$0xff] %vm3466, 0.0
      %3599 = vst.msk [vmem:[#allocation3 + $0xa8] sm:$0x3] %vm3596, 0.0
      %3600 = vst.msk [vmem:[#allocation3 + $0x140] sm:$0xff] %vm3466, 0.0
      %3601 = vst.msk [vmem:[#allocation3 + $0x148] sm:$0x3] %vm3596, 0.0
      %3602 = vst.msk [vmem:[#allocation3 + $0x1e0] sm:$0xff] %vm3466, 0.0
      %3603 = vst.msk [vmem:[#allocation3 + $0x1e8] sm:$0x3] %vm3596, 0.0
      %3604 = vst.msk [vmem:[#allocation3 + $0x280] sm:$0xff] %vm3466, 0.0
      %3605 = vst.msk [vmem:[#allocation3 + $0x288] sm:$0x3] %vm3596, 0.0
      %3606 = vst.msk [vmem:[#allocation3 + $0x320] sm:$0xff] %vm3466, 0.0
      %3607 = vst.msk [vmem:[#allocation3 + $0x328] sm:$0x3] %vm3596, 0.0
      %3608 = vst.msk [vmem:[#allocation3 + $0x3c0] sm:$0xff] %vm3466, 0.0
      %3609 = vst.msk [vmem:[#allocation3 + $0x3c8] sm:$0x3] %vm3596, 0.0
      %3610 = vst.msk [vmem:[#allocation3 + $0x460] sm:$0xff] %vm3466, 0.0
      %3611 = vst.msk [vmem:[#allocation3 + $0x468] sm:$0x3] %vm3596, 0.0
      %s3612 = scalar_lea.vmem [#allocation3], 144
      %3613 = vst.msk [vmem:[%s3612] sm:$0xff] %vm3466, 0.0
      %3614 = vst.msk [vmem:[%s3612 + $0x8] sm:$0x3] %vm3596, 0.0
      %3615 = vst.msk [vmem:[%s3612 + $0xa0] sm:$0xff] %vm3466, 0.0
      %3616 = vst.msk [vmem:[%s3612 + $0xa8] sm:$0x3] %vm3596, 0.0
      %3617 = vst.msk [vmem:[%s3612 + $0x140] sm:$0xff] %vm3466, 0.0
      %3618 = vst.msk [vmem:[%s3612 + $0x148] sm:$0x3] %vm3596, 0.0
      %3619 = vst.msk [vmem:[%s3612 + $0x1e0] sm:$0xff] %vm3466, 0.0
      %3620 = vst.msk [vmem:[%s3612 + $0x1e8] sm:$0x3] %vm3596, 0.0
      %3621 = vst.msk [vmem:[%s3612 + $0x280] sm:$0xff] %vm3466, 0.0
      %3622 = vst.msk [vmem:[%s3612 + $0x288] sm:$0x3] %vm3596, 0.0
      %3623 = vst.msk [vmem:[%s3612 + $0x320] sm:$0xff] %vm3466, 0.0
      %3624 = vst.msk [vmem:[%s3612 + $0x328] sm:$0x3] %vm3596, 0.0
      %3625 = vst.msk [vmem:[%s3612 + $0x3c0] sm:$0xff] %vm3466, 0.0
      %3626 = vst.msk [vmem:[%s3612 + $0x3c8] sm:$0x3] %vm3596, 0.0
      %3627 = vst.msk [vmem:[%s3612 + $0x460] sm:$0xff] %vm3466, 0.0
      %3628 = vst.msk [vmem:[%s3612 + $0x468] sm:$0x3] %vm3596, 0.0
      %vm3629 = vcmask 122880
      %3630 = vst.msk [vmem:[#allocation3] sm:$0x1] %vm3629, 0.0
      %3631 = vst.msk [vmem:[#allocation3 + $0x10] sm:$0x1] %vm3629, 0.0
      %3632 = vst.msk [vmem:[#allocation3 + $0x20] sm:$0x1] %vm3629, 0.0
      %3633 = vst.msk [vmem:[#allocation3 + $0x30] sm:$0x1] %vm3629, 0.0
      %3634 = vst.msk [vmem:[#allocation3 + $0x40] sm:$0x1] %vm3629, 0.0
      %3635 = vst.msk [vmem:[#allocation3 + $0x50] sm:$0x1] %vm3629, 0.0
      %3636 = vst.msk [vmem:[#allocation3 + $0x60] sm:$0x1] %vm3629, 0.0
      %3637 = vst.msk [vmem:[#allocation3 + $0x70] sm:$0x1] %vm3629, 0.0
      %3638 = vst.msk [vmem:[#allocation3 + $0x80] sm:$0x1] %vm3629, 0.0
      %3639 = vst.msk [vmem:[#allocation3 + $0x90] sm:$0x1] %vm3629, 0.0
      %3640 = vst.msk [vmem:[#allocation3 + $0xa0] sm:$0x1] %vm3629, 0.0
      %3641 = vst.msk [vmem:[#allocation3 + $0xb0] sm:$0x1] %vm3629, 0.0
      %3642 = vst.msk [vmem:[#allocation3 + $0xc0] sm:$0x1] %vm3629, 0.0
      %3643 = vst.msk [vmem:[#allocation3 + $0xd0] sm:$0x1] %vm3629, 0.0
      %3644 = vst.msk [vmem:[#allocation3 + $0xe0] sm:$0x1] %vm3629, 0.0
      %3645 = vst.msk [vmem:[#allocation3 + $0xf0] sm:$0x1] %vm3629, 0.0
      %3646 = vst.msk [vmem:[#allocation3 + $0x100] sm:$0x1] %vm3629, 0.0
      %3647 = vst.msk [vmem:[#allocation3 + $0x110] sm:$0x1] %vm3629, 0.0
      %3648 = vst.msk [vmem:[#allocation3 + $0x120] sm:$0x1] %vm3629, 0.0
      %3649 = vst.msk [vmem:[#allocation3 + $0x130] sm:$0x1] %vm3629, 0.0
      %3650 = vst.msk [vmem:[#allocation3 + $0x140] sm:$0x1] %vm3629, 0.0
      %3651 = vst.msk [vmem:[#allocation3 + $0x150] sm:$0x1] %vm3629, 0.0
      %3652 = vst.msk [vmem:[#allocation3 + $0x160] sm:$0x1] %vm3629, 0.0
      %3653 = vst.msk [vmem:[#allocation3 + $0x170] sm:$0x1] %vm3629, 0.0
      %3654 = vst.msk [vmem:[#allocation3 + $0x180] sm:$0x1] %vm3629, 0.0
      %3655 = vst.msk [vmem:[#allocation3 + $0x190] sm:$0x1] %vm3629, 0.0
      %3656 = vst.msk [vmem:[#allocation3 + $0x1a0] sm:$0x1] %vm3629, 0.0
      %3657 = vst.msk [vmem:[#allocation3 + $0x1b0] sm:$0x1] %vm3629, 0.0
      %3658 = vst.msk [vmem:[#allocation3 + $0x1c0] sm:$0x1] %vm3629, 0.0
      %3659 = vst.msk [vmem:[#allocation3 + $0x1d0] sm:$0x1] %vm3629, 0.0
      %3660 = vst.msk [vmem:[#allocation3 + $0x1e0] sm:$0x1] %vm3629, 0.0
      %3661 = vst.msk [vmem:[#allocation3 + $0x1f0] sm:$0x1] %vm3629, 0.0
      %3662 = vst.msk [vmem:[#allocation3 + $0x200] sm:$0x1] %vm3629, 0.0
      %3663 = vst.msk [vmem:[#allocation3 + $0x210] sm:$0x1] %vm3629, 0.0
      %3664 = vst.msk [vmem:[#allocation3 + $0x220] sm:$0x1] %vm3629, 0.0
      %3665 = vst.msk [vmem:[#allocation3 + $0x230] sm:$0x1] %vm3629, 0.0
      %3666 = vst.msk [vmem:[#allocation3 + $0x240] sm:$0x1] %vm3629, 0.0
      %3667 = vst.msk [vmem:[#allocation3 + $0x250] sm:$0x1] %vm3629, 0.0
      %3668 = vst.msk [vmem:[#allocation3 + $0x260] sm:$0x1] %vm3629, 0.0
      %3669 = vst.msk [vmem:[#allocation3 + $0x270] sm:$0x1] %vm3629, 0.0
      %3670 = vst.msk [vmem:[#allocation3 + $0x280] sm:$0x1] %vm3629, 0.0
      %3671 = vst.msk [vmem:[#allocation3 + $0x290] sm:$0x1] %vm3629, 0.0
      %3672 = vst.msk [vmem:[#allocation3 + $0x2a0] sm:$0x1] %vm3629, 0.0
      %3673 = vst.msk [vmem:[#allocation3 + $0x2b0] sm:$0x1] %vm3629, 0.0
      %3674 = vst.msk [vmem:[#allocation3 + $0x2c0] sm:$0x1] %vm3629, 0.0
      %3675 = vst.msk [vmem:[#allocation3 + $0x2d0] sm:$0x1] %vm3629, 0.0
      %3676 = vst.msk [vmem:[#allocation3 + $0x2e0] sm:$0x1] %vm3629, 0.0
      %3677 = vst.msk [vmem:[#allocation3 + $0x2f0] sm:$0x1] %vm3629, 0.0
      %3678 = vst.msk [vmem:[#allocation3 + $0x300] sm:$0x1] %vm3629, 0.0
      %3679 = vst.msk [vmem:[#allocation3 + $0x310] sm:$0x1] %vm3629, 0.0
      %3680 = vst.msk [vmem:[#allocation3 + $0x320] sm:$0x1] %vm3629, 0.0
      %3681 = vst.msk [vmem:[#allocation3 + $0x330] sm:$0x1] %vm3629, 0.0
      %3682 = vst.msk [vmem:[#allocation3 + $0x340] sm:$0x1] %vm3629, 0.0
      %3683 = vst.msk [vmem:[#allocation3 + $0x350] sm:$0x1] %vm3629, 0.0
      %3684 = vst.msk [vmem:[#allocation3 + $0x360] sm:$0x1] %vm3629, 0.0
      %3685 = vst.msk [vmem:[#allocation3 + $0x370] sm:$0x1] %vm3629, 0.0
      %3686 = vst.msk [vmem:[#allocation3 + $0x380] sm:$0x1] %vm3629, 0.0
      %3687 = vst.msk [vmem:[#allocation3 + $0x390] sm:$0x1] %vm3629, 0.0
      %3688 = vst.msk [vmem:[#allocation3 + $0x3a0] sm:$0x1] %vm3629, 0.0
      %3689 = vst.msk [vmem:[#allocation3 + $0x3b0] sm:$0x1] %vm3629, 0.0
      %3690 = vst.msk [vmem:[#allocation3 + $0x3c0] sm:$0x1] %vm3629, 0.0
      %3691 = vst.msk [vmem:[#allocation3 + $0x3d0] sm:$0x1] %vm3629, 0.0
      %3692 = vst.msk [vmem:[#allocation3 + $0x3e0] sm:$0x1] %vm3629, 0.0
      %3693 = vst.msk [vmem:[#allocation3 + $0x3f0] sm:$0x1] %vm3629, 0.0
      %3694 = vst.msk [vmem:[#allocation3 + $0x400] sm:$0x1] %vm3629, 0.0
      %3695 = vst.msk [vmem:[#allocation3 + $0x410] sm:$0x1] %vm3629, 0.0
      %3696 = vst.msk [vmem:[#allocation3 + $0x420] sm:$0x1] %vm3629, 0.0
      %3697 = vst.msk [vmem:[#allocation3 + $0x430] sm:$0x1] %vm3629, 0.0
      %3698 = vst.msk [vmem:[#allocation3 + $0x440] sm:$0x1] %vm3629, 0.0
      %3699 = vst.msk [vmem:[#allocation3 + $0x450] sm:$0x1] %vm3629, 0.0
      %3700 = vst.msk [vmem:[#allocation3 + $0x460] sm:$0x1] %vm3629, 0.0
      %3701 = vst.msk [vmem:[#allocation3 + $0x470] sm:$0x1] %vm3629, 0.0
      %3702 = vst.msk [vmem:[#allocation3 + $0x480] sm:$0x1] %vm3629, 0.0
      %3703 = vst.msk [vmem:[#allocation3 + $0x490] sm:$0x1] %vm3629, 0.0
      %3704 = vst.msk [vmem:[#allocation3 + $0x4a0] sm:$0x1] %vm3629, 0.0
      %3705 = vst.msk [vmem:[#allocation3 + $0x4b0] sm:$0x1] %vm3629, 0.0
      %3706 = vst.msk [vmem:[#allocation3 + $0x4c0] sm:$0x1] %vm3629, 0.0
      %3707 = vst.msk [vmem:[#allocation3 + $0x4d0] sm:$0x1] %vm3629, 0.0
      %3708 = vst.msk [vmem:[#allocation3 + $0x4e0] sm:$0x1] %vm3629, 0.0
      %3709 = vst.msk [vmem:[#allocation3 + $0x4f0] sm:$0x1] %vm3629, 0.0
      %3710 = vst.msk [vmem:[#allocation3 + $0x9] sm:$0x1] %vm3629, 0.0
      %3711 = vst.msk [vmem:[#allocation3 + $0x19] sm:$0x1] %vm3629, 0.0
      %3712 = vst.msk [vmem:[#allocation3 + $0x29] sm:$0x1] %vm3629, 0.0
      %3713 = vst.msk [vmem:[#allocation3 + $0x39] sm:$0x1] %vm3629, 0.0
      %3714 = vst.msk [vmem:[#allocation3 + $0x49] sm:$0x1] %vm3629, 0.0
      %3715 = vst.msk [vmem:[#allocation3 + $0x59] sm:$0x1] %vm3629, 0.0
      %3716 = vst.msk [vmem:[#allocation3 + $0x69] sm:$0x1] %vm3629, 0.0
      %3717 = vst.msk [vmem:[#allocation3 + $0x79] sm:$0x1] %vm3629, 0.0
      %3718 = vst.msk [vmem:[#allocation3 + $0x89] sm:$0x1] %vm3629, 0.0
      %3719 = vst.msk [vmem:[#allocation3 + $0x99] sm:$0x1] %vm3629, 0.0
      %3720 = vst.msk [vmem:[#allocation3 + $0xa9] sm:$0x1] %vm3629, 0.0
      %3721 = vst.msk [vmem:[#allocation3 + $0xb9] sm:$0x1] %vm3629, 0.0
      %3722 = vst.msk [vmem:[#allocation3 + $0xc9] sm:$0x1] %vm3629, 0.0
      %3723 = vst.msk [vmem:[#allocation3 + $0xd9] sm:$0x1] %vm3629, 0.0
      %3724 = vst.msk [vmem:[#allocation3 + $0xe9] sm:$0x1] %vm3629, 0.0
      %3725 = vst.msk [vmem:[#allocation3 + $0xf9] sm:$0x1] %vm3629, 0.0
      %3726 = vst.msk [vmem:[#allocation3 + $0x109] sm:$0x1] %vm3629, 0.0
      %3727 = vst.msk [vmem:[#allocation3 + $0x119] sm:$0x1] %vm3629, 0.0
      %3728 = vst.msk [vmem:[#allocation3 + $0x129] sm:$0x1] %vm3629, 0.0
      %3729 = vst.msk [vmem:[#allocation3 + $0x139] sm:$0x1] %vm3629, 0.0
      %3730 = vst.msk [vmem:[#allocation3 + $0x149] sm:$0x1] %vm3629, 0.0
      %3731 = vst.msk [vmem:[#allocation3 + $0x159] sm:$0x1] %vm3629, 0.0
      %3732 = vst.msk [vmem:[#allocation3 + $0x169] sm:$0x1] %vm3629, 0.0
      %3733 = vst.msk [vmem:[#allocation3 + $0x179] sm:$0x1] %vm3629, 0.0
      %3734 = vst.msk [vmem:[#allocation3 + $0x189] sm:$0x1] %vm3629, 0.0
      %3735 = vst.msk [vmem:[#allocation3 + $0x199] sm:$0x1] %vm3629, 0.0
      %3736 = vst.msk [vmem:[#allocation3 + $0x1a9] sm:$0x1] %vm3629, 0.0
      %3737 = vst.msk [vmem:[#allocation3 + $0x1b9] sm:$0x1] %vm3629, 0.0
      %3738 = vst.msk [vmem:[#allocation3 + $0x1c9] sm:$0x1] %vm3629, 0.0
      %3739 = vst.msk [vmem:[#allocation3 + $0x1d9] sm:$0x1] %vm3629, 0.0
      %3740 = vst.msk [vmem:[#allocation3 + $0x1e9] sm:$0x1] %vm3629, 0.0
      %3741 = vst.msk [vmem:[#allocation3 + $0x1f9] sm:$0x1] %vm3629, 0.0
      %3742 = vst.msk [vmem:[#allocation3 + $0x209] sm:$0x1] %vm3629, 0.0
      %3743 = vst.msk [vmem:[#allocation3 + $0x219] sm:$0x1] %vm3629, 0.0
      %3744 = vst.msk [vmem:[#allocation3 + $0x229] sm:$0x1] %vm3629, 0.0
      %3745 = vst.msk [vmem:[#allocation3 + $0x239] sm:$0x1] %vm3629, 0.0
      %3746 = vst.msk [vmem:[#allocation3 + $0x249] sm:$0x1] %vm3629, 0.0
      %3747 = vst.msk [vmem:[#allocation3 + $0x259] sm:$0x1] %vm3629, 0.0
      %3748 = vst.msk [vmem:[#allocation3 + $0x269] sm:$0x1] %vm3629, 0.0
      %3749 = vst.msk [vmem:[#allocation3 + $0x279] sm:$0x1] %vm3629, 0.0
      %3750 = vst.msk [vmem:[#allocation3 + $0x289] sm:$0x1] %vm3629, 0.0
      %3751 = vst.msk [vmem:[#allocation3 + $0x299] sm:$0x1] %vm3629, 0.0
      %3752 = vst.msk [vmem:[#allocation3 + $0x2a9] sm:$0x1] %vm3629, 0.0
      %3753 = vst.msk [vmem:[#allocation3 + $0x2b9] sm:$0x1] %vm3629, 0.0
      %3754 = vst.msk [vmem:[#allocation3 + $0x2c9] sm:$0x1] %vm3629, 0.0
      %3755 = vst.msk [vmem:[#allocation3 + $0x2d9] sm:$0x1] %vm3629, 0.0
      %3756 = vst.msk [vmem:[#allocation3 + $0x2e9] sm:$0x1] %vm3629, 0.0
      %3757 = vst.msk [vmem:[#allocation3 + $0x2f9] sm:$0x1] %vm3629, 0.0
      %3758 = vst.msk [vmem:[#allocation3 + $0x309] sm:$0x1] %vm3629, 0.0
      %3759 = vst.msk [vmem:[#allocation3 + $0x319] sm:$0x1] %vm3629, 0.0
      %3760 = vst.msk [vmem:[#allocation3 + $0x329] sm:$0x1] %vm3629, 0.0
      %3761 = vst.msk [vmem:[#allocation3 + $0x339] sm:$0x1] %vm3629, 0.0
      %3762 = vst.msk [vmem:[#allocation3 + $0x349] sm:$0x1] %vm3629, 0.0
      %3763 = vst.msk [vmem:[#allocation3 + $0x359] sm:$0x1] %vm3629, 0.0
      %3764 = vst.msk [vmem:[#allocation3 + $0x369] sm:$0x1] %vm3629, 0.0
      %3765 = vst.msk [vmem:[#allocation3 + $0x379] sm:$0x1] %vm3629, 0.0
      %3766 = vst.msk [vmem:[#allocation3 + $0x389] sm:$0x1] %vm3629, 0.0
      %3767 = vst.msk [vmem:[#allocation3 + $0x399] sm:$0x1] %vm3629, 0.0
      %3768 = vst.msk [vmem:[#allocation3 + $0x3a9] sm:$0x1] %vm3629, 0.0
      %3769 = vst.msk [vmem:[#allocation3 + $0x3b9] sm:$0x1] %vm3629, 0.0
      %3770 = vst.msk [vmem:[#allocation3 + $0x3c9] sm:$0x1] %vm3629, 0.0
      %3771 = vst.msk [vmem:[#allocation3 + $0x3d9] sm:$0x1] %vm3629, 0.0
      %3772 = vst.msk [vmem:[#allocation3 + $0x3e9] sm:$0x1] %vm3629, 0.0
      %3773 = vst.msk [vmem:[#allocation3 + $0x3f9] sm:$0x1] %vm3629, 0.0
      %3774 = vst.msk [vmem:[#allocation3 + $0x409] sm:$0x1] %vm3629, 0.0
      %3775 = vst.msk [vmem:[#allocation3 + $0x419] sm:$0x1] %vm3629, 0.0
      %3776 = vst.msk [vmem:[#allocation3 + $0x429] sm:$0x1] %vm3629, 0.0
      %3777 = vst.msk [vmem:[#allocation3 + $0x439] sm:$0x1] %vm3629, 0.0
      %3778 = vst.msk [vmem:[#allocation3 + $0x449] sm:$0x1] %vm3629, 0.0
      %3779 = vst.msk [vmem:[#allocation3 + $0x459] sm:$0x1] %vm3629, 0.0
      %3780 = vst.msk [vmem:[#allocation3 + $0x469] sm:$0x1] %vm3629, 0.0
      %3781 = vst.msk [vmem:[#allocation3 + $0x479] sm:$0x1] %vm3629, 0.0
      %3782 = vst.msk [vmem:[#allocation3 + $0x489] sm:$0x1] %vm3629, 0.0
      %3783 = vst.msk [vmem:[#allocation3 + $0x499] sm:$0x1] %vm3629, 0.0
      %3784 = vst.msk [vmem:[#allocation3 + $0x4a9] sm:$0x1] %vm3629, 0.0
      %3785 = vst.msk [vmem:[#allocation3 + $0x4b9] sm:$0x1] %vm3629, 0.0
      %3786 = vst.msk [vmem:[#allocation3 + $0x4c9] sm:$0x1] %vm3629, 0.0
      %3787 = vst.msk [vmem:[#allocation3 + $0x4d9] sm:$0x1] %vm3629, 0.0
      %3788 = vst.msk [vmem:[#allocation3 + $0x4e9] sm:$0x1] %vm3629, 0.0
      %3789 = vst.msk [vmem:[#allocation3 + $0x4f9] sm:$0x1] %vm3629, 0.0
      %v3790 = vld [vmem:[#allocation2] ss:$2 sm:$0xff]
      %s3791 = scalar_lea.vmem [#allocation2], 16
      %v3792 = vld [vmem:[%s3791] ss:$2 sm:$0xff]
      %s3793 = scalar_lea.vmem [#allocation2], 32
      %v3794 = vld [vmem:[%s3793] ss:$2 sm:$0xff]
      %s3795 = scalar_lea.vmem [#allocation2], 48
      %v3796 = vld [vmem:[%s3795] ss:$2 sm:$0xff]
      %s3797 = scalar_lea.vmem [#allocation2], 64
      %v3798 = vld [vmem:[%s3797] ss:$2 sm:$0xff]
      %s3799 = scalar_lea.vmem [#allocation2], 80
      %v3800 = vld [vmem:[%s3799] ss:$2 sm:$0xff]
      %s3801 = scalar_lea.vmem [#allocation2], 96
      %v3802 = vld [vmem:[%s3801] ss:$2 sm:$0xff]
      %s3803 = scalar_lea.vmem [#allocation2], 112
      %v3804 = vld [vmem:[%s3803] ss:$2 sm:$0xff]
      %s3805 = scalar_lea.vmem [#allocation2], 128
      %v3806 = vld [vmem:[%s3805] ss:$2 sm:$0xff]
      %s3807 = scalar_lea.vmem [#allocation2], 144
      %v3808 = vld [vmem:[%s3807] ss:$2 sm:$0xff]
      %s3809 = scalar_lea.vmem [#allocation2], 160
      %v3810 = vld [vmem:[%s3809] ss:$2 sm:$0xff]
      %s3811 = scalar_lea.vmem [#allocation2], 176
      %v3812 = vld [vmem:[%s3811] ss:$2 sm:$0xff]
      %s3813 = scalar_lea.vmem [#allocation2], 192
      %v3814 = vld [vmem:[%s3813] ss:$2 sm:$0xff]
      %s3815 = scalar_lea.vmem [#allocation2], 208
      %v3816 = vld [vmem:[%s3815] ss:$2 sm:$0xff]
      %s3817 = scalar_lea.vmem [#allocation2], 224
      %v3818 = vld [vmem:[%s3817] ss:$2 sm:$0xff]
      %s3819 = scalar_lea.vmem [#allocation2], 240
      %v3820 = vld [vmem:[%s3819] ss:$2 sm:$0xff]
      %s3821 = scalar_lea.vmem [#allocation2], 256
      %v3822 = vld [vmem:[%s3821] ss:$2 sm:$0xff]
      %s3823 = scalar_lea.vmem [#allocation2], 272
      %v3824 = vld [vmem:[%s3823] ss:$2 sm:$0xff]
      %s3825 = scalar_lea.vmem [#allocation2], 288
      %v3826 = vld [vmem:[%s3825] ss:$2 sm:$0xff]
      %s3827 = scalar_lea.vmem [#allocation2], 304
      %v3828 = vld [vmem:[%s3827] ss:$2 sm:$0xff]
      %s3829 = scalar_lea.vmem [#allocation2], 320
      %v3830 = vld [vmem:[%s3829] ss:$2 sm:$0xff]
      %s3831 = scalar_lea.vmem [#allocation2], 336
      %v3832 = vld [vmem:[%s3831] ss:$2 sm:$0xff]
      %s3833 = scalar_lea.vmem [#allocation2], 352
      %v3834 = vld [vmem:[%s3833] ss:$2 sm:$0xff]
      %s3835 = scalar_lea.vmem [#allocation2], 368
      %v3836 = vld [vmem:[%s3835] ss:$2 sm:$0xff]
      %s3837 = scalar_lea.vmem [#allocation2], 384
      %v3838 = vld [vmem:[%s3837] ss:$2 sm:$0xff]
      %s3839 = scalar_lea.vmem [#allocation2], 400
      %v3840 = vld [vmem:[%s3839] ss:$2 sm:$0xff]
      %s3841 = scalar_lea.vmem [#allocation2], 416
      %v3842 = vld [vmem:[%s3841] ss:$2 sm:$0xff]
      %s3843 = scalar_lea.vmem [#allocation2], 432
      %v3844 = vld [vmem:[%s3843] ss:$2 sm:$0xff]
      %s3845 = scalar_lea.vmem [#allocation2], 448
      %v3846 = vld [vmem:[%s3845] ss:$2 sm:$0xff]
      %s3847 = scalar_lea.vmem [#allocation2], 464
      %v3848 = vld [vmem:[%s3847] ss:$2 sm:$0xff]
      %s3849 = scalar_lea.vmem [#allocation2], 480
      %v3850 = vld [vmem:[%s3849] ss:$2 sm:$0xff]
      %s3851 = scalar_lea.vmem [#allocation2], 496
      %v3852 = vld [vmem:[%s3851] ss:$2 sm:$0xff]
      %s3853 = scalar_lea.vmem [#allocation2], 512
      %v3854 = vld [vmem:[%s3853] ss:$2 sm:$0xff]
      %s3855 = scalar_lea.vmem [#allocation2], 528
      %v3856 = vld [vmem:[%s3855] ss:$2 sm:$0xff]
      %s3857 = scalar_lea.vmem [#allocation2], 544
      %v3858 = vld [vmem:[%s3857] ss:$2 sm:$0xff]
      %s3859 = scalar_lea.vmem [#allocation2], 560
      %v3860 = vld [vmem:[%s3859] ss:$2 sm:$0xff]
      %s3861 = scalar_lea.vmem [#allocation2], 576
      %v3862 = vld [vmem:[%s3861] ss:$2 sm:$0xff]
      %s3863 = scalar_lea.vmem [#allocation2], 592
      %v3864 = vld [vmem:[%s3863] ss:$2 sm:$0xff]
      %s3865 = scalar_lea.vmem [#allocation2], 608
      %v3866 = vld [vmem:[%s3865] ss:$2 sm:$0xff]
      %s3867 = scalar_lea.vmem [#allocation2], 624
      %v3868 = vld [vmem:[%s3867] ss:$2 sm:$0xff]
      %s3869 = scalar_lea.vmem [#allocation2], 640
      %v3870 = vld [vmem:[%s3869] ss:$2 sm:$0xff]
      %s3871 = scalar_lea.vmem [#allocation2], 656
      %v3872 = vld [vmem:[%s3871] ss:$2 sm:$0xff]
      %s3873 = scalar_lea.vmem [#allocation2], 672
      %v3874 = vld [vmem:[%s3873] ss:$2 sm:$0xff]
      %s3875 = scalar_lea.vmem [#allocation2], 688
      %v3876 = vld [vmem:[%s3875] ss:$2 sm:$0xff]
      %s3877 = scalar_lea.vmem [#allocation2], 704
      %v3878 = vld [vmem:[%s3877] ss:$2 sm:$0xff]
      %s3879 = scalar_lea.vmem [#allocation2], 720
      %v3880 = vld [vmem:[%s3879] ss:$2 sm:$0xff]
      %s3881 = scalar_lea.vmem [#allocation2], 736
      %v3882 = vld [vmem:[%s3881] ss:$2 sm:$0xff]
      %s3883 = scalar_lea.vmem [#allocation2], 752
      %v3884 = vld [vmem:[%s3883] ss:$2 sm:$0xff]
      %s3885 = scalar_lea.vmem [#allocation2], 768
      %v3886 = vld [vmem:[%s3885] ss:$2 sm:$0xff]
      %s3887 = scalar_lea.vmem [#allocation2], 784
      %v3888 = vld [vmem:[%s3887] ss:$2 sm:$0xff]
      %s3889 = scalar_lea.vmem [#allocation2], 800
      %v3890 = vld [vmem:[%s3889] ss:$2 sm:$0xff]
      %s3891 = scalar_lea.vmem [#allocation2], 816
      %v3892 = vld [vmem:[%s3891] ss:$2 sm:$0xff]
      %s3893 = scalar_lea.vmem [#allocation2], 832
      %v3894 = vld [vmem:[%s3893] ss:$2 sm:$0xff]
      %s3895 = scalar_lea.vmem [#allocation2], 848
      %v3896 = vld [vmem:[%s3895] ss:$2 sm:$0xff]
      %s3897 = scalar_lea.vmem [#allocation2], 864
      %v3898 = vld [vmem:[%s3897] ss:$2 sm:$0xff]
      %s3899 = scalar_lea.vmem [#allocation2], 880
      %v3900 = vld [vmem:[%s3899] ss:$2 sm:$0xff]
      %s3901 = scalar_lea.vmem [#allocation2], 896
      %v3902 = vld [vmem:[%s3901] ss:$2 sm:$0xff]
      %s3903 = scalar_lea.vmem [#allocation2], 912
      %v3904 = vld [vmem:[%s3903] ss:$2 sm:$0xff]
      %s3905 = scalar_lea.vmem [#allocation2], 928
      %v3906 = vld [vmem:[%s3905] ss:$2 sm:$0xff]
      %s3907 = scalar_lea.vmem [#allocation2], 944
      %v3908 = vld [vmem:[%s3907] ss:$2 sm:$0xff]
      %s3909 = scalar_lea.vmem [#allocation2], 960
      %v3910 = vld [vmem:[%s3909] ss:$2 sm:$0xff]
      %s3911 = scalar_lea.vmem [#allocation2], 976
      %v3912 = vld [vmem:[%s3911] ss:$2 sm:$0xff]
      %s3913 = scalar_lea.vmem [#allocation2], 992
      %v3914 = vld [vmem:[%s3913] ss:$2 sm:$0xff]
      %s3915 = scalar_lea.vmem [#allocation2], 1008
      %v3916 = vld [vmem:[%s3915] ss:$2 sm:$0xff]
      %s3917 = scalar_lea.vmem [#allocation2], 1
      %v3918 = vld [vmem:[%s3917] ss:$2 sm:$0xff]
      %s3919 = scalar_lea.vmem [#allocation2], 17
      %v3920 = vld [vmem:[%s3919] ss:$2 sm:$0xff]
      %s3921 = scalar_lea.vmem [#allocation2], 33
      %v3922 = vld [vmem:[%s3921] ss:$2 sm:$0xff]
      %s3923 = scalar_lea.vmem [#allocation2], 49
      %v3924 = vld [vmem:[%s3923] ss:$2 sm:$0xff]
      %s3925 = scalar_lea.vmem [#allocation2], 65
      %v3926 = vld [vmem:[%s3925] ss:$2 sm:$0xff]
      %s3927 = scalar_lea.vmem [#allocation2], 81
      %v3928 = vld [vmem:[%s3927] ss:$2 sm:$0xff]
      %s3929 = scalar_lea.vmem [#allocation2], 97
      %v3930 = vld [vmem:[%s3929] ss:$2 sm:$0xff]
      %s3931 = scalar_lea.vmem [#allocation2], 113
      %v3932 = vld [vmem:[%s3931] ss:$2 sm:$0xff]
      %s3933 = scalar_lea.vmem [#allocation2], 129
      %v3934 = vld [vmem:[%s3933] ss:$2 sm:$0xff]
      %s3935 = scalar_lea.vmem [#allocation2], 145
      %v3936 = vld [vmem:[%s3935] ss:$2 sm:$0xff]
      %s3937 = scalar_lea.vmem [#allocation2], 161
      %v3938 = vld [vmem:[%s3937] ss:$2 sm:$0xff]
      %s3939 = scalar_lea.vmem [#allocation2], 177
      %v3940 = vld [vmem:[%s3939] ss:$2 sm:$0xff]
      %s3941 = scalar_lea.vmem [#allocation2], 193
      %v3942 = vld [vmem:[%s3941] ss:$2 sm:$0xff]
      %s3943 = scalar_lea.vmem [#allocation2], 209
      %v3944 = vld [vmem:[%s3943] ss:$2 sm:$0xff]
      %s3945 = scalar_lea.vmem [#allocation2], 225
      %v3946 = vld [vmem:[%s3945] ss:$2 sm:$0xff]
      %s3947 = scalar_lea.vmem [#allocation2], 241
      %v3948 = vld [vmem:[%s3947] ss:$2 sm:$0xff]
      %s3949 = scalar_lea.vmem [#allocation2], 257
      %v3950 = vld [vmem:[%s3949] ss:$2 sm:$0xff]
      %s3951 = scalar_lea.vmem [#allocation2], 273
      %v3952 = vld [vmem:[%s3951] ss:$2 sm:$0xff]
      %s3953 = scalar_lea.vmem [#allocation2], 289
      %v3954 = vld [vmem:[%s3953] ss:$2 sm:$0xff]
      %s3955 = scalar_lea.vmem [#allocation2], 305
      %v3956 = vld [vmem:[%s3955] ss:$2 sm:$0xff]
      %s3957 = scalar_lea.vmem [#allocation2], 321
      %v3958 = vld [vmem:[%s3957] ss:$2 sm:$0xff]
      %s3959 = scalar_lea.vmem [#allocation2], 337
      %v3960 = vld [vmem:[%s3959] ss:$2 sm:$0xff]
      %s3961 = scalar_lea.vmem [#allocation2], 353
      %v3962 = vld [vmem:[%s3961] ss:$2 sm:$0xff]
      %s3963 = scalar_lea.vmem [#allocation2], 369
      %v3964 = vld [vmem:[%s3963] ss:$2 sm:$0xff]
      %s3965 = scalar_lea.vmem [#allocation2], 385
      %v3966 = vld [vmem:[%s3965] ss:$2 sm:$0xff]
      %s3967 = scalar_lea.vmem [#allocation2], 401
      %v3968 = vld [vmem:[%s3967] ss:$2 sm:$0xff]
      %s3969 = scalar_lea.vmem [#allocation2], 417
      %v3970 = vld [vmem:[%s3969] ss:$2 sm:$0xff]
      %s3971 = scalar_lea.vmem [#allocation2], 433
      %v3972 = vld [vmem:[%s3971] ss:$2 sm:$0xff]
      %s3973 = scalar_lea.vmem [#allocation2], 449
      %v3974 = vld [vmem:[%s3973] ss:$2 sm:$0xff]
      %s3975 = scalar_lea.vmem [#allocation2], 465
      %v3976 = vld [vmem:[%s3975] ss:$2 sm:$0xff]
      %s3977 = scalar_lea.vmem [#allocation2], 481
      %v3978 = vld [vmem:[%s3977] ss:$2 sm:$0xff]
      %s3979 = scalar_lea.vmem [#allocation2], 497
      %v3980 = vld [vmem:[%s3979] ss:$2 sm:$0xff]
      %s3981 = scalar_lea.vmem [#allocation2], 513
      %v3982 = vld [vmem:[%s3981] ss:$2 sm:$0xff]
      %s3983 = scalar_lea.vmem [#allocation2], 529
      %v3984 = vld [vmem:[%s3983] ss:$2 sm:$0xff]
      %s3985 = scalar_lea.vmem [#allocation2], 545
      %v3986 = vld [vmem:[%s3985] ss:$2 sm:$0xff]
      %s3987 = scalar_lea.vmem [#allocation2], 561
      %v3988 = vld [vmem:[%s3987] ss:$2 sm:$0xff]
      %s3989 = scalar_lea.vmem [#allocation2], 577
      %v3990 = vld [vmem:[%s3989] ss:$2 sm:$0xff]
      %s3991 = scalar_lea.vmem [#allocation2], 593
      %v3992 = vld [vmem:[%s3991] ss:$2 sm:$0xff]
      %s3993 = scalar_lea.vmem [#allocation2], 609
      %v3994 = vld [vmem:[%s3993] ss:$2 sm:$0xff]
      %s3995 = scalar_lea.vmem [#allocation2], 625
      %v3996 = vld [vmem:[%s3995] ss:$2 sm:$0xff]
      %s3997 = scalar_lea.vmem [#allocation2], 641
      %v3998 = vld [vmem:[%s3997] ss:$2 sm:$0xff]
      %s3999 = scalar_lea.vmem [#allocation2], 657
      %v4000 = vld [vmem:[%s3999] ss:$2 sm:$0xff]
      %s4001 = scalar_lea.vmem [#allocation2], 673
      %v4002 = vld [vmem:[%s4001] ss:$2 sm:$0xff]
      %s4003 = scalar_lea.vmem [#allocation2], 689
      %v4004 = vld [vmem:[%s4003] ss:$2 sm:$0xff]
      %s4005 = scalar_lea.vmem [#allocation2], 705
      %v4006 = vld [vmem:[%s4005] ss:$2 sm:$0xff]
      %s4007 = scalar_lea.vmem [#allocation2], 721
      %v4008 = vld [vmem:[%s4007] ss:$2 sm:$0xff]
      %s4009 = scalar_lea.vmem [#allocation2], 737
      %v4010 = vld [vmem:[%s4009] ss:$2 sm:$0xff]
      %s4011 = scalar_lea.vmem [#allocation2], 753
      %v4012 = vld [vmem:[%s4011] ss:$2 sm:$0xff]
      %s4013 = scalar_lea.vmem [#allocation2], 769
      %v4014 = vld [vmem:[%s4013] ss:$2 sm:$0xff]
      %s4015 = scalar_lea.vmem [#allocation2], 785
      %v4016 = vld [vmem:[%s4015] ss:$2 sm:$0xff]
      %s4017 = scalar_lea.vmem [#allocation2], 801
      %v4018 = vld [vmem:[%s4017] ss:$2 sm:$0xff]
      %s4019 = scalar_lea.vmem [#allocation2], 817
      %v4020 = vld [vmem:[%s4019] ss:$2 sm:$0xff]
      %s4021 = scalar_lea.vmem [#allocation2], 833
      %v4022 = vld [vmem:[%s4021] ss:$2 sm:$0xff]
      %s4023 = scalar_lea.vmem [#allocation2], 849
      %v4024 = vld [vmem:[%s4023] ss:$2 sm:$0xff]
      %s4025 = scalar_lea.vmem [#allocation2], 865
      %v4026 = vld [vmem:[%s4025] ss:$2 sm:$0xff]
      %s4027 = scalar_lea.vmem [#allocation2], 881
      %v4028 = vld [vmem:[%s4027] ss:$2 sm:$0xff]
      %s4029 = scalar_lea.vmem [#allocation2], 897
      %v4030 = vld [vmem:[%s4029] ss:$2 sm:$0xff]
      %s4031 = scalar_lea.vmem [#allocation2], 913
      %v4032 = vld [vmem:[%s4031] ss:$2 sm:$0xff]
      %s4033 = scalar_lea.vmem [#allocation2], 929
      %v4034 = vld [vmem:[%s4033] ss:$2 sm:$0xff]
      %s4035 = scalar_lea.vmem [#allocation2], 945
      %v4036 = vld [vmem:[%s4035] ss:$2 sm:$0xff]
      %s4037 = scalar_lea.vmem [#allocation2], 961
      %v4038 = vld [vmem:[%s4037] ss:$2 sm:$0xff]
      %s4039 = scalar_lea.vmem [#allocation2], 977
      %v4040 = vld [vmem:[%s4039] ss:$2 sm:$0xff]
      %s4041 = scalar_lea.vmem [#allocation2], 993
      %v4042 = vld [vmem:[%s4041] ss:$2 sm:$0xff]
      %s4043 = scalar_lea.vmem [#allocation2], 1009
      %v4044 = vld [vmem:[%s4043] ss:$2 sm:$0xff]
      %v4045 = vmax.f32 %v3790, %v3918
      %v4046 = vmax.f32 %v3792, %v3920
      %v4047 = vmax.f32 %v3794, %v3922
      %v4048 = vmax.f32 %v3796, %v3924
      %v4049 = vmax.f32 %v3798, %v3926
      %v4050 = vmax.f32 %v3800, %v3928
      %v4051 = vmax.f32 %v3802, %v3930
      %v4052 = vmax.f32 %v3804, %v3932
      %v4053 = vmax.f32 %v3806, %v3934
      %v4054 = vmax.f32 %v3808, %v3936
      %v4055 = vmax.f32 %v3810, %v3938
      %v4056 = vmax.f32 %v3812, %v3940
      %v4057 = vmax.f32 %v3814, %v3942
      %v4058 = vmax.f32 %v3816, %v3944
      %v4059 = vmax.f32 %v3818, %v3946
      %v4060 = vmax.f32 %v3820, %v3948
      %v4061 = vmax.f32 %v3822, %v3950
      %v4062 = vmax.f32 %v3824, %v3952
      %v4063 = vmax.f32 %v3826, %v3954
      %v4064 = vmax.f32 %v3828, %v3956
      %v4065 = vmax.f32 %v3830, %v3958
      %v4066 = vmax.f32 %v3832, %v3960
      %v4067 = vmax.f32 %v3834, %v3962
      %v4068 = vmax.f32 %v3836, %v3964
      %v4069 = vmax.f32 %v3838, %v3966
      %v4070 = vmax.f32 %v3840, %v3968
      %v4071 = vmax.f32 %v3842, %v3970
      %v4072 = vmax.f32 %v3844, %v3972
      %v4073 = vmax.f32 %v3846, %v3974
      %v4074 = vmax.f32 %v3848, %v3976
      %v4075 = vmax.f32 %v3850, %v3978
      %v4076 = vmax.f32 %v3852, %v3980
      %v4077 = vmax.f32 %v3854, %v3982
      %v4078 = vmax.f32 %v3856, %v3984
      %v4079 = vmax.f32 %v3858, %v3986
      %v4080 = vmax.f32 %v3860, %v3988
      %v4081 = vmax.f32 %v3862, %v3990
      %v4082 = vmax.f32 %v3864, %v3992
      %v4083 = vmax.f32 %v3866, %v3994
      %v4084 = vmax.f32 %v3868, %v3996
      %v4085 = vmax.f32 %v3870, %v3998
      %v4086 = vmax.f32 %v3872, %v4000
      %v4087 = vmax.f32 %v3874, %v4002
      %v4088 = vmax.f32 %v3876, %v4004
      %v4089 = vmax.f32 %v3878, %v4006
      %v4090 = vmax.f32 %v3880, %v4008
      %v4091 = vmax.f32 %v3882, %v4010
      %v4092 = vmax.f32 %v3884, %v4012
      %v4093 = vmax.f32 %v3886, %v4014
      %v4094 = vmax.f32 %v3888, %v4016
      %v4095 = vmax.f32 %v3890, %v4018
      %v4096 = vmax.f32 %v3892, %v4020
      %v4097 = vmax.f32 %v3894, %v4022
      %v4098 = vmax.f32 %v3896, %v4024
      %v4099 = vmax.f32 %v3898, %v4026
      %v4100 = vmax.f32 %v3900, %v4028
      %v4101 = vmax.f32 %v3902, %v4030
      %v4102 = vmax.f32 %v3904, %v4032
      %v4103 = vmax.f32 %v3906, %v4034
      %v4104 = vmax.f32 %v3908, %v4036
      %v4105 = vmax.f32 %v3910, %v4038
      %v4106 = vmax.f32 %v3912, %v4040
      %v4107 = vmax.f32 %v3914, %v4042
      %v4108 = vmax.f32 %v3916, %v4044
      %s4109 = scalar_lea.vmem [#allocation3], 16
      %4110 = vst.msk [vmem:[%s4109 + $0x1] sm:$0xff] %vm3466, %v4045
      %4111 = vst.msk [vmem:[%s4109 + $0x11] sm:$0xff] %vm3466, %v4046
      %4112 = vst.msk [vmem:[%s4109 + $0x21] sm:$0xff] %vm3466, %v4047
      %4113 = vst.msk [vmem:[%s4109 + $0x31] sm:$0xff] %vm3466, %v4048
      %4114 = vst.msk [vmem:[%s4109 + $0x41] sm:$0xff] %vm3466, %v4049
      %4115 = vst.msk [vmem:[%s4109 + $0x51] sm:$0xff] %vm3466, %v4050
      %4116 = vst.msk [vmem:[%s4109 + $0x61] sm:$0xff] %vm3466, %v4051
      %4117 = vst.msk [vmem:[%s4109 + $0x71] sm:$0xff] %vm3466, %v4052
      %4118 = vst.msk [vmem:[%s4109 + $0xa1] sm:$0xff] %vm3466, %v4053
      %4119 = vst.msk [vmem:[%s4109 + $0xb1] sm:$0xff] %vm3466, %v4054
      %4120 = vst.msk [vmem:[%s4109 + $0xc1] sm:$0xff] %vm3466, %v4055
      %4121 = vst.msk [vmem:[%s4109 + $0xd1] sm:$0xff] %vm3466, %v4056
      %4122 = vst.msk [vmem:[%s4109 + $0xe1] sm:$0xff] %vm3466, %v4057
      %4123 = vst.msk [vmem:[%s4109 + $0xf1] sm:$0xff] %vm3466, %v4058
      %4124 = vst.msk [vmem:[%s4109 + $0x101] sm:$0xff] %vm3466, %v4059
      %4125 = vst.msk [vmem:[%s4109 + $0x111] sm:$0xff] %vm3466, %v4060
      %4126 = vst.msk [vmem:[%s4109 + $0x141] sm:$0xff] %vm3466, %v4061
      %4127 = vst.msk [vmem:[%s4109 + $0x151] sm:$0xff] %vm3466, %v4062
      %4128 = vst.msk [vmem:[%s4109 + $0x161] sm:$0xff] %vm3466, %v4063
      %4129 = vst.msk [vmem:[%s4109 + $0x171] sm:$0xff] %vm3466, %v4064
      %4130 = vst.msk [vmem:[%s4109 + $0x181] sm:$0xff] %vm3466, %v4065
      %4131 = vst.msk [vmem:[%s4109 + $0x191] sm:$0xff] %vm3466, %v4066
      %4132 = vst.msk [vmem:[%s4109 + $0x1a1] sm:$0xff] %vm3466, %v4067
      %4133 = vst.msk [vmem:[%s4109 + $0x1b1] sm:$0xff] %vm3466, %v4068
      %4134 = vst.msk [vmem:[%s4109 + $0x1e1] sm:$0xff] %vm3466, %v4069
      %4135 = vst.msk [vmem:[%s4109 + $0x1f1] sm:$0xff] %vm3466, %v4070
      %4136 = vst.msk [vmem:[%s4109 + $0x201] sm:$0xff] %vm3466, %v4071
      %4137 = vst.msk [vmem:[%s4109 + $0x211] sm:$0xff] %vm3466, %v4072
      %4138 = vst.msk [vmem:[%s4109 + $0x221] sm:$0xff] %vm3466, %v4073
      %4139 = vst.msk [vmem:[%s4109 + $0x231] sm:$0xff] %vm3466, %v4074
      %4140 = vst.msk [vmem:[%s4109 + $0x241] sm:$0xff] %vm3466, %v4075
      %4141 = vst.msk [vmem:[%s4109 + $0x251] sm:$0xff] %vm3466, %v4076
      %4142 = vst.msk [vmem:[%s4109 + $0x281] sm:$0xff] %vm3466, %v4077
      %4143 = vst.msk [vmem:[%s4109 + $0x291] sm:$0xff] %vm3466, %v4078
      %4144 = vst.msk [vmem:[%s4109 + $0x2a1] sm:$0xff] %vm3466, %v4079
      %4145 = vst.msk [vmem:[%s4109 + $0x2b1] sm:$0xff] %vm3466, %v4080
      %4146 = vst.msk [vmem:[%s4109 + $0x2c1] sm:$0xff] %vm3466, %v4081
      %4147 = vst.msk [vmem:[%s4109 + $0x2d1] sm:$0xff] %vm3466, %v4082
      %4148 = vst.msk [vmem:[%s4109 + $0x2e1] sm:$0xff] %vm3466, %v4083
      %4149 = vst.msk [vmem:[%s4109 + $0x2f1] sm:$0xff] %vm3466, %v4084
      %4150 = vst.msk [vmem:[%s4109 + $0x321] sm:$0xff] %vm3466, %v4085
      %4151 = vst.msk [vmem:[%s4109 + $0x331] sm:$0xff] %vm3466, %v4086
      %4152 = vst.msk [vmem:[%s4109 + $0x341] sm:$0xff] %vm3466, %v4087
      %4153 = vst.msk [vmem:[%s4109 + $0x351] sm:$0xff] %vm3466, %v4088
      %4154 = vst.msk [vmem:[%s4109 + $0x361] sm:$0xff] %vm3466, %v4089
      %4155 = vst.msk [vmem:[%s4109 + $0x371] sm:$0xff] %vm3466, %v4090
      %4156 = vst.msk [vmem:[%s4109 + $0x381] sm:$0xff] %vm3466, %v4091
      %4157 = vst.msk [vmem:[%s4109 + $0x391] sm:$0xff] %vm3466, %v4092
      %4158 = vst.msk [vmem:[%s4109 + $0x3c1] sm:$0xff] %vm3466, %v4093
      %4159 = vst.msk [vmem:[%s4109 + $0x3d1] sm:$0xff] %vm3466, %v4094
      %4160 = vst.msk [vmem:[%s4109 + $0x3e1] sm:$0xff] %vm3466, %v4095
      %4161 = vst.msk [vmem:[%s4109 + $0x3f1] sm:$0xff] %vm3466, %v4096
      %4162 = vst.msk [vmem:[%s4109 + $0x401] sm:$0xff] %vm3466, %v4097
      %4163 = vst.msk [vmem:[%s4109 + $0x411] sm:$0xff] %vm3466, %v4098
      %4164 = vst.msk [vmem:[%s4109 + $0x421] sm:$0xff] %vm3466, %v4099
      %4165 = vst.msk [vmem:[%s4109 + $0x431] sm:$0xff] %vm3466, %v4100
      %4166 = vst.msk [vmem:[%s4109 + $0x461] sm:$0xff] %vm3466, %v4101
      %4167 = vst.msk [vmem:[%s4109 + $0x471] sm:$0xff] %vm3466, %v4102
      %4168 = vst.msk [vmem:[%s4109 + $0x481] sm:$0xff] %vm3466, %v4103
      %4169 = vst.msk [vmem:[%s4109 + $0x491] sm:$0xff] %vm3466, %v4104
      %4170 = vst.msk [vmem:[%s4109 + $0x4a1] sm:$0xff] %vm3466, %v4105
      %4171 = vst.msk [vmem:[%s4109 + $0x4b1] sm:$0xff] %vm3466, %v4106
      %4172 = vst.msk [vmem:[%s4109 + $0x4c1] sm:$0xff] %vm3466, %v4107
      %4173 = vst.msk [vmem:[%s4109 + $0x4d1] sm:$0xff] %vm3466, %v4108
      %v4174 = vld [vmem:[#allocation3] sm:$0xff]
      %v4175 = vld [vmem:[#allocation3 + $0x10] sm:$0xff]
      %v4176 = vld [vmem:[#allocation3 + $0x20] sm:$0xff]
      %v4177 = vld [vmem:[#allocation3 + $0x30] sm:$0xff]
      %v4178 = vld [vmem:[#allocation3 + $0x40] sm:$0xff]
      %v4179 = vld [vmem:[#allocation3 + $0x50] sm:$0xff]
      %v4180 = vld [vmem:[#allocation3 + $0x60] sm:$0xff]
      %v4181 = vld [vmem:[#allocation3 + $0x70] sm:$0xff]
      %v4182 = vld [vmem:[#allocation3 + $0xa0] sm:$0xff]
      %v4183 = vld [vmem:[#allocation3 + $0xb0] sm:$0xff]
      %v4184 = vld [vmem:[#allocation3 + $0xc0] sm:$0xff]
      %v4185 = vld [vmem:[#allocation3 + $0xd0] sm:$0xff]
      %v4186 = vld [vmem:[#allocation3 + $0xe0] sm:$0xff]
      %v4187 = vld [vmem:[#allocation3 + $0xf0] sm:$0xff]
      %v4188 = vld [vmem:[#allocation3 + $0x100] sm:$0xff]
      %v4189 = vld [vmem:[#allocation3 + $0x110] sm:$0xff]
      %v4190 = vld [vmem:[#allocation3 + $0x140] sm:$0xff]
      %v4191 = vld [vmem:[#allocation3 + $0x150] sm:$0xff]
      %v4192 = vld [vmem:[#allocation3 + $0x160] sm:$0xff]
      %v4193 = vld [vmem:[#allocation3 + $0x170] sm:$0xff]
      %v4194 = vld [vmem:[#allocation3 + $0x180] sm:$0xff]
      %v4195 = vld [vmem:[#allocation3 + $0x190] sm:$0xff]
      %v4196 = vld [vmem:[#allocation3 + $0x1a0] sm:$0xff]
      %v4197 = vld [vmem:[#allocation3 + $0x1b0] sm:$0xff]
      %v4198 = vld [vmem:[#allocation3 + $0x1e0] sm:$0xff]
      %v4199 = vld [vmem:[#allocation3 + $0x1f0] sm:$0xff]
      %v4200 = vld [vmem:[#allocation3 + $0x200] sm:$0xff]
      %v4201 = vld [vmem:[#allocation3 + $0x210] sm:$0xff]
      %v4202 = vld [vmem:[#allocation3 + $0x220] sm:$0xff]
      %v4203 = vld [vmem:[#allocation3 + $0x230] sm:$0xff]
      %v4204 = vld [vmem:[#allocation3 + $0x240] sm:$0xff]
      %v4205 = vld [vmem:[#allocation3 + $0x250] sm:$0xff]
      %v4206 = vld [vmem:[#allocation3 + $0x280] sm:$0xff]
      %v4207 = vld [vmem:[#allocation3 + $0x290] sm:$0xff]
      %v4208 = vld [vmem:[#allocation3 + $0x2a0] sm:$0xff]
      %v4209 = vld [vmem:[#allocation3 + $0x2b0] sm:$0xff]
      %v4210 = vld [vmem:[#allocation3 + $0x2c0] sm:$0xff]
      %v4211 = vld [vmem:[#allocation3 + $0x2d0] sm:$0xff]
      %v4212 = vld [vmem:[#allocation3 + $0x2e0] sm:$0xff]
      %v4213 = vld [vmem:[#allocation3 + $0x2f0] sm:$0xff]
      %v4214 = vld [vmem:[#allocation3 + $0x320] sm:$0xff]
      %v4215 = vld [vmem:[#allocation3 + $0x330] sm:$0xff]
      %v4216 = vld [vmem:[#allocation3 + $0x340] sm:$0xff]
      %v4217 = vld [vmem:[#allocation3 + $0x350] sm:$0xff]
      %v4218 = vld [vmem:[#allocation3 + $0x360] sm:$0xff]
      %v4219 = vld [vmem:[#allocation3 + $0x370] sm:$0xff]
      %v4220 = vld [vmem:[#allocation3 + $0x380] sm:$0xff]
      %v4221 = vld [vmem:[#allocation3 + $0x390] sm:$0xff]
      %v4222 = vld [vmem:[#allocation3 + $0x3c0] sm:$0xff]
      %v4223 = vld [vmem:[#allocation3 + $0x3d0] sm:$0xff]
      %v4224 = vld [vmem:[#allocation3 + $0x3e0] sm:$0xff]
      %v4225 = vld [vmem:[#allocation3 + $0x3f0] sm:$0xff]
      %v4226 = vld [vmem:[#allocation3 + $0x400] sm:$0xff]
      %v4227 = vld [vmem:[#allocation3 + $0x410] sm:$0xff]
      %v4228 = vld [vmem:[#allocation3 + $0x420] sm:$0xff]
      %v4229 = vld [vmem:[#allocation3 + $0x430] sm:$0xff]
      %v4230 = vld [vmem:[#allocation3 + $0x460] sm:$0xff]
      %v4231 = vld [vmem:[#allocation3 + $0x470] sm:$0xff]
      %v4232 = vld [vmem:[#allocation3 + $0x480] sm:$0xff]
      %v4233 = vld [vmem:[#allocation3 + $0x490] sm:$0xff]
      %v4234 = vld [vmem:[#allocation3 + $0x4a0] sm:$0xff]
      %v4235 = vld [vmem:[#allocation3 + $0x4b0] sm:$0xff]
      %v4236 = vld [vmem:[#allocation3 + $0x4c0] sm:$0xff]
      %v4237 = vld [vmem:[#allocation3 + $0x4d0] sm:$0xff]
      %v4238 = vpack.c.bf16 %v4175, %v4174
      %v4239 = vpack.c.bf16 %v4177, %v4176
      %v4240 = vpack.c.bf16 %v4179, %v4178
      %v4241 = vpack.c.bf16 %v4181, %v4180
      %v4242 = vpack.c.bf16 %v4183, %v4182
      %v4243 = vpack.c.bf16 %v4185, %v4184
      %v4244 = vpack.c.bf16 %v4187, %v4186
      %v4245 = vpack.c.bf16 %v4189, %v4188
      %v4246 = vpack.c.bf16 %v4191, %v4190
      %v4247 = vpack.c.bf16 %v4193, %v4192
      %v4248 = vpack.c.bf16 %v4195, %v4194
      %v4249 = vpack.c.bf16 %v4197, %v4196
      %v4250 = vpack.c.bf16 %v4199, %v4198
      %v4251 = vpack.c.bf16 %v4201, %v4200
      %v4252 = vpack.c.bf16 %v4203, %v4202
      %v4253 = vpack.c.bf16 %v4205, %v4204
      %v4254 = vpack.c.bf16 %v4207, %v4206
      %v4255 = vpack.c.bf16 %v4209, %v4208
      %v4256 = vpack.c.bf16 %v4211, %v4210
      %v4257 = vpack.c.bf16 %v4213, %v4212
      %v4258 = vpack.c.bf16 %v4215, %v4214
      %v4259 = vpack.c.bf16 %v4217, %v4216
      %v4260 = vpack.c.bf16 %v4219, %v4218
      %v4261 = vpack.c.bf16 %v4221, %v4220
      %v4262 = vpack.c.bf16 %v4223, %v4222
      %v4263 = vpack.c.bf16 %v4225, %v4224
      %v4264 = vpack.c.bf16 %v4227, %v4226
      %v4265 = vpack.c.bf16 %v4229, %v4228
      %v4266 = vpack.c.bf16 %v4231, %v4230
      %v4267 = vpack.c.bf16 %v4233, %v4232
      %v4268 = vpack.c.bf16 %v4235, %v4234
      %v4269 = vpack.c.bf16 %v4237, %v4236
      %v4270 = vld [vmem:[%s4] sm:$0xf]
      %v4271 = vld [vmem:[%s4 + $0x4] sm:$0xf]
      %v4272 = vld [vmem:[#allocation3 + $0x1] sm:$0xff]
      %v4273 = vld [vmem:[#allocation3 + $0x11] sm:$0xff]
      %v4274 = vld [vmem:[#allocation3 + $0x21] sm:$0xff]
      %v4275 = vld [vmem:[#allocation3 + $0x31] sm:$0xff]
      %v4276 = vld [vmem:[#allocation3 + $0x41] sm:$0xff]
      %v4277 = vld [vmem:[#allocation3 + $0x51] sm:$0xff]
      %v4278 = vld [vmem:[#allocation3 + $0x61] sm:$0xff]
      %v4279 = vld [vmem:[#allocation3 + $0x71] sm:$0xff]
      %v4280 = vld [vmem:[#allocation3 + $0xa1] sm:$0xff]
      %v4281 = vld [vmem:[#allocation3 + $0xb1] sm:$0xff]
      %v4282 = vld [vmem:[#allocation3 + $0xc1] sm:$0xff]
      %v4283 = vld [vmem:[#allocation3 + $0xd1] sm:$0xff]
      %v4284 = vld [vmem:[#allocation3 + $0xe1] sm:$0xff]
      %v4285 = vld [vmem:[#allocation3 + $0xf1] sm:$0xff]
      %v4286 = vld [vmem:[#allocation3 + $0x101] sm:$0xff]
      %v4287 = vld [vmem:[#allocation3 + $0x111] sm:$0xff]
      %v4288 = vld [vmem:[#allocation3 + $0x141] sm:$0xff]
      %v4289 = vld [vmem:[#allocation3 + $0x151] sm:$0xff]
      %v4290 = vld [vmem:[#allocation3 + $0x161] sm:$0xff]
      %v4291 = vld [vmem:[#allocation3 + $0x171] sm:$0xff]
      %v4292 = vld [vmem:[#allocation3 + $0x181] sm:$0xff]
      %v4293 = vld [vmem:[#allocation3 + $0x191] sm:$0xff]
      %v4294 = vld [vmem:[#allocation3 + $0x1a1] sm:$0xff]
      %v4295 = vld [vmem:[#allocation3 + $0x1b1] sm:$0xff]
      %v4296 = vld [vmem:[#allocation3 + $0x1e1] sm:$0xff]
      %v4297 = vld [vmem:[#allocation3 + $0x1f1] sm:$0xff]
      %v4298 = vld [vmem:[#allocation3 + $0x201] sm:$0xff]
      %v4299 = vld [vmem:[#allocation3 + $0x211] sm:$0xff]
      %v4300 = vld [vmem:[#allocation3 + $0x221] sm:$0xff]
      %v4301 = vld [vmem:[#allocation3 + $0x231] sm:$0xff]
      %v4302 = vld [vmem:[#allocation3 + $0x241] sm:$0xff]
      %v4303 = vld [vmem:[#allocation3 + $0x251] sm:$0xff]
      %v4304 = vld [vmem:[#allocation3 + $0x281] sm:$0xff]
      %v4305 = vld [vmem:[#allocation3 + $0x291] sm:$0xff]
      %v4306 = vld [vmem:[#allocation3 + $0x2a1] sm:$0xff]
      %v4307 = vld [vmem:[#allocation3 + $0x2b1] sm:$0xff]
      %v4308 = vld [vmem:[#allocation3 + $0x2c1] sm:$0xff]
      %v4309 = vld [vmem:[#allocation3 + $0x2d1] sm:$0xff]
      %v4310 = vld [vmem:[#allocation3 + $0x2e1] sm:$0xff]
      %v4311 = vld [vmem:[#allocation3 + $0x2f1] sm:$0xff]
      %v4312 = vld [vmem:[#allocation3 + $0x321] sm:$0xff]
      %v4313 = vld [vmem:[#allocation3 + $0x331] sm:$0xff]
      %v4314 = vld [vmem:[#allocation3 + $0x341] sm:$0xff]
      %v4315 = vld [vmem:[#allocation3 + $0x351] sm:$0xff]
      %v4316 = vld [vmem:[#allocation3 + $0x361] sm:$0xff]
      %v4317 = vld [vmem:[#allocation3 + $0x371] sm:$0xff]
      %v4318 = vld [vmem:[#allocation3 + $0x381] sm:$0xff]
      %v4319 = vld [vmem:[#allocation3 + $0x391] sm:$0xff]
      %v4320 = vld [vmem:[#allocation3 + $0x3c1] sm:$0xff]
      %v4321 = vld [vmem:[#allocation3 + $0x3d1] sm:$0xff]
      %v4322 = vld [vmem:[#allocation3 + $0x3e1] sm:$0xff]
      %v4323 = vld [vmem:[#allocation3 + $0x3f1] sm:$0xff]
      %v4324 = vld [vmem:[#allocation3 + $0x401] sm:$0xff]
      %v4325 = vld [vmem:[#allocation3 + $0x411] sm:$0xff]
      %v4326 = vld [vmem:[#allocation3 + $0x421] sm:$0xff]
      %v4327 = vld [vmem:[#allocation3 + $0x431] sm:$0xff]
      %v4328 = vld [vmem:[#allocation3 + $0x461] sm:$0xff]
      %v4329 = vld [vmem:[#allocation3 + $0x471] sm:$0xff]
      %v4330 = vld [vmem:[#allocation3 + $0x481] sm:$0xff]
      %v4331 = vld [vmem:[#allocation3 + $0x491] sm:$0xff]
      %v4332 = vld [vmem:[#allocation3 + $0x4a1] sm:$0xff]
      %v4333 = vld [vmem:[#allocation3 + $0x4b1] sm:$0xff]
      %v4334 = vld [vmem:[#allocation3 + $0x4c1] sm:$0xff]
      %v4335 = vld [vmem:[#allocation3 + $0x4d1] sm:$0xff]
      %v4336 = vpack.c.bf16 %v4273, %v4272
      %v4337 = vpack.c.bf16 %v4275, %v4274
      %v4338 = vpack.c.bf16 %v4277, %v4276
      %v4339 = vpack.c.bf16 %v4279, %v4278
      %v4340 = vpack.c.bf16 %v4281, %v4280
      %v4341 = vpack.c.bf16 %v4283, %v4282
      %v4342 = vpack.c.bf16 %v4285, %v4284
      %v4343 = vpack.c.bf16 %v4287, %v4286
      %v4344 = vpack.c.bf16 %v4289, %v4288
      %v4345 = vpack.c.bf16 %v4291, %v4290
      %v4346 = vpack.c.bf16 %v4293, %v4292
      %v4347 = vpack.c.bf16 %v4295, %v4294
      %v4348 = vpack.c.bf16 %v4297, %v4296
      %v4349 = vpack.c.bf16 %v4299, %v4298
      %v4350 = vpack.c.bf16 %v4301, %v4300
      %v4351 = vpack.c.bf16 %v4303, %v4302
      %v4352 = vpack.c.bf16 %v4305, %v4304
      %v4353 = vpack.c.bf16 %v4307, %v4306
      %v4354 = vpack.c.bf16 %v4309, %v4308
      %v4355 = vpack.c.bf16 %v4311, %v4310
      %v4356 = vpack.c.bf16 %v4313, %v4312
      %v4357 = vpack.c.bf16 %v4315, %v4314
      %v4358 = vpack.c.bf16 %v4317, %v4316
      %v4359 = vpack.c.bf16 %v4319, %v4318
      %v4360 = vpack.c.bf16 %v4321, %v4320
      %v4361 = vpack.c.bf16 %v4323, %v4322
      %v4362 = vpack.c.bf16 %v4325, %v4324
      %v4363 = vpack.c.bf16 %v4327, %v4326
      %v4364 = vpack.c.bf16 %v4329, %v4328
      %v4365 = vpack.c.bf16 %v4331, %v4330
      %v4366 = vpack.c.bf16 %v4333, %v4332
      %v4367 = vpack.c.bf16 %v4335, %v4334
      %s4368 = scalar_lea.vmem %s4, 8
      %v4369 = vld [vmem:[%s4368] sm:$0xf]
      %v4370 = vld [vmem:[%s4368 + $0x4] sm:$0xf]
      %v4373 = vunpack.c.l.b16 %v4369
      %v4374 = vunpack.c.l.b16 %v4370
      %v4375 = vpack.c.b16 %v4374, %v4373
      %v4378 = vsel %vm3466, %v4336, 0
      %v4381 = vsel %vm3466, %v4337, 0
      %v4384 = vsel %vm3466, %v4338, 0
      %v4387 = vsel %vm3466, %v4339, 0
      %v4390 = vsel %vm3466, %v4340, 0
      %v4393 = vsel %vm3466, %v4341, 0
      %v4396 = vsel %vm3466, %v4342, 0
      %v4399 = vsel %vm3466, %v4343, 0
      %v4402 = vsel %vm3466, %v4344, 0
      %v4405 = vsel %vm3466, %v4345, 0
      %v4408 = vsel %vm3466, %v4346, 0
      %v4411 = vsel %vm3466, %v4347, 0
      %v4414 = vsel %vm3466, %v4348, 0
      %v4417 = vsel %vm3466, %v4349, 0
      %v4420 = vsel %vm3466, %v4350, 0
      %v4423 = vsel %vm3466, %v4351, 0
      %v4426 = vsel %vm3466, %v4352, 0
      %v4429 = vsel %vm3466, %v4353, 0
      %v4432 = vsel %vm3466, %v4354, 0
      %v4435 = vsel %vm3466, %v4355, 0
      %v4438 = vsel %vm3466, %v4356, 0
      %v4441 = vsel %vm3466, %v4357, 0
      %v4444 = vsel %vm3466, %v4358, 0
      %v4447 = vsel %vm3466, %v4359, 0
      %v4450 = vsel %vm3466, %v4360, 0
      %v4453 = vsel %vm3466, %v4361, 0
      %v4456 = vsel %vm3466, %v4362, 0
      %v4459 = vsel %vm3466, %v4363, 0
      %v4462 = vsel %vm3466, %v4364, 0
      %v4465 = vsel %vm3466, %v4365, 0
      %v4468 = vsel %vm3466, %v4366, 0
      %v4471 = vsel %vm3466, %v4367, 0
      %4473 = vmatpush.bf16.msra.mxu0 0
      %4474 = vmatpush.bf16.msra.mxu0 0
      %4475 = vmatpush.bf16.msra.mxu0 0
      %4476 = vmatpush.bf16.msra.mxu0 0
      %4477 = vmatpush.bf16.msra.mxu0 0
      %4478 = vmatpush.bf16.msra.mxu0 0
      %4479 = vmatpush.bf16.msra.mxu0 0
      %4480 = vmatpush.bf16.msra.mxu0 %v4375
      %4481 = vmatmul.bf16.gmra.mxu0 %v4378
      %v4482 = vpop.f32.mrf.mxu0
      %v4483 = vadd.f32 0.0, %v4482
      %v4484 = vpop.f32.mrf.mxu0
      %v4485 = vadd.f32 0.0, %v4484
      %4486 = vmatmul.bf16.gmra.mxu0 %v4381
      %v4487 = vpop.f32.mrf.mxu0
      %v4488 = vadd.f32 0.0, %v4487
      %v4489 = vpop.f32.mrf.mxu0
      %v4490 = vadd.f32 0.0, %v4489
      %4491 = vmatmul.bf16.gmra.mxu0 %v4384
      %v4492 = vpop.f32.mrf.mxu0
      %v4493 = vadd.f32 0.0, %v4492
      %v4494 = vpop.f32.mrf.mxu0
      %v4495 = vadd.f32 0.0, %v4494
      %4496 = vmatmul.bf16.gmra.mxu0 %v4387
      %v4497 = vpop.f32.mrf.mxu0
      %v4498 = vadd.f32 0.0, %v4497
      %v4499 = vpop.f32.mrf.mxu0
      %v4500 = vadd.f32 0.0, %v4499
      %4501 = vmatmul.bf16.gmra.mxu0 %v4390
      %v4502 = vpop.f32.mrf.mxu0
      %v4503 = vadd.f32 0.0, %v4502
      %v4504 = vpop.f32.mrf.mxu0
      %v4505 = vadd.f32 0.0, %v4504
      %4506 = vmatmul.bf16.gmra.mxu0 %v4393
      %v4507 = vpop.f32.mrf.mxu0
      %v4508 = vadd.f32 0.0, %v4507
      %v4509 = vpop.f32.mrf.mxu0
      %v4510 = vadd.f32 0.0, %v4509
      %4511 = vmatmul.bf16.gmra.mxu0 %v4396
      %v4512 = vpop.f32.mrf.mxu0
      %v4513 = vadd.f32 0.0, %v4512
      %v4514 = vpop.f32.mrf.mxu0
      %v4515 = vadd.f32 0.0, %v4514
      %4516 = vmatmul.bf16.gmra.mxu0 %v4399
      %v4517 = vpop.f32.mrf.mxu0
      %v4518 = vadd.f32 0.0, %v4517
      %v4519 = vpop.f32.mrf.mxu0
      %v4520 = vadd.f32 0.0, %v4519
      %4521 = vmatmul.bf16.gmra.mxu0 %v4402
      %v4522 = vpop.f32.mrf.mxu0
      %v4523 = vadd.f32 0.0, %v4522
      %v4524 = vpop.f32.mrf.mxu0
      %v4525 = vadd.f32 0.0, %v4524
      %4526 = vmatmul.bf16.gmra.mxu0 %v4405
      %v4527 = vpop.f32.mrf.mxu0
      %v4528 = vadd.f32 0.0, %v4527
      %v4529 = vpop.f32.mrf.mxu0
      %v4530 = vadd.f32 0.0, %v4529
      %4531 = vmatmul.bf16.gmra.mxu0 %v4408
      %v4532 = vpop.f32.mrf.mxu0
      %v4533 = vadd.f32 0.0, %v4532
      %v4534 = vpop.f32.mrf.mxu0
      %v4535 = vadd.f32 0.0, %v4534
      %4536 = vmatmul.bf16.gmra.mxu0 %v4411
      %v4537 = vpop.f32.mrf.mxu0
      %v4538 = vadd.f32 0.0, %v4537
      %v4539 = vpop.f32.mrf.mxu0
      %v4540 = vadd.f32 0.0, %v4539
      %4541 = vmatmul.bf16.gmra.mxu0 %v4414
      %v4542 = vpop.f32.mrf.mxu0
      %v4543 = vadd.f32 0.0, %v4542
      %v4544 = vpop.f32.mrf.mxu0
      %v4545 = vadd.f32 0.0, %v4544
      %4546 = vmatmul.bf16.gmra.mxu0 %v4417
      %v4547 = vpop.f32.mrf.mxu0
      %v4548 = vadd.f32 0.0, %v4547
      %v4549 = vpop.f32.mrf.mxu0
      %v4550 = vadd.f32 0.0, %v4549
      %4551 = vmatmul.bf16.gmra.mxu0 %v4420
      %v4552 = vpop.f32.mrf.mxu0
      %v4553 = vadd.f32 0.0, %v4552
      %v4554 = vpop.f32.mrf.mxu0
      %v4555 = vadd.f32 0.0, %v4554
      %4556 = vmatmul.bf16.gmra.mxu0 %v4423
      %v4557 = vpop.f32.mrf.mxu0
      %v4558 = vadd.f32 0.0, %v4557
      %v4559 = vpop.f32.mrf.mxu0
      %v4560 = vadd.f32 0.0, %v4559
      %4561 = vmatmul.bf16.gmra.mxu0 %v4426
      %v4562 = vpop.f32.mrf.mxu0
      %v4563 = vadd.f32 0.0, %v4562
      %v4564 = vpop.f32.mrf.mxu0
      %v4565 = vadd.f32 0.0, %v4564
      %4566 = vmatmul.bf16.gmra.mxu0 %v4429
      %v4567 = vpop.f32.mrf.mxu0
      %v4568 = vadd.f32 0.0, %v4567
      %v4569 = vpop.f32.mrf.mxu0
      %v4570 = vadd.f32 0.0, %v4569
      %4571 = vmatmul.bf16.gmra.mxu0 %v4432
      %v4572 = vpop.f32.mrf.mxu0
      %v4573 = vadd.f32 0.0, %v4572
      %v4574 = vpop.f32.mrf.mxu0
      %v4575 = vadd.f32 0.0, %v4574
      %4576 = vmatmul.bf16.gmra.mxu0 %v4435
      %v4577 = vpop.f32.mrf.mxu0
      %v4578 = vadd.f32 0.0, %v4577
      %v4579 = vpop.f32.mrf.mxu0
      %v4580 = vadd.f32 0.0, %v4579
      %4581 = vmatmul.bf16.gmra.mxu0 %v4438
      %v4582 = vpop.f32.mrf.mxu0
      %v4583 = vadd.f32 0.0, %v4582
      %v4584 = vpop.f32.mrf.mxu0
      %v4585 = vadd.f32 0.0, %v4584
      %4586 = vmatmul.bf16.gmra.mxu0 %v4441
      %v4587 = vpop.f32.mrf.mxu0
      %v4588 = vadd.f32 0.0, %v4587
      %v4589 = vpop.f32.mrf.mxu0
      %v4590 = vadd.f32 0.0, %v4589
      %4591 = vmatmul.bf16.gmra.mxu0 %v4444
      %v4592 = vpop.f32.mrf.mxu0
      %v4593 = vadd.f32 0.0, %v4592
      %v4594 = vpop.f32.mrf.mxu0
      %v4595 = vadd.f32 0.0, %v4594
      %4596 = vmatmul.bf16.gmra.mxu0 %v4447
      %v4597 = vpop.f32.mrf.mxu0
      %v4598 = vadd.f32 0.0, %v4597
      %v4599 = vpop.f32.mrf.mxu0
      %v4600 = vadd.f32 0.0, %v4599
      %4601 = vmatmul.bf16.gmra.mxu0 %v4450
      %v4602 = vpop.f32.mrf.mxu0
      %v4603 = vadd.f32 0.0, %v4602
      %v4604 = vpop.f32.mrf.mxu0
      %v4605 = vadd.f32 0.0, %v4604
      %4606 = vmatmul.bf16.gmra.mxu0 %v4453
      %v4607 = vpop.f32.mrf.mxu0
      %v4608 = vadd.f32 0.0, %v4607
      %v4609 = vpop.f32.mrf.mxu0
      %v4610 = vadd.f32 0.0, %v4609
      %4611 = vmatmul.bf16.gmra.mxu0 %v4456
      %v4612 = vpop.f32.mrf.mxu0
      %v4613 = vadd.f32 0.0, %v4612
      %v4614 = vpop.f32.mrf.mxu0
      %v4615 = vadd.f32 0.0, %v4614
      %4616 = vmatmul.bf16.gmra.mxu0 %v4459
      %v4617 = vpop.f32.mrf.mxu0
      %v4618 = vadd.f32 0.0, %v4617
      %v4619 = vpop.f32.mrf.mxu0
      %v4620 = vadd.f32 0.0, %v4619
      %4621 = vmatmul.bf16.gmra.mxu0 %v4462
      %v4622 = vpop.f32.mrf.mxu0
      %v4623 = vadd.f32 0.0, %v4622
      %v4624 = vpop.f32.mrf.mxu0
      %v4625 = vadd.f32 0.0, %v4624
      %4626 = vmatmul.bf16.gmra.mxu0 %v4465
      %v4627 = vpop.f32.mrf.mxu0
      %v4628 = vadd.f32 0.0, %v4627
      %v4629 = vpop.f32.mrf.mxu0
      %v4630 = vadd.f32 0.0, %v4629
      %4631 = vmatmul.bf16.gmra.mxu0 %v4468
      %v4632 = vpop.f32.mrf.mxu0
      %v4633 = vadd.f32 0.0, %v4632
      %v4634 = vpop.f32.mrf.mxu0
      %v4635 = vadd.f32 0.0, %v4634
      %4636 = vmatmul.bf16.gmra.mxu0 %v4471
      %v4637 = vpop.f32.mrf.mxu0
      %v4638 = vadd.f32 0.0, %v4637
      %v4639 = vpop.f32.mrf.mxu0
      %v4640 = vadd.f32 0.0, %v4639
      %4641 = vdwg.mxu0
      %v4644 = vunpack.c.l.b16 %v4270
      %v4645 = vunpack.c.l.b16 %v4271
      %v4646 = vpack.c.b16 %v4645, %v4644
      %v4649 = vsel %vm3466, %v4238, 0
      %v4652 = vsel %vm3466, %v4239, 0
      %v4655 = vsel %vm3466, %v4240, 0
      %v4658 = vsel %vm3466, %v4241, 0
      %v4661 = vsel %vm3466, %v4242, 0
      %v4664 = vsel %vm3466, %v4243, 0
      %v4667 = vsel %vm3466, %v4244, 0
      %v4670 = vsel %vm3466, %v4245, 0
      %v4673 = vsel %vm3466, %v4246, 0
      %v4676 = vsel %vm3466, %v4247, 0
      %v4679 = vsel %vm3466, %v4248, 0
      %v4682 = vsel %vm3466, %v4249, 0
      %v4685 = vsel %vm3466, %v4250, 0
      %v4688 = vsel %vm3466, %v4251, 0
      %v4691 = vsel %vm3466, %v4252, 0
      %v4694 = vsel %vm3466, %v4253, 0
      %v4697 = vsel %vm3466, %v4254, 0
      %v4700 = vsel %vm3466, %v4255, 0
      %v4703 = vsel %vm3466, %v4256, 0
      %v4706 = vsel %vm3466, %v4257, 0
      %v4709 = vsel %vm3466, %v4258, 0
      %v4712 = vsel %vm3466, %v4259, 0
      %v4715 = vsel %vm3466, %v4260, 0
      %v4718 = vsel %vm3466, %v4261, 0
      %v4721 = vsel %vm3466, %v4262, 0
      %v4724 = vsel %vm3466, %v4263, 0
      %v4727 = vsel %vm3466, %v4264, 0
      %v4730 = vsel %vm3466, %v4265, 0
      %v4733 = vsel %vm3466, %v4266, 0
      %v4736 = vsel %vm3466, %v4267, 0
      %v4739 = vsel %vm3466, %v4268, 0
      %v4742 = vsel %vm3466, %v4269, 0
      %4744 = vmatpush.bf16.msra.mxu0 0
      %4745 = vmatpush.bf16.msra.mxu0 0
      %4746 = vmatpush.bf16.msra.mxu0 0
      %4747 = vmatpush.bf16.msra.mxu0 0
      %4748 = vmatpush.bf16.msra.mxu0 0
      %4749 = vmatpush.bf16.msra.mxu0 0
      %4750 = vmatpush.bf16.msra.mxu0 0
      %4751 = vmatpush.bf16.msra.mxu0 %v4646
      %4752 = vmatmul.bf16.gmra.mxu0 %v4649
      %v4753 = vpop.f32.mrf.mxu0
      %v4754 = vadd.f32 %v4483, %v4753
      %v4755 = vpop.f32.mrf.mxu0
      %v4756 = vadd.f32 %v4485, %v4755
      %4757 = vmatmul.bf16.gmra.mxu0 %v4652
      %v4758 = vpop.f32.mrf.mxu0
      %v4759 = vadd.f32 %v4488, %v4758
      %v4760 = vpop.f32.mrf.mxu0
      %v4761 = vadd.f32 %v4490, %v4760
      %4762 = vmatmul.bf16.gmra.mxu0 %v4655
      %v4763 = vpop.f32.mrf.mxu0
      %v4764 = vadd.f32 %v4493, %v4763
      %v4765 = vpop.f32.mrf.mxu0
      %v4766 = vadd.f32 %v4495, %v4765
      %4767 = vmatmul.bf16.gmra.mxu0 %v4658
      %v4768 = vpop.f32.mrf.mxu0
      %v4769 = vadd.f32 %v4498, %v4768
      %v4770 = vpop.f32.mrf.mxu0
      %v4771 = vadd.f32 %v4500, %v4770
      %4772 = vmatmul.bf16.gmra.mxu0 %v4661
      %v4773 = vpop.f32.mrf.mxu0
      %v4774 = vadd.f32 %v4503, %v4773
      %v4775 = vpop.f32.mrf.mxu0
      %v4776 = vadd.f32 %v4505, %v4775
      %4777 = vmatmul.bf16.gmra.mxu0 %v4664
      %v4778 = vpop.f32.mrf.mxu0
      %v4779 = vadd.f32 %v4508, %v4778
      %v4780 = vpop.f32.mrf.mxu0
      %v4781 = vadd.f32 %v4510, %v4780
      %4782 = vmatmul.bf16.gmra.mxu0 %v4667
      %v4783 = vpop.f32.mrf.mxu0
      %v4784 = vadd.f32 %v4513, %v4783
      %v4785 = vpop.f32.mrf.mxu0
      %v4786 = vadd.f32 %v4515, %v4785
      %4787 = vmatmul.bf16.gmra.mxu0 %v4670
      %v4788 = vpop.f32.mrf.mxu0
      %v4789 = vadd.f32 %v4518, %v4788
      %v4790 = vpop.f32.mrf.mxu0
      %v4791 = vadd.f32 %v4520, %v4790
      %4792 = vmatmul.bf16.gmra.mxu0 %v4673
      %v4793 = vpop.f32.mrf.mxu0
      %v4794 = vadd.f32 %v4523, %v4793
      %v4795 = vpop.f32.mrf.mxu0
      %v4796 = vadd.f32 %v4525, %v4795
      %4797 = vmatmul.bf16.gmra.mxu0 %v4676
      %v4798 = vpop.f32.mrf.mxu0
      %v4799 = vadd.f32 %v4528, %v4798
      %v4800 = vpop.f32.mrf.mxu0
      %v4801 = vadd.f32 %v4530, %v4800
      %4802 = vmatmul.bf16.gmra.mxu0 %v4679
      %v4803 = vpop.f32.mrf.mxu0
      %v4804 = vadd.f32 %v4533, %v4803
      %v4805 = vpop.f32.mrf.mxu0
      %v4806 = vadd.f32 %v4535, %v4805
      %4807 = vmatmul.bf16.gmra.mxu0 %v4682
      %v4808 = vpop.f32.mrf.mxu0
      %v4809 = vadd.f32 %v4538, %v4808
      %v4810 = vpop.f32.mrf.mxu0
      %v4811 = vadd.f32 %v4540, %v4810
      %4812 = vmatmul.bf16.gmra.mxu0 %v4685
      %v4813 = vpop.f32.mrf.mxu0
      %v4814 = vadd.f32 %v4543, %v4813
      %v4815 = vpop.f32.mrf.mxu0
      %v4816 = vadd.f32 %v4545, %v4815
      %4817 = vmatmul.bf16.gmra.mxu0 %v4688
      %v4818 = vpop.f32.mrf.mxu0
      %v4819 = vadd.f32 %v4548, %v4818
      %v4820 = vpop.f32.mrf.mxu0
      %v4821 = vadd.f32 %v4550, %v4820
      %4822 = vmatmul.bf16.gmra.mxu0 %v4691
      %v4823 = vpop.f32.mrf.mxu0
      %v4824 = vadd.f32 %v4553, %v4823
      %v4825 = vpop.f32.mrf.mxu0
      %v4826 = vadd.f32 %v4555, %v4825
      %4827 = vmatmul.bf16.gmra.mxu0 %v4694
      %v4828 = vpop.f32.mrf.mxu0
      %v4829 = vadd.f32 %v4558, %v4828
      %v4830 = vpop.f32.mrf.mxu0
      %v4831 = vadd.f32 %v4560, %v4830
      %4832 = vmatmul.bf16.gmra.mxu0 %v4697
      %v4833 = vpop.f32.mrf.mxu0
      %v4834 = vadd.f32 %v4563, %v4833
      %v4835 = vpop.f32.mrf.mxu0
      %v4836 = vadd.f32 %v4565, %v4835
      %4837 = vmatmul.bf16.gmra.mxu0 %v4700
      %v4838 = vpop.f32.mrf.mxu0
      %v4839 = vadd.f32 %v4568, %v4838
      %v4840 = vpop.f32.mrf.mxu0
      %v4841 = vadd.f32 %v4570, %v4840
      %4842 = vmatmul.bf16.gmra.mxu0 %v4703
      %v4843 = vpop.f32.mrf.mxu0
      %v4844 = vadd.f32 %v4573, %v4843
      %v4845 = vpop.f32.mrf.mxu0
      %v4846 = vadd.f32 %v4575, %v4845
      %4847 = vmatmul.bf16.gmra.mxu0 %v4706
      %v4848 = vpop.f32.mrf.mxu0
      %v4849 = vadd.f32 %v4578, %v4848
      %v4850 = vpop.f32.mrf.mxu0
      %v4851 = vadd.f32 %v4580, %v4850
      %4852 = vmatmul.bf16.gmra.mxu0 %v4709
      %v4853 = vpop.f32.mrf.mxu0
      %v4854 = vadd.f32 %v4583, %v4853
      %v4855 = vpop.f32.mrf.mxu0
      %v4856 = vadd.f32 %v4585, %v4855
      %4857 = vmatmul.bf16.gmra.mxu0 %v4712
      %v4858 = vpop.f32.mrf.mxu0
      %v4859 = vadd.f32 %v4588, %v4858
      %v4860 = vpop.f32.mrf.mxu0
      %v4861 = vadd.f32 %v4590, %v4860
      %4862 = vmatmul.bf16.gmra.mxu0 %v4715
      %v4863 = vpop.f32.mrf.mxu0
      %v4864 = vadd.f32 %v4593, %v4863
      %v4865 = vpop.f32.mrf.mxu0
      %v4866 = vadd.f32 %v4595, %v4865
      %4867 = vmatmul.bf16.gmra.mxu0 %v4718
      %v4868 = vpop.f32.mrf.mxu0
      %v4869 = vadd.f32 %v4598, %v4868
      %v4870 = vpop.f32.mrf.mxu0
      %v4871 = vadd.f32 %v4600, %v4870
      %4872 = vmatmul.bf16.gmra.mxu0 %v4721
      %v4873 = vpop.f32.mrf.mxu0
      %v4874 = vadd.f32 %v4603, %v4873
      %v4875 = vpop.f32.mrf.mxu0
      %v4876 = vadd.f32 %v4605, %v4875
      %4877 = vmatmul.bf16.gmra.mxu0 %v4724
      %v4878 = vpop.f32.mrf.mxu0
      %v4879 = vadd.f32 %v4608, %v4878
      %v4880 = vpop.f32.mrf.mxu0
      %v4881 = vadd.f32 %v4610, %v4880
      %4882 = vmatmul.bf16.gmra.mxu0 %v4727
      %v4883 = vpop.f32.mrf.mxu0
      %v4884 = vadd.f32 %v4613, %v4883
      %v4885 = vpop.f32.mrf.mxu0
      %v4886 = vadd.f32 %v4615, %v4885
      %4887 = vmatmul.bf16.gmra.mxu0 %v4730
      %v4888 = vpop.f32.mrf.mxu0
      %v4889 = vadd.f32 %v4618, %v4888
      %v4890 = vpop.f32.mrf.mxu0
      %v4891 = vadd.f32 %v4620, %v4890
      %4892 = vmatmul.bf16.gmra.mxu0 %v4733
      %v4893 = vpop.f32.mrf.mxu0
      %v4894 = vadd.f32 %v4623, %v4893
      %v4895 = vpop.f32.mrf.mxu0
      %v4896 = vadd.f32 %v4625, %v4895
      %4897 = vmatmul.bf16.gmra.mxu0 %v4736
      %v4898 = vpop.f32.mrf.mxu0
      %v4899 = vadd.f32 %v4628, %v4898
      %v4900 = vpop.f32.mrf.mxu0
      %v4901 = vadd.f32 %v4630, %v4900
      %4902 = vmatmul.bf16.gmra.mxu0 %v4739
      %v4903 = vpop.f32.mrf.mxu0
      %v4904 = vadd.f32 %v4633, %v4903
      %v4905 = vpop.f32.mrf.mxu0
      %v4906 = vadd.f32 %v4635, %v4905
      %4907 = vmatmul.bf16.gmra.mxu0 %v4742
      %v4908 = vpop.f32.mrf.mxu0
      %v4909 = vadd.f32 %v4638, %v4908
      %v4910 = vpop.f32.mrf.mxu0
      %v4911 = vadd.f32 %v4640, %v4910
      %4912 = vdwg.mxu0
      %v4913 = vld [vmem:[#allocation3 + $0x2] sm:$0xff]
      %v4914 = vld [vmem:[#allocation3 + $0x12] sm:$0xff]
      %v4915 = vld [vmem:[#allocation3 + $0x22] sm:$0xff]
      %v4916 = vld [vmem:[#allocation3 + $0x32] sm:$0xff]
      %v4917 = vld [vmem:[#allocation3 + $0x42] sm:$0xff]
      %v4918 = vld [vmem:[#allocation3 + $0x52] sm:$0xff]
      %v4919 = vld [vmem:[#allocation3 + $0x62] sm:$0xff]
      %v4920 = vld [vmem:[#allocation3 + $0x72] sm:$0xff]
      %v4921 = vld [vmem:[#allocation3 + $0xa2] sm:$0xff]
      %v4922 = vld [vmem:[#allocation3 + $0xb2] sm:$0xff]
      %v4923 = vld [vmem:[#allocation3 + $0xc2] sm:$0xff]
      %v4924 = vld [vmem:[#allocation3 + $0xd2] sm:$0xff]
      %v4925 = vld [vmem:[#allocation3 + $0xe2] sm:$0xff]
      %v4926 = vld [vmem:[#allocation3 + $0xf2] sm:$0xff]
      %v4927 = vld [vmem:[#allocation3 + $0x102] sm:$0xff]
      %v4928 = vld [vmem:[#allocation3 + $0x112] sm:$0xff]
      %v4929 = vld [vmem:[#allocation3 + $0x142] sm:$0xff]
      %v4930 = vld [vmem:[#allocation3 + $0x152] sm:$0xff]
      %v4931 = vld [vmem:[#allocation3 + $0x162] sm:$0xff]
      %v4932 = vld [vmem:[#allocation3 + $0x172] sm:$0xff]
      %v4933 = vld [vmem:[#allocation3 + $0x182] sm:$0xff]
      %v4934 = vld [vmem:[#allocation3 + $0x192] sm:$0xff]
      %v4935 = vld [vmem:[#allocation3 + $0x1a2] sm:$0xff]
      %v4936 = vld [vmem:[#allocation3 + $0x1b2] sm:$0xff]
      %v4937 = vld [vmem:[#allocation3 + $0x1e2] sm:$0xff]
      %v4938 = vld [vmem:[#allocation3 + $0x1f2] sm:$0xff]
      %v4939 = vld [vmem:[#allocation3 + $0x202] sm:$0xff]
      %v4940 = vld [vmem:[#allocation3 + $0x212] sm:$0xff]
      %v4941 = vld [vmem:[#allocation3 + $0x222] sm:$0xff]
      %v4942 = vld [vmem:[#allocation3 + $0x232] sm:$0xff]
      %v4943 = vld [vmem:[#allocation3 + $0x242] sm:$0xff]
      %v4944 = vld [vmem:[#allocation3 + $0x252] sm:$0xff]
      %v4945 = vld [vmem:[#allocation3 + $0x282] sm:$0xff]
      %v4946 = vld [vmem:[#allocation3 + $0x292] sm:$0xff]
      %v4947 = vld [vmem:[#allocation3 + $0x2a2] sm:$0xff]
      %v4948 = vld [vmem:[#allocation3 + $0x2b2] sm:$0xff]
      %v4949 = vld [vmem:[#allocation3 + $0x2c2] sm:$0xff]
      %v4950 = vld [vmem:[#allocation3 + $0x2d2] sm:$0xff]
      %v4951 = vld [vmem:[#allocation3 + $0x2e2] sm:$0xff]
      %v4952 = vld [vmem:[#allocation3 + $0x2f2] sm:$0xff]
      %v4953 = vld [vmem:[#allocation3 + $0x322] sm:$0xff]
      %v4954 = vld [vmem:[#allocation3 + $0x332] sm:$0xff]
      %v4955 = vld [vmem:[#allocation3 + $0x342] sm:$0xff]
      %v4956 = vld [vmem:[#allocation3 + $0x352] sm:$0xff]
      %v4957 = vld [vmem:[#allocation3 + $0x362] sm:$0xff]
      %v4958 = vld [vmem:[#allocation3 + $0x372] sm:$0xff]
      %v4959 = vld [vmem:[#allocation3 + $0x382] sm:$0xff]
      %v4960 = vld [vmem:[#allocation3 + $0x392] sm:$0xff]
      %v4961 = vld [vmem:[#allocation3 + $0x3c2] sm:$0xff]
      %v4962 = vld [vmem:[#allocation3 + $0x3d2] sm:$0xff]
      %v4963 = vld [vmem:[#allocation3 + $0x3e2] sm:$0xff]
      %v4964 = vld [vmem:[#allocation3 + $0x3f2] sm:$0xff]
      %v4965 = vld [vmem:[#allocation3 + $0x402] sm:$0xff]
      %v4966 = vld [vmem:[#allocation3 + $0x412] sm:$0xff]
      %v4967 = vld [vmem:[#allocation3 + $0x422] sm:$0xff]
      %v4968 = vld [vmem:[#allocation3 + $0x432] sm:$0xff]
      %v4969 = vld [vmem:[#allocation3 + $0x462] sm:$0xff]
      %v4970 = vld [vmem:[#allocation3 + $0x472] sm:$0xff]
      %v4971 = vld [vmem:[#allocation3 + $0x482] sm:$0xff]
      %v4972 = vld [vmem:[#allocation3 + $0x492] sm:$0xff]
      %v4973 = vld [vmem:[#allocation3 + $0x4a2] sm:$0xff]
      %v4974 = vld [vmem:[#allocation3 + $0x4b2] sm:$0xff]
      %v4975 = vld [vmem:[#allocation3 + $0x4c2] sm:$0xff]
      %v4976 = vld [vmem:[#allocation3 + $0x4d2] sm:$0xff]
      %v4977 = vpack.c.bf16 %v4914, %v4913
      %v4978 = vpack.c.bf16 %v4916, %v4915
      %v4979 = vpack.c.bf16 %v4918, %v4917
      %v4980 = vpack.c.bf16 %v4920, %v4919
      %v4981 = vpack.c.bf16 %v4922, %v4921
      %v4982 = vpack.c.bf16 %v4924, %v4923
      %v4983 = vpack.c.bf16 %v4926, %v4925
      %v4984 = vpack.c.bf16 %v4928, %v4927
      %v4985 = vpack.c.bf16 %v4930, %v4929
      %v4986 = vpack.c.bf16 %v4932, %v4931
      %v4987 = vpack.c.bf16 %v4934, %v4933
      %v4988 = vpack.c.bf16 %v4936, %v4935
      %v4989 = vpack.c.bf16 %v4938, %v4937
      %v4990 = vpack.c.bf16 %v4940, %v4939
      %v4991 = vpack.c.bf16 %v4942, %v4941
      %v4992 = vpack.c.bf16 %v4944, %v4943
      %v4993 = vpack.c.bf16 %v4946, %v4945
      %v4994 = vpack.c.bf16 %v4948, %v4947
      %v4995 = vpack.c.bf16 %v4950, %v4949
      %v4996 = vpack.c.bf16 %v4952, %v4951
      %v4997 = vpack.c.bf16 %v4954, %v4953
      %v4998 = vpack.c.bf16 %v4956, %v4955
      %v4999 = vpack.c.bf16 %v4958, %v4957
      %v5000 = vpack.c.bf16 %v4960, %v4959
      %v5001 = vpack.c.bf16 %v4962, %v4961
      %v5002 = vpack.c.bf16 %v4964, %v4963
      %v5003 = vpack.c.bf16 %v4966, %v4965
      %v5004 = vpack.c.bf16 %v4968, %v4967
      %v5005 = vpack.c.bf16 %v4970, %v4969
      %v5006 = vpack.c.bf16 %v4972, %v4971
      %v5007 = vpack.c.bf16 %v4974, %v4973
      %v5008 = vpack.c.bf16 %v4976, %v4975
      %s5009 = scalar_lea.vmem %s4, 16
      %v5010 = vld [vmem:[%s5009] sm:$0xf]
      %v5011 = vld [vmem:[%s5009 + $0x4] sm:$0xf]
      %v5014 = vunpack.c.l.b16 %v5010
      %v5015 = vunpack.c.l.b16 %v5011
      %v5016 = vpack.c.b16 %v5015, %v5014
      %v5019 = vsel %vm3466, %v4977, 0
      %v5022 = vsel %vm3466, %v4978, 0
      %v5025 = vsel %vm3466, %v4979, 0
      %v5028 = vsel %vm3466, %v4980, 0
      %v5031 = vsel %vm3466, %v4981, 0
      %v5034 = vsel %vm3466, %v4982, 0
      %v5037 = vsel %vm3466, %v4983, 0
      %v5040 = vsel %vm3466, %v4984, 0
      %v5043 = vsel %vm3466, %v4985, 0
      %v5046 = vsel %vm3466, %v4986, 0
      %v5049 = vsel %vm3466, %v4987, 0
      %v5052 = vsel %vm3466, %v4988, 0
      %v5055 = vsel %vm3466, %v4989, 0
      %v5058 = vsel %vm3466, %v4990, 0
      %v5061 = vsel %vm3466, %v4991, 0
      %v5064 = vsel %vm3466, %v4992, 0
      %v5067 = vsel %vm3466, %v4993, 0
      %v5070 = vsel %vm3466, %v4994, 0
      %v5073 = vsel %vm3466, %v4995, 0
      %v5076 = vsel %vm3466, %v4996, 0
      %v5079 = vsel %vm3466, %v4997, 0
      %v5082 = vsel %vm3466, %v4998, 0
      %v5085 = vsel %vm3466, %v4999, 0
      %v5088 = vsel %vm3466, %v5000, 0
      %v5091 = vsel %vm3466, %v5001, 0
      %v5094 = vsel %vm3466, %v5002, 0
      %v5097 = vsel %vm3466, %v5003, 0
      %v5100 = vsel %vm3466, %v5004, 0
      %v5103 = vsel %vm3466, %v5005, 0
      %v5106 = vsel %vm3466, %v5006, 0
      %v5109 = vsel %vm3466, %v5007, 0
      %v5112 = vsel %vm3466, %v5008, 0
      %5114 = vmatpush.bf16.msra.mxu0 0
      %5115 = vmatpush.bf16.msra.mxu0 0
      %5116 = vmatpush.bf16.msra.mxu0 0
      %5117 = vmatpush.bf16.msra.mxu0 0
      %5118 = vmatpush.bf16.msra.mxu0 0
      %5119 = vmatpush.bf16.msra.mxu0 0
      %5120 = vmatpush.bf16.msra.mxu0 0
      %5121 = vmatpush.bf16.msra.mxu0 %v5016
      %5122 = vmatmul.bf16.gmra.mxu0 %v5019
      %v5123 = vpop.f32.mrf.mxu0
      %v5124 = vadd.f32 0.0, %v5123
      %v5125 = vpop.f32.mrf.mxu0
      %v5126 = vadd.f32 0.0, %v5125
      %5127 = vmatmul.bf16.gmra.mxu0 %v5022
      %v5128 = vpop.f32.mrf.mxu0
      %v5129 = vadd.f32 0.0, %v5128
      %v5130 = vpop.f32.mrf.mxu0
      %v5131 = vadd.f32 0.0, %v5130
      %5132 = vmatmul.bf16.gmra.mxu0 %v5025
      %v5133 = vpop.f32.mrf.mxu0
      %v5134 = vadd.f32 0.0, %v5133
      %v5135 = vpop.f32.mrf.mxu0
      %v5136 = vadd.f32 0.0, %v5135
      %5137 = vmatmul.bf16.gmra.mxu0 %v5028
      %v5138 = vpop.f32.mrf.mxu0
      %v5139 = vadd.f32 0.0, %v5138
      %v5140 = vpop.f32.mrf.mxu0
      %v5141 = vadd.f32 0.0, %v5140
      %5142 = vmatmul.bf16.gmra.mxu0 %v5031
      %v5143 = vpop.f32.mrf.mxu0
      %v5144 = vadd.f32 0.0, %v5143
      %v5145 = vpop.f32.mrf.mxu0
      %v5146 = vadd.f32 0.0, %v5145
      %5147 = vmatmul.bf16.gmra.mxu0 %v5034
      %v5148 = vpop.f32.mrf.mxu0
      %v5149 = vadd.f32 0.0, %v5148
      %v5150 = vpop.f32.mrf.mxu0
      %v5151 = vadd.f32 0.0, %v5150
      %5152 = vmatmul.bf16.gmra.mxu0 %v5037
      %v5153 = vpop.f32.mrf.mxu0
      %v5154 = vadd.f32 0.0, %v5153
      %v5155 = vpop.f32.mrf.mxu0
      %v5156 = vadd.f32 0.0, %v5155
      %5157 = vmatmul.bf16.gmra.mxu0 %v5040
      %v5158 = vpop.f32.mrf.mxu0
      %v5159 = vadd.f32 0.0, %v5158
      %v5160 = vpop.f32.mrf.mxu0
      %v5161 = vadd.f32 0.0, %v5160
      %5162 = vmatmul.bf16.gmra.mxu0 %v5043
      %v5163 = vpop.f32.mrf.mxu0
      %v5164 = vadd.f32 0.0, %v5163
      %v5165 = vpop.f32.mrf.mxu0
      %v5166 = vadd.f32 0.0, %v5165
      %5167 = vmatmul.bf16.gmra.mxu0 %v5046
      %v5168 = vpop.f32.mrf.mxu0
      %v5169 = vadd.f32 0.0, %v5168
      %v5170 = vpop.f32.mrf.mxu0
      %v5171 = vadd.f32 0.0, %v5170
      %5172 = vmatmul.bf16.gmra.mxu0 %v5049
      %v5173 = vpop.f32.mrf.mxu0
      %v5174 = vadd.f32 0.0, %v5173
      %v5175 = vpop.f32.mrf.mxu0
      %v5176 = vadd.f32 0.0, %v5175
      %5177 = vmatmul.bf16.gmra.mxu0 %v5052
      %v5178 = vpop.f32.mrf.mxu0
      %v5179 = vadd.f32 0.0, %v5178
      %v5180 = vpop.f32.mrf.mxu0
      %v5181 = vadd.f32 0.0, %v5180
      %5182 = vmatmul.bf16.gmra.mxu0 %v5055
      %v5183 = vpop.f32.mrf.mxu0
      %v5184 = vadd.f32 0.0, %v5183
      %v5185 = vpop.f32.mrf.mxu0
      %v5186 = vadd.f32 0.0, %v5185
      %5187 = vmatmul.bf16.gmra.mxu0 %v5058
      %v5188 = vpop.f32.mrf.mxu0
      %v5189 = vadd.f32 0.0, %v5188
      %v5190 = vpop.f32.mrf.mxu0
      %v5191 = vadd.f32 0.0, %v5190
      %5192 = vmatmul.bf16.gmra.mxu0 %v5061
      %v5193 = vpop.f32.mrf.mxu0
      %v5194 = vadd.f32 0.0, %v5193
      %v5195 = vpop.f32.mrf.mxu0
      %v5196 = vadd.f32 0.0, %v5195
      %5197 = vmatmul.bf16.gmra.mxu0 %v5064
      %v5198 = vpop.f32.mrf.mxu0
      %v5199 = vadd.f32 0.0, %v5198
      %v5200 = vpop.f32.mrf.mxu0
      %v5201 = vadd.f32 0.0, %v5200
      %5202 = vmatmul.bf16.gmra.mxu0 %v5067
      %v5203 = vpop.f32.mrf.mxu0
      %v5204 = vadd.f32 0.0, %v5203
      %v5205 = vpop.f32.mrf.mxu0
      %v5206 = vadd.f32 0.0, %v5205
      %5207 = vmatmul.bf16.gmra.mxu0 %v5070
      %v5208 = vpop.f32.mrf.mxu0
      %v5209 = vadd.f32 0.0, %v5208
      %v5210 = vpop.f32.mrf.mxu0
      %v5211 = vadd.f32 0.0, %v5210
      %5212 = vmatmul.bf16.gmra.mxu0 %v5073
      %v5213 = vpop.f32.mrf.mxu0
      %v5214 = vadd.f32 0.0, %v5213
      %v5215 = vpop.f32.mrf.mxu0
      %v5216 = vadd.f32 0.0, %v5215
      %5217 = vmatmul.bf16.gmra.mxu0 %v5076
      %v5218 = vpop.f32.mrf.mxu0
      %v5219 = vadd.f32 0.0, %v5218
      %v5220 = vpop.f32.mrf.mxu0
      %v5221 = vadd.f32 0.0, %v5220
      %5222 = vmatmul.bf16.gmra.mxu0 %v5079
      %v5223 = vpop.f32.mrf.mxu0
      %v5224 = vadd.f32 0.0, %v5223
      %v5225 = vpop.f32.mrf.mxu0
      %v5226 = vadd.f32 0.0, %v5225
      %5227 = vmatmul.bf16.gmra.mxu0 %v5082
      %v5228 = vpop.f32.mrf.mxu0
      %v5229 = vadd.f32 0.0, %v5228
      %v5230 = vpop.f32.mrf.mxu0
      %v5231 = vadd.f32 0.0, %v5230
      %5232 = vmatmul.bf16.gmra.mxu0 %v5085
      %v5233 = vpop.f32.mrf.mxu0
      %v5234 = vadd.f32 0.0, %v5233
      %v5235 = vpop.f32.mrf.mxu0
      %v5236 = vadd.f32 0.0, %v5235
      %5237 = vmatmul.bf16.gmra.mxu0 %v5088
      %v5238 = vpop.f32.mrf.mxu0
      %v5239 = vadd.f32 0.0, %v5238
      %v5240 = vpop.f32.mrf.mxu0
      %v5241 = vadd.f32 0.0, %v5240
      %5242 = vmatmul.bf16.gmra.mxu0 %v5091
      %v5243 = vpop.f32.mrf.mxu0
      %v5244 = vadd.f32 0.0, %v5243
      %v5245 = vpop.f32.mrf.mxu0
      %v5246 = vadd.f32 0.0, %v5245
      %5247 = vmatmul.bf16.gmra.mxu0 %v5094
      %v5248 = vpop.f32.mrf.mxu0
      %v5249 = vadd.f32 0.0, %v5248
      %v5250 = vpop.f32.mrf.mxu0
      %v5251 = vadd.f32 0.0, %v5250
      %5252 = vmatmul.bf16.gmra.mxu0 %v5097
      %v5253 = vpop.f32.mrf.mxu0
      %v5254 = vadd.f32 0.0, %v5253
      %v5255 = vpop.f32.mrf.mxu0
      %v5256 = vadd.f32 0.0, %v5255
      %5257 = vmatmul.bf16.gmra.mxu0 %v5100
      %v5258 = vpop.f32.mrf.mxu0
      %v5259 = vadd.f32 0.0, %v5258
      %v5260 = vpop.f32.mrf.mxu0
      %v5261 = vadd.f32 0.0, %v5260
      %5262 = vmatmul.bf16.gmra.mxu0 %v5103
      %v5263 = vpop.f32.mrf.mxu0
      %v5264 = vadd.f32 0.0, %v5263
      %v5265 = vpop.f32.mrf.mxu0
      %v5266 = vadd.f32 0.0, %v5265
      %5267 = vmatmul.bf16.gmra.mxu0 %v5106
      %v5268 = vpop.f32.mrf.mxu0
      %v5269 = vadd.f32 0.0, %v5268
      %v5270 = vpop.f32.mrf.mxu0
      %v5271 = vadd.f32 0.0, %v5270
      %5272 = vmatmul.bf16.gmra.mxu0 %v5109
      %v5273 = vpop.f32.mrf.mxu0
      %v5274 = vadd.f32 0.0, %v5273
      %v5275 = vpop.f32.mrf.mxu0
      %v5276 = vadd.f32 0.0, %v5275
      %5277 = vmatmul.bf16.gmra.mxu0 %v5112
      %v5278 = vpop.f32.mrf.mxu0
      %v5279 = vadd.f32 0.0, %v5278
      %v5280 = vpop.f32.mrf.mxu0
      %v5281 = vadd.f32 0.0, %v5280
      %5282 = vdwg.mxu0
      %v5283 = vadd.f32 %v4754, %v5124
      %v5284 = vadd.f32 %v4756, %v5126
      %v5285 = vadd.f32 %v4759, %v5129
      %v5286 = vadd.f32 %v4761, %v5131
      %v5287 = vadd.f32 %v4764, %v5134
      %v5288 = vadd.f32 %v4766, %v5136
      %v5289 = vadd.f32 %v4769, %v5139
      %v5290 = vadd.f32 %v4771, %v5141
      %v5291 = vadd.f32 %v4774, %v5144
      %v5292 = vadd.f32 %v4776, %v5146
      %v5293 = vadd.f32 %v4779, %v5149
      %v5294 = vadd.f32 %v4781, %v5151
      %v5295 = vadd.f32 %v4784, %v5154
      %v5296 = vadd.f32 %v4786, %v5156
      %v5297 = vadd.f32 %v4789, %v5159
      %v5298 = vadd.f32 %v4791, %v5161
      %v5299 = vadd.f32 %v4794, %v5164
      %v5300 = vadd.f32 %v4796, %v5166
      %v5301 = vadd.f32 %v4799, %v5169
      %v5302 = vadd.f32 %v4801, %v5171
      %v5303 = vadd.f32 %v4804, %v5174
      %v5304 = vadd.f32 %v4806, %v5176
      %v5305 = vadd.f32 %v4809, %v5179
      %v5306 = vadd.f32 %v4811, %v5181
      %v5307 = vadd.f32 %v4814, %v5184
      %v5308 = vadd.f32 %v4816, %v5186
      %v5309 = vadd.f32 %v4819, %v5189
      %v5310 = vadd.f32 %v4821, %v5191
      %v5311 = vadd.f32 %v4824, %v5194
      %v5312 = vadd.f32 %v4826, %v5196
      %v5313 = vadd.f32 %v4829, %v5199
      %v5314 = vadd.f32 %v4831, %v5201
      %v5315 = vadd.f32 %v4834, %v5204
      %v5316 = vadd.f32 %v4836, %v5206
      %v5317 = vadd.f32 %v4839, %v5209
      %v5318 = vadd.f32 %v4841, %v5211
      %v5319 = vadd.f32 %v4844, %v5214
      %v5320 = vadd.f32 %v4846, %v5216
      %v5321 = vadd.f32 %v4849, %v5219
      %v5322 = vadd.f32 %v4851, %v5221
      %v5323 = vadd.f32 %v4854, %v5224
      %v5324 = vadd.f32 %v4856, %v5226
      %v5325 = vadd.f32 %v4859, %v5229
      %v5326 = vadd.f32 %v4861, %v5231
      %v5327 = vadd.f32 %v4864, %v5234
      %v5328 = vadd.f32 %v4866, %v5236
      %v5329 = vadd.f32 %v4869, %v5239
      %v5330 = vadd.f32 %v4871, %v5241
      %v5331 = vadd.f32 %v4874, %v5244
      %v5332 = vadd.f32 %v4876, %v5246
      %v5333 = vadd.f32 %v4879, %v5249
      %v5334 = vadd.f32 %v4881, %v5251
      %v5335 = vadd.f32 %v4884, %v5254
      %v5336 = vadd.f32 %v4886, %v5256
      %v5337 = vadd.f32 %v4889, %v5259
      %v5338 = vadd.f32 %v4891, %v5261
      %v5339 = vadd.f32 %v4894, %v5264
      %v5340 = vadd.f32 %v4896, %v5266
      %v5341 = vadd.f32 %v4899, %v5269
      %v5342 = vadd.f32 %v4901, %v5271
      %v5343 = vadd.f32 %v4904, %v5274
      %v5344 = vadd.f32 %v4906, %v5276
      %v5345 = vadd.f32 %v4909, %v5279
      %v5346 = vadd.f32 %v4911, %v5281
      %v5347 = vld [vmem:[%s4109] sm:$0xff]
      %v5348 = vld [vmem:[%s4109 + $0x10] sm:$0xff]
      %v5349 = vld [vmem:[%s4109 + $0x20] sm:$0xff]
      %v5350 = vld [vmem:[%s4109 + $0x30] sm:$0xff]
      %v5351 = vld [vmem:[%s4109 + $0x40] sm:$0xff]
      %v5352 = vld [vmem:[%s4109 + $0x50] sm:$0xff]
      %v5353 = vld [vmem:[%s4109 + $0x60] sm:$0xff]
      %v5354 = vld [vmem:[%s4109 + $0x70] sm:$0xff]
      %v5355 = vld [vmem:[%s4109 + $0xa0] sm:$0xff]
      %v5356 = vld [vmem:[%s4109 + $0xb0] sm:$0xff]
      %v5357 = vld [vmem:[%s4109 + $0xc0] sm:$0xff]
      %v5358 = vld [vmem:[%s4109 + $0xd0] sm:$0xff]
      %v5359 = vld [vmem:[%s4109 + $0xe0] sm:$0xff]
      %v5360 = vld [vmem:[%s4109 + $0xf0] sm:$0xff]
      %v5361 = vld [vmem:[%s4109 + $0x100] sm:$0xff]
      %v5362 = vld [vmem:[%s4109 + $0x110] sm:$0xff]
      %v5363 = vld [vmem:[%s4109 + $0x140] sm:$0xff]
      %v5364 = vld [vmem:[%s4109 + $0x150] sm:$0xff]
      %v5365 = vld [vmem:[%s4109 + $0x160] sm:$0xff]
      %v5366 = vld [vmem:[%s4109 + $0x170] sm:$0xff]
      %v5367 = vld [vmem:[%s4109 + $0x180] sm:$0xff]
      %v5368 = vld [vmem:[%s4109 + $0x190] sm:$0xff]
      %v5369 = vld [vmem:[%s4109 + $0x1a0] sm:$0xff]
      %v5370 = vld [vmem:[%s4109 + $0x1b0] sm:$0xff]
      %v5371 = vld [vmem:[%s4109 + $0x1e0] sm:$0xff]
      %v5372 = vld [vmem:[%s4109 + $0x1f0] sm:$0xff]
      %v5373 = vld [vmem:[%s4109 + $0x200] sm:$0xff]
      %v5374 = vld [vmem:[%s4109 + $0x210] sm:$0xff]
      %v5375 = vld [vmem:[%s4109 + $0x220] sm:$0xff]
      %v5376 = vld [vmem:[%s4109 + $0x230] sm:$0xff]
      %v5377 = vld [vmem:[%s4109 + $0x240] sm:$0xff]
      %v5378 = vld [vmem:[%s4109 + $0x250] sm:$0xff]
      %v5379 = vld [vmem:[%s4109 + $0x280] sm:$0xff]
      %v5380 = vld [vmem:[%s4109 + $0x290] sm:$0xff]
      %v5381 = vld [vmem:[%s4109 + $0x2a0] sm:$0xff]
      %v5382 = vld [vmem:[%s4109 + $0x2b0] sm:$0xff]
      %v5383 = vld [vmem:[%s4109 + $0x2c0] sm:$0xff]
      %v5384 = vld [vmem:[%s4109 + $0x2d0] sm:$0xff]
      %v5385 = vld [vmem:[%s4109 + $0x2e0] sm:$0xff]
      %v5386 = vld [vmem:[%s4109 + $0x2f0] sm:$0xff]
      %v5387 = vld [vmem:[%s4109 + $0x320] sm:$0xff]
      %v5388 = vld [vmem:[%s4109 + $0x330] sm:$0xff]
      %v5389 = vld [vmem:[%s4109 + $0x340] sm:$0xff]
      %v5390 = vld [vmem:[%s4109 + $0x350] sm:$0xff]
      %v5391 = vld [vmem:[%s4109 + $0x360] sm:$0xff]
      %v5392 = vld [vmem:[%s4109 + $0x370] sm:$0xff]
      %v5393 = vld [vmem:[%s4109 + $0x380] sm:$0xff]
      %v5394 = vld [vmem:[%s4109 + $0x390] sm:$0xff]
      %v5395 = vld [vmem:[%s4109 + $0x3c0] sm:$0xff]
      %v5396 = vld [vmem:[%s4109 + $0x3d0] sm:$0xff]
      %v5397 = vld [vmem:[%s4109 + $0x3e0] sm:$0xff]
      %v5398 = vld [vmem:[%s4109 + $0x3f0] sm:$0xff]
      %v5399 = vld [vmem:[%s4109 + $0x400] sm:$0xff]
      %v5400 = vld [vmem:[%s4109 + $0x410] sm:$0xff]
      %v5401 = vld [vmem:[%s4109 + $0x420] sm:$0xff]
      %v5402 = vld [vmem:[%s4109 + $0x430] sm:$0xff]
      %v5403 = vld [vmem:[%s4109 + $0x460] sm:$0xff]
      %v5404 = vld [vmem:[%s4109 + $0x470] sm:$0xff]
      %v5405 = vld [vmem:[%s4109 + $0x480] sm:$0xff]
      %v5406 = vld [vmem:[%s4109 + $0x490] sm:$0xff]
      %v5407 = vld [vmem:[%s4109 + $0x4a0] sm:$0xff]
      %v5408 = vld [vmem:[%s4109 + $0x4b0] sm:$0xff]
      %v5409 = vld [vmem:[%s4109 + $0x4c0] sm:$0xff]
      %v5410 = vld [vmem:[%s4109 + $0x4d0] sm:$0xff]
      %v5411 = vpack.c.bf16 %v5348, %v5347
      %v5412 = vpack.c.bf16 %v5350, %v5349
      %v5413 = vpack.c.bf16 %v5352, %v5351
      %v5414 = vpack.c.bf16 %v5354, %v5353
      %v5415 = vpack.c.bf16 %v5356, %v5355
      %v5416 = vpack.c.bf16 %v5358, %v5357
      %v5417 = vpack.c.bf16 %v5360, %v5359
      %v5418 = vpack.c.bf16 %v5362, %v5361
      %v5419 = vpack.c.bf16 %v5364, %v5363
      %v5420 = vpack.c.bf16 %v5366, %v5365
      %v5421 = vpack.c.bf16 %v5368, %v5367
      %v5422 = vpack.c.bf16 %v5370, %v5369
      %v5423 = vpack.c.bf16 %v5372, %v5371
      %v5424 = vpack.c.bf16 %v5374, %v5373
      %v5425 = vpack.c.bf16 %v5376, %v5375
      %v5426 = vpack.c.bf16 %v5378, %v5377
      %v5427 = vpack.c.bf16 %v5380, %v5379
      %v5428 = vpack.c.bf16 %v5382, %v5381
      %v5429 = vpack.c.bf16 %v5384, %v5383
      %v5430 = vpack.c.bf16 %v5386, %v5385
      %v5431 = vpack.c.bf16 %v5388, %v5387
      %v5432 = vpack.c.bf16 %v5390, %v5389
      %v5433 = vpack.c.bf16 %v5392, %v5391
      %v5434 = vpack.c.bf16 %v5394, %v5393
      %v5435 = vpack.c.bf16 %v5396, %v5395
      %v5436 = vpack.c.bf16 %v5398, %v5397
      %v5437 = vpack.c.bf16 %v5400, %v5399
      %v5438 = vpack.c.bf16 %v5402, %v5401
      %v5439 = vpack.c.bf16 %v5404, %v5403
      %v5440 = vpack.c.bf16 %v5406, %v5405
      %v5441 = vpack.c.bf16 %v5408, %v5407
      %v5442 = vpack.c.bf16 %v5410, %v5409
      %s5443 = scalar_lea.vmem %s4, 24
      %v5444 = vld [vmem:[%s5443] sm:$0xf]
      %v5445 = vld [vmem:[%s5443 + $0x4] sm:$0xf]
      %v5448 = vunpack.c.l.b16 %v5444
      %v5449 = vunpack.c.l.b16 %v5445
      %v5450 = vpack.c.b16 %v5449, %v5448
      %v5453 = vsel %vm3466, %v5411, 0
      %v5456 = vsel %vm3466, %v5412, 0
      %v5459 = vsel %vm3466, %v5413, 0
      %v5462 = vsel %vm3466, %v5414, 0
      %v5465 = vsel %vm3466, %v5415, 0
      %v5468 = vsel %vm3466, %v5416, 0
      %v5471 = vsel %vm3466, %v5417, 0
      %v5474 = vsel %vm3466, %v5418, 0
      %v5477 = vsel %vm3466, %v5419, 0
      %v5480 = vsel %vm3466, %v5420, 0
      %v5483 = vsel %vm3466, %v5421, 0
      %v5486 = vsel %vm3466, %v5422, 0
      %v5489 = vsel %vm3466, %v5423, 0
      %v5492 = vsel %vm3466, %v5424, 0
      %v5495 = vsel %vm3466, %v5425, 0
      %v5498 = vsel %vm3466, %v5426, 0
      %v5501 = vsel %vm3466, %v5427, 0
      %v5504 = vsel %vm3466, %v5428, 0
      %v5507 = vsel %vm3466, %v5429, 0
      %v5510 = vsel %vm3466, %v5430, 0
      %v5513 = vsel %vm3466, %v5431, 0
      %v5516 = vsel %vm3466, %v5432, 0
      %v5519 = vsel %vm3466, %v5433, 0
      %v5522 = vsel %vm3466, %v5434, 0
      %v5525 = vsel %vm3466, %v5435, 0
      %v5528 = vsel %vm3466, %v5436, 0
      %v5531 = vsel %vm3466, %v5437, 0
      %v5534 = vsel %vm3466, %v5438, 0
      %v5537 = vsel %vm3466, %v5439, 0
      %v5540 = vsel %vm3466, %v5440, 0
      %v5543 = vsel %vm3466, %v5441, 0
      %v5546 = vsel %vm3466, %v5442, 0
      %5548 = vmatpush.bf16.msra.mxu0 0
      %5549 = vmatpush.bf16.msra.mxu0 0
      %5550 = vmatpush.bf16.msra.mxu0 0
      %5551 = vmatpush.bf16.msra.mxu0 0
      %5552 = vmatpush.bf16.msra.mxu0 0
      %5553 = vmatpush.bf16.msra.mxu0 0
      %5554 = vmatpush.bf16.msra.mxu0 0
      %5555 = vmatpush.bf16.msra.mxu0 %v5450
      %5556 = vmatmul.bf16.gmra.mxu0 %v5453
      %v5557 = vpop.f32.mrf.mxu0
      %v5558 = vadd.f32 0.0, %v5557
      %v5559 = vpop.f32.mrf.mxu0
      %v5560 = vadd.f32 0.0, %v5559
      %5561 = vmatmul.bf16.gmra.mxu0 %v5456
      %v5562 = vpop.f32.mrf.mxu0
      %v5563 = vadd.f32 0.0, %v5562
      %v5564 = vpop.f32.mrf.mxu0
      %v5565 = vadd.f32 0.0, %v5564
      %5566 = vmatmul.bf16.gmra.mxu0 %v5459
      %v5567 = vpop.f32.mrf.mxu0
      %v5568 = vadd.f32 0.0, %v5567
      %v5569 = vpop.f32.mrf.mxu0
      %v5570 = vadd.f32 0.0, %v5569
      %5571 = vmatmul.bf16.gmra.mxu0 %v5462
      %v5572 = vpop.f32.mrf.mxu0
      %v5573 = vadd.f32 0.0, %v5572
      %v5574 = vpop.f32.mrf.mxu0
      %v5575 = vadd.f32 0.0, %v5574
      %5576 = vmatmul.bf16.gmra.mxu0 %v5465
      %v5577 = vpop.f32.mrf.mxu0
      %v5578 = vadd.f32 0.0, %v5577
      %v5579 = vpop.f32.mrf.mxu0
      %v5580 = vadd.f32 0.0, %v5579
      %5581 = vmatmul.bf16.gmra.mxu0 %v5468
      %v5582 = vpop.f32.mrf.mxu0
      %v5583 = vadd.f32 0.0, %v5582
      %v5584 = vpop.f32.mrf.mxu0
      %v5585 = vadd.f32 0.0, %v5584
      %5586 = vmatmul.bf16.gmra.mxu0 %v5471
      %v5587 = vpop.f32.mrf.mxu0
      %v5588 = vadd.f32 0.0, %v5587
      %v5589 = vpop.f32.mrf.mxu0
      %v5590 = vadd.f32 0.0, %v5589
      %5591 = vmatmul.bf16.gmra.mxu0 %v5474
      %v5592 = vpop.f32.mrf.mxu0
      %v5593 = vadd.f32 0.0, %v5592
      %v5594 = vpop.f32.mrf.mxu0
      %v5595 = vadd.f32 0.0, %v5594
      %5596 = vmatmul.bf16.gmra.mxu0 %v5477
      %v5597 = vpop.f32.mrf.mxu0
      %v5598 = vadd.f32 0.0, %v5597
      %v5599 = vpop.f32.mrf.mxu0
      %v5600 = vadd.f32 0.0, %v5599
      %5601 = vmatmul.bf16.gmra.mxu0 %v5480
      %v5602 = vpop.f32.mrf.mxu0
      %v5603 = vadd.f32 0.0, %v5602
      %v5604 = vpop.f32.mrf.mxu0
      %v5605 = vadd.f32 0.0, %v5604
      %5606 = vmatmul.bf16.gmra.mxu0 %v5483
      %v5607 = vpop.f32.mrf.mxu0
      %v5608 = vadd.f32 0.0, %v5607
      %v5609 = vpop.f32.mrf.mxu0
      %v5610 = vadd.f32 0.0, %v5609
      %5611 = vmatmul.bf16.gmra.mxu0 %v5486
      %v5612 = vpop.f32.mrf.mxu0
      %v5613 = vadd.f32 0.0, %v5612
      %v5614 = vpop.f32.mrf.mxu0
      %v5615 = vadd.f32 0.0, %v5614
      %5616 = vmatmul.bf16.gmra.mxu0 %v5489
      %v5617 = vpop.f32.mrf.mxu0
      %v5618 = vadd.f32 0.0, %v5617
      %v5619 = vpop.f32.mrf.mxu0
      %v5620 = vadd.f32 0.0, %v5619
      %5621 = vmatmul.bf16.gmra.mxu0 %v5492
      %v5622 = vpop.f32.mrf.mxu0
      %v5623 = vadd.f32 0.0, %v5622
      %v5624 = vpop.f32.mrf.mxu0
      %v5625 = vadd.f32 0.0, %v5624
      %5626 = vmatmul.bf16.gmra.mxu0 %v5495
      %v5627 = vpop.f32.mrf.mxu0
      %v5628 = vadd.f32 0.0, %v5627
      %v5629 = vpop.f32.mrf.mxu0
      %v5630 = vadd.f32 0.0, %v5629
      %5631 = vmatmul.bf16.gmra.mxu0 %v5498
      %v5632 = vpop.f32.mrf.mxu0
      %v5633 = vadd.f32 0.0, %v5632
      %v5634 = vpop.f32.mrf.mxu0
      %v5635 = vadd.f32 0.0, %v5634
      %5636 = vmatmul.bf16.gmra.mxu0 %v5501
      %v5637 = vpop.f32.mrf.mxu0
      %v5638 = vadd.f32 0.0, %v5637
      %v5639 = vpop.f32.mrf.mxu0
      %v5640 = vadd.f32 0.0, %v5639
      %5641 = vmatmul.bf16.gmra.mxu0 %v5504
      %v5642 = vpop.f32.mrf.mxu0
      %v5643 = vadd.f32 0.0, %v5642
      %v5644 = vpop.f32.mrf.mxu0
      %v5645 = vadd.f32 0.0, %v5644
      %5646 = vmatmul.bf16.gmra.mxu0 %v5507
      %v5647 = vpop.f32.mrf.mxu0
      %v5648 = vadd.f32 0.0, %v5647
      %v5649 = vpop.f32.mrf.mxu0
      %v5650 = vadd.f32 0.0, %v5649
      %5651 = vmatmul.bf16.gmra.mxu0 %v5510
      %v5652 = vpop.f32.mrf.mxu0
      %v5653 = vadd.f32 0.0, %v5652
      %v5654 = vpop.f32.mrf.mxu0
      %v5655 = vadd.f32 0.0, %v5654
      %5656 = vmatmul.bf16.gmra.mxu0 %v5513
      %v5657 = vpop.f32.mrf.mxu0
      %v5658 = vadd.f32 0.0, %v5657
      %v5659 = vpop.f32.mrf.mxu0
      %v5660 = vadd.f32 0.0, %v5659
      %5661 = vmatmul.bf16.gmra.mxu0 %v5516
      %v5662 = vpop.f32.mrf.mxu0
      %v5663 = vadd.f32 0.0, %v5662
      %v5664 = vpop.f32.mrf.mxu0
      %v5665 = vadd.f32 0.0, %v5664
      %5666 = vmatmul.bf16.gmra.mxu0 %v5519
      %v5667 = vpop.f32.mrf.mxu0
      %v5668 = vadd.f32 0.0, %v5667
      %v5669 = vpop.f32.mrf.mxu0
      %v5670 = vadd.f32 0.0, %v5669
      %5671 = vmatmul.bf16.gmra.mxu0 %v5522
      %v5672 = vpop.f32.mrf.mxu0
      %v5673 = vadd.f32 0.0, %v5672
      %v5674 = vpop.f32.mrf.mxu0
      %v5675 = vadd.f32 0.0, %v5674
      %5676 = vmatmul.bf16.gmra.mxu0 %v5525
      %v5677 = vpop.f32.mrf.mxu0
      %v5678 = vadd.f32 0.0, %v5677
      %v5679 = vpop.f32.mrf.mxu0
      %v5680 = vadd.f32 0.0, %v5679
      %5681 = vmatmul.bf16.gmra.mxu0 %v5528
      %v5682 = vpop.f32.mrf.mxu0
      %v5683 = vadd.f32 0.0, %v5682
      %v5684 = vpop.f32.mrf.mxu0
      %v5685 = vadd.f32 0.0, %v5684
      %5686 = vmatmul.bf16.gmra.mxu0 %v5531
      %v5687 = vpop.f32.mrf.mxu0
      %v5688 = vadd.f32 0.0, %v5687
      %v5689 = vpop.f32.mrf.mxu0
      %v5690 = vadd.f32 0.0, %v5689
      %5691 = vmatmul.bf16.gmra.mxu0 %v5534
      %v5692 = vpop.f32.mrf.mxu0
      %v5693 = vadd.f32 0.0, %v5692
      %v5694 = vpop.f32.mrf.mxu0
      %v5695 = vadd.f32 0.0, %v5694
      %5696 = vmatmul.bf16.gmra.mxu0 %v5537
      %v5697 = vpop.f32.mrf.mxu0
      %v5698 = vadd.f32 0.0, %v5697
      %v5699 = vpop.f32.mrf.mxu0
      %v5700 = vadd.f32 0.0, %v5699
      %5701 = vmatmul.bf16.gmra.mxu0 %v5540
      %v5702 = vpop.f32.mrf.mxu0
      %v5703 = vadd.f32 0.0, %v5702
      %v5704 = vpop.f32.mrf.mxu0
      %v5705 = vadd.f32 0.0, %v5704
      %5706 = vmatmul.bf16.gmra.mxu0 %v5543
      %v5707 = vpop.f32.mrf.mxu0
      %v5708 = vadd.f32 0.0, %v5707
      %v5709 = vpop.f32.mrf.mxu0
      %v5710 = vadd.f32 0.0, %v5709
      %5711 = vmatmul.bf16.gmra.mxu0 %v5546
      %v5712 = vpop.f32.mrf.mxu0
      %v5713 = vadd.f32 0.0, %v5712
      %v5714 = vpop.f32.mrf.mxu0
      %v5715 = vadd.f32 0.0, %v5714
      %5716 = vdwg.mxu0
      %v5717 = vadd.f32 %v5283, %v5558
      %v5718 = vadd.f32 %v5284, %v5560
      %v5719 = vadd.f32 %v5285, %v5563
      %v5720 = vadd.f32 %v5286, %v5565
      %v5721 = vadd.f32 %v5287, %v5568
      %v5722 = vadd.f32 %v5288, %v5570
      %v5723 = vadd.f32 %v5289, %v5573
      %v5724 = vadd.f32 %v5290, %v5575
      %v5725 = vadd.f32 %v5291, %v5578
      %v5726 = vadd.f32 %v5292, %v5580
      %v5727 = vadd.f32 %v5293, %v5583
      %v5728 = vadd.f32 %v5294, %v5585
      %v5729 = vadd.f32 %v5295, %v5588
      %v5730 = vadd.f32 %v5296, %v5590
      %v5731 = vadd.f32 %v5297, %v5593
      %v5732 = vadd.f32 %v5298, %v5595
      %v5733 = vadd.f32 %v5299, %v5598
      %v5734 = vadd.f32 %v5300, %v5600
      %v5735 = vadd.f32 %v5301, %v5603
      %v5736 = vadd.f32 %v5302, %v5605
      %v5737 = vadd.f32 %v5303, %v5608
      %v5738 = vadd.f32 %v5304, %v5610
      %v5739 = vadd.f32 %v5305, %v5613
      %v5740 = vadd.f32 %v5306, %v5615
      %v5741 = vadd.f32 %v5307, %v5618
      %v5742 = vadd.f32 %v5308, %v5620
      %v5743 = vadd.f32 %v5309, %v5623
      %v5744 = vadd.f32 %v5310, %v5625
      %v5745 = vadd.f32 %v5311, %v5628
      %v5746 = vadd.f32 %v5312, %v5630
      %v5747 = vadd.f32 %v5313, %v5633
      %v5748 = vadd.f32 %v5314, %v5635
      %v5749 = vadd.f32 %v5315, %v5638
      %v5750 = vadd.f32 %v5316, %v5640
      %v5751 = vadd.f32 %v5317, %v5643
      %v5752 = vadd.f32 %v5318, %v5645
      %v5753 = vadd.f32 %v5319, %v5648
      %v5754 = vadd.f32 %v5320, %v5650
      %v5755 = vadd.f32 %v5321, %v5653
      %v5756 = vadd.f32 %v5322, %v5655
      %v5757 = vadd.f32 %v5323, %v5658
      %v5758 = vadd.f32 %v5324, %v5660
      %v5759 = vadd.f32 %v5325, %v5663
      %v5760 = vadd.f32 %v5326, %v5665
      %v5761 = vadd.f32 %v5327, %v5668
      %v5762 = vadd.f32 %v5328, %v5670
      %v5763 = vadd.f32 %v5329, %v5673
      %v5764 = vadd.f32 %v5330, %v5675
      %v5765 = vadd.f32 %v5331, %v5678
      %v5766 = vadd.f32 %v5332, %v5680
      %v5767 = vadd.f32 %v5333, %v5683
      %v5768 = vadd.f32 %v5334, %v5685
      %v5769 = vadd.f32 %v5335, %v5688
      %v5770 = vadd.f32 %v5336, %v5690
      %v5771 = vadd.f32 %v5337, %v5693
      %v5772 = vadd.f32 %v5338, %v5695
      %v5773 = vadd.f32 %v5339, %v5698
      %v5774 = vadd.f32 %v5340, %v5700
      %v5775 = vadd.f32 %v5341, %v5703
      %v5776 = vadd.f32 %v5342, %v5705
      %v5777 = vadd.f32 %v5343, %v5708
      %v5778 = vadd.f32 %v5344, %v5710
      %v5779 = vadd.f32 %v5345, %v5713
      %v5780 = vadd.f32 %v5346, %v5715
      %v5781 = vld [vmem:[%s4109 + $0x1] sm:$0xff]
      %v5782 = vld [vmem:[%s4109 + $0x11] sm:$0xff]
      %v5783 = vld [vmem:[%s4109 + $0x21] sm:$0xff]
      %v5784 = vld [vmem:[%s4109 + $0x31] sm:$0xff]
      %v5785 = vld [vmem:[%s4109 + $0x41] sm:$0xff]
      %v5786 = vld [vmem:[%s4109 + $0x51] sm:$0xff]
      %v5787 = vld [vmem:[%s4109 + $0x61] sm:$0xff]
      %v5788 = vld [vmem:[%s4109 + $0x71] sm:$0xff]
      %v5789 = vld [vmem:[%s4109 + $0xa1] sm:$0xff]
      %v5790 = vld [vmem:[%s4109 + $0xb1] sm:$0xff]
      %v5791 = vld [vmem:[%s4109 + $0xc1] sm:$0xff]
      %v5792 = vld [vmem:[%s4109 + $0xd1] sm:$0xff]
      %v5793 = vld [vmem:[%s4109 + $0xe1] sm:$0xff]
      %v5794 = vld [vmem:[%s4109 + $0xf1] sm:$0xff]
      %v5795 = vld [vmem:[%s4109 + $0x101] sm:$0xff]
      %v5796 = vld [vmem:[%s4109 + $0x111] sm:$0xff]
      %v5797 = vld [vmem:[%s4109 + $0x141] sm:$0xff]
      %v5798 = vld [vmem:[%s4109 + $0x151] sm:$0xff]
      %v5799 = vld [vmem:[%s4109 + $0x161] sm:$0xff]
      %v5800 = vld [vmem:[%s4109 + $0x171] sm:$0xff]
      %v5801 = vld [vmem:[%s4109 + $0x181] sm:$0xff]
      %v5802 = vld [vmem:[%s4109 + $0x191] sm:$0xff]
      %v5803 = vld [vmem:[%s4109 + $0x1a1] sm:$0xff]
      %v5804 = vld [vmem:[%s4109 + $0x1b1] sm:$0xff]
      %v5805 = vld [vmem:[%s4109 + $0x1e1] sm:$0xff]
      %v5806 = vld [vmem:[%s4109 + $0x1f1] sm:$0xff]
      %v5807 = vld [vmem:[%s4109 + $0x201] sm:$0xff]
      %v5808 = vld [vmem:[%s4109 + $0x211] sm:$0xff]
      %v5809 = vld [vmem:[%s4109 + $0x221] sm:$0xff]
      %v5810 = vld [vmem:[%s4109 + $0x231] sm:$0xff]
      %v5811 = vld [vmem:[%s4109 + $0x241] sm:$0xff]
      %v5812 = vld [vmem:[%s4109 + $0x251] sm:$0xff]
      %v5813 = vld [vmem:[%s4109 + $0x281] sm:$0xff]
      %v5814 = vld [vmem:[%s4109 + $0x291] sm:$0xff]
      %v5815 = vld [vmem:[%s4109 + $0x2a1] sm:$0xff]
      %v5816 = vld [vmem:[%s4109 + $0x2b1] sm:$0xff]
      %v5817 = vld [vmem:[%s4109 + $0x2c1] sm:$0xff]
      %v5818 = vld [vmem:[%s4109 + $0x2d1] sm:$0xff]
      %v5819 = vld [vmem:[%s4109 + $0x2e1] sm:$0xff]
      %v5820 = vld [vmem:[%s4109 + $0x2f1] sm:$0xff]
      %v5821 = vld [vmem:[%s4109 + $0x321] sm:$0xff]
      %v5822 = vld [vmem:[%s4109 + $0x331] sm:$0xff]
      %v5823 = vld [vmem:[%s4109 + $0x341] sm:$0xff]
      %v5824 = vld [vmem:[%s4109 + $0x351] sm:$0xff]
      %v5825 = vld [vmem:[%s4109 + $0x361] sm:$0xff]
      %v5826 = vld [vmem:[%s4109 + $0x371] sm:$0xff]
      %v5827 = vld [vmem:[%s4109 + $0x381] sm:$0xff]
      %v5828 = vld [vmem:[%s4109 + $0x391] sm:$0xff]
      %v5829 = vld [vmem:[%s4109 + $0x3c1] sm:$0xff]
      %v5830 = vld [vmem:[%s4109 + $0x3d1] sm:$0xff]
      %v5831 = vld [vmem:[%s4109 + $0x3e1] sm:$0xff]
      %v5832 = vld [vmem:[%s4109 + $0x3f1] sm:$0xff]
      %v5833 = vld [vmem:[%s4109 + $0x401] sm:$0xff]
      %v5834 = vld [vmem:[%s4109 + $0x411] sm:$0xff]
      %v5835 = vld [vmem:[%s4109 + $0x421] sm:$0xff]
      %v5836 = vld [vmem:[%s4109 + $0x431] sm:$0xff]
      %v5837 = vld [vmem:[%s4109 + $0x461] sm:$0xff]
      %v5838 = vld [vmem:[%s4109 + $0x471] sm:$0xff]
      %v5839 = vld [vmem:[%s4109 + $0x481] sm:$0xff]
      %v5840 = vld [vmem:[%s4109 + $0x491] sm:$0xff]
      %v5841 = vld [vmem:[%s4109 + $0x4a1] sm:$0xff]
      %v5842 = vld [vmem:[%s4109 + $0x4b1] sm:$0xff]
      %v5843 = vld [vmem:[%s4109 + $0x4c1] sm:$0xff]
      %v5844 = vld [vmem:[%s4109 + $0x4d1] sm:$0xff]
      %v5845 = vpack.c.bf16 %v5782, %v5781
      %v5846 = vpack.c.bf16 %v5784, %v5783
      %v5847 = vpack.c.bf16 %v5786, %v5785
      %v5848 = vpack.c.bf16 %v5788, %v5787
      %v5849 = vpack.c.bf16 %v5790, %v5789
      %v5850 = vpack.c.bf16 %v5792, %v5791
      %v5851 = vpack.c.bf16 %v5794, %v5793
      %v5852 = vpack.c.bf16 %v5796, %v5795
      %v5853 = vpack.c.bf16 %v5798, %v5797
      %v5854 = vpack.c.bf16 %v5800, %v5799
      %v5855 = vpack.c.bf16 %v5802, %v5801
      %v5856 = vpack.c.bf16 %v5804, %v5803
      %v5857 = vpack.c.bf16 %v5806, %v5805
      %v5858 = vpack.c.bf16 %v5808, %v5807
      %v5859 = vpack.c.bf16 %v5810, %v5809
      %v5860 = vpack.c.bf16 %v5812, %v5811
      %v5861 = vpack.c.bf16 %v5814, %v5813
      %v5862 = vpack.c.bf16 %v5816, %v5815
      %v5863 = vpack.c.bf16 %v5818, %v5817
      %v5864 = vpack.c.bf16 %v5820, %v5819
      %v5865 = vpack.c.bf16 %v5822, %v5821
      %v5866 = vpack.c.bf16 %v5824, %v5823
      %v5867 = vpack.c.bf16 %v5826, %v5825
      %v5868 = vpack.c.bf16 %v5828, %v5827
      %v5869 = vpack.c.bf16 %v5830, %v5829
      %v5870 = vpack.c.bf16 %v5832, %v5831
      %v5871 = vpack.c.bf16 %v5834, %v5833
      %v5872 = vpack.c.bf16 %v5836, %v5835
      %v5873 = vpack.c.bf16 %v5838, %v5837
      %v5874 = vpack.c.bf16 %v5840, %v5839
      %v5875 = vpack.c.bf16 %v5842, %v5841
      %v5876 = vpack.c.bf16 %v5844, %v5843
      %s5877 = scalar_lea.vmem %s4, 32
      %v5878 = vld [vmem:[%s5877] sm:$0xf]
      %v5879 = vld [vmem:[%s5877 + $0x4] sm:$0xf]
      %v5882 = vunpack.c.l.b16 %v5878
      %v5883 = vunpack.c.l.b16 %v5879
      %v5884 = vpack.c.b16 %v5883, %v5882
      %v5887 = vsel %vm3466, %v5845, 0
      %v5890 = vsel %vm3466, %v5846, 0
      %v5893 = vsel %vm3466, %v5847, 0
      %v5896 = vsel %vm3466, %v5848, 0
      %v5899 = vsel %vm3466, %v5849, 0
      %v5902 = vsel %vm3466, %v5850, 0
      %v5905 = vsel %vm3466, %v5851, 0
      %v5908 = vsel %vm3466, %v5852, 0
      %v5911 = vsel %vm3466, %v5853, 0
      %v5914 = vsel %vm3466, %v5854, 0
      %v5917 = vsel %vm3466, %v5855, 0
      %v5920 = vsel %vm3466, %v5856, 0
      %v5923 = vsel %vm3466, %v5857, 0
      %v5926 = vsel %vm3466, %v5858, 0
      %v5929 = vsel %vm3466, %v5859, 0
      %v5932 = vsel %vm3466, %v5860, 0
      %v5935 = vsel %vm3466, %v5861, 0
      %v5938 = vsel %vm3466, %v5862, 0
      %v5941 = vsel %vm3466, %v5863, 0
      %v5944 = vsel %vm3466, %v5864, 0
      %v5947 = vsel %vm3466, %v5865, 0
      %v5950 = vsel %vm3466, %v5866, 0
      %v5953 = vsel %vm3466, %v5867, 0
      %v5956 = vsel %vm3466, %v5868, 0
      %v5959 = vsel %vm3466, %v5869, 0
      %v5962 = vsel %vm3466, %v5870, 0
      %v5965 = vsel %vm3466, %v5871, 0
      %v5968 = vsel %vm3466, %v5872, 0
      %v5971 = vsel %vm3466, %v5873, 0
      %v5974 = vsel %vm3466, %v5874, 0
      %v5977 = vsel %vm3466, %v5875, 0
      %v5980 = vsel %vm3466, %v5876, 0
      %5982 = vmatpush.bf16.msra.mxu0 0
      %5983 = vmatpush.bf16.msra.mxu0 0
      %5984 = vmatpush.bf16.msra.mxu0 0
      %5985 = vmatpush.bf16.msra.mxu0 0
      %5986 = vmatpush.bf16.msra.mxu0 0
      %5987 = vmatpush.bf16.msra.mxu0 0
      %5988 = vmatpush.bf16.msra.mxu0 0
      %5989 = vmatpush.bf16.msra.mxu0 %v5884
      %5990 = vmatmul.bf16.gmra.mxu0 %v5887
      %v5991 = vpop.f32.mrf.mxu0
      %v5992 = vadd.f32 0.0, %v5991
      %v5993 = vpop.f32.mrf.mxu0
      %v5994 = vadd.f32 0.0, %v5993
      %5995 = vmatmul.bf16.gmra.mxu0 %v5890
      %v5996 = vpop.f32.mrf.mxu0
      %v5997 = vadd.f32 0.0, %v5996
      %v5998 = vpop.f32.mrf.mxu0
      %v5999 = vadd.f32 0.0, %v5998
      %6000 = vmatmul.bf16.gmra.mxu0 %v5893
      %v6001 = vpop.f32.mrf.mxu0
      %v6002 = vadd.f32 0.0, %v6001
      %v6003 = vpop.f32.mrf.mxu0
      %v6004 = vadd.f32 0.0, %v6003
      %6005 = vmatmul.bf16.gmra.mxu0 %v5896
      %v6006 = vpop.f32.mrf.mxu0
      %v6007 = vadd.f32 0.0, %v6006
      %v6008 = vpop.f32.mrf.mxu0
      %v6009 = vadd.f32 0.0, %v6008
      %6010 = vmatmul.bf16.gmra.mxu0 %v5899
      %v6011 = vpop.f32.mrf.mxu0
      %v6012 = vadd.f32 0.0, %v6011
      %v6013 = vpop.f32.mrf.mxu0
      %v6014 = vadd.f32 0.0, %v6013
      %6015 = vmatmul.bf16.gmra.mxu0 %v5902
      %v6016 = vpop.f32.mrf.mxu0
      %v6017 = vadd.f32 0.0, %v6016
      %v6018 = vpop.f32.mrf.mxu0
      %v6019 = vadd.f32 0.0, %v6018
      %6020 = vmatmul.bf16.gmra.mxu0 %v5905
      %v6021 = vpop.f32.mrf.mxu0
      %v6022 = vadd.f32 0.0, %v6021
      %v6023 = vpop.f32.mrf.mxu0
      %v6024 = vadd.f32 0.0, %v6023
      %6025 = vmatmul.bf16.gmra.mxu0 %v5908
      %v6026 = vpop.f32.mrf.mxu0
      %v6027 = vadd.f32 0.0, %v6026
      %v6028 = vpop.f32.mrf.mxu0
      %v6029 = vadd.f32 0.0, %v6028
      %6030 = vmatmul.bf16.gmra.mxu0 %v5911
      %v6031 = vpop.f32.mrf.mxu0
      %v6032 = vadd.f32 0.0, %v6031
      %v6033 = vpop.f32.mrf.mxu0
      %v6034 = vadd.f32 0.0, %v6033
      %6035 = vmatmul.bf16.gmra.mxu0 %v5914
      %v6036 = vpop.f32.mrf.mxu0
      %v6037 = vadd.f32 0.0, %v6036
      %v6038 = vpop.f32.mrf.mxu0
      %v6039 = vadd.f32 0.0, %v6038
      %6040 = vmatmul.bf16.gmra.mxu0 %v5917
      %v6041 = vpop.f32.mrf.mxu0
      %v6042 = vadd.f32 0.0, %v6041
      %v6043 = vpop.f32.mrf.mxu0
      %v6044 = vadd.f32 0.0, %v6043
      %6045 = vmatmul.bf16.gmra.mxu0 %v5920
      %v6046 = vpop.f32.mrf.mxu0
      %v6047 = vadd.f32 0.0, %v6046
      %v6048 = vpop.f32.mrf.mxu0
      %v6049 = vadd.f32 0.0, %v6048
      %6050 = vmatmul.bf16.gmra.mxu0 %v5923
      %v6051 = vpop.f32.mrf.mxu0
      %v6052 = vadd.f32 0.0, %v6051
      %v6053 = vpop.f32.mrf.mxu0
      %v6054 = vadd.f32 0.0, %v6053
      %6055 = vmatmul.bf16.gmra.mxu0 %v5926
      %v6056 = vpop.f32.mrf.mxu0
      %v6057 = vadd.f32 0.0, %v6056
      %v6058 = vpop.f32.mrf.mxu0
      %v6059 = vadd.f32 0.0, %v6058
      %6060 = vmatmul.bf16.gmra.mxu0 %v5929
      %v6061 = vpop.f32.mrf.mxu0
      %v6062 = vadd.f32 0.0, %v6061
      %v6063 = vpop.f32.mrf.mxu0
      %v6064 = vadd.f32 0.0, %v6063
      %6065 = vmatmul.bf16.gmra.mxu0 %v5932
      %v6066 = vpop.f32.mrf.mxu0
      %v6067 = vadd.f32 0.0, %v6066
      %v6068 = vpop.f32.mrf.mxu0
      %v6069 = vadd.f32 0.0, %v6068
      %6070 = vmatmul.bf16.gmra.mxu0 %v5935
      %v6071 = vpop.f32.mrf.mxu0
      %v6072 = vadd.f32 0.0, %v6071
      %v6073 = vpop.f32.mrf.mxu0
      %v6074 = vadd.f32 0.0, %v6073
      %6075 = vmatmul.bf16.gmra.mxu0 %v5938
      %v6076 = vpop.f32.mrf.mxu0
      %v6077 = vadd.f32 0.0, %v6076
      %v6078 = vpop.f32.mrf.mxu0
      %v6079 = vadd.f32 0.0, %v6078
      %6080 = vmatmul.bf16.gmra.mxu0 %v5941
      %v6081 = vpop.f32.mrf.mxu0
      %v6082 = vadd.f32 0.0, %v6081
      %v6083 = vpop.f32.mrf.mxu0
      %v6084 = vadd.f32 0.0, %v6083
      %6085 = vmatmul.bf16.gmra.mxu0 %v5944
      %v6086 = vpop.f32.mrf.mxu0
      %v6087 = vadd.f32 0.0, %v6086
      %v6088 = vpop.f32.mrf.mxu0
      %v6089 = vadd.f32 0.0, %v6088
      %6090 = vmatmul.bf16.gmra.mxu0 %v5947
      %v6091 = vpop.f32.mrf.mxu0
      %v6092 = vadd.f32 0.0, %v6091
      %v6093 = vpop.f32.mrf.mxu0
      %v6094 = vadd.f32 0.0, %v6093
      %6095 = vmatmul.bf16.gmra.mxu0 %v5950
      %v6096 = vpop.f32.mrf.mxu0
      %v6097 = vadd.f32 0.0, %v6096
      %v6098 = vpop.f32.mrf.mxu0
      %v6099 = vadd.f32 0.0, %v6098
      %6100 = vmatmul.bf16.gmra.mxu0 %v5953
      %v6101 = vpop.f32.mrf.mxu0
      %v6102 = vadd.f32 0.0, %v6101
      %v6103 = vpop.f32.mrf.mxu0
      %v6104 = vadd.f32 0.0, %v6103
      %6105 = vmatmul.bf16.gmra.mxu0 %v5956
      %v6106 = vpop.f32.mrf.mxu0
      %v6107 = vadd.f32 0.0, %v6106
      %v6108 = vpop.f32.mrf.mxu0
      %v6109 = vadd.f32 0.0, %v6108
      %6110 = vmatmul.bf16.gmra.mxu0 %v5959
      %v6111 = vpop.f32.mrf.mxu0
      %v6112 = vadd.f32 0.0, %v6111
      %v6113 = vpop.f32.mrf.mxu0
      %v6114 = vadd.f32 0.0, %v6113
      %6115 = vmatmul.bf16.gmra.mxu0 %v5962
      %v6116 = vpop.f32.mrf.mxu0
      %v6117 = vadd.f32 0.0, %v6116
      %v6118 = vpop.f32.mrf.mxu0
      %v6119 = vadd.f32 0.0, %v6118
      %6120 = vmatmul.bf16.gmra.mxu0 %v5965
      %v6121 = vpop.f32.mrf.mxu0
      %v6122 = vadd.f32 0.0, %v6121
      %v6123 = vpop.f32.mrf.mxu0
      %v6124 = vadd.f32 0.0, %v6123
      %6125 = vmatmul.bf16.gmra.mxu0 %v5968
      %v6126 = vpop.f32.mrf.mxu0
      %v6127 = vadd.f32 0.0, %v6126
      %v6128 = vpop.f32.mrf.mxu0
      %v6129 = vadd.f32 0.0, %v6128
      %6130 = vmatmul.bf16.gmra.mxu0 %v5971
      %v6131 = vpop.f32.mrf.mxu0
      %v6132 = vadd.f32 0.0, %v6131
      %v6133 = vpop.f32.mrf.mxu0
      %v6134 = vadd.f32 0.0, %v6133
      %6135 = vmatmul.bf16.gmra.mxu0 %v5974
      %v6136 = vpop.f32.mrf.mxu0
      %v6137 = vadd.f32 0.0, %v6136
      %v6138 = vpop.f32.mrf.mxu0
      %v6139 = vadd.f32 0.0, %v6138
      %6140 = vmatmul.bf16.gmra.mxu0 %v5977
      %v6141 = vpop.f32.mrf.mxu0
      %v6142 = vadd.f32 0.0, %v6141
      %v6143 = vpop.f32.mrf.mxu0
      %v6144 = vadd.f32 0.0, %v6143
      %6145 = vmatmul.bf16.gmra.mxu0 %v5980
      %v6146 = vpop.f32.mrf.mxu0
      %v6147 = vadd.f32 0.0, %v6146
      %v6148 = vpop.f32.mrf.mxu0
      %v6149 = vadd.f32 0.0, %v6148
      %6150 = vdwg.mxu0
      %v6151 = vadd.f32 %v5717, %v5992
      %v6152 = vadd.f32 %v5718, %v5994
      %v6153 = vadd.f32 %v5719, %v5997
      %v6154 = vadd.f32 %v5720, %v5999
      %v6155 = vadd.f32 %v5721, %v6002
      %v6156 = vadd.f32 %v5722, %v6004
      %v6157 = vadd.f32 %v5723, %v6007
      %v6158 = vadd.f32 %v5724, %v6009
      %v6159 = vadd.f32 %v5725, %v6012
      %v6160 = vadd.f32 %v5726, %v6014
      %v6161 = vadd.f32 %v5727, %v6017
      %v6162 = vadd.f32 %v5728, %v6019
      %v6163 = vadd.f32 %v5729, %v6022
      %v6164 = vadd.f32 %v5730, %v6024
      %v6165 = vadd.f32 %v5731, %v6027
      %v6166 = vadd.f32 %v5732, %v6029
      %v6167 = vadd.f32 %v5733, %v6032
      %v6168 = vadd.f32 %v5734, %v6034
      %v6169 = vadd.f32 %v5735, %v6037
      %v6170 = vadd.f32 %v5736, %v6039
      %v6171 = vadd.f32 %v5737, %v6042
      %v6172 = vadd.f32 %v5738, %v6044
      %v6173 = vadd.f32 %v5739, %v6047
      %v6174 = vadd.f32 %v5740, %v6049
      %v6175 = vadd.f32 %v5741, %v6052
      %v6176 = vadd.f32 %v5742, %v6054
      %v6177 = vadd.f32 %v5743, %v6057
      %v6178 = vadd.f32 %v5744, %v6059
      %v6179 = vadd.f32 %v5745, %v6062
      %v6180 = vadd.f32 %v5746, %v6064
      %v6181 = vadd.f32 %v5747, %v6067
      %v6182 = vadd.f32 %v5748, %v6069
      %v6183 = vadd.f32 %v5749, %v6072
      %v6184 = vadd.f32 %v5750, %v6074
      %v6185 = vadd.f32 %v5751, %v6077
      %v6186 = vadd.f32 %v5752, %v6079
      %v6187 = vadd.f32 %v5753, %v6082
      %v6188 = vadd.f32 %v5754, %v6084
      %v6189 = vadd.f32 %v5755, %v6087
      %v6190 = vadd.f32 %v5756, %v6089
      %v6191 = vadd.f32 %v5757, %v6092
      %v6192 = vadd.f32 %v5758, %v6094
      %v6193 = vadd.f32 %v5759, %v6097
      %v6194 = vadd.f32 %v5760, %v6099
      %v6195 = vadd.f32 %v5761, %v6102
      %v6196 = vadd.f32 %v5762, %v6104
      %v6197 = vadd.f32 %v5763, %v6107
      %v6198 = vadd.f32 %v5764, %v6109
      %v6199 = vadd.f32 %v5765, %v6112
      %v6200 = vadd.f32 %v5766, %v6114
      %v6201 = vadd.f32 %v5767, %v6117
      %v6202 = vadd.f32 %v5768, %v6119
      %v6203 = vadd.f32 %v5769, %v6122
      %v6204 = vadd.f32 %v5770, %v6124
      %v6205 = vadd.f32 %v5771, %v6127
      %v6206 = vadd.f32 %v5772, %v6129
      %v6207 = vadd.f32 %v5773, %v6132
      %v6208 = vadd.f32 %v5774, %v6134
      %v6209 = vadd.f32 %v5775, %v6137
      %v6210 = vadd.f32 %v5776, %v6139
      %v6211 = vadd.f32 %v5777, %v6142
      %v6212 = vadd.f32 %v5778, %v6144
      %v6213 = vadd.f32 %v5779, %v6147
      %v6214 = vadd.f32 %v5780, %v6149
      %v6215 = vld [vmem:[%s4109 + $0x2] sm:$0xff]
      %v6216 = vld [vmem:[%s4109 + $0x12] sm:$0xff]
      %v6217 = vld [vmem:[%s4109 + $0x22] sm:$0xff]
      %v6218 = vld [vmem:[%s4109 + $0x32] sm:$0xff]
      %v6219 = vld [vmem:[%s4109 + $0x42] sm:$0xff]
      %v6220 = vld [vmem:[%s4109 + $0x52] sm:$0xff]
      %v6221 = vld [vmem:[%s4109 + $0x62] sm:$0xff]
      %v6222 = vld [vmem:[%s4109 + $0x72] sm:$0xff]
      %v6223 = vld [vmem:[%s4109 + $0xa2] sm:$0xff]
      %v6224 = vld [vmem:[%s4109 + $0xb2] sm:$0xff]
      %v6225 = vld [vmem:[%s4109 + $0xc2] sm:$0xff]
      %v6226 = vld [vmem:[%s4109 + $0xd2] sm:$0xff]
      %v6227 = vld [vmem:[%s4109 + $0xe2] sm:$0xff]
      %v6228 = vld [vmem:[%s4109 + $0xf2] sm:$0xff]
      %v6229 = vld [vmem:[%s4109 + $0x102] sm:$0xff]
      %v6230 = vld [vmem:[%s4109 + $0x112] sm:$0xff]
      %v6231 = vld [vmem:[%s4109 + $0x142] sm:$0xff]
      %v6232 = vld [vmem:[%s4109 + $0x152] sm:$0xff]
      %v6233 = vld [vmem:[%s4109 + $0x162] sm:$0xff]
      %v6234 = vld [vmem:[%s4109 + $0x172] sm:$0xff]
      %v6235 = vld [vmem:[%s4109 + $0x182] sm:$0xff]
      %v6236 = vld [vmem:[%s4109 + $0x192] sm:$0xff]
      %v6237 = vld [vmem:[%s4109 + $0x1a2] sm:$0xff]
      %v6238 = vld [vmem:[%s4109 + $0x1b2] sm:$0xff]
      %v6239 = vld [vmem:[%s4109 + $0x1e2] sm:$0xff]
      %v6240 = vld [vmem:[%s4109 + $0x1f2] sm:$0xff]
      %v6241 = vld [vmem:[%s4109 + $0x202] sm:$0xff]
      %v6242 = vld [vmem:[%s4109 + $0x212] sm:$0xff]
      %v6243 = vld [vmem:[%s4109 + $0x222] sm:$0xff]
      %v6244 = vld [vmem:[%s4109 + $0x232] sm:$0xff]
      %v6245 = vld [vmem:[%s4109 + $0x242] sm:$0xff]
      %v6246 = vld [vmem:[%s4109 + $0x252] sm:$0xff]
      %v6247 = vld [vmem:[%s4109 + $0x282] sm:$0xff]
      %v6248 = vld [vmem:[%s4109 + $0x292] sm:$0xff]
      %v6249 = vld [vmem:[%s4109 + $0x2a2] sm:$0xff]
      %v6250 = vld [vmem:[%s4109 + $0x2b2] sm:$0xff]
      %v6251 = vld [vmem:[%s4109 + $0x2c2] sm:$0xff]
      %v6252 = vld [vmem:[%s4109 + $0x2d2] sm:$0xff]
      %v6253 = vld [vmem:[%s4109 + $0x2e2] sm:$0xff]
      %v6254 = vld [vmem:[%s4109 + $0x2f2] sm:$0xff]
      %v6255 = vld [vmem:[%s4109 + $0x322] sm:$0xff]
      %v6256 = vld [vmem:[%s4109 + $0x332] sm:$0xff]
      %v6257 = vld [vmem:[%s4109 + $0x342] sm:$0xff]
      %v6258 = vld [vmem:[%s4109 + $0x352] sm:$0xff]
      %v6259 = vld [vmem:[%s4109 + $0x362] sm:$0xff]
      %v6260 = vld [vmem:[%s4109 + $0x372] sm:$0xff]
      %v6261 = vld [vmem:[%s4109 + $0x382] sm:$0xff]
      %v6262 = vld [vmem:[%s4109 + $0x392] sm:$0xff]
      %v6263 = vld [vmem:[%s4109 + $0x3c2] sm:$0xff]
      %v6264 = vld [vmem:[%s4109 + $0x3d2] sm:$0xff]
      %v6265 = vld [vmem:[%s4109 + $0x3e2] sm:$0xff]
      %v6266 = vld [vmem:[%s4109 + $0x3f2] sm:$0xff]
      %v6267 = vld [vmem:[%s4109 + $0x402] sm:$0xff]
      %v6268 = vld [vmem:[%s4109 + $0x412] sm:$0xff]
      %v6269 = vld [vmem:[%s4109 + $0x422] sm:$0xff]
      %v6270 = vld [vmem:[%s4109 + $0x432] sm:$0xff]
      %v6271 = vld [vmem:[%s4109 + $0x462] sm:$0xff]
      %v6272 = vld [vmem:[%s4109 + $0x472] sm:$0xff]
      %v6273 = vld [vmem:[%s4109 + $0x482] sm:$0xff]
      %v6274 = vld [vmem:[%s4109 + $0x492] sm:$0xff]
      %v6275 = vld [vmem:[%s4109 + $0x4a2] sm:$0xff]
      %v6276 = vld [vmem:[%s4109 + $0x4b2] sm:$0xff]
      %v6277 = vld [vmem:[%s4109 + $0x4c2] sm:$0xff]
      %v6278 = vld [vmem:[%s4109 + $0x4d2] sm:$0xff]
      %v6279 = vpack.c.bf16 %v6216, %v6215
      %v6280 = vpack.c.bf16 %v6218, %v6217
      %v6281 = vpack.c.bf16 %v6220, %v6219
      %v6282 = vpack.c.bf16 %v6222, %v6221
      %v6283 = vpack.c.bf16 %v6224, %v6223
      %v6284 = vpack.c.bf16 %v6226, %v6225
      %v6285 = vpack.c.bf16 %v6228, %v6227
      %v6286 = vpack.c.bf16 %v6230, %v6229
      %v6287 = vpack.c.bf16 %v6232, %v6231
      %v6288 = vpack.c.bf16 %v6234, %v6233
      %v6289 = vpack.c.bf16 %v6236, %v6235
      %v6290 = vpack.c.bf16 %v6238, %v6237
      %v6291 = vpack.c.bf16 %v6240, %v6239
      %v6292 = vpack.c.bf16 %v6242, %v6241
      %v6293 = vpack.c.bf16 %v6244, %v6243
      %v6294 = vpack.c.bf16 %v6246, %v6245
      %v6295 = vpack.c.bf16 %v6248, %v6247
      %v6296 = vpack.c.bf16 %v6250, %v6249
      %v6297 = vpack.c.bf16 %v6252, %v6251
      %v6298 = vpack.c.bf16 %v6254, %v6253
      %v6299 = vpack.c.bf16 %v6256, %v6255
      %v6300 = vpack.c.bf16 %v6258, %v6257
      %v6301 = vpack.c.bf16 %v6260, %v6259
      %v6302 = vpack.c.bf16 %v6262, %v6261
      %v6303 = vpack.c.bf16 %v6264, %v6263
      %v6304 = vpack.c.bf16 %v6266, %v6265
      %v6305 = vpack.c.bf16 %v6268, %v6267
      %v6306 = vpack.c.bf16 %v6270, %v6269
      %v6307 = vpack.c.bf16 %v6272, %v6271
      %v6308 = vpack.c.bf16 %v6274, %v6273
      %v6309 = vpack.c.bf16 %v6276, %v6275
      %v6310 = vpack.c.bf16 %v6278, %v6277
      %s6311 = scalar_lea.vmem %s4, 40
      %v6312 = vld [vmem:[%s6311] sm:$0xf]
      %v6313 = vld [vmem:[%s6311 + $0x4] sm:$0xf]
      %v6316 = vunpack.c.l.b16 %v6312
      %v6317 = vunpack.c.l.b16 %v6313
      %v6318 = vpack.c.b16 %v6317, %v6316
      %v6321 = vsel %vm3466, %v6279, 0
      %v6324 = vsel %vm3466, %v6280, 0
      %v6327 = vsel %vm3466, %v6281, 0
      %v6330 = vsel %vm3466, %v6282, 0
      %v6333 = vsel %vm3466, %v6283, 0
      %v6336 = vsel %vm3466, %v6284, 0
      %v6339 = vsel %vm3466, %v6285, 0
      %v6342 = vsel %vm3466, %v6286, 0
      %v6345 = vsel %vm3466, %v6287, 0
      %v6348 = vsel %vm3466, %v6288, 0
      %v6351 = vsel %vm3466, %v6289, 0
      %v6354 = vsel %vm3466, %v6290, 0
      %v6357 = vsel %vm3466, %v6291, 0
      %v6360 = vsel %vm3466, %v6292, 0
      %v6363 = vsel %vm3466, %v6293, 0
      %v6366 = vsel %vm3466, %v6294, 0
      %v6369 = vsel %vm3466, %v6295, 0
      %v6372 = vsel %vm3466, %v6296, 0
      %v6375 = vsel %vm3466, %v6297, 0
      %v6378 = vsel %vm3466, %v6298, 0
      %v6381 = vsel %vm3466, %v6299, 0
      %v6384 = vsel %vm3466, %v6300, 0
      %v6387 = vsel %vm3466, %v6301, 0
      %v6390 = vsel %vm3466, %v6302, 0
      %v6393 = vsel %vm3466, %v6303, 0
      %v6396 = vsel %vm3466, %v6304, 0
      %v6399 = vsel %vm3466, %v6305, 0
      %v6402 = vsel %vm3466, %v6306, 0
      %v6405 = vsel %vm3466, %v6307, 0
      %v6408 = vsel %vm3466, %v6308, 0
      %v6411 = vsel %vm3466, %v6309, 0
      %v6414 = vsel %vm3466, %v6310, 0
      %6416 = vmatpush.bf16.msra.mxu0 0
      %6417 = vmatpush.bf16.msra.mxu0 0
      %6418 = vmatpush.bf16.msra.mxu0 0
      %6419 = vmatpush.bf16.msra.mxu0 0
      %6420 = vmatpush.bf16.msra.mxu0 0
      %6421 = vmatpush.bf16.msra.mxu0 0
      %6422 = vmatpush.bf16.msra.mxu0 0
      %6423 = vmatpush.bf16.msra.mxu0 %v6318
      %6424 = vmatmul.bf16.gmra.mxu0 %v6321
      %v6425 = vpop.f32.mrf.mxu0
      %v6426 = vadd.f32 0.0, %v6425
      %v6427 = vpop.f32.mrf.mxu0
      %v6428 = vadd.f32 0.0, %v6427
      %6429 = vmatmul.bf16.gmra.mxu0 %v6324
      %v6430 = vpop.f32.mrf.mxu0
      %v6431 = vadd.f32 0.0, %v6430
      %v6432 = vpop.f32.mrf.mxu0
      %v6433 = vadd.f32 0.0, %v6432
      %6434 = vmatmul.bf16.gmra.mxu0 %v6327
      %v6435 = vpop.f32.mrf.mxu0
      %v6436 = vadd.f32 0.0, %v6435
      %v6437 = vpop.f32.mrf.mxu0
      %v6438 = vadd.f32 0.0, %v6437
      %6439 = vmatmul.bf16.gmra.mxu0 %v6330
      %v6440 = vpop.f32.mrf.mxu0
      %v6441 = vadd.f32 0.0, %v6440
      %v6442 = vpop.f32.mrf.mxu0
      %v6443 = vadd.f32 0.0, %v6442
      %6444 = vmatmul.bf16.gmra.mxu0 %v6333
      %v6445 = vpop.f32.mrf.mxu0
      %v6446 = vadd.f32 0.0, %v6445
      %v6447 = vpop.f32.mrf.mxu0
      %v6448 = vadd.f32 0.0, %v6447
      %6449 = vmatmul.bf16.gmra.mxu0 %v6336
      %v6450 = vpop.f32.mrf.mxu0
      %v6451 = vadd.f32 0.0, %v6450
      %v6452 = vpop.f32.mrf.mxu0
      %v6453 = vadd.f32 0.0, %v6452
      %6454 = vmatmul.bf16.gmra.mxu0 %v6339
      %v6455 = vpop.f32.mrf.mxu0
      %v6456 = vadd.f32 0.0, %v6455
      %v6457 = vpop.f32.mrf.mxu0
      %v6458 = vadd.f32 0.0, %v6457
      %6459 = vmatmul.bf16.gmra.mxu0 %v6342
      %v6460 = vpop.f32.mrf.mxu0
      %v6461 = vadd.f32 0.0, %v6460
      %v6462 = vpop.f32.mrf.mxu0
      %v6463 = vadd.f32 0.0, %v6462
      %6464 = vmatmul.bf16.gmra.mxu0 %v6345
      %v6465 = vpop.f32.mrf.mxu0
      %v6466 = vadd.f32 0.0, %v6465
      %v6467 = vpop.f32.mrf.mxu0
      %v6468 = vadd.f32 0.0, %v6467
      %6469 = vmatmul.bf16.gmra.mxu0 %v6348
      %v6470 = vpop.f32.mrf.mxu0
      %v6471 = vadd.f32 0.0, %v6470
      %v6472 = vpop.f32.mrf.mxu0
      %v6473 = vadd.f32 0.0, %v6472
      %6474 = vmatmul.bf16.gmra.mxu0 %v6351
      %v6475 = vpop.f32.mrf.mxu0
      %v6476 = vadd.f32 0.0, %v6475
      %v6477 = vpop.f32.mrf.mxu0
      %v6478 = vadd.f32 0.0, %v6477
      %6479 = vmatmul.bf16.gmra.mxu0 %v6354
      %v6480 = vpop.f32.mrf.mxu0
      %v6481 = vadd.f32 0.0, %v6480
      %v6482 = vpop.f32.mrf.mxu0
      %v6483 = vadd.f32 0.0, %v6482
      %6484 = vmatmul.bf16.gmra.mxu0 %v6357
      %v6485 = vpop.f32.mrf.mxu0
      %v6486 = vadd.f32 0.0, %v6485
      %v6487 = vpop.f32.mrf.mxu0
      %v6488 = vadd.f32 0.0, %v6487
      %6489 = vmatmul.bf16.gmra.mxu0 %v6360
      %v6490 = vpop.f32.mrf.mxu0
      %v6491 = vadd.f32 0.0, %v6490
      %v6492 = vpop.f32.mrf.mxu0
      %v6493 = vadd.f32 0.0, %v6492
      %6494 = vmatmul.bf16.gmra.mxu0 %v6363
      %v6495 = vpop.f32.mrf.mxu0
      %v6496 = vadd.f32 0.0, %v6495
      %v6497 = vpop.f32.mrf.mxu0
      %v6498 = vadd.f32 0.0, %v6497
      %6499 = vmatmul.bf16.gmra.mxu0 %v6366
      %v6500 = vpop.f32.mrf.mxu0
      %v6501 = vadd.f32 0.0, %v6500
      %v6502 = vpop.f32.mrf.mxu0
      %v6503 = vadd.f32 0.0, %v6502
      %6504 = vmatmul.bf16.gmra.mxu0 %v6369
      %v6505 = vpop.f32.mrf.mxu0
      %v6506 = vadd.f32 0.0, %v6505
      %v6507 = vpop.f32.mrf.mxu0
      %v6508 = vadd.f32 0.0, %v6507
      %6509 = vmatmul.bf16.gmra.mxu0 %v6372
      %v6510 = vpop.f32.mrf.mxu0
      %v6511 = vadd.f32 0.0, %v6510
      %v6512 = vpop.f32.mrf.mxu0
      %v6513 = vadd.f32 0.0, %v6512
      %6514 = vmatmul.bf16.gmra.mxu0 %v6375
      %v6515 = vpop.f32.mrf.mxu0
      %v6516 = vadd.f32 0.0, %v6515
      %v6517 = vpop.f32.mrf.mxu0
      %v6518 = vadd.f32 0.0, %v6517
      %6519 = vmatmul.bf16.gmra.mxu0 %v6378
      %v6520 = vpop.f32.mrf.mxu0
      %v6521 = vadd.f32 0.0, %v6520
      %v6522 = vpop.f32.mrf.mxu0
      %v6523 = vadd.f32 0.0, %v6522
      %6524 = vmatmul.bf16.gmra.mxu0 %v6381
      %v6525 = vpop.f32.mrf.mxu0
      %v6526 = vadd.f32 0.0, %v6525
      %v6527 = vpop.f32.mrf.mxu0
      %v6528 = vadd.f32 0.0, %v6527
      %6529 = vmatmul.bf16.gmra.mxu0 %v6384
      %v6530 = vpop.f32.mrf.mxu0
      %v6531 = vadd.f32 0.0, %v6530
      %v6532 = vpop.f32.mrf.mxu0
      %v6533 = vadd.f32 0.0, %v6532
      %6534 = vmatmul.bf16.gmra.mxu0 %v6387
      %v6535 = vpop.f32.mrf.mxu0
      %v6536 = vadd.f32 0.0, %v6535
      %v6537 = vpop.f32.mrf.mxu0
      %v6538 = vadd.f32 0.0, %v6537
      %6539 = vmatmul.bf16.gmra.mxu0 %v6390
      %v6540 = vpop.f32.mrf.mxu0
      %v6541 = vadd.f32 0.0, %v6540
      %v6542 = vpop.f32.mrf.mxu0
      %v6543 = vadd.f32 0.0, %v6542
      %6544 = vmatmul.bf16.gmra.mxu0 %v6393
      %v6545 = vpop.f32.mrf.mxu0
      %v6546 = vadd.f32 0.0, %v6545
      %v6547 = vpop.f32.mrf.mxu0
      %v6548 = vadd.f32 0.0, %v6547
      %6549 = vmatmul.bf16.gmra.mxu0 %v6396
      %v6550 = vpop.f32.mrf.mxu0
      %v6551 = vadd.f32 0.0, %v6550
      %v6552 = vpop.f32.mrf.mxu0
      %v6553 = vadd.f32 0.0, %v6552
      %6554 = vmatmul.bf16.gmra.mxu0 %v6399
      %v6555 = vpop.f32.mrf.mxu0
      %v6556 = vadd.f32 0.0, %v6555
      %v6557 = vpop.f32.mrf.mxu0
      %v6558 = vadd.f32 0.0, %v6557
      %6559 = vmatmul.bf16.gmra.mxu0 %v6402
      %v6560 = vpop.f32.mrf.mxu0
      %v6561 = vadd.f32 0.0, %v6560
      %v6562 = vpop.f32.mrf.mxu0
      %v6563 = vadd.f32 0.0, %v6562
      %6564 = vmatmul.bf16.gmra.mxu0 %v6405
      %v6565 = vpop.f32.mrf.mxu0
      %v6566 = vadd.f32 0.0, %v6565
      %v6567 = vpop.f32.mrf.mxu0
      %v6568 = vadd.f32 0.0, %v6567
      %6569 = vmatmul.bf16.gmra.mxu0 %v6408
      %v6570 = vpop.f32.mrf.mxu0
      %v6571 = vadd.f32 0.0, %v6570
      %v6572 = vpop.f32.mrf.mxu0
      %v6573 = vadd.f32 0.0, %v6572
      %6574 = vmatmul.bf16.gmra.mxu0 %v6411
      %v6575 = vpop.f32.mrf.mxu0
      %v6576 = vadd.f32 0.0, %v6575
      %v6577 = vpop.f32.mrf.mxu0
      %v6578 = vadd.f32 0.0, %v6577
      %6579 = vmatmul.bf16.gmra.mxu0 %v6414
      %v6580 = vpop.f32.mrf.mxu0
      %v6581 = vadd.f32 0.0, %v6580
      %v6582 = vpop.f32.mrf.mxu0
      %v6583 = vadd.f32 0.0, %v6582
      %6584 = vdwg.mxu0
      %v6585 = vadd.f32 %v6151, %v6426
      %v6586 = vadd.f32 %v6152, %v6428
      %v6587 = vadd.f32 %v6153, %v6431
      %v6588 = vadd.f32 %v6154, %v6433
      %v6589 = vadd.f32 %v6155, %v6436
      %v6590 = vadd.f32 %v6156, %v6438
      %v6591 = vadd.f32 %v6157, %v6441
      %v6592 = vadd.f32 %v6158, %v6443
      %v6593 = vadd.f32 %v6159, %v6446
      %v6594 = vadd.f32 %v6160, %v6448
      %v6595 = vadd.f32 %v6161, %v6451
      %v6596 = vadd.f32 %v6162, %v6453
      %v6597 = vadd.f32 %v6163, %v6456
      %v6598 = vadd.f32 %v6164, %v6458
      %v6599 = vadd.f32 %v6165, %v6461
      %v6600 = vadd.f32 %v6166, %v6463
      %v6601 = vadd.f32 %v6167, %v6466
      %v6602 = vadd.f32 %v6168, %v6468
      %v6603 = vadd.f32 %v6169, %v6471
      %v6604 = vadd.f32 %v6170, %v6473
      %v6605 = vadd.f32 %v6171, %v6476
      %v6606 = vadd.f32 %v6172, %v6478
      %v6607 = vadd.f32 %v6173, %v6481
      %v6608 = vadd.f32 %v6174, %v6483
      %v6609 = vadd.f32 %v6175, %v6486
      %v6610 = vadd.f32 %v6176, %v6488
      %v6611 = vadd.f32 %v6177, %v6491
      %v6612 = vadd.f32 %v6178, %v6493
      %v6613 = vadd.f32 %v6179, %v6496
      %v6614 = vadd.f32 %v6180, %v6498
      %v6615 = vadd.f32 %v6181, %v6501
      %v6616 = vadd.f32 %v6182, %v6503
      %v6617 = vadd.f32 %v6183, %v6506
      %v6618 = vadd.f32 %v6184, %v6508
      %v6619 = vadd.f32 %v6185, %v6511
      %v6620 = vadd.f32 %v6186, %v6513
      %v6621 = vadd.f32 %v6187, %v6516
      %v6622 = vadd.f32 %v6188, %v6518
      %v6623 = vadd.f32 %v6189, %v6521
      %v6624 = vadd.f32 %v6190, %v6523
      %v6625 = vadd.f32 %v6191, %v6526
      %v6626 = vadd.f32 %v6192, %v6528
      %v6627 = vadd.f32 %v6193, %v6531
      %v6628 = vadd.f32 %v6194, %v6533
      %v6629 = vadd.f32 %v6195, %v6536
      %v6630 = vadd.f32 %v6196, %v6538
      %v6631 = vadd.f32 %v6197, %v6541
      %v6632 = vadd.f32 %v6198, %v6543
      %v6633 = vadd.f32 %v6199, %v6546
      %v6634 = vadd.f32 %v6200, %v6548
      %v6635 = vadd.f32 %v6201, %v6551
      %v6636 = vadd.f32 %v6202, %v6553
      %v6637 = vadd.f32 %v6203, %v6556
      %v6638 = vadd.f32 %v6204, %v6558
      %v6639 = vadd.f32 %v6205, %v6561
      %v6640 = vadd.f32 %v6206, %v6563
      %v6641 = vadd.f32 %v6207, %v6566
      %v6642 = vadd.f32 %v6208, %v6568
      %v6643 = vadd.f32 %v6209, %v6571
      %v6644 = vadd.f32 %v6210, %v6573
      %v6645 = vadd.f32 %v6211, %v6576
      %v6646 = vadd.f32 %v6212, %v6578
      %v6647 = vadd.f32 %v6213, %v6581
      %v6648 = vadd.f32 %v6214, %v6583
      %s6649 = scalar_lea.vmem [#allocation3], 32
      %v6650 = vld [vmem:[%s6649] sm:$0xff]
      %v6651 = vld [vmem:[%s6649 + $0x10] sm:$0xff]
      %v6652 = vld [vmem:[%s6649 + $0x20] sm:$0xff]
      %v6653 = vld [vmem:[%s6649 + $0x30] sm:$0xff]
      %v6654 = vld [vmem:[%s6649 + $0x40] sm:$0xff]
      %v6655 = vld [vmem:[%s6649 + $0x50] sm:$0xff]
      %v6656 = vld [vmem:[%s6649 + $0x60] sm:$0xff]
      %v6657 = vld [vmem:[%s6649 + $0x70] sm:$0xff]
      %v6658 = vld [vmem:[%s6649 + $0xa0] sm:$0xff]
      %v6659 = vld [vmem:[%s6649 + $0xb0] sm:$0xff]
      %v6660 = vld [vmem:[%s6649 + $0xc0] sm:$0xff]
      %v6661 = vld [vmem:[%s6649 + $0xd0] sm:$0xff]
      %v6662 = vld [vmem:[%s6649 + $0xe0] sm:$0xff]
      %v6663 = vld [vmem:[%s6649 + $0xf0] sm:$0xff]
      %v6664 = vld [vmem:[%s6649 + $0x100] sm:$0xff]
      %v6665 = vld [vmem:[%s6649 + $0x110] sm:$0xff]
      %v6666 = vld [vmem:[%s6649 + $0x140] sm:$0xff]
      %v6667 = vld [vmem:[%s6649 + $0x150] sm:$0xff]
      %v6668 = vld [vmem:[%s6649 + $0x160] sm:$0xff]
      %v6669 = vld [vmem:[%s6649 + $0x170] sm:$0xff]
      %v6670 = vld [vmem:[%s6649 + $0x180] sm:$0xff]
      %v6671 = vld [vmem:[%s6649 + $0x190] sm:$0xff]
      %v6672 = vld [vmem:[%s6649 + $0x1a0] sm:$0xff]
      %v6673 = vld [vmem:[%s6649 + $0x1b0] sm:$0xff]
      %v6674 = vld [vmem:[%s6649 + $0x1e0] sm:$0xff]
      %v6675 = vld [vmem:[%s6649 + $0x1f0] sm:$0xff]
      %v6676 = vld [vmem:[%s6649 + $0x200] sm:$0xff]
      %v6677 = vld [vmem:[%s6649 + $0x210] sm:$0xff]
      %v6678 = vld [vmem:[%s6649 + $0x220] sm:$0xff]
      %v6679 = vld [vmem:[%s6649 + $0x230] sm:$0xff]
      %v6680 = vld [vmem:[%s6649 + $0x240] sm:$0xff]
      %v6681 = vld [vmem:[%s6649 + $0x250] sm:$0xff]
      %v6682 = vld [vmem:[%s6649 + $0x280] sm:$0xff]
      %v6683 = vld [vmem:[%s6649 + $0x290] sm:$0xff]
      %v6684 = vld [vmem:[%s6649 + $0x2a0] sm:$0xff]
      %v6685 = vld [vmem:[%s6649 + $0x2b0] sm:$0xff]
      %v6686 = vld [vmem:[%s6649 + $0x2c0] sm:$0xff]
      %v6687 = vld [vmem:[%s6649 + $0x2d0] sm:$0xff]
      %v6688 = vld [vmem:[%s6649 + $0x2e0] sm:$0xff]
      %v6689 = vld [vmem:[%s6649 + $0x2f0] sm:$0xff]
      %v6690 = vld [vmem:[%s6649 + $0x320] sm:$0xff]
      %v6691 = vld [vmem:[%s6649 + $0x330] sm:$0xff]
      %v6692 = vld [vmem:[%s6649 + $0x340] sm:$0xff]
      %v6693 = vld [vmem:[%s6649 + $0x350] sm:$0xff]
      %v6694 = vld [vmem:[%s6649 + $0x360] sm:$0xff]
      %v6695 = vld [vmem:[%s6649 + $0x370] sm:$0xff]
      %v6696 = vld [vmem:[%s6649 + $0x380] sm:$0xff]
      %v6697 = vld [vmem:[%s6649 + $0x390] sm:$0xff]
      %v6698 = vld [vmem:[%s6649 + $0x3c0] sm:$0xff]
      %v6699 = vld [vmem:[%s6649 + $0x3d0] sm:$0xff]
      %v6700 = vld [vmem:[%s6649 + $0x3e0] sm:$0xff]
      %v6701 = vld [vmem:[%s6649 + $0x3f0] sm:$0xff]
      %v6702 = vld [vmem:[%s6649 + $0x400] sm:$0xff]
      %v6703 = vld [vmem:[%s6649 + $0x410] sm:$0xff]
      %v6704 = vld [vmem:[%s6649 + $0x420] sm:$0xff]
      %v6705 = vld [vmem:[%s6649 + $0x430] sm:$0xff]
      %v6706 = vld [vmem:[%s6649 + $0x460] sm:$0xff]
      %v6707 = vld [vmem:[%s6649 + $0x470] sm:$0xff]
      %v6708 = vld [vmem:[%s6649 + $0x480] sm:$0xff]
      %v6709 = vld [vmem:[%s6649 + $0x490] sm:$0xff]
      %v6710 = vld [vmem:[%s6649 + $0x4a0] sm:$0xff]
      %v6711 = vld [vmem:[%s6649 + $0x4b0] sm:$0xff]
      %v6712 = vld [vmem:[%s6649 + $0x4c0] sm:$0xff]
      %v6713 = vld [vmem:[%s6649 + $0x4d0] sm:$0xff]
      %v6714 = vpack.c.bf16 %v6651, %v6650
      %v6715 = vpack.c.bf16 %v6653, %v6652
      %v6716 = vpack.c.bf16 %v6655, %v6654
      %v6717 = vpack.c.bf16 %v6657, %v6656
      %v6718 = vpack.c.bf16 %v6659, %v6658
      %v6719 = vpack.c.bf16 %v6661, %v6660
      %v6720 = vpack.c.bf16 %v6663, %v6662
      %v6721 = vpack.c.bf16 %v6665, %v6664
      %v6722 = vpack.c.bf16 %v6667, %v6666
      %v6723 = vpack.c.bf16 %v6669, %v6668
      %v6724 = vpack.c.bf16 %v6671, %v6670
      %v6725 = vpack.c.bf16 %v6673, %v6672
      %v6726 = vpack.c.bf16 %v6675, %v6674
      %v6727 = vpack.c.bf16 %v6677, %v6676
      %v6728 = vpack.c.bf16 %v6679, %v6678
      %v6729 = vpack.c.bf16 %v6681, %v6680
      %v6730 = vpack.c.bf16 %v6683, %v6682
      %v6731 = vpack.c.bf16 %v6685, %v6684
      %v6732 = vpack.c.bf16 %v6687, %v6686
      %v6733 = vpack.c.bf16 %v6689, %v6688
      %v6734 = vpack.c.bf16 %v6691, %v6690
      %v6735 = vpack.c.bf16 %v6693, %v6692
      %v6736 = vpack.c.bf16 %v6695, %v6694
      %v6737 = vpack.c.bf16 %v6697, %v6696
      %v6738 = vpack.c.bf16 %v6699, %v6698
      %v6739 = vpack.c.bf16 %v6701, %v6700
      %v6740 = vpack.c.bf16 %v6703, %v6702
      %v6741 = vpack.c.bf16 %v6705, %v6704
      %v6742 = vpack.c.bf16 %v6707, %v6706
      %v6743 = vpack.c.bf16 %v6709, %v6708
      %v6744 = vpack.c.bf16 %v6711, %v6710
      %v6745 = vpack.c.bf16 %v6713, %v6712
      %s6746 = scalar_lea.vmem %s4, 48
      %v6747 = vld [vmem:[%s6746] sm:$0xf]
      %v6748 = vld [vmem:[%s6746 + $0x4] sm:$0xf]
      %v6751 = vunpack.c.l.b16 %v6747
      %v6752 = vunpack.c.l.b16 %v6748
      %v6753 = vpack.c.b16 %v6752, %v6751
      %v6756 = vsel %vm3466, %v6714, 0
      %v6759 = vsel %vm3466, %v6715, 0
      %v6762 = vsel %vm3466, %v6716, 0
      %v6765 = vsel %vm3466, %v6717, 0
      %v6768 = vsel %vm3466, %v6718, 0
      %v6771 = vsel %vm3466, %v6719, 0
      %v6774 = vsel %vm3466, %v6720, 0
      %v6777 = vsel %vm3466, %v6721, 0
      %v6780 = vsel %vm3466, %v6722, 0
      %v6783 = vsel %vm3466, %v6723, 0
      %v6786 = vsel %vm3466, %v6724, 0
      %v6789 = vsel %vm3466, %v6725, 0
      %v6792 = vsel %vm3466, %v6726, 0
      %v6795 = vsel %vm3466, %v6727, 0
      %v6798 = vsel %vm3466, %v6728, 0
      %v6801 = vsel %vm3466, %v6729, 0
      %v6804 = vsel %vm3466, %v6730, 0
      %v6807 = vsel %vm3466, %v6731, 0
      %v6810 = vsel %vm3466, %v6732, 0
      %v6813 = vsel %vm3466, %v6733, 0
      %v6816 = vsel %vm3466, %v6734, 0
      %v6819 = vsel %vm3466, %v6735, 0
      %v6822 = vsel %vm3466, %v6736, 0
      %v6825 = vsel %vm3466, %v6737, 0
      %v6828 = vsel %vm3466, %v6738, 0
      %v6831 = vsel %vm3466, %v6739, 0
      %v6834 = vsel %vm3466, %v6740, 0
      %v6837 = vsel %vm3466, %v6741, 0
      %v6840 = vsel %vm3466, %v6742, 0
      %v6843 = vsel %vm3466, %v6743, 0
      %v6846 = vsel %vm3466, %v6744, 0
      %v6849 = vsel %vm3466, %v6745, 0
      %6851 = vmatpush.bf16.msra.mxu0 0
      %6852 = vmatpush.bf16.msra.mxu0 0
      %6853 = vmatpush.bf16.msra.mxu0 0
      %6854 = vmatpush.bf16.msra.mxu0 0
      %6855 = vmatpush.bf16.msra.mxu0 0
      %6856 = vmatpush.bf16.msra.mxu0 0
      %6857 = vmatpush.bf16.msra.mxu0 0
      %6858 = vmatpush.bf16.msra.mxu0 %v6753
      %6859 = vmatmul.bf16.gmra.mxu0 %v6756
      %v6860 = vpop.f32.mrf.mxu0
      %v6861 = vadd.f32 0.0, %v6860
      %v6862 = vpop.f32.mrf.mxu0
      %v6863 = vadd.f32 0.0, %v6862
      %6864 = vmatmul.bf16.gmra.mxu0 %v6759
      %v6865 = vpop.f32.mrf.mxu0
      %v6866 = vadd.f32 0.0, %v6865
      %v6867 = vpop.f32.mrf.mxu0
      %v6868 = vadd.f32 0.0, %v6867
      %6869 = vmatmul.bf16.gmra.mxu0 %v6762
      %v6870 = vpop.f32.mrf.mxu0
      %v6871 = vadd.f32 0.0, %v6870
      %v6872 = vpop.f32.mrf.mxu0
      %v6873 = vadd.f32 0.0, %v6872
      %6874 = vmatmul.bf16.gmra.mxu0 %v6765
      %v6875 = vpop.f32.mrf.mxu0
      %v6876 = vadd.f32 0.0, %v6875
      %v6877 = vpop.f32.mrf.mxu0
      %v6878 = vadd.f32 0.0, %v6877
      %6879 = vmatmul.bf16.gmra.mxu0 %v6768
      %v6880 = vpop.f32.mrf.mxu0
      %v6881 = vadd.f32 0.0, %v6880
      %v6882 = vpop.f32.mrf.mxu0
      %v6883 = vadd.f32 0.0, %v6882
      %6884 = vmatmul.bf16.gmra.mxu0 %v6771
      %v6885 = vpop.f32.mrf.mxu0
      %v6886 = vadd.f32 0.0, %v6885
      %v6887 = vpop.f32.mrf.mxu0
      %v6888 = vadd.f32 0.0, %v6887
      %6889 = vmatmul.bf16.gmra.mxu0 %v6774
      %v6890 = vpop.f32.mrf.mxu0
      %v6891 = vadd.f32 0.0, %v6890
      %v6892 = vpop.f32.mrf.mxu0
      %v6893 = vadd.f32 0.0, %v6892
      %6894 = vmatmul.bf16.gmra.mxu0 %v6777
      %v6895 = vpop.f32.mrf.mxu0
      %v6896 = vadd.f32 0.0, %v6895
      %v6897 = vpop.f32.mrf.mxu0
      %v6898 = vadd.f32 0.0, %v6897
      %6899 = vmatmul.bf16.gmra.mxu0 %v6780
      %v6900 = vpop.f32.mrf.mxu0
      %v6901 = vadd.f32 0.0, %v6900
      %v6902 = vpop.f32.mrf.mxu0
      %v6903 = vadd.f32 0.0, %v6902
      %6904 = vmatmul.bf16.gmra.mxu0 %v6783
      %v6905 = vpop.f32.mrf.mxu0
      %v6906 = vadd.f32 0.0, %v6905
      %v6907 = vpop.f32.mrf.mxu0
      %v6908 = vadd.f32 0.0, %v6907
      %6909 = vmatmul.bf16.gmra.mxu0 %v6786
      %v6910 = vpop.f32.mrf.mxu0
      %v6911 = vadd.f32 0.0, %v6910
      %v6912 = vpop.f32.mrf.mxu0
      %v6913 = vadd.f32 0.0, %v6912
      %6914 = vmatmul.bf16.gmra.mxu0 %v6789
      %v6915 = vpop.f32.mrf.mxu0
      %v6916 = vadd.f32 0.0, %v6915
      %v6917 = vpop.f32.mrf.mxu0
      %v6918 = vadd.f32 0.0, %v6917
      %6919 = vmatmul.bf16.gmra.mxu0 %v6792
      %v6920 = vpop.f32.mrf.mxu0
      %v6921 = vadd.f32 0.0, %v6920
      %v6922 = vpop.f32.mrf.mxu0
      %v6923 = vadd.f32 0.0, %v6922
      %6924 = vmatmul.bf16.gmra.mxu0 %v6795
      %v6925 = vpop.f32.mrf.mxu0
      %v6926 = vadd.f32 0.0, %v6925
      %v6927 = vpop.f32.mrf.mxu0
      %v6928 = vadd.f32 0.0, %v6927
      %6929 = vmatmul.bf16.gmra.mxu0 %v6798
      %v6930 = vpop.f32.mrf.mxu0
      %v6931 = vadd.f32 0.0, %v6930
      %v6932 = vpop.f32.mrf.mxu0
      %v6933 = vadd.f32 0.0, %v6932
      %6934 = vmatmul.bf16.gmra.mxu0 %v6801
      %v6935 = vpop.f32.mrf.mxu0
      %v6936 = vadd.f32 0.0, %v6935
      %v6937 = vpop.f32.mrf.mxu0
      %v6938 = vadd.f32 0.0, %v6937
      %6939 = vmatmul.bf16.gmra.mxu0 %v6804
      %v6940 = vpop.f32.mrf.mxu0
      %v6941 = vadd.f32 0.0, %v6940
      %v6942 = vpop.f32.mrf.mxu0
      %v6943 = vadd.f32 0.0, %v6942
      %6944 = vmatmul.bf16.gmra.mxu0 %v6807
      %v6945 = vpop.f32.mrf.mxu0
      %v6946 = vadd.f32 0.0, %v6945
      %v6947 = vpop.f32.mrf.mxu0
      %v6948 = vadd.f32 0.0, %v6947
      %6949 = vmatmul.bf16.gmra.mxu0 %v6810
      %v6950 = vpop.f32.mrf.mxu0
      %v6951 = vadd.f32 0.0, %v6950
      %v6952 = vpop.f32.mrf.mxu0
      %v6953 = vadd.f32 0.0, %v6952
      %6954 = vmatmul.bf16.gmra.mxu0 %v6813
      %v6955 = vpop.f32.mrf.mxu0
      %v6956 = vadd.f32 0.0, %v6955
      %v6957 = vpop.f32.mrf.mxu0
      %v6958 = vadd.f32 0.0, %v6957
      %6959 = vmatmul.bf16.gmra.mxu0 %v6816
      %v6960 = vpop.f32.mrf.mxu0
      %v6961 = vadd.f32 0.0, %v6960
      %v6962 = vpop.f32.mrf.mxu0
      %v6963 = vadd.f32 0.0, %v6962
      %6964 = vmatmul.bf16.gmra.mxu0 %v6819
      %v6965 = vpop.f32.mrf.mxu0
      %v6966 = vadd.f32 0.0, %v6965
      %v6967 = vpop.f32.mrf.mxu0
      %v6968 = vadd.f32 0.0, %v6967
      %6969 = vmatmul.bf16.gmra.mxu0 %v6822
      %v6970 = vpop.f32.mrf.mxu0
      %v6971 = vadd.f32 0.0, %v6970
      %v6972 = vpop.f32.mrf.mxu0
      %v6973 = vadd.f32 0.0, %v6972
      %6974 = vmatmul.bf16.gmra.mxu0 %v6825
      %v6975 = vpop.f32.mrf.mxu0
      %v6976 = vadd.f32 0.0, %v6975
      %v6977 = vpop.f32.mrf.mxu0
      %v6978 = vadd.f32 0.0, %v6977
      %6979 = vmatmul.bf16.gmra.mxu0 %v6828
      %v6980 = vpop.f32.mrf.mxu0
      %v6981 = vadd.f32 0.0, %v6980
      %v6982 = vpop.f32.mrf.mxu0
      %v6983 = vadd.f32 0.0, %v6982
      %6984 = vmatmul.bf16.gmra.mxu0 %v6831
      %v6985 = vpop.f32.mrf.mxu0
      %v6986 = vadd.f32 0.0, %v6985
      %v6987 = vpop.f32.mrf.mxu0
      %v6988 = vadd.f32 0.0, %v6987
      %6989 = vmatmul.bf16.gmra.mxu0 %v6834
      %v6990 = vpop.f32.mrf.mxu0
      %v6991 = vadd.f32 0.0, %v6990
      %v6992 = vpop.f32.mrf.mxu0
      %v6993 = vadd.f32 0.0, %v6992
      %6994 = vmatmul.bf16.gmra.mxu0 %v6837
      %v6995 = vpop.f32.mrf.mxu0
      %v6996 = vadd.f32 0.0, %v6995
      %v6997 = vpop.f32.mrf.mxu0
      %v6998 = vadd.f32 0.0, %v6997
      %6999 = vmatmul.bf16.gmra.mxu0 %v6840
      %v7000 = vpop.f32.mrf.mxu0
      %v7001 = vadd.f32 0.0, %v7000
      %v7002 = vpop.f32.mrf.mxu0
      %v7003 = vadd.f32 0.0, %v7002
      %7004 = vmatmul.bf16.gmra.mxu0 %v6843
      %v7005 = vpop.f32.mrf.mxu0
      %v7006 = vadd.f32 0.0, %v7005
      %v7007 = vpop.f32.mrf.mxu0
      %v7008 = vadd.f32 0.0, %v7007
      %7009 = vmatmul.bf16.gmra.mxu0 %v6846
      %v7010 = vpop.f32.mrf.mxu0
      %v7011 = vadd.f32 0.0, %v7010
      %v7012 = vpop.f32.mrf.mxu0
      %v7013 = vadd.f32 0.0, %v7012
      %7014 = vmatmul.bf16.gmra.mxu0 %v6849
      %v7015 = vpop.f32.mrf.mxu0
      %v7016 = vadd.f32 0.0, %v7015
      %v7017 = vpop.f32.mrf.mxu0
      %v7018 = vadd.f32 0.0, %v7017
      %7019 = vdwg.mxu0
      %v7020 = vadd.f32 %v6585, %v6861
      %v7021 = vadd.f32 %v6586, %v6863
      %v7022 = vadd.f32 %v6587, %v6866
      %v7023 = vadd.f32 %v6588, %v6868
      %v7024 = vadd.f32 %v6589, %v6871
      %v7025 = vadd.f32 %v6590, %v6873
      %v7026 = vadd.f32 %v6591, %v6876
      %v7027 = vadd.f32 %v6592, %v6878
      %v7028 = vadd.f32 %v6593, %v6881
      %v7029 = vadd.f32 %v6594, %v6883
      %v7030 = vadd.f32 %v6595, %v6886
      %v7031 = vadd.f32 %v6596, %v6888
      %v7032 = vadd.f32 %v6597, %v6891
      %v7033 = vadd.f32 %v6598, %v6893
      %v7034 = vadd.f32 %v6599, %v6896
      %v7035 = vadd.f32 %v6600, %v6898
      %v7036 = vadd.f32 %v6601, %v6901
      %v7037 = vadd.f32 %v6602, %v6903
      %v7038 = vadd.f32 %v6603, %v6906
      %v7039 = vadd.f32 %v6604, %v6908
      %v7040 = vadd.f32 %v6605, %v6911
      %v7041 = vadd.f32 %v6606, %v6913
      %v7042 = vadd.f32 %v6607, %v6916
      %v7043 = vadd.f32 %v6608, %v6918
      %v7044 = vadd.f32 %v6609, %v6921
      %v7045 = vadd.f32 %v6610, %v6923
      %v7046 = vadd.f32 %v6611, %v6926
      %v7047 = vadd.f32 %v6612, %v6928
      %v7048 = vadd.f32 %v6613, %v6931
      %v7049 = vadd.f32 %v6614, %v6933
      %v7050 = vadd.f32 %v6615, %v6936
      %v7051 = vadd.f32 %v6616, %v6938
      %v7052 = vadd.f32 %v6617, %v6941
      %v7053 = vadd.f32 %v6618, %v6943
      %v7054 = vadd.f32 %v6619, %v6946
      %v7055 = vadd.f32 %v6620, %v6948
      %v7056 = vadd.f32 %v6621, %v6951
      %v7057 = vadd.f32 %v6622, %v6953
      %v7058 = vadd.f32 %v6623, %v6956
      %v7059 = vadd.f32 %v6624, %v6958
      %v7060 = vadd.f32 %v6625, %v6961
      %v7061 = vadd.f32 %v6626, %v6963
      %v7062 = vadd.f32 %v6627, %v6966
      %v7063 = vadd.f32 %v6628, %v6968
      %v7064 = vadd.f32 %v6629, %v6971
      %v7065 = vadd.f32 %v6630, %v6973
      %v7066 = vadd.f32 %v6631, %v6976
      %v7067 = vadd.f32 %v6632, %v6978
      %v7068 = vadd.f32 %v6633, %v6981
      %v7069 = vadd.f32 %v6634, %v6983
      %v7070 = vadd.f32 %v6635, %v6986
      %v7071 = vadd.f32 %v6636, %v6988
      %v7072 = vadd.f32 %v6637, %v6991
      %v7073 = vadd.f32 %v6638, %v6993
      %v7074 = vadd.f32 %v6639, %v6996
      %v7075 = vadd.f32 %v6640, %v6998
      %v7076 = vadd.f32 %v6641, %v7001
      %v7077 = vadd.f32 %v6642, %v7003
      %v7078 = vadd.f32 %v6643, %v7006
      %v7079 = vadd.f32 %v6644, %v7008
      %v7080 = vadd.f32 %v6645, %v7011
      %v7081 = vadd.f32 %v6646, %v7013
      %v7082 = vadd.f32 %v6647, %v7016
      %v7083 = vadd.f32 %v6648, %v7018
      %v7084 = vld [vmem:[%s6649 + $0x1] sm:$0xff]
      %v7085 = vld [vmem:[%s6649 + $0x11] sm:$0xff]
      %v7086 = vld [vmem:[%s6649 + $0x21] sm:$0xff]
      %v7087 = vld [vmem:[%s6649 + $0x31] sm:$0xff]
      %v7088 = vld [vmem:[%s6649 + $0x41] sm:$0xff]
      %v7089 = vld [vmem:[%s6649 + $0x51] sm:$0xff]
      %v7090 = vld [vmem:[%s6649 + $0x61] sm:$0xff]
      %v7091 = vld [vmem:[%s6649 + $0x71] sm:$0xff]
      %v7092 = vld [vmem:[%s6649 + $0xa1] sm:$0xff]
      %v7093 = vld [vmem:[%s6649 + $0xb1] sm:$0xff]
      %v7094 = vld [vmem:[%s6649 + $0xc1] sm:$0xff]
      %v7095 = vld [vmem:[%s6649 + $0xd1] sm:$0xff]
      %v7096 = vld [vmem:[%s6649 + $0xe1] sm:$0xff]
      %v7097 = vld [vmem:[%s6649 + $0xf1] sm:$0xff]
      %v7098 = vld [vmem:[%s6649 + $0x101] sm:$0xff]
      %v7099 = vld [vmem:[%s6649 + $0x111] sm:$0xff]
      %v7100 = vld [vmem:[%s6649 + $0x141] sm:$0xff]
      %v7101 = vld [vmem:[%s6649 + $0x151] sm:$0xff]
      %v7102 = vld [vmem:[%s6649 + $0x161] sm:$0xff]
      %v7103 = vld [vmem:[%s6649 + $0x171] sm:$0xff]
      %v7104 = vld [vmem:[%s6649 + $0x181] sm:$0xff]
      %v7105 = vld [vmem:[%s6649 + $0x191] sm:$0xff]
      %v7106 = vld [vmem:[%s6649 + $0x1a1] sm:$0xff]
      %v7107 = vld [vmem:[%s6649 + $0x1b1] sm:$0xff]
      %v7108 = vld [vmem:[%s6649 + $0x1e1] sm:$0xff]
      %v7109 = vld [vmem:[%s6649 + $0x1f1] sm:$0xff]
      %v7110 = vld [vmem:[%s6649 + $0x201] sm:$0xff]
      %v7111 = vld [vmem:[%s6649 + $0x211] sm:$0xff]
      %v7112 = vld [vmem:[%s6649 + $0x221] sm:$0xff]
      %v7113 = vld [vmem:[%s6649 + $0x231] sm:$0xff]
      %v7114 = vld [vmem:[%s6649 + $0x241] sm:$0xff]
      %v7115 = vld [vmem:[%s6649 + $0x251] sm:$0xff]
      %v7116 = vld [vmem:[%s6649 + $0x281] sm:$0xff]
      %v7117 = vld [vmem:[%s6649 + $0x291] sm:$0xff]
      %v7118 = vld [vmem:[%s6649 + $0x2a1] sm:$0xff]
      %v7119 = vld [vmem:[%s6649 + $0x2b1] sm:$0xff]
      %v7120 = vld [vmem:[%s6649 + $0x2c1] sm:$0xff]
      %v7121 = vld [vmem:[%s6649 + $0x2d1] sm:$0xff]
      %v7122 = vld [vmem:[%s6649 + $0x2e1] sm:$0xff]
      %v7123 = vld [vmem:[%s6649 + $0x2f1] sm:$0xff]
      %v7124 = vld [vmem:[%s6649 + $0x321] sm:$0xff]
      %v7125 = vld [vmem:[%s6649 + $0x331] sm:$0xff]
      %v7126 = vld [vmem:[%s6649 + $0x341] sm:$0xff]
      %v7127 = vld [vmem:[%s6649 + $0x351] sm:$0xff]
      %v7128 = vld [vmem:[%s6649 + $0x361] sm:$0xff]
      %v7129 = vld [vmem:[%s6649 + $0x371] sm:$0xff]
      %v7130 = vld [vmem:[%s6649 + $0x381] sm:$0xff]
      %v7131 = vld [vmem:[%s6649 + $0x391] sm:$0xff]
      %v7132 = vld [vmem:[%s6649 + $0x3c1] sm:$0xff]
      %v7133 = vld [vmem:[%s6649 + $0x3d1] sm:$0xff]
      %v7134 = vld [vmem:[%s6649 + $0x3e1] sm:$0xff]
      %v7135 = vld [vmem:[%s6649 + $0x3f1] sm:$0xff]
      %v7136 = vld [vmem:[%s6649 + $0x401] sm:$0xff]
      %v7137 = vld [vmem:[%s6649 + $0x411] sm:$0xff]
      %v7138 = vld [vmem:[%s6649 + $0x421] sm:$0xff]
      %v7139 = vld [vmem:[%s6649 + $0x431] sm:$0xff]
      %v7140 = vld [vmem:[%s6649 + $0x461] sm:$0xff]
      %v7141 = vld [vmem:[%s6649 + $0x471] sm:$0xff]
      %v7142 = vld [vmem:[%s6649 + $0x481] sm:$0xff]
      %v7143 = vld [vmem:[%s6649 + $0x491] sm:$0xff]
      %v7144 = vld [vmem:[%s6649 + $0x4a1] sm:$0xff]
      %v7145 = vld [vmem:[%s6649 + $0x4b1] sm:$0xff]
      %v7146 = vld [vmem:[%s6649 + $0x4c1] sm:$0xff]
      %v7147 = vld [vmem:[%s6649 + $0x4d1] sm:$0xff]
      %v7148 = vpack.c.bf16 %v7085, %v7084
      %v7149 = vpack.c.bf16 %v7087, %v7086
      %v7150 = vpack.c.bf16 %v7089, %v7088
      %v7151 = vpack.c.bf16 %v7091, %v7090
      %v7152 = vpack.c.bf16 %v7093, %v7092
      %v7153 = vpack.c.bf16 %v7095, %v7094
      %v7154 = vpack.c.bf16 %v7097, %v7096
      %v7155 = vpack.c.bf16 %v7099, %v7098
      %v7156 = vpack.c.bf16 %v7101, %v7100
      %v7157 = vpack.c.bf16 %v7103, %v7102
      %v7158 = vpack.c.bf16 %v7105, %v7104
      %v7159 = vpack.c.bf16 %v7107, %v7106
      %v7160 = vpack.c.bf16 %v7109, %v7108
      %v7161 = vpack.c.bf16 %v7111, %v7110
      %v7162 = vpack.c.bf16 %v7113, %v7112
      %v7163 = vpack.c.bf16 %v7115, %v7114
      %v7164 = vpack.c.bf16 %v7117, %v7116
      %v7165 = vpack.c.bf16 %v7119, %v7118
      %v7166 = vpack.c.bf16 %v7121, %v7120
      %v7167 = vpack.c.bf16 %v7123, %v7122
      %v7168 = vpack.c.bf16 %v7125, %v7124
      %v7169 = vpack.c.bf16 %v7127, %v7126
      %v7170 = vpack.c.bf16 %v7129, %v7128
      %v7171 = vpack.c.bf16 %v7131, %v7130
      %v7172 = vpack.c.bf16 %v7133, %v7132
      %v7173 = vpack.c.bf16 %v7135, %v7134
      %v7174 = vpack.c.bf16 %v7137, %v7136
      %v7175 = vpack.c.bf16 %v7139, %v7138
      %v7176 = vpack.c.bf16 %v7141, %v7140
      %v7177 = vpack.c.bf16 %v7143, %v7142
      %v7178 = vpack.c.bf16 %v7145, %v7144
      %v7179 = vpack.c.bf16 %v7147, %v7146
      %s7180 = scalar_lea.vmem %s4, 56
      %v7181 = vld [vmem:[%s7180] sm:$0xf]
      %v7182 = vld [vmem:[%s7180 + $0x4] sm:$0xf]
      %v7185 = vunpack.c.l.b16 %v7181
      %v7186 = vunpack.c.l.b16 %v7182
      %v7187 = vpack.c.b16 %v7186, %v7185
      %v7190 = vsel %vm3466, %v7148, 0
      %v7193 = vsel %vm3466, %v7149, 0
      %v7196 = vsel %vm3466, %v7150, 0
      %v7199 = vsel %vm3466, %v7151, 0
      %v7202 = vsel %vm3466, %v7152, 0
      %v7205 = vsel %vm3466, %v7153, 0
      %v7208 = vsel %vm3466, %v7154, 0
      %v7211 = vsel %vm3466, %v7155, 0
      %v7214 = vsel %vm3466, %v7156, 0
      %v7217 = vsel %vm3466, %v7157, 0
      %v7220 = vsel %vm3466, %v7158, 0
      %v7223 = vsel %vm3466, %v7159, 0
      %v7226 = vsel %vm3466, %v7160, 0
      %v7229 = vsel %vm3466, %v7161, 0
      %v7232 = vsel %vm3466, %v7162, 0
      %v7235 = vsel %vm3466, %v7163, 0
      %v7238 = vsel %vm3466, %v7164, 0
      %v7241 = vsel %vm3466, %v7165, 0
      %v7244 = vsel %vm3466, %v7166, 0
      %v7247 = vsel %vm3466, %v7167, 0
      %v7250 = vsel %vm3466, %v7168, 0
      %v7253 = vsel %vm3466, %v7169, 0
      %v7256 = vsel %vm3466, %v7170, 0
      %v7259 = vsel %vm3466, %v7171, 0
      %v7262 = vsel %vm3466, %v7172, 0
      %v7265 = vsel %vm3466, %v7173, 0
      %v7268 = vsel %vm3466, %v7174, 0
      %v7271 = vsel %vm3466, %v7175, 0
      %v7274 = vsel %vm3466, %v7176, 0
      %v7277 = vsel %vm3466, %v7177, 0
      %v7280 = vsel %vm3466, %v7178, 0
      %v7283 = vsel %vm3466, %v7179, 0
      %7285 = vmatpush.bf16.msra.mxu0 0
      %7286 = vmatpush.bf16.msra.mxu0 0
      %7287 = vmatpush.bf16.msra.mxu0 0
      %7288 = vmatpush.bf16.msra.mxu0 0
      %7289 = vmatpush.bf16.msra.mxu0 0
      %7290 = vmatpush.bf16.msra.mxu0 0
      %7291 = vmatpush.bf16.msra.mxu0 0
      %7292 = vmatpush.bf16.msra.mxu0 %v7187
      %7293 = vmatmul.bf16.gmra.mxu0 %v7190
      %v7294 = vpop.f32.mrf.mxu0
      %v7295 = vadd.f32 0.0, %v7294
      %v7296 = vpop.f32.mrf.mxu0
      %v7297 = vadd.f32 0.0, %v7296
      %7298 = vmatmul.bf16.gmra.mxu0 %v7193
      %v7299 = vpop.f32.mrf.mxu0
      %v7300 = vadd.f32 0.0, %v7299
      %v7301 = vpop.f32.mrf.mxu0
      %v7302 = vadd.f32 0.0, %v7301
      %7303 = vmatmul.bf16.gmra.mxu0 %v7196
      %v7304 = vpop.f32.mrf.mxu0
      %v7305 = vadd.f32 0.0, %v7304
      %v7306 = vpop.f32.mrf.mxu0
      %v7307 = vadd.f32 0.0, %v7306
      %7308 = vmatmul.bf16.gmra.mxu0 %v7199
      %v7309 = vpop.f32.mrf.mxu0
      %v7310 = vadd.f32 0.0, %v7309
      %v7311 = vpop.f32.mrf.mxu0
      %v7312 = vadd.f32 0.0, %v7311
      %7313 = vmatmul.bf16.gmra.mxu0 %v7202
      %v7314 = vpop.f32.mrf.mxu0
      %v7315 = vadd.f32 0.0, %v7314
      %v7316 = vpop.f32.mrf.mxu0
      %v7317 = vadd.f32 0.0, %v7316
      %7318 = vmatmul.bf16.gmra.mxu0 %v7205
      %v7319 = vpop.f32.mrf.mxu0
      %v7320 = vadd.f32 0.0, %v7319
      %v7321 = vpop.f32.mrf.mxu0
      %v7322 = vadd.f32 0.0, %v7321
      %7323 = vmatmul.bf16.gmra.mxu0 %v7208
      %v7324 = vpop.f32.mrf.mxu0
      %v7325 = vadd.f32 0.0, %v7324
      %v7326 = vpop.f32.mrf.mxu0
      %v7327 = vadd.f32 0.0, %v7326
      %7328 = vmatmul.bf16.gmra.mxu0 %v7211
      %v7329 = vpop.f32.mrf.mxu0
      %v7330 = vadd.f32 0.0, %v7329
      %v7331 = vpop.f32.mrf.mxu0
      %v7332 = vadd.f32 0.0, %v7331
      %7333 = vmatmul.bf16.gmra.mxu0 %v7214
      %v7334 = vpop.f32.mrf.mxu0
      %v7335 = vadd.f32 0.0, %v7334
      %v7336 = vpop.f32.mrf.mxu0
      %v7337 = vadd.f32 0.0, %v7336
      %7338 = vmatmul.bf16.gmra.mxu0 %v7217
      %v7339 = vpop.f32.mrf.mxu0
      %v7340 = vadd.f32 0.0, %v7339
      %v7341 = vpop.f32.mrf.mxu0
      %v7342 = vadd.f32 0.0, %v7341
      %7343 = vmatmul.bf16.gmra.mxu0 %v7220
      %v7344 = vpop.f32.mrf.mxu0
      %v7345 = vadd.f32 0.0, %v7344
      %v7346 = vpop.f32.mrf.mxu0
      %v7347 = vadd.f32 0.0, %v7346
      %7348 = vmatmul.bf16.gmra.mxu0 %v7223
      %v7349 = vpop.f32.mrf.mxu0
      %v7350 = vadd.f32 0.0, %v7349
      %v7351 = vpop.f32.mrf.mxu0
      %v7352 = vadd.f32 0.0, %v7351
      %7353 = vmatmul.bf16.gmra.mxu0 %v7226
      %v7354 = vpop.f32.mrf.mxu0
      %v7355 = vadd.f32 0.0, %v7354
      %v7356 = vpop.f32.mrf.mxu0
      %v7357 = vadd.f32 0.0, %v7356
      %7358 = vmatmul.bf16.gmra.mxu0 %v7229
      %v7359 = vpop.f32.mrf.mxu0
      %v7360 = vadd.f32 0.0, %v7359
      %v7361 = vpop.f32.mrf.mxu0
      %v7362 = vadd.f32 0.0, %v7361
      %7363 = vmatmul.bf16.gmra.mxu0 %v7232
      %v7364 = vpop.f32.mrf.mxu0
      %v7365 = vadd.f32 0.0, %v7364
      %v7366 = vpop.f32.mrf.mxu0
      %v7367 = vadd.f32 0.0, %v7366
      %7368 = vmatmul.bf16.gmra.mxu0 %v7235
      %v7369 = vpop.f32.mrf.mxu0
      %v7370 = vadd.f32 0.0, %v7369
      %v7371 = vpop.f32.mrf.mxu0
      %v7372 = vadd.f32 0.0, %v7371
      %7373 = vmatmul.bf16.gmra.mxu0 %v7238
      %v7374 = vpop.f32.mrf.mxu0
      %v7375 = vadd.f32 0.0, %v7374
      %v7376 = vpop.f32.mrf.mxu0
      %v7377 = vadd.f32 0.0, %v7376
      %7378 = vmatmul.bf16.gmra.mxu0 %v7241
      %v7379 = vpop.f32.mrf.mxu0
      %v7380 = vadd.f32 0.0, %v7379
      %v7381 = vpop.f32.mrf.mxu0
      %v7382 = vadd.f32 0.0, %v7381
      %7383 = vmatmul.bf16.gmra.mxu0 %v7244
      %v7384 = vpop.f32.mrf.mxu0
      %v7385 = vadd.f32 0.0, %v7384
      %v7386 = vpop.f32.mrf.mxu0
      %v7387 = vadd.f32 0.0, %v7386
      %7388 = vmatmul.bf16.gmra.mxu0 %v7247
      %v7389 = vpop.f32.mrf.mxu0
      %v7390 = vadd.f32 0.0, %v7389
      %v7391 = vpop.f32.mrf.mxu0
      %v7392 = vadd.f32 0.0, %v7391
      %7393 = vmatmul.bf16.gmra.mxu0 %v7250
      %v7394 = vpop.f32.mrf.mxu0
      %v7395 = vadd.f32 0.0, %v7394
      %v7396 = vpop.f32.mrf.mxu0
      %v7397 = vadd.f32 0.0, %v7396
      %7398 = vmatmul.bf16.gmra.mxu0 %v7253
      %v7399 = vpop.f32.mrf.mxu0
      %v7400 = vadd.f32 0.0, %v7399
      %v7401 = vpop.f32.mrf.mxu0
      %v7402 = vadd.f32 0.0, %v7401
      %7403 = vmatmul.bf16.gmra.mxu0 %v7256
      %v7404 = vpop.f32.mrf.mxu0
      %v7405 = vadd.f32 0.0, %v7404
      %v7406 = vpop.f32.mrf.mxu0
      %v7407 = vadd.f32 0.0, %v7406
      %7408 = vmatmul.bf16.gmra.mxu0 %v7259
      %v7409 = vpop.f32.mrf.mxu0
      %v7410 = vadd.f32 0.0, %v7409
      %v7411 = vpop.f32.mrf.mxu0
      %v7412 = vadd.f32 0.0, %v7411
      %7413 = vmatmul.bf16.gmra.mxu0 %v7262
      %v7414 = vpop.f32.mrf.mxu0
      %v7415 = vadd.f32 0.0, %v7414
      %v7416 = vpop.f32.mrf.mxu0
      %v7417 = vadd.f32 0.0, %v7416
      %7418 = vmatmul.bf16.gmra.mxu0 %v7265
      %v7419 = vpop.f32.mrf.mxu0
      %v7420 = vadd.f32 0.0, %v7419
      %v7421 = vpop.f32.mrf.mxu0
      %v7422 = vadd.f32 0.0, %v7421
      %7423 = vmatmul.bf16.gmra.mxu0 %v7268
      %v7424 = vpop.f32.mrf.mxu0
      %v7425 = vadd.f32 0.0, %v7424
      %v7426 = vpop.f32.mrf.mxu0
      %v7427 = vadd.f32 0.0, %v7426
      %7428 = vmatmul.bf16.gmra.mxu0 %v7271
      %v7429 = vpop.f32.mrf.mxu0
      %v7430 = vadd.f32 0.0, %v7429
      %v7431 = vpop.f32.mrf.mxu0
      %v7432 = vadd.f32 0.0, %v7431
      %7433 = vmatmul.bf16.gmra.mxu0 %v7274
      %v7434 = vpop.f32.mrf.mxu0
      %v7435 = vadd.f32 0.0, %v7434
      %v7436 = vpop.f32.mrf.mxu0
      %v7437 = vadd.f32 0.0, %v7436
      %7438 = vmatmul.bf16.gmra.mxu0 %v7277
      %v7439 = vpop.f32.mrf.mxu0
      %v7440 = vadd.f32 0.0, %v7439
      %v7441 = vpop.f32.mrf.mxu0
      %v7442 = vadd.f32 0.0, %v7441
      %7443 = vmatmul.bf16.gmra.mxu0 %v7280
      %v7444 = vpop.f32.mrf.mxu0
      %v7445 = vadd.f32 0.0, %v7444
      %v7446 = vpop.f32.mrf.mxu0
      %v7447 = vadd.f32 0.0, %v7446
      %7448 = vmatmul.bf16.gmra.mxu0 %v7283
      %v7449 = vpop.f32.mrf.mxu0
      %v7450 = vadd.f32 0.0, %v7449
      %v7451 = vpop.f32.mrf.mxu0
      %v7452 = vadd.f32 0.0, %v7451
      %7453 = vdwg.mxu0
      %v7454 = vadd.f32 %v7020, %v7295
      %v7455 = vadd.f32 %v7021, %v7297
      %v7456 = vadd.f32 %v7022, %v7300
      %v7457 = vadd.f32 %v7023, %v7302
      %v7458 = vadd.f32 %v7024, %v7305
      %v7459 = vadd.f32 %v7025, %v7307
      %v7460 = vadd.f32 %v7026, %v7310
      %v7461 = vadd.f32 %v7027, %v7312
      %v7462 = vadd.f32 %v7028, %v7315
      %v7463 = vadd.f32 %v7029, %v7317
      %v7464 = vadd.f32 %v7030, %v7320
      %v7465 = vadd.f32 %v7031, %v7322
      %v7466 = vadd.f32 %v7032, %v7325
      %v7467 = vadd.f32 %v7033, %v7327
      %v7468 = vadd.f32 %v7034, %v7330
      %v7469 = vadd.f32 %v7035, %v7332
      %v7470 = vadd.f32 %v7036, %v7335
      %v7471 = vadd.f32 %v7037, %v7337
      %v7472 = vadd.f32 %v7038, %v7340
      %v7473 = vadd.f32 %v7039, %v7342
      %v7474 = vadd.f32 %v7040, %v7345
      %v7475 = vadd.f32 %v7041, %v7347
      %v7476 = vadd.f32 %v7042, %v7350
      %v7477 = vadd.f32 %v7043, %v7352
      %v7478 = vadd.f32 %v7044, %v7355
      %v7479 = vadd.f32 %v7045, %v7357
      %v7480 = vadd.f32 %v7046, %v7360
      %v7481 = vadd.f32 %v7047, %v7362
      %v7482 = vadd.f32 %v7048, %v7365
      %v7483 = vadd.f32 %v7049, %v7367
      %v7484 = vadd.f32 %v7050, %v7370
      %v7485 = vadd.f32 %v7051, %v7372
      %v7486 = vadd.f32 %v7052, %v7375
      %v7487 = vadd.f32 %v7053, %v7377
      %v7488 = vadd.f32 %v7054, %v7380
      %v7489 = vadd.f32 %v7055, %v7382
      %v7490 = vadd.f32 %v7056, %v7385
      %v7491 = vadd.f32 %v7057, %v7387
      %v7492 = vadd.f32 %v7058, %v7390
      %v7493 = vadd.f32 %v7059, %v7392
      %v7494 = vadd.f32 %v7060, %v7395
      %v7495 = vadd.f32 %v7061, %v7397
      %v7496 = vadd.f32 %v7062, %v7400
      %v7497 = vadd.f32 %v7063, %v7402
      %v7498 = vadd.f32 %v7064, %v7405
      %v7499 = vadd.f32 %v7065, %v7407
      %v7500 = vadd.f32 %v7066, %v7410
      %v7501 = vadd.f32 %v7067, %v7412
      %v7502 = vadd.f32 %v7068, %v7415
      %v7503 = vadd.f32 %v7069, %v7417
      %v7504 = vadd.f32 %v7070, %v7420
      %v7505 = vadd.f32 %v7071, %v7422
      %v7506 = vadd.f32 %v7072, %v7425
      %v7507 = vadd.f32 %v7073, %v7427
      %v7508 = vadd.f32 %v7074, %v7430
      %v7509 = vadd.f32 %v7075, %v7432
      %v7510 = vadd.f32 %v7076, %v7435
      %v7511 = vadd.f32 %v7077, %v7437
      %v7512 = vadd.f32 %v7078, %v7440
      %v7513 = vadd.f32 %v7079, %v7442
      %v7514 = vadd.f32 %v7080, %v7445
      %v7515 = vadd.f32 %v7081, %v7447
      %v7516 = vadd.f32 %v7082, %v7450
      %v7517 = vadd.f32 %v7083, %v7452
      %v7518 = vld [vmem:[%s6649 + $0x2] sm:$0xff]
      %v7519 = vld [vmem:[%s6649 + $0x12] sm:$0xff]
      %v7520 = vld [vmem:[%s6649 + $0x22] sm:$0xff]
      %v7521 = vld [vmem:[%s6649 + $0x32] sm:$0xff]
      %v7522 = vld [vmem:[%s6649 + $0x42] sm:$0xff]
      %v7523 = vld [vmem:[%s6649 + $0x52] sm:$0xff]
      %v7524 = vld [vmem:[%s6649 + $0x62] sm:$0xff]
      %v7525 = vld [vmem:[%s6649 + $0x72] sm:$0xff]
      %v7526 = vld [vmem:[%s6649 + $0xa2] sm:$0xff]
      %v7527 = vld [vmem:[%s6649 + $0xb2] sm:$0xff]
      %v7528 = vld [vmem:[%s6649 + $0xc2] sm:$0xff]
      %v7529 = vld [vmem:[%s6649 + $0xd2] sm:$0xff]
      %v7530 = vld [vmem:[%s6649 + $0xe2] sm:$0xff]
      %v7531 = vld [vmem:[%s6649 + $0xf2] sm:$0xff]
      %v7532 = vld [vmem:[%s6649 + $0x102] sm:$0xff]
      %v7533 = vld [vmem:[%s6649 + $0x112] sm:$0xff]
      %v7534 = vld [vmem:[%s6649 + $0x142] sm:$0xff]
      %v7535 = vld [vmem:[%s6649 + $0x152] sm:$0xff]
      %v7536 = vld [vmem:[%s6649 + $0x162] sm:$0xff]
      %v7537 = vld [vmem:[%s6649 + $0x172] sm:$0xff]
      %v7538 = vld [vmem:[%s6649 + $0x182] sm:$0xff]
      %v7539 = vld [vmem:[%s6649 + $0x192] sm:$0xff]
      %v7540 = vld [vmem:[%s6649 + $0x1a2] sm:$0xff]
      %v7541 = vld [vmem:[%s6649 + $0x1b2] sm:$0xff]
      %v7542 = vld [vmem:[%s6649 + $0x1e2] sm:$0xff]
      %v7543 = vld [vmem:[%s6649 + $0x1f2] sm:$0xff]
      %v7544 = vld [vmem:[%s6649 + $0x202] sm:$0xff]
      %v7545 = vld [vmem:[%s6649 + $0x212] sm:$0xff]
      %v7546 = vld [vmem:[%s6649 + $0x222] sm:$0xff]
      %v7547 = vld [vmem:[%s6649 + $0x232] sm:$0xff]
      %v7548 = vld [vmem:[%s6649 + $0x242] sm:$0xff]
      %v7549 = vld [vmem:[%s6649 + $0x252] sm:$0xff]
      %v7550 = vld [vmem:[%s6649 + $0x282] sm:$0xff]
      %v7551 = vld [vmem:[%s6649 + $0x292] sm:$0xff]
      %v7552 = vld [vmem:[%s6649 + $0x2a2] sm:$0xff]
      %v7553 = vld [vmem:[%s6649 + $0x2b2] sm:$0xff]
      %v7554 = vld [vmem:[%s6649 + $0x2c2] sm:$0xff]
      %v7555 = vld [vmem:[%s6649 + $0x2d2] sm:$0xff]
      %v7556 = vld [vmem:[%s6649 + $0x2e2] sm:$0xff]
      %v7557 = vld [vmem:[%s6649 + $0x2f2] sm:$0xff]
      %v7558 = vld [vmem:[%s6649 + $0x322] sm:$0xff]
      %v7559 = vld [vmem:[%s6649 + $0x332] sm:$0xff]
      %v7560 = vld [vmem:[%s6649 + $0x342] sm:$0xff]
      %v7561 = vld [vmem:[%s6649 + $0x352] sm:$0xff]
      %v7562 = vld [vmem:[%s6649 + $0x362] sm:$0xff]
      %v7563 = vld [vmem:[%s6649 + $0x372] sm:$0xff]
      %v7564 = vld [vmem:[%s6649 + $0x382] sm:$0xff]
      %v7565 = vld [vmem:[%s6649 + $0x392] sm:$0xff]
      %v7566 = vld [vmem:[%s6649 + $0x3c2] sm:$0xff]
      %v7567 = vld [vmem:[%s6649 + $0x3d2] sm:$0xff]
      %v7568 = vld [vmem:[%s6649 + $0x3e2] sm:$0xff]
      %v7569 = vld [vmem:[%s6649 + $0x3f2] sm:$0xff]
      %v7570 = vld [vmem:[%s6649 + $0x402] sm:$0xff]
      %v7571 = vld [vmem:[%s6649 + $0x412] sm:$0xff]
      %v7572 = vld [vmem:[%s6649 + $0x422] sm:$0xff]
      %v7573 = vld [vmem:[%s6649 + $0x432] sm:$0xff]
      %v7574 = vld [vmem:[%s6649 + $0x462] sm:$0xff]
      %v7575 = vld [vmem:[%s6649 + $0x472] sm:$0xff]
      %v7576 = vld [vmem:[%s6649 + $0x482] sm:$0xff]
      %v7577 = vld [vmem:[%s6649 + $0x492] sm:$0xff]
      %v7578 = vld [vmem:[%s6649 + $0x4a2] sm:$0xff]
      %v7579 = vld [vmem:[%s6649 + $0x4b2] sm:$0xff]
      %v7580 = vld [vmem:[%s6649 + $0x4c2] sm:$0xff]
      %v7581 = vld [vmem:[%s6649 + $0x4d2] sm:$0xff]
      %v7582 = vpack.c.bf16 %v7519, %v7518
      %v7583 = vpack.c.bf16 %v7521, %v7520
      %v7584 = vpack.c.bf16 %v7523, %v7522
      %v7585 = vpack.c.bf16 %v7525, %v7524
      %v7586 = vpack.c.bf16 %v7527, %v7526
      %v7587 = vpack.c.bf16 %v7529, %v7528
      %v7588 = vpack.c.bf16 %v7531, %v7530
      %v7589 = vpack.c.bf16 %v7533, %v7532
      %v7590 = vpack.c.bf16 %v7535, %v7534
      %v7591 = vpack.c.bf16 %v7537, %v7536
      %v7592 = vpack.c.bf16 %v7539, %v7538
      %v7593 = vpack.c.bf16 %v7541, %v7540
      %v7594 = vpack.c.bf16 %v7543, %v7542
      %v7595 = vpack.c.bf16 %v7545, %v7544
      %v7596 = vpack.c.bf16 %v7547, %v7546
      %v7597 = vpack.c.bf16 %v7549, %v7548
      %v7598 = vpack.c.bf16 %v7551, %v7550
      %v7599 = vpack.c.bf16 %v7553, %v7552
      %v7600 = vpack.c.bf16 %v7555, %v7554
      %v7601 = vpack.c.bf16 %v7557, %v7556
      %v7602 = vpack.c.bf16 %v7559, %v7558
      %v7603 = vpack.c.bf16 %v7561, %v7560
      %v7604 = vpack.c.bf16 %v7563, %v7562
      %v7605 = vpack.c.bf16 %v7565, %v7564
      %v7606 = vpack.c.bf16 %v7567, %v7566
      %v7607 = vpack.c.bf16 %v7569, %v7568
      %v7608 = vpack.c.bf16 %v7571, %v7570
      %v7609 = vpack.c.bf16 %v7573, %v7572
      %v7610 = vpack.c.bf16 %v7575, %v7574
      %v7611 = vpack.c.bf16 %v7577, %v7576
      %v7612 = vpack.c.bf16 %v7579, %v7578
      %v7613 = vpack.c.bf16 %v7581, %v7580
      %s7614 = scalar_lea.vmem %s4, 64
      %v7615 = vld [vmem:[%s7614] sm:$0xf]
      %v7616 = vld [vmem:[%s7614 + $0x4] sm:$0xf]
      %v7619 = vunpack.c.l.b16 %v7615
      %v7620 = vunpack.c.l.b16 %v7616
      %v7621 = vpack.c.b16 %v7620, %v7619
      %v7624 = vsel %vm3466, %v7582, 0
      %v7627 = vsel %vm3466, %v7583, 0
      %v7630 = vsel %vm3466, %v7584, 0
      %v7633 = vsel %vm3466, %v7585, 0
      %v7636 = vsel %vm3466, %v7586, 0
      %v7639 = vsel %vm3466, %v7587, 0
      %v7642 = vsel %vm3466, %v7588, 0
      %v7645 = vsel %vm3466, %v7589, 0
      %v7648 = vsel %vm3466, %v7590, 0
      %v7651 = vsel %vm3466, %v7591, 0
      %v7654 = vsel %vm3466, %v7592, 0
      %v7657 = vsel %vm3466, %v7593, 0
      %v7660 = vsel %vm3466, %v7594, 0
      %v7663 = vsel %vm3466, %v7595, 0
      %v7666 = vsel %vm3466, %v7596, 0
      %v7669 = vsel %vm3466, %v7597, 0
      %v7672 = vsel %vm3466, %v7598, 0
      %v7675 = vsel %vm3466, %v7599, 0
      %v7678 = vsel %vm3466, %v7600, 0
      %v7681 = vsel %vm3466, %v7601, 0
      %v7684 = vsel %vm3466, %v7602, 0
      %v7687 = vsel %vm3466, %v7603, 0
      %v7690 = vsel %vm3466, %v7604, 0
      %v7693 = vsel %vm3466, %v7605, 0
      %v7696 = vsel %vm3466, %v7606, 0
      %v7699 = vsel %vm3466, %v7607, 0
      %v7702 = vsel %vm3466, %v7608, 0
      %v7705 = vsel %vm3466, %v7609, 0
      %v7708 = vsel %vm3466, %v7610, 0
      %v7711 = vsel %vm3466, %v7611, 0
      %v7714 = vsel %vm3466, %v7612, 0
      %v7717 = vsel %vm3466, %v7613, 0
      %7719 = vmatpush.bf16.msra.mxu0 0
      %7720 = vmatpush.bf16.msra.mxu0 0
      %7721 = vmatpush.bf16.msra.mxu0 0
      %7722 = vmatpush.bf16.msra.mxu0 0
      %7723 = vmatpush.bf16.msra.mxu0 0
      %7724 = vmatpush.bf16.msra.mxu0 0
      %7725 = vmatpush.bf16.msra.mxu0 0
      %7726 = vmatpush.bf16.msra.mxu0 %v7621
      %7727 = vmatmul.bf16.gmra.mxu0 %v7624
      %v7728 = vpop.f32.mrf.mxu0
      %v7729 = vadd.f32 0.0, %v7728
      %v7730 = vpop.f32.mrf.mxu0
      %v7731 = vadd.f32 0.0, %v7730
      %7732 = vmatmul.bf16.gmra.mxu0 %v7627
      %v7733 = vpop.f32.mrf.mxu0
      %v7734 = vadd.f32 0.0, %v7733
      %v7735 = vpop.f32.mrf.mxu0
      %v7736 = vadd.f32 0.0, %v7735
      %7737 = vmatmul.bf16.gmra.mxu0 %v7630
      %v7738 = vpop.f32.mrf.mxu0
      %v7739 = vadd.f32 0.0, %v7738
      %v7740 = vpop.f32.mrf.mxu0
      %v7741 = vadd.f32 0.0, %v7740
      %7742 = vmatmul.bf16.gmra.mxu0 %v7633
      %v7743 = vpop.f32.mrf.mxu0
      %v7744 = vadd.f32 0.0, %v7743
      %v7745 = vpop.f32.mrf.mxu0
      %v7746 = vadd.f32 0.0, %v7745
      %7747 = vmatmul.bf16.gmra.mxu0 %v7636
      %v7748 = vpop.f32.mrf.mxu0
      %v7749 = vadd.f32 0.0, %v7748
      %v7750 = vpop.f32.mrf.mxu0
      %v7751 = vadd.f32 0.0, %v7750
      %7752 = vmatmul.bf16.gmra.mxu0 %v7639
      %v7753 = vpop.f32.mrf.mxu0
      %v7754 = vadd.f32 0.0, %v7753
      %v7755 = vpop.f32.mrf.mxu0
      %v7756 = vadd.f32 0.0, %v7755
      %7757 = vmatmul.bf16.gmra.mxu0 %v7642
      %v7758 = vpop.f32.mrf.mxu0
      %v7759 = vadd.f32 0.0, %v7758
      %v7760 = vpop.f32.mrf.mxu0
      %v7761 = vadd.f32 0.0, %v7760
      %7762 = vmatmul.bf16.gmra.mxu0 %v7645
      %v7763 = vpop.f32.mrf.mxu0
      %v7764 = vadd.f32 0.0, %v7763
      %v7765 = vpop.f32.mrf.mxu0
      %v7766 = vadd.f32 0.0, %v7765
      %7767 = vmatmul.bf16.gmra.mxu0 %v7648
      %v7768 = vpop.f32.mrf.mxu0
      %v7769 = vadd.f32 0.0, %v7768
      %v7770 = vpop.f32.mrf.mxu0
      %v7771 = vadd.f32 0.0, %v7770
      %7772 = vmatmul.bf16.gmra.mxu0 %v7651
      %v7773 = vpop.f32.mrf.mxu0
      %v7774 = vadd.f32 0.0, %v7773
      %v7775 = vpop.f32.mrf.mxu0
      %v7776 = vadd.f32 0.0, %v7775
      %7777 = vmatmul.bf16.gmra.mxu0 %v7654
      %v7778 = vpop.f32.mrf.mxu0
      %v7779 = vadd.f32 0.0, %v7778
      %v7780 = vpop.f32.mrf.mxu0
      %v7781 = vadd.f32 0.0, %v7780
      %7782 = vmatmul.bf16.gmra.mxu0 %v7657
      %v7783 = vpop.f32.mrf.mxu0
      %v7784 = vadd.f32 0.0, %v7783
      %v7785 = vpop.f32.mrf.mxu0
      %v7786 = vadd.f32 0.0, %v7785
      %7787 = vmatmul.bf16.gmra.mxu0 %v7660
      %v7788 = vpop.f32.mrf.mxu0
      %v7789 = vadd.f32 0.0, %v7788
      %v7790 = vpop.f32.mrf.mxu0
      %v7791 = vadd.f32 0.0, %v7790
      %7792 = vmatmul.bf16.gmra.mxu0 %v7663
      %v7793 = vpop.f32.mrf.mxu0
      %v7794 = vadd.f32 0.0, %v7793
      %v7795 = vpop.f32.mrf.mxu0
      %v7796 = vadd.f32 0.0, %v7795
      %7797 = vmatmul.bf16.gmra.mxu0 %v7666
      %v7798 = vpop.f32.mrf.mxu0
      %v7799 = vadd.f32 0.0, %v7798
      %v7800 = vpop.f32.mrf.mxu0
      %v7801 = vadd.f32 0.0, %v7800
      %7802 = vmatmul.bf16.gmra.mxu0 %v7669
      %v7803 = vpop.f32.mrf.mxu0
      %v7804 = vadd.f32 0.0, %v7803
      %v7805 = vpop.f32.mrf.mxu0
      %v7806 = vadd.f32 0.0, %v7805
      %7807 = vmatmul.bf16.gmra.mxu0 %v7672
      %v7808 = vpop.f32.mrf.mxu0
      %v7809 = vadd.f32 0.0, %v7808
      %v7810 = vpop.f32.mrf.mxu0
      %v7811 = vadd.f32 0.0, %v7810
      %7812 = vmatmul.bf16.gmra.mxu0 %v7675
      %v7813 = vpop.f32.mrf.mxu0
      %v7814 = vadd.f32 0.0, %v7813
      %v7815 = vpop.f32.mrf.mxu0
      %v7816 = vadd.f32 0.0, %v7815
      %7817 = vmatmul.bf16.gmra.mxu0 %v7678
      %v7818 = vpop.f32.mrf.mxu0
      %v7819 = vadd.f32 0.0, %v7818
      %v7820 = vpop.f32.mrf.mxu0
      %v7821 = vadd.f32 0.0, %v7820
      %7822 = vmatmul.bf16.gmra.mxu0 %v7681
      %v7823 = vpop.f32.mrf.mxu0
      %v7824 = vadd.f32 0.0, %v7823
      %v7825 = vpop.f32.mrf.mxu0
      %v7826 = vadd.f32 0.0, %v7825
      %7827 = vmatmul.bf16.gmra.mxu0 %v7684
      %v7828 = vpop.f32.mrf.mxu0
      %v7829 = vadd.f32 0.0, %v7828
      %v7830 = vpop.f32.mrf.mxu0
      %v7831 = vadd.f32 0.0, %v7830
      %7832 = vmatmul.bf16.gmra.mxu0 %v7687
      %v7833 = vpop.f32.mrf.mxu0
      %v7834 = vadd.f32 0.0, %v7833
      %v7835 = vpop.f32.mrf.mxu0
      %v7836 = vadd.f32 0.0, %v7835
      %7837 = vmatmul.bf16.gmra.mxu0 %v7690
      %v7838 = vpop.f32.mrf.mxu0
      %v7839 = vadd.f32 0.0, %v7838
      %v7840 = vpop.f32.mrf.mxu0
      %v7841 = vadd.f32 0.0, %v7840
      %7842 = vmatmul.bf16.gmra.mxu0 %v7693
      %v7843 = vpop.f32.mrf.mxu0
      %v7844 = vadd.f32 0.0, %v7843
      %v7845 = vpop.f32.mrf.mxu0
      %v7846 = vadd.f32 0.0, %v7845
      %7847 = vmatmul.bf16.gmra.mxu0 %v7696
      %v7848 = vpop.f32.mrf.mxu0
      %v7849 = vadd.f32 0.0, %v7848
      %v7850 = vpop.f32.mrf.mxu0
      %v7851 = vadd.f32 0.0, %v7850
      %7852 = vmatmul.bf16.gmra.mxu0 %v7699
      %v7853 = vpop.f32.mrf.mxu0
      %v7854 = vadd.f32 0.0, %v7853
      %v7855 = vpop.f32.mrf.mxu0
      %v7856 = vadd.f32 0.0, %v7855
      %7857 = vmatmul.bf16.gmra.mxu0 %v7702
      %v7858 = vpop.f32.mrf.mxu0
      %v7859 = vadd.f32 0.0, %v7858
      %v7860 = vpop.f32.mrf.mxu0
      %v7861 = vadd.f32 0.0, %v7860
      %7862 = vmatmul.bf16.gmra.mxu0 %v7705
      %v7863 = vpop.f32.mrf.mxu0
      %v7864 = vadd.f32 0.0, %v7863
      %v7865 = vpop.f32.mrf.mxu0
      %v7866 = vadd.f32 0.0, %v7865
      %7867 = vmatmul.bf16.gmra.mxu0 %v7708
      %v7868 = vpop.f32.mrf.mxu0
      %v7869 = vadd.f32 0.0, %v7868
      %v7870 = vpop.f32.mrf.mxu0
      %v7871 = vadd.f32 0.0, %v7870
      %7872 = vmatmul.bf16.gmra.mxu0 %v7711
      %v7873 = vpop.f32.mrf.mxu0
      %v7874 = vadd.f32 0.0, %v7873
      %v7875 = vpop.f32.mrf.mxu0
      %v7876 = vadd.f32 0.0, %v7875
      %7877 = vmatmul.bf16.gmra.mxu0 %v7714
      %v7878 = vpop.f32.mrf.mxu0
      %v7879 = vadd.f32 0.0, %v7878
      %v7880 = vpop.f32.mrf.mxu0
      %v7881 = vadd.f32 0.0, %v7880
      %7882 = vmatmul.bf16.gmra.mxu0 %v7717
      %v7883 = vpop.f32.mrf.mxu0
      %v7884 = vadd.f32 0.0, %v7883
      %v7885 = vpop.f32.mrf.mxu0
      %v7886 = vadd.f32 0.0, %v7885
      %7887 = vdwg.mxu0
      %v7888 = vadd.f32 %v7454, %v7729
      %v7889 = vadd.f32 %v7455, %v7731
      %v7890 = vadd.f32 %v7456, %v7734
      %v7891 = vadd.f32 %v7457, %v7736
      %v7892 = vadd.f32 %v7458, %v7739
      %v7893 = vadd.f32 %v7459, %v7741
      %v7894 = vadd.f32 %v7460, %v7744
      %v7895 = vadd.f32 %v7461, %v7746
      %v7896 = vadd.f32 %v7462, %v7749
      %v7897 = vadd.f32 %v7463, %v7751
      %v7898 = vadd.f32 %v7464, %v7754
      %v7899 = vadd.f32 %v7465, %v7756
      %v7900 = vadd.f32 %v7466, %v7759
      %v7901 = vadd.f32 %v7467, %v7761
      %v7902 = vadd.f32 %v7468, %v7764
      %v7903 = vadd.f32 %v7469, %v7766
      %v7904 = vadd.f32 %v7470, %v7769
      %v7905 = vadd.f32 %v7471, %v7771
      %v7906 = vadd.f32 %v7472, %v7774
      %v7907 = vadd.f32 %v7473, %v7776
      %v7908 = vadd.f32 %v7474, %v7779
      %v7909 = vadd.f32 %v7475, %v7781
      %v7910 = vadd.f32 %v7476, %v7784
      %v7911 = vadd.f32 %v7477, %v7786
      %v7912 = vadd.f32 %v7478, %v7789
      %v7913 = vadd.f32 %v7479, %v7791
      %v7914 = vadd.f32 %v7480, %v7794
      %v7915 = vadd.f32 %v7481, %v7796
      %v7916 = vadd.f32 %v7482, %v7799
      %v7917 = vadd.f32 %v7483, %v7801
      %v7918 = vadd.f32 %v7484, %v7804
      %v7919 = vadd.f32 %v7485, %v7806
      %v7920 = vadd.f32 %v7486, %v7809
      %v7921 = vadd.f32 %v7487, %v7811
      %v7922 = vadd.f32 %v7488, %v7814
      %v7923 = vadd.f32 %v7489, %v7816
      %v7924 = vadd.f32 %v7490, %v7819
      %v7925 = vadd.f32 %v7491, %v7821
      %v7926 = vadd.f32 %v7492, %v7824
      %v7927 = vadd.f32 %v7493, %v7826
      %v7928 = vadd.f32 %v7494, %v7829
      %v7929 = vadd.f32 %v7495, %v7831
      %v7930 = vadd.f32 %v7496, %v7834
      %v7931 = vadd.f32 %v7497, %v7836
      %v7932 = vadd.f32 %v7498, %v7839
      %v7933 = vadd.f32 %v7499, %v7841
      %v7934 = vadd.f32 %v7500, %v7844
      %v7935 = vadd.f32 %v7501, %v7846
      %v7936 = vadd.f32 %v7502, %v7849
      %v7937 = vadd.f32 %v7503, %v7851
      %v7938 = vadd.f32 %v7504, %v7854
      %v7939 = vadd.f32 %v7505, %v7856
      %v7940 = vadd.f32 %v7506, %v7859
      %v7941 = vadd.f32 %v7507, %v7861
      %v7942 = vadd.f32 %v7508, %v7864
      %v7943 = vadd.f32 %v7509, %v7866
      %v7944 = vadd.f32 %v7510, %v7869
      %v7945 = vadd.f32 %v7511, %v7871
      %v7946 = vadd.f32 %v7512, %v7874
      %v7947 = vadd.f32 %v7513, %v7876
      %v7948 = vadd.f32 %v7514, %v7879
      %v7949 = vadd.f32 %v7515, %v7881
      %v7950 = vadd.f32 %v7516, %v7884
      %v7951 = vadd.f32 %v7517, %v7886
      %v7952 = vld [vmem:[%s5] sm:$0x1]
      %v7954 = vperm.slane %v7952, 0
      %v7956 = vmul.f32 %v7888, %v7954
      %v7957 = vmul.f32 %v7889, %v7954
      %v7958 = vmul.f32 %v7890, %v7954
      %v7959 = vmul.f32 %v7891, %v7954
      %v7960 = vmul.f32 %v7892, %v7954
      %v7961 = vmul.f32 %v7893, %v7954
      %v7962 = vmul.f32 %v7894, %v7954
      %v7963 = vmul.f32 %v7895, %v7954
      %v7964 = vmul.f32 %v7896, %v7954
      %v7965 = vmul.f32 %v7897, %v7954
      %v7966 = vmul.f32 %v7898, %v7954
      %v7967 = vmul.f32 %v7899, %v7954
      %v7968 = vmul.f32 %v7900, %v7954
      %v7969 = vmul.f32 %v7901, %v7954
      %v7970 = vmul.f32 %v7902, %v7954
      %v7971 = vmul.f32 %v7903, %v7954
      %v7972 = vmul.f32 %v7904, %v7954
      %v7973 = vmul.f32 %v7905, %v7954
      %v7974 = vmul.f32 %v7906, %v7954
      %v7975 = vmul.f32 %v7907, %v7954
      %v7976 = vmul.f32 %v7908, %v7954
      %v7977 = vmul.f32 %v7909, %v7954
      %v7978 = vmul.f32 %v7910, %v7954
      %v7979 = vmul.f32 %v7911, %v7954
      %v7980 = vmul.f32 %v7912, %v7954
      %v7981 = vmul.f32 %v7913, %v7954
      %v7982 = vmul.f32 %v7914, %v7954
      %v7983 = vmul.f32 %v7915, %v7954
      %v7984 = vmul.f32 %v7916, %v7954
      %v7985 = vmul.f32 %v7917, %v7954
      %v7986 = vmul.f32 %v7918, %v7954
      %v7987 = vmul.f32 %v7919, %v7954
      %v7988 = vmul.f32 %v7920, %v7954
      %v7989 = vmul.f32 %v7921, %v7954
      %v7990 = vmul.f32 %v7922, %v7954
      %v7991 = vmul.f32 %v7923, %v7954
      %v7992 = vmul.f32 %v7924, %v7954
      %v7993 = vmul.f32 %v7925, %v7954
      %v7994 = vmul.f32 %v7926, %v7954
      %v7995 = vmul.f32 %v7927, %v7954
      %v7996 = vmul.f32 %v7928, %v7954
      %v7997 = vmul.f32 %v7929, %v7954
      %v7998 = vmul.f32 %v7930, %v7954
      %v7999 = vmul.f32 %v7931, %v7954
      %v8000 = vmul.f32 %v7932, %v7954
      %v8001 = vmul.f32 %v7933, %v7954
      %v8002 = vmul.f32 %v7934, %v7954
      %v8003 = vmul.f32 %v7935, %v7954
      %v8004 = vmul.f32 %v7936, %v7954
      %v8005 = vmul.f32 %v7937, %v7954
      %v8006 = vmul.f32 %v7938, %v7954
      %v8007 = vmul.f32 %v7939, %v7954
      %v8008 = vmul.f32 %v7940, %v7954
      %v8009 = vmul.f32 %v7941, %v7954
      %v8010 = vmul.f32 %v7942, %v7954
      %v8011 = vmul.f32 %v7943, %v7954
      %v8012 = vmul.f32 %v7944, %v7954
      %v8013 = vmul.f32 %v7945, %v7954
      %v8014 = vmul.f32 %v7946, %v7954
      %v8015 = vmul.f32 %v7947, %v7954
      %v8016 = vmul.f32 %v7948, %v7954
      %v8017 = vmul.f32 %v7949, %v7954
      %v8018 = vmul.f32 %v7950, %v7954
      %v8019 = vmul.f32 %v7951, %v7954
      %v8020 = vld [vmem:[%s6] sm:$0x1]
      %v8022 = vperm.slane %v8020, 0
      %v8024 = vadd.f32 %v7956, %v8022
      %v8025 = vadd.f32 %v7957, %v8022
      %v8026 = vadd.f32 %v7958, %v8022
      %v8027 = vadd.f32 %v7959, %v8022
      %v8028 = vadd.f32 %v7960, %v8022
      %v8029 = vadd.f32 %v7961, %v8022
      %v8030 = vadd.f32 %v7962, %v8022
      %v8031 = vadd.f32 %v7963, %v8022
      %v8032 = vadd.f32 %v7964, %v8022
      %v8033 = vadd.f32 %v7965, %v8022
      %v8034 = vadd.f32 %v7966, %v8022
      %v8035 = vadd.f32 %v7967, %v8022
      %v8036 = vadd.f32 %v7968, %v8022
      %v8037 = vadd.f32 %v7969, %v8022
      %v8038 = vadd.f32 %v7970, %v8022
      %v8039 = vadd.f32 %v7971, %v8022
      %v8040 = vadd.f32 %v7972, %v8022
      %v8041 = vadd.f32 %v7973, %v8022
      %v8042 = vadd.f32 %v7974, %v8022
      %v8043 = vadd.f32 %v7975, %v8022
      %v8044 = vadd.f32 %v7976, %v8022
      %v8045 = vadd.f32 %v7977, %v8022
      %v8046 = vadd.f32 %v7978, %v8022
      %v8047 = vadd.f32 %v7979, %v8022
      %v8048 = vadd.f32 %v7980, %v8022
      %v8049 = vadd.f32 %v7981, %v8022
      %v8050 = vadd.f32 %v7982, %v8022
      %v8051 = vadd.f32 %v7983, %v8022
      %v8052 = vadd.f32 %v7984, %v8022
      %v8053 = vadd.f32 %v7985, %v8022
      %v8054 = vadd.f32 %v7986, %v8022
      %v8055 = vadd.f32 %v7987, %v8022
      %v8056 = vadd.f32 %v7988, %v8022
      %v8057 = vadd.f32 %v7989, %v8022
      %v8058 = vadd.f32 %v7990, %v8022
      %v8059 = vadd.f32 %v7991, %v8022
      %v8060 = vadd.f32 %v7992, %v8022
      %v8061 = vadd.f32 %v7993, %v8022
      %v8062 = vadd.f32 %v7994, %v8022
      %v8063 = vadd.f32 %v7995, %v8022
      %v8064 = vadd.f32 %v7996, %v8022
      %v8065 = vadd.f32 %v7997, %v8022
      %v8066 = vadd.f32 %v7998, %v8022
      %v8067 = vadd.f32 %v7999, %v8022
      %v8068 = vadd.f32 %v8000, %v8022
      %v8069 = vadd.f32 %v8001, %v8022
      %v8070 = vadd.f32 %v8002, %v8022
      %v8071 = vadd.f32 %v8003, %v8022
      %v8072 = vadd.f32 %v8004, %v8022
      %v8073 = vadd.f32 %v8005, %v8022
      %v8074 = vadd.f32 %v8006, %v8022
      %v8075 = vadd.f32 %v8007, %v8022
      %v8076 = vadd.f32 %v8008, %v8022
      %v8077 = vadd.f32 %v8009, %v8022
      %v8078 = vadd.f32 %v8010, %v8022
      %v8079 = vadd.f32 %v8011, %v8022
      %v8080 = vadd.f32 %v8012, %v8022
      %v8081 = vadd.f32 %v8013, %v8022
      %v8082 = vadd.f32 %v8014, %v8022
      %v8083 = vadd.f32 %v8015, %v8022
      %v8084 = vadd.f32 %v8016, %v8022
      %v8085 = vadd.f32 %v8017, %v8022
      %v8086 = vadd.f32 %v8018, %v8022
      %v8087 = vadd.f32 %v8019, %v8022
      %v8088 = vmax.f32 %v8024, 0.0
      %v8089 = vmax.f32 %v8025, 0.0
      %v8090 = vmax.f32 %v8026, 0.0
      %v8091 = vmax.f32 %v8027, 0.0
      %v8092 = vmax.f32 %v8028, 0.0
      %v8093 = vmax.f32 %v8029, 0.0
      %v8094 = vmax.f32 %v8030, 0.0
      %v8095 = vmax.f32 %v8031, 0.0
      %v8096 = vmax.f32 %v8032, 0.0
      %v8097 = vmax.f32 %v8033, 0.0
      %v8098 = vmax.f32 %v8034, 0.0
      %v8099 = vmax.f32 %v8035, 0.0
      %v8100 = vmax.f32 %v8036, 0.0
      %v8101 = vmax.f32 %v8037, 0.0
      %v8102 = vmax.f32 %v8038, 0.0
      %v8103 = vmax.f32 %v8039, 0.0
      %v8104 = vmax.f32 %v8040, 0.0
      %v8105 = vmax.f32 %v8041, 0.0
      %v8106 = vmax.f32 %v8042, 0.0
      %v8107 = vmax.f32 %v8043, 0.0
      %v8108 = vmax.f32 %v8044, 0.0
      %v8109 = vmax.f32 %v8045, 0.0
      %v8110 = vmax.f32 %v8046, 0.0
      %v8111 = vmax.f32 %v8047, 0.0
      %v8112 = vmax.f32 %v8048, 0.0
      %v8113 = vmax.f32 %v8049, 0.0
      %v8114 = vmax.f32 %v8050, 0.0
      %v8115 = vmax.f32 %v8051, 0.0
      %v8116 = vmax.f32 %v8052, 0.0
      %v8117 = vmax.f32 %v8053, 0.0
      %v8118 = vmax.f32 %v8054, 0.0
      %v8119 = vmax.f32 %v8055, 0.0
      %v8120 = vmax.f32 %v8056, 0.0
      %v8121 = vmax.f32 %v8057, 0.0
      %v8122 = vmax.f32 %v8058, 0.0
      %v8123 = vmax.f32 %v8059, 0.0
      %v8124 = vmax.f32 %v8060, 0.0
      %v8125 = vmax.f32 %v8061, 0.0
      %v8126 = vmax.f32 %v8062, 0.0
      %v8127 = vmax.f32 %v8063, 0.0
      %v8128 = vmax.f32 %v8064, 0.0
      %v8129 = vmax.f32 %v8065, 0.0
      %v8130 = vmax.f32 %v8066, 0.0
      %v8131 = vmax.f32 %v8067, 0.0
      %v8132 = vmax.f32 %v8068, 0.0
      %v8133 = vmax.f32 %v8069, 0.0
      %v8134 = vmax.f32 %v8070, 0.0
      %v8135 = vmax.f32 %v8071, 0.0
      %v8136 = vmax.f32 %v8072, 0.0
      %v8137 = vmax.f32 %v8073, 0.0
      %v8138 = vmax.f32 %v8074, 0.0
      %v8139 = vmax.f32 %v8075, 0.0
      %v8140 = vmax.f32 %v8076, 0.0
      %v8141 = vmax.f32 %v8077, 0.0
      %v8142 = vmax.f32 %v8078, 0.0
      %v8143 = vmax.f32 %v8079, 0.0
      %v8144 = vmax.f32 %v8080, 0.0
      %v8145 = vmax.f32 %v8081, 0.0
      %v8146 = vmax.f32 %v8082, 0.0
      %v8147 = vmax.f32 %v8083, 0.0
      %v8148 = vmax.f32 %v8084, 0.0
      %v8149 = vmax.f32 %v8085, 0.0
      %v8150 = vmax.f32 %v8086, 0.0
      %v8151 = vmax.f32 %v8087, 0.0
      %v8152 = vmax.f32 %v8088, %v8089
      %v8153 = vmax.f32 %v8090, %v8091
      %v8154 = vmax.f32 %v8092, %v8093
      %v8155 = vmax.f32 %v8094, %v8095
      %v8156 = vmax.f32 %v8096, %v8097
      %v8157 = vmax.f32 %v8098, %v8099
      %v8158 = vmax.f32 %v8100, %v8101
      %v8159 = vmax.f32 %v8102, %v8103
      %v8160 = vmax.f32 %v8104, %v8105
      %v8161 = vmax.f32 %v8106, %v8107
      %v8162 = vmax.f32 %v8108, %v8109
      %v8163 = vmax.f32 %v8110, %v8111
      %v8164 = vmax.f32 %v8112, %v8113
      %v8165 = vmax.f32 %v8114, %v8115
      %v8166 = vmax.f32 %v8116, %v8117
      %v8167 = vmax.f32 %v8118, %v8119
      %v8168 = vmax.f32 %v8120, %v8121
      %v8169 = vmax.f32 %v8122, %v8123
      %v8170 = vmax.f32 %v8124, %v8125
      %v8171 = vmax.f32 %v8126, %v8127
      %v8172 = vmax.f32 %v8128, %v8129
      %v8173 = vmax.f32 %v8130, %v8131
      %v8174 = vmax.f32 %v8132, %v8133
      %v8175 = vmax.f32 %v8134, %v8135
      %v8176 = vmax.f32 %v8136, %v8137
      %v8177 = vmax.f32 %v8138, %v8139
      %v8178 = vmax.f32 %v8140, %v8141
      %v8179 = vmax.f32 %v8142, %v8143
      %v8180 = vmax.f32 %v8144, %v8145
      %v8181 = vmax.f32 %v8146, %v8147
      %v8182 = vmax.f32 %v8148, %v8149
      %v8183 = vmax.f32 %v8150, %v8151
      %vm8184 = vcmask 261120
      %8185 = vst.msk [vmem:[#allocation4] sm:$0xff] %vm8184, %v8152
      %8186 = vst.msk [vmem:[#allocation4 + $0x8] sm:$0xff] %vm8184, %v8153
      %8187 = vst.msk [vmem:[#allocation4 + $0x10] sm:$0xff] %vm8184, %v8154
      %8188 = vst.msk [vmem:[#allocation4 + $0x18] sm:$0xff] %vm8184, %v8155
      %8189 = vst.msk [vmem:[#allocation4 + $0x20] sm:$0xff] %vm8184, %v8156
      %8190 = vst.msk [vmem:[#allocation4 + $0x28] sm:$0xff] %vm8184, %v8157
      %8191 = vst.msk [vmem:[#allocation4 + $0x30] sm:$0xff] %vm8184, %v8158
      %8192 = vst.msk [vmem:[#allocation4 + $0x38] sm:$0xff] %vm8184, %v8159
      %8193 = vst.msk [vmem:[#allocation4 + $0x40] sm:$0xff] %vm8184, %v8160
      %8194 = vst.msk [vmem:[#allocation4 + $0x48] sm:$0xff] %vm8184, %v8161
      %8195 = vst.msk [vmem:[#allocation4 + $0x50] sm:$0xff] %vm8184, %v8162
      %8196 = vst.msk [vmem:[#allocation4 + $0x58] sm:$0xff] %vm8184, %v8163
      %8197 = vst.msk [vmem:[#allocation4 + $0x60] sm:$0xff] %vm8184, %v8164
      %8198 = vst.msk [vmem:[#allocation4 + $0x68] sm:$0xff] %vm8184, %v8165
      %8199 = vst.msk [vmem:[#allocation4 + $0x70] sm:$0xff] %vm8184, %v8166
      %8200 = vst.msk [vmem:[#allocation4 + $0x78] sm:$0xff] %vm8184, %v8167
      %8201 = vst.msk [vmem:[#allocation4 + $0x80] sm:$0xff] %vm8184, %v8168
      %8202 = vst.msk [vmem:[#allocation4 + $0x88] sm:$0xff] %vm8184, %v8169
      %8203 = vst.msk [vmem:[#allocation4 + $0x90] sm:$0xff] %vm8184, %v8170
      %8204 = vst.msk [vmem:[#allocation4 + $0x98] sm:$0xff] %vm8184, %v8171
      %8205 = vst.msk [vmem:[#allocation4 + $0xa0] sm:$0xff] %vm8184, %v8172
      %8206 = vst.msk [vmem:[#allocation4 + $0xa8] sm:$0xff] %vm8184, %v8173
      %8207 = vst.msk [vmem:[#allocation4 + $0xb0] sm:$0xff] %vm8184, %v8174
      %8208 = vst.msk [vmem:[#allocation4 + $0xb8] sm:$0xff] %vm8184, %v8175
      %8209 = vst.msk [vmem:[#allocation4 + $0xc0] sm:$0xff] %vm8184, %v8176
      %8210 = vst.msk [vmem:[#allocation4 + $0xc8] sm:$0xff] %vm8184, %v8177
      %8211 = vst.msk [vmem:[#allocation4 + $0xd0] sm:$0xff] %vm8184, %v8178
      %8212 = vst.msk [vmem:[#allocation4 + $0xd8] sm:$0xff] %vm8184, %v8179
      %8213 = vst.msk [vmem:[#allocation4 + $0xe0] sm:$0xff] %vm8184, %v8180
      %8214 = vst.msk [vmem:[#allocation4 + $0xe8] sm:$0xff] %vm8184, %v8181
      %8215 = vst.msk [vmem:[#allocation4 + $0xf0] sm:$0xff] %vm8184, %v8182
      %8216 = vst.msk [vmem:[#allocation4 + $0xf8] sm:$0xff] %vm8184, %v8183
      %vm8217 = vcmask 259072
      %8218 = vst.msk [vmem:[#allocation5] sm:$0x3f] %vm8217, 0.0
      %8219 = vst.msk [vmem:[#allocation5 + $0x30] sm:$0x3f] %vm8217, 0.0
      %8220 = vst.msk [vmem:[#allocation5 + $0x60] sm:$0x3f] %vm8217, 0.0
      %8221 = vst.msk [vmem:[#allocation5 + $0x90] sm:$0x3f] %vm8217, 0.0
      %8222 = vst.msk [vmem:[#allocation5 + $0xc0] sm:$0x3f] %vm8217, 0.0
      %8223 = vst.msk [vmem:[#allocation5 + $0xf0] sm:$0x3f] %vm8217, 0.0
      %8224 = vst.msk [vmem:[#allocation5 + $0x120] sm:$0x3f] %vm8217, 0.0
      %8225 = vst.msk [vmem:[#allocation5 + $0x150] sm:$0x3f] %vm8217, 0.0
      %s8226 = scalar_lea.vmem [#allocation5], 40
      %8227 = vst.msk [vmem:[%s8226] sm:$0x3f] %vm8217, 0.0
      %8228 = vst.msk [vmem:[%s8226 + $0x30] sm:$0x3f] %vm8217, 0.0
      %8229 = vst.msk [vmem:[%s8226 + $0x60] sm:$0x3f] %vm8217, 0.0
      %8230 = vst.msk [vmem:[%s8226 + $0x90] sm:$0x3f] %vm8217, 0.0
      %8231 = vst.msk [vmem:[%s8226 + $0xc0] sm:$0x3f] %vm8217, 0.0
      %8232 = vst.msk [vmem:[%s8226 + $0xf0] sm:$0x3f] %vm8217, 0.0
      %8233 = vst.msk [vmem:[%s8226 + $0x120] sm:$0x3f] %vm8217, 0.0
      %8234 = vst.msk [vmem:[%s8226 + $0x150] sm:$0x3f] %vm8217, 0.0
      %vm8235 = vcmask 253952
      %8236 = vst.msk [vmem:[#allocation5] sm:$0x1] %vm8235, 0.0
      %8237 = vst.msk [vmem:[#allocation5 + $0x8] sm:$0x1] %vm8235, 0.0
      %8238 = vst.msk [vmem:[#allocation5 + $0x10] sm:$0x1] %vm8235, 0.0
      %8239 = vst.msk [vmem:[#allocation5 + $0x18] sm:$0x1] %vm8235, 0.0
      %8240 = vst.msk [vmem:[#allocation5 + $0x20] sm:$0x1] %vm8235, 0.0
      %8241 = vst.msk [vmem:[#allocation5 + $0x28] sm:$0x1] %vm8235, 0.0
      %8242 = vst.msk [vmem:[#allocation5 + $0x30] sm:$0x1] %vm8235, 0.0
      %8243 = vst.msk [vmem:[#allocation5 + $0x38] sm:$0x1] %vm8235, 0.0
      %8244 = vst.msk [vmem:[#allocation5 + $0x40] sm:$0x1] %vm8235, 0.0
      %8245 = vst.msk [vmem:[#allocation5 + $0x48] sm:$0x1] %vm8235, 0.0
      %8246 = vst.msk [vmem:[#allocation5 + $0x50] sm:$0x1] %vm8235, 0.0
      %8247 = vst.msk [vmem:[#allocation5 + $0x58] sm:$0x1] %vm8235, 0.0
      %8248 = vst.msk [vmem:[#allocation5 + $0x60] sm:$0x1] %vm8235, 0.0
      %8249 = vst.msk [vmem:[#allocation5 + $0x68] sm:$0x1] %vm8235, 0.0
      %8250 = vst.msk [vmem:[#allocation5 + $0x70] sm:$0x1] %vm8235, 0.0
      %8251 = vst.msk [vmem:[#allocation5 + $0x78] sm:$0x1] %vm8235, 0.0
      %8252 = vst.msk [vmem:[#allocation5 + $0x80] sm:$0x1] %vm8235, 0.0
      %8253 = vst.msk [vmem:[#allocation5 + $0x88] sm:$0x1] %vm8235, 0.0
      %8254 = vst.msk [vmem:[#allocation5 + $0x90] sm:$0x1] %vm8235, 0.0
      %8255 = vst.msk [vmem:[#allocation5 + $0x98] sm:$0x1] %vm8235, 0.0
      %8256 = vst.msk [vmem:[#allocation5 + $0xa0] sm:$0x1] %vm8235, 0.0
      %8257 = vst.msk [vmem:[#allocation5 + $0xa8] sm:$0x1] %vm8235, 0.0
      %8258 = vst.msk [vmem:[#allocation5 + $0xb0] sm:$0x1] %vm8235, 0.0
      %8259 = vst.msk [vmem:[#allocation5 + $0xb8] sm:$0x1] %vm8235, 0.0
      %8260 = vst.msk [vmem:[#allocation5 + $0xc0] sm:$0x1] %vm8235, 0.0
      %8261 = vst.msk [vmem:[#allocation5 + $0xc8] sm:$0x1] %vm8235, 0.0
      %8262 = vst.msk [vmem:[#allocation5 + $0xd0] sm:$0x1] %vm8235, 0.0
      %8263 = vst.msk [vmem:[#allocation5 + $0xd8] sm:$0x1] %vm8235, 0.0
      %8264 = vst.msk [vmem:[#allocation5 + $0xe0] sm:$0x1] %vm8235, 0.0
      %8265 = vst.msk [vmem:[#allocation5 + $0xe8] sm:$0x1] %vm8235, 0.0
      %8266 = vst.msk [vmem:[#allocation5 + $0xf0] sm:$0x1] %vm8235, 0.0
      %8267 = vst.msk [vmem:[#allocation5 + $0xf8] sm:$0x1] %vm8235, 0.0
      %8268 = vst.msk [vmem:[#allocation5 + $0x100] sm:$0x1] %vm8235, 0.0
      %8269 = vst.msk [vmem:[#allocation5 + $0x108] sm:$0x1] %vm8235, 0.0
      %8270 = vst.msk [vmem:[#allocation5 + $0x110] sm:$0x1] %vm8235, 0.0
      %8271 = vst.msk [vmem:[#allocation5 + $0x118] sm:$0x1] %vm8235, 0.0
      %8272 = vst.msk [vmem:[#allocation5 + $0x120] sm:$0x1] %vm8235, 0.0
      %8273 = vst.msk [vmem:[#allocation5 + $0x128] sm:$0x1] %vm8235, 0.0
      %8274 = vst.msk [vmem:[#allocation5 + $0x130] sm:$0x1] %vm8235, 0.0
      %8275 = vst.msk [vmem:[#allocation5 + $0x138] sm:$0x1] %vm8235, 0.0
      %8276 = vst.msk [vmem:[#allocation5 + $0x140] sm:$0x1] %vm8235, 0.0
      %8277 = vst.msk [vmem:[#allocation5 + $0x148] sm:$0x1] %vm8235, 0.0
      %8278 = vst.msk [vmem:[#allocation5 + $0x150] sm:$0x1] %vm8235, 0.0
      %8279 = vst.msk [vmem:[#allocation5 + $0x158] sm:$0x1] %vm8235, 0.0
      %8280 = vst.msk [vmem:[#allocation5 + $0x160] sm:$0x1] %vm8235, 0.0
      %8281 = vst.msk [vmem:[#allocation5 + $0x168] sm:$0x1] %vm8235, 0.0
      %8282 = vst.msk [vmem:[#allocation5 + $0x170] sm:$0x1] %vm8235, 0.0
      %8283 = vst.msk [vmem:[#allocation5 + $0x178] sm:$0x1] %vm8235, 0.0
      %8284 = vst.msk [vmem:[#allocation5 + $0x5] sm:$0x1] %vm8235, 0.0
      %8285 = vst.msk [vmem:[#allocation5 + $0xd] sm:$0x1] %vm8235, 0.0
      %8286 = vst.msk [vmem:[#allocation5 + $0x15] sm:$0x1] %vm8235, 0.0
      %8287 = vst.msk [vmem:[#allocation5 + $0x1d] sm:$0x1] %vm8235, 0.0
      %8288 = vst.msk [vmem:[#allocation5 + $0x25] sm:$0x1] %vm8235, 0.0
      %8289 = vst.msk [vmem:[#allocation5 + $0x2d] sm:$0x1] %vm8235, 0.0
      %8290 = vst.msk [vmem:[#allocation5 + $0x35] sm:$0x1] %vm8235, 0.0
      %8291 = vst.msk [vmem:[#allocation5 + $0x3d] sm:$0x1] %vm8235, 0.0
      %8292 = vst.msk [vmem:[#allocation5 + $0x45] sm:$0x1] %vm8235, 0.0
      %8293 = vst.msk [vmem:[#allocation5 + $0x4d] sm:$0x1] %vm8235, 0.0
      %8294 = vst.msk [vmem:[#allocation5 + $0x55] sm:$0x1] %vm8235, 0.0
      %8295 = vst.msk [vmem:[#allocation5 + $0x5d] sm:$0x1] %vm8235, 0.0
      %8296 = vst.msk [vmem:[#allocation5 + $0x65] sm:$0x1] %vm8235, 0.0
      %8297 = vst.msk [vmem:[#allocation5 + $0x6d] sm:$0x1] %vm8235, 0.0
      %8298 = vst.msk [vmem:[#allocation5 + $0x75] sm:$0x1] %vm8235, 0.0
      %8299 = vst.msk [vmem:[#allocation5 + $0x7d] sm:$0x1] %vm8235, 0.0
      %8300 = vst.msk [vmem:[#allocation5 + $0x85] sm:$0x1] %vm8235, 0.0
      %8301 = vst.msk [vmem:[#allocation5 + $0x8d] sm:$0x1] %vm8235, 0.0
      %8302 = vst.msk [vmem:[#allocation5 + $0x95] sm:$0x1] %vm8235, 0.0
      %8303 = vst.msk [vmem:[#allocation5 + $0x9d] sm:$0x1] %vm8235, 0.0
      %8304 = vst.msk [vmem:[#allocation5 + $0xa5] sm:$0x1] %vm8235, 0.0
      %8305 = vst.msk [vmem:[#allocation5 + $0xad] sm:$0x1] %vm8235, 0.0
      %8306 = vst.msk [vmem:[#allocation5 + $0xb5] sm:$0x1] %vm8235, 0.0
      %8307 = vst.msk [vmem:[#allocation5 + $0xbd] sm:$0x1] %vm8235, 0.0
      %8308 = vst.msk [vmem:[#allocation5 + $0xc5] sm:$0x1] %vm8235, 0.0
      %8309 = vst.msk [vmem:[#allocation5 + $0xcd] sm:$0x1] %vm8235, 0.0
      %8310 = vst.msk [vmem:[#allocation5 + $0xd5] sm:$0x1] %vm8235, 0.0
      %8311 = vst.msk [vmem:[#allocation5 + $0xdd] sm:$0x1] %vm8235, 0.0
      %8312 = vst.msk [vmem:[#allocation5 + $0xe5] sm:$0x1] %vm8235, 0.0
      %8313 = vst.msk [vmem:[#allocation5 + $0xed] sm:$0x1] %vm8235, 0.0
      %8314 = vst.msk [vmem:[#allocation5 + $0xf5] sm:$0x1] %vm8235, 0.0
      %8315 = vst.msk [vmem:[#allocation5 + $0xfd] sm:$0x1] %vm8235, 0.0
      %8316 = vst.msk [vmem:[#allocation5 + $0x105] sm:$0x1] %vm8235, 0.0
      %8317 = vst.msk [vmem:[#allocation5 + $0x10d] sm:$0x1] %vm8235, 0.0
      %8318 = vst.msk [vmem:[#allocation5 + $0x115] sm:$0x1] %vm8235, 0.0
      %8319 = vst.msk [vmem:[#allocation5 + $0x11d] sm:$0x1] %vm8235, 0.0
      %8320 = vst.msk [vmem:[#allocation5 + $0x125] sm:$0x1] %vm8235, 0.0
      %8321 = vst.msk [vmem:[#allocation5 + $0x12d] sm:$0x1] %vm8235, 0.0
      %8322 = vst.msk [vmem:[#allocation5 + $0x135] sm:$0x1] %vm8235, 0.0
      %8323 = vst.msk [vmem:[#allocation5 + $0x13d] sm:$0x1] %vm8235, 0.0
      %8324 = vst.msk [vmem:[#allocation5 + $0x145] sm:$0x1] %vm8235, 0.0
      %8325 = vst.msk [vmem:[#allocation5 + $0x14d] sm:$0x1] %vm8235, 0.0
      %8326 = vst.msk [vmem:[#allocation5 + $0x155] sm:$0x1] %vm8235, 0.0
      %8327 = vst.msk [vmem:[#allocation5 + $0x15d] sm:$0x1] %vm8235, 0.0
      %8328 = vst.msk [vmem:[#allocation5 + $0x165] sm:$0x1] %vm8235, 0.0
      %8329 = vst.msk [vmem:[#allocation5 + $0x16d] sm:$0x1] %vm8235, 0.0
      %8330 = vst.msk [vmem:[#allocation5 + $0x175] sm:$0x1] %vm8235, 0.0
      %8331 = vst.msk [vmem:[#allocation5 + $0x17d] sm:$0x1] %vm8235, 0.0
      %v8332 = vld [vmem:[#allocation4] ss:$2 sm:$0xf]
      %s8333 = scalar_lea.vmem [#allocation4], 8
      %v8334 = vld [vmem:[%s8333] ss:$2 sm:$0xf]
      %s8335 = scalar_lea.vmem [#allocation4], 16
      %v8336 = vld [vmem:[%s8335] ss:$2 sm:$0xf]
      %s8337 = scalar_lea.vmem [#allocation4], 24
      %v8338 = vld [vmem:[%s8337] ss:$2 sm:$0xf]
      %s8339 = scalar_lea.vmem [#allocation4], 32
      %v8340 = vld [vmem:[%s8339] ss:$2 sm:$0xf]
      %s8341 = scalar_lea.vmem [#allocation4], 40
      %v8342 = vld [vmem:[%s8341] ss:$2 sm:$0xf]
      %s8343 = scalar_lea.vmem [#allocation4], 48
      %v8344 = vld [vmem:[%s8343] ss:$2 sm:$0xf]
      %s8345 = scalar_lea.vmem [#allocation4], 56
      %v8346 = vld [vmem:[%s8345] ss:$2 sm:$0xf]
      %s8347 = scalar_lea.vmem [#allocation4], 64
      %v8348 = vld [vmem:[%s8347] ss:$2 sm:$0xf]
      %s8349 = scalar_lea.vmem [#allocation4], 72
      %v8350 = vld [vmem:[%s8349] ss:$2 sm:$0xf]
      %s8351 = scalar_lea.vmem [#allocation4], 80
      %v8352 = vld [vmem:[%s8351] ss:$2 sm:$0xf]
      %s8353 = scalar_lea.vmem [#allocation4], 88
      %v8354 = vld [vmem:[%s8353] ss:$2 sm:$0xf]
      %s8355 = scalar_lea.vmem [#allocation4], 96
      %v8356 = vld [vmem:[%s8355] ss:$2 sm:$0xf]
      %s8357 = scalar_lea.vmem [#allocation4], 104
      %v8358 = vld [vmem:[%s8357] ss:$2 sm:$0xf]
      %s8359 = scalar_lea.vmem [#allocation4], 112
      %v8360 = vld [vmem:[%s8359] ss:$2 sm:$0xf]
      %s8361 = scalar_lea.vmem [#allocation4], 120
      %v8362 = vld [vmem:[%s8361] ss:$2 sm:$0xf]
      %s8363 = scalar_lea.vmem [#allocation4], 128
      %v8364 = vld [vmem:[%s8363] ss:$2 sm:$0xf]
      %s8365 = scalar_lea.vmem [#allocation4], 136
      %v8366 = vld [vmem:[%s8365] ss:$2 sm:$0xf]
      %s8367 = scalar_lea.vmem [#allocation4], 144
      %v8368 = vld [vmem:[%s8367] ss:$2 sm:$0xf]
      %s8369 = scalar_lea.vmem [#allocation4], 152
      %v8370 = vld [vmem:[%s8369] ss:$2 sm:$0xf]
      %s8371 = scalar_lea.vmem [#allocation4], 160
      %v8372 = vld [vmem:[%s8371] ss:$2 sm:$0xf]
      %s8373 = scalar_lea.vmem [#allocation4], 168
      %v8374 = vld [vmem:[%s8373] ss:$2 sm:$0xf]
      %s8375 = scalar_lea.vmem [#allocation4], 176
      %v8376 = vld [vmem:[%s8375] ss:$2 sm:$0xf]
      %s8377 = scalar_lea.vmem [#allocation4], 184
      %v8378 = vld [vmem:[%s8377] ss:$2 sm:$0xf]
      %s8379 = scalar_lea.vmem [#allocation4], 192
      %v8380 = vld [vmem:[%s8379] ss:$2 sm:$0xf]
      %s8381 = scalar_lea.vmem [#allocation4], 200
      %v8382 = vld [vmem:[%s8381] ss:$2 sm:$0xf]
      %s8383 = scalar_lea.vmem [#allocation4], 208
      %v8384 = vld [vmem:[%s8383] ss:$2 sm:$0xf]
      %s8385 = scalar_lea.vmem [#allocation4], 216
      %v8386 = vld [vmem:[%s8385] ss:$2 sm:$0xf]
      %s8387 = scalar_lea.vmem [#allocation4], 224
      %v8388 = vld [vmem:[%s8387] ss:$2 sm:$0xf]
      %s8389 = scalar_lea.vmem [#allocation4], 232
      %v8390 = vld [vmem:[%s8389] ss:$2 sm:$0xf]
      %s8391 = scalar_lea.vmem [#allocation4], 240
      %v8392 = vld [vmem:[%s8391] ss:$2 sm:$0xf]
      %s8393 = scalar_lea.vmem [#allocation4], 248
      %v8394 = vld [vmem:[%s8393] ss:$2 sm:$0xf]
      %s8395 = scalar_lea.vmem [#allocation4], 1
      %v8396 = vld [vmem:[%s8395] ss:$2 sm:$0xf]
      %s8397 = scalar_lea.vmem [#allocation4], 9
      %v8398 = vld [vmem:[%s8397] ss:$2 sm:$0xf]
      %s8399 = scalar_lea.vmem [#allocation4], 17
      %v8400 = vld [vmem:[%s8399] ss:$2 sm:$0xf]
      %s8401 = scalar_lea.vmem [#allocation4], 25
      %v8402 = vld [vmem:[%s8401] ss:$2 sm:$0xf]
      %s8403 = scalar_lea.vmem [#allocation4], 33
      %v8404 = vld [vmem:[%s8403] ss:$2 sm:$0xf]
      %s8405 = scalar_lea.vmem [#allocation4], 41
      %v8406 = vld [vmem:[%s8405] ss:$2 sm:$0xf]
      %s8407 = scalar_lea.vmem [#allocation4], 49
      %v8408 = vld [vmem:[%s8407] ss:$2 sm:$0xf]
      %s8409 = scalar_lea.vmem [#allocation4], 57
      %v8410 = vld [vmem:[%s8409] ss:$2 sm:$0xf]
      %s8411 = scalar_lea.vmem [#allocation4], 65
      %v8412 = vld [vmem:[%s8411] ss:$2 sm:$0xf]
      %s8413 = scalar_lea.vmem [#allocation4], 73
      %v8414 = vld [vmem:[%s8413] ss:$2 sm:$0xf]
      %s8415 = scalar_lea.vmem [#allocation4], 81
      %v8416 = vld [vmem:[%s8415] ss:$2 sm:$0xf]
      %s8417 = scalar_lea.vmem [#allocation4], 89
      %v8418 = vld [vmem:[%s8417] ss:$2 sm:$0xf]
      %s8419 = scalar_lea.vmem [#allocation4], 97
      %v8420 = vld [vmem:[%s8419] ss:$2 sm:$0xf]
      %s8421 = scalar_lea.vmem [#allocation4], 105
      %v8422 = vld [vmem:[%s8421] ss:$2 sm:$0xf]
      %s8423 = scalar_lea.vmem [#allocation4], 113
      %v8424 = vld [vmem:[%s8423] ss:$2 sm:$0xf]
      %s8425 = scalar_lea.vmem [#allocation4], 121
      %v8426 = vld [vmem:[%s8425] ss:$2 sm:$0xf]
      %s8427 = scalar_lea.vmem [#allocation4], 129
      %v8428 = vld [vmem:[%s8427] ss:$2 sm:$0xf]
      %s8429 = scalar_lea.vmem [#allocation4], 137
      %v8430 = vld [vmem:[%s8429] ss:$2 sm:$0xf]
      %s8431 = scalar_lea.vmem [#allocation4], 145
      %v8432 = vld [vmem:[%s8431] ss:$2 sm:$0xf]
      %s8433 = scalar_lea.vmem [#allocation4], 153
      %v8434 = vld [vmem:[%s8433] ss:$2 sm:$0xf]
      %s8435 = scalar_lea.vmem [#allocation4], 161
      %v8436 = vld [vmem:[%s8435] ss:$2 sm:$0xf]
      %s8437 = scalar_lea.vmem [#allocation4], 169
      %v8438 = vld [vmem:[%s8437] ss:$2 sm:$0xf]
      %s8439 = scalar_lea.vmem [#allocation4], 177
      %v8440 = vld [vmem:[%s8439] ss:$2 sm:$0xf]
      %s8441 = scalar_lea.vmem [#allocation4], 185
      %v8442 = vld [vmem:[%s8441] ss:$2 sm:$0xf]
      %s8443 = scalar_lea.vmem [#allocation4], 193
      %v8444 = vld [vmem:[%s8443] ss:$2 sm:$0xf]
      %s8445 = scalar_lea.vmem [#allocation4], 201
      %v8446 = vld [vmem:[%s8445] ss:$2 sm:$0xf]
      %s8447 = scalar_lea.vmem [#allocation4], 209
      %v8448 = vld [vmem:[%s8447] ss:$2 sm:$0xf]
      %s8449 = scalar_lea.vmem [#allocation4], 217
      %v8450 = vld [vmem:[%s8449] ss:$2 sm:$0xf]
      %s8451 = scalar_lea.vmem [#allocation4], 225
      %v8452 = vld [vmem:[%s8451] ss:$2 sm:$0xf]
      %s8453 = scalar_lea.vmem [#allocation4], 233
      %v8454 = vld [vmem:[%s8453] ss:$2 sm:$0xf]
      %s8455 = scalar_lea.vmem [#allocation4], 241
      %v8456 = vld [vmem:[%s8455] ss:$2 sm:$0xf]
      %s8457 = scalar_lea.vmem [#allocation4], 249
      %v8458 = vld [vmem:[%s8457] ss:$2 sm:$0xf]
      %v8459 = vmax.f32 %v8332, %v8396
      %v8460 = vmax.f32 %v8334, %v8398
      %v8461 = vmax.f32 %v8336, %v8400
      %v8462 = vmax.f32 %v8338, %v8402
      %v8463 = vmax.f32 %v8340, %v8404
      %v8464 = vmax.f32 %v8342, %v8406
      %v8465 = vmax.f32 %v8344, %v8408
      %v8466 = vmax.f32 %v8346, %v8410
      %v8467 = vmax.f32 %v8348, %v8412
      %v8468 = vmax.f32 %v8350, %v8414
      %v8469 = vmax.f32 %v8352, %v8416
      %v8470 = vmax.f32 %v8354, %v8418
      %v8471 = vmax.f32 %v8356, %v8420
      %v8472 = vmax.f32 %v8358, %v8422
      %v8473 = vmax.f32 %v8360, %v8424
      %v8474 = vmax.f32 %v8362, %v8426
      %v8475 = vmax.f32 %v8364, %v8428
      %v8476 = vmax.f32 %v8366, %v8430
      %v8477 = vmax.f32 %v8368, %v8432
      %v8478 = vmax.f32 %v8370, %v8434
      %v8479 = vmax.f32 %v8372, %v8436
      %v8480 = vmax.f32 %v8374, %v8438
      %v8481 = vmax.f32 %v8376, %v8440
      %v8482 = vmax.f32 %v8378, %v8442
      %v8483 = vmax.f32 %v8380, %v8444
      %v8484 = vmax.f32 %v8382, %v8446
      %v8485 = vmax.f32 %v8384, %v8448
      %v8486 = vmax.f32 %v8386, %v8450
      %v8487 = vmax.f32 %v8388, %v8452
      %v8488 = vmax.f32 %v8390, %v8454
      %v8489 = vmax.f32 %v8392, %v8456
      %v8490 = vmax.f32 %v8394, %v8458
      %s8491 = scalar_lea.vmem [#allocation5], 8
      %vm8492 = vcmask 257024
      %8493 = vst.msk [vmem:[%s8491 + $0x1] sm:$0xf] %vm8492, %v8459
      %8494 = vst.msk [vmem:[%s8491 + $0x9] sm:$0xf] %vm8492, %v8460
      %8495 = vst.msk [vmem:[%s8491 + $0x11] sm:$0xf] %vm8492, %v8461
      %8496 = vst.msk [vmem:[%s8491 + $0x19] sm:$0xf] %vm8492, %v8462
      %8497 = vst.msk [vmem:[%s8491 + $0x31] sm:$0xf] %vm8492, %v8463
      %8498 = vst.msk [vmem:[%s8491 + $0x39] sm:$0xf] %vm8492, %v8464
      %8499 = vst.msk [vmem:[%s8491 + $0x41] sm:$0xf] %vm8492, %v8465
      %8500 = vst.msk [vmem:[%s8491 + $0x49] sm:$0xf] %vm8492, %v8466
      %8501 = vst.msk [vmem:[%s8491 + $0x61] sm:$0xf] %vm8492, %v8467
      %8502 = vst.msk [vmem:[%s8491 + $0x69] sm:$0xf] %vm8492, %v8468
      %8503 = vst.msk [vmem:[%s8491 + $0x71] sm:$0xf] %vm8492, %v8469
      %8504 = vst.msk [vmem:[%s8491 + $0x79] sm:$0xf] %vm8492, %v8470
      %8505 = vst.msk [vmem:[%s8491 + $0x91] sm:$0xf] %vm8492, %v8471
      %8506 = vst.msk [vmem:[%s8491 + $0x99] sm:$0xf] %vm8492, %v8472
      %8507 = vst.msk [vmem:[%s8491 + $0xa1] sm:$0xf] %vm8492, %v8473
      %8508 = vst.msk [vmem:[%s8491 + $0xa9] sm:$0xf] %vm8492, %v8474
      %8509 = vst.msk [vmem:[%s8491 + $0xc1] sm:$0xf] %vm8492, %v8475
      %8510 = vst.msk [vmem:[%s8491 + $0xc9] sm:$0xf] %vm8492, %v8476
      %8511 = vst.msk [vmem:[%s8491 + $0xd1] sm:$0xf] %vm8492, %v8477
      %8512 = vst.msk [vmem:[%s8491 + $0xd9] sm:$0xf] %vm8492, %v8478
      %8513 = vst.msk [vmem:[%s8491 + $0xf1] sm:$0xf] %vm8492, %v8479
      %8514 = vst.msk [vmem:[%s8491 + $0xf9] sm:$0xf] %vm8492, %v8480
      %8515 = vst.msk [vmem:[%s8491 + $0x101] sm:$0xf] %vm8492, %v8481
      %8516 = vst.msk [vmem:[%s8491 + $0x109] sm:$0xf] %vm8492, %v8482
      %8517 = vst.msk [vmem:[%s8491 + $0x121] sm:$0xf] %vm8492, %v8483
      %8518 = vst.msk [vmem:[%s8491 + $0x129] sm:$0xf] %vm8492, %v8484
      %8519 = vst.msk [vmem:[%s8491 + $0x131] sm:$0xf] %vm8492, %v8485
      %8520 = vst.msk [vmem:[%s8491 + $0x139] sm:$0xf] %vm8492, %v8486
      %8521 = vst.msk [vmem:[%s8491 + $0x151] sm:$0xf] %vm8492, %v8487
      %8522 = vst.msk [vmem:[%s8491 + $0x159] sm:$0xf] %vm8492, %v8488
      %8523 = vst.msk [vmem:[%s8491 + $0x161] sm:$0xf] %vm8492, %v8489
      %8524 = vst.msk [vmem:[%s8491 + $0x169] sm:$0xf] %vm8492, %v8490
      %v8525 = vld [vmem:[#allocation5] sm:$0xf]
      %v8526 = vld [vmem:[#allocation5 + $0x8] sm:$0xf]
      %v8527 = vld [vmem:[#allocation5 + $0x10] sm:$0xf]
      %v8528 = vld [vmem:[#allocation5 + $0x18] sm:$0xf]
      %v8529 = vld [vmem:[#allocation5 + $0x30] sm:$0xf]
      %v8530 = vld [vmem:[#allocation5 + $0x38] sm:$0xf]
      %v8531 = vld [vmem:[#allocation5 + $0x40] sm:$0xf]
      %v8532 = vld [vmem:[#allocation5 + $0x48] sm:$0xf]
      %v8533 = vld [vmem:[#allocation5 + $0x60] sm:$0xf]
      %v8534 = vld [vmem:[#allocation5 + $0x68] sm:$0xf]
      %v8535 = vld [vmem:[#allocation5 + $0x70] sm:$0xf]
      %v8536 = vld [vmem:[#allocation5 + $0x78] sm:$0xf]
      %v8537 = vld [vmem:[#allocation5 + $0x90] sm:$0xf]
      %v8538 = vld [vmem:[#allocation5 + $0x98] sm:$0xf]
      %v8539 = vld [vmem:[#allocation5 + $0xa0] sm:$0xf]
      %v8540 = vld [vmem:[#allocation5 + $0xa8] sm:$0xf]
      %v8541 = vld [vmem:[#allocation5 + $0xc0] sm:$0xf]
      %v8542 = vld [vmem:[#allocation5 + $0xc8] sm:$0xf]
      %v8543 = vld [vmem:[#allocation5 + $0xd0] sm:$0xf]
      %v8544 = vld [vmem:[#allocation5 + $0xd8] sm:$0xf]
      %v8545 = vld [vmem:[#allocation5 + $0xf0] sm:$0xf]
      %v8546 = vld [vmem:[#allocation5 + $0xf8] sm:$0xf]
      %v8547 = vld [vmem:[#allocation5 + $0x100] sm:$0xf]
      %v8548 = vld [vmem:[#allocation5 + $0x108] sm:$0xf]
      %v8549 = vld [vmem:[#allocation5 + $0x120] sm:$0xf]
      %v8550 = vld [vmem:[#allocation5 + $0x128] sm:$0xf]
      %v8551 = vld [vmem:[#allocation5 + $0x130] sm:$0xf]
      %v8552 = vld [vmem:[#allocation5 + $0x138] sm:$0xf]
      %v8553 = vld [vmem:[#allocation5 + $0x150] sm:$0xf]
      %v8554 = vld [vmem:[#allocation5 + $0x158] sm:$0xf]
      %v8555 = vld [vmem:[#allocation5 + $0x160] sm:$0xf]
      %v8556 = vld [vmem:[#allocation5 + $0x168] sm:$0xf]
      %8589 = vst [vmem:[#allocation1] ss:$2 sm:$0xff] %v8525
      %s8590 = scalar_lea.vmem [#allocation1], 1
      %8591 = vst [vmem:[%s8590] ss:$2 sm:$0xff] %v8526
      %s8592 = scalar_lea.vmem [#allocation1], 16
      %8593 = vst [vmem:[%s8592] ss:$2 sm:$0xff] %v8527
      %s8594 = scalar_lea.vmem [#allocation1], 17
      %8595 = vst [vmem:[%s8594] ss:$2 sm:$0xff] %v8528
      %s8596 = scalar_lea.vmem [#allocation1], 32
      %8597 = vst [vmem:[%s8596] ss:$2 sm:$0xff] %v8529
      %s8598 = scalar_lea.vmem [#allocation1], 33
      %8599 = vst [vmem:[%s8598] ss:$2 sm:$0xff] %v8530
      %s8600 = scalar_lea.vmem [#allocation1], 48
      %8601 = vst [vmem:[%s8600] ss:$2 sm:$0xff] %v8531
      %s8602 = scalar_lea.vmem [#allocation1], 49
      %8603 = vst [vmem:[%s8602] ss:$2 sm:$0xff] %v8532
      %v8604 = vld.sshfl [vmem:[#allocation1] sm:$0xff pattern:$0x75316420]
      %v8605 = vld.sshfl [vmem:[#allocation1 + $0x10] sm:$0xff pattern:$0x75316420]
      %v8606 = vld.sshfl [vmem:[#allocation1 + $0x20] sm:$0xff pattern:$0x75316420]
      %v8607 = vld.sshfl [vmem:[#allocation1 + $0x30] sm:$0xff pattern:$0x75316420]
      %8608 = vst [vmem:[#allocation1] ss:$2 sm:$0xff] %v8533
      %8609 = vst [vmem:[%s8590] ss:$2 sm:$0xff] %v8534
      %8610 = vst [vmem:[%s8592] ss:$2 sm:$0xff] %v8535
      %8611 = vst [vmem:[%s8594] ss:$2 sm:$0xff] %v8536
      %8612 = vst [vmem:[%s8596] ss:$2 sm:$0xff] %v8537
      %8613 = vst [vmem:[%s8598] ss:$2 sm:$0xff] %v8538
      %8614 = vst [vmem:[%s8600] ss:$2 sm:$0xff] %v8539
      %8615 = vst [vmem:[%s8602] ss:$2 sm:$0xff] %v8540
      %v8616 = vld.sshfl [vmem:[#allocation1] sm:$0xff pattern:$0x75316420]
      %v8617 = vld.sshfl [vmem:[#allocation1 + $0x10] sm:$0xff pattern:$0x75316420]
      %v8618 = vld.sshfl [vmem:[#allocation1 + $0x20] sm:$0xff pattern:$0x75316420]
      %v8619 = vld.sshfl [vmem:[#allocation1 + $0x30] sm:$0xff pattern:$0x75316420]
      %8620 = vst [vmem:[#allocation1] ss:$2 sm:$0xff] %v8541
      %8621 = vst [vmem:[%s8590] ss:$2 sm:$0xff] %v8542
      %8622 = vst [vmem:[%s8592] ss:$2 sm:$0xff] %v8543
      %8623 = vst [vmem:[%s8594] ss:$2 sm:$0xff] %v8544
      %8624 = vst [vmem:[%s8596] ss:$2 sm:$0xff] %v8545
      %8625 = vst [vmem:[%s8598] ss:$2 sm:$0xff] %v8546
      %8626 = vst [vmem:[%s8600] ss:$2 sm:$0xff] %v8547
      %8627 = vst [vmem:[%s8602] ss:$2 sm:$0xff] %v8548
      %v8628 = vld.sshfl [vmem:[#allocation1] sm:$0xff pattern:$0x75316420]
      %v8629 = vld.sshfl [vmem:[#allocation1 + $0x10] sm:$0xff pattern:$0x75316420]
      %v8630 = vld.sshfl [vmem:[#allocation1 + $0x20] sm:$0xff pattern:$0x75316420]
      %v8631 = vld.sshfl [vmem:[#allocation1 + $0x30] sm:$0xff pattern:$0x75316420]
      %8632 = vst [vmem:[#allocation1] ss:$2 sm:$0xff] %v8549
      %8633 = vst [vmem:[%s8590] ss:$2 sm:$0xff] %v8550
      %8634 = vst [vmem:[%s8592] ss:$2 sm:$0xff] %v8551
      %8635 = vst [vmem:[%s8594] ss:$2 sm:$0xff] %v8552
      %8636 = vst [vmem:[%s8596] ss:$2 sm:$0xff] %v8553
      %8637 = vst [vmem:[%s8598] ss:$2 sm:$0xff] %v8554
      %8638 = vst [vmem:[%s8600] ss:$2 sm:$0xff] %v8555
      %8639 = vst [vmem:[%s8602] ss:$2 sm:$0xff] %v8556
      %v8640 = vld.sshfl [vmem:[#allocation1] sm:$0xff pattern:$0x75316420]
      %v8641 = vld.sshfl [vmem:[#allocation1 + $0x10] sm:$0xff pattern:$0x75316420]
      %v8642 = vld.sshfl [vmem:[#allocation1 + $0x20] sm:$0xff pattern:$0x75316420]
      %v8643 = vld.sshfl [vmem:[#allocation1 + $0x30] sm:$0xff pattern:$0x75316420]
      %v8660 = vpack.c.bf16 %v8605, %v8604
      %v8661 = vpack.c.bf16 %v8607, %v8606
      %v8662 = vpack.c.bf16 %v8617, %v8616
      %v8663 = vpack.c.bf16 %v8619, %v8618
      %v8664 = vpack.c.bf16 %v8629, %v8628
      %v8665 = vpack.c.bf16 %v8631, %v8630
      %v8666 = vpack.c.bf16 %v8641, %v8640
      %v8667 = vpack.c.bf16 %v8643, %v8642
      %v8668 = vld [vmem:[%s7] sm:$0xf]
      %v8669 = vld [vmem:[%s7 + $0x4] sm:$0xf]
      %v8670 = vld [vmem:[%s7 + $0x8] sm:$0xf]
      %v8671 = vld [vmem:[%s7 + $0xc] sm:$0xf]
      %v8672 = vld [vmem:[#allocation5 + $0x1] sm:$0xf]
      %v8673 = vld [vmem:[#allocation5 + $0x9] sm:$0xf]
      %v8674 = vld [vmem:[#allocation5 + $0x11] sm:$0xf]
      %v8675 = vld [vmem:[#allocation5 + $0x19] sm:$0xf]
      %v8676 = vld [vmem:[#allocation5 + $0x31] sm:$0xf]
      %v8677 = vld [vmem:[#allocation5 + $0x39] sm:$0xf]
      %v8678 = vld [vmem:[#allocation5 + $0x41] sm:$0xf]
      %v8679 = vld [vmem:[#allocation5 + $0x49] sm:$0xf]
      %v8680 = vld [vmem:[#allocation5 + $0x61] sm:$0xf]
      %v8681 = vld [vmem:[#allocation5 + $0x69] sm:$0xf]
      %v8682 = vld [vmem:[#allocation5 + $0x71] sm:$0xf]
      %v8683 = vld [vmem:[#allocation5 + $0x79] sm:$0xf]
      %v8684 = vld [vmem:[#allocation5 + $0x91] sm:$0xf]
      %v8685 = vld [vmem:[#allocation5 + $0x99] sm:$0xf]
      %v8686 = vld [vmem:[#allocation5 + $0xa1] sm:$0xf]
      %v8687 = vld [vmem:[#allocation5 + $0xa9] sm:$0xf]
      %v8688 = vld [vmem:[#allocation5 + $0xc1] sm:$0xf]
      %v8689 = vld [vmem:[#allocation5 + $0xc9] sm:$0xf]
      %v8690 = vld [vmem:[#allocation5 + $0xd1] sm:$0xf]
      %v8691 = vld [vmem:[#allocation5 + $0xd9] sm:$0xf]
      %v8692 = vld [vmem:[#allocation5 + $0xf1] sm:$0xf]
      %v8693 = vld [vmem:[#allocation5 + $0xf9] sm:$0xf]
      %v8694 = vld [vmem:[#allocation5 + $0x101] sm:$0xf]
      %v8695 = vld [vmem:[#allocation5 + $0x109] sm:$0xf]
      %v8696 = vld [vmem:[#allocation5 + $0x121] sm:$0xf]
      %v8697 = vld [vmem:[#allocation5 + $0x129] sm:$0xf]
      %v8698 = vld [vmem:[#allocation5 + $0x131] sm:$0xf]
      %v8699 = vld [vmem:[#allocation5 + $0x139] sm:$0xf]
      %v8700 = vld [vmem:[#allocation5 + $0x151] sm:$0xf]
      %v8701 = vld [vmem:[#allocation5 + $0x159] sm:$0xf]
      %v8702 = vld [vmem:[#allocation5 + $0x161] sm:$0xf]
      %v8703 = vld [vmem:[#allocation5 + $0x169] sm:$0xf]
      %8736 = vst [vmem:[#allocation1] ss:$2 sm:$0xff] %v8672
      %s8737 = scalar_lea.vmem [#allocation1], 1
      %8738 = vst [vmem:[%s8737] ss:$2 sm:$0xff] %v8673
      %s8739 = scalar_lea.vmem [#allocation1], 16
      %8740 = vst [vmem:[%s8739] ss:$2 sm:$0xff] %v8674
      %s8741 = scalar_lea.vmem [#allocation1], 17
      %8742 = vst [vmem:[%s8741] ss:$2 sm:$0xff] %v8675
      %s8743 = scalar_lea.vmem [#allocation1], 32
      %8744 = vst [vmem:[%s8743] ss:$2 sm:$0xff] %v8676
      %s8745 = scalar_lea.vmem [#allocation1], 33
      %8746 = vst [vmem:[%s8745] ss:$2 sm:$0xff] %v8677
      %s8747 = scalar_lea.vmem [#allocation1], 48
      %8748 = vst [vmem:[%s8747] ss:$2 sm:$0xff] %v8678
      %s8749 = scalar_lea.vmem [#allocation1], 49
      %8750 = vst [vmem:[%s8749] ss:$2 sm:$0xff] %v8679
      %v8751 = vld.sshfl [vmem:[#allocation1] sm:$0xff pattern:$0x75316420]
      %v8752 = vld.sshfl [vmem:[#allocation1 + $0x10] sm:$0xff pattern:$0x75316420]
      %v8753 = vld.sshfl [vmem:[#allocation1 + $0x20] sm:$0xff pattern:$0x75316420]
      %v8754 = vld.sshfl [vmem:[#allocation1 + $0x30] sm:$0xff pattern:$0x75316420]
      %8755 = vst [vmem:[#allocation1] ss:$2 sm:$0xff] %v8680
      %8756 = vst [vmem:[%s8737] ss:$2 sm:$0xff] %v8681
      %8757 = vst [vmem:[%s8739] ss:$2 sm:$0xff] %v8682
      %8758 = vst [vmem:[%s8741] ss:$2 sm:$0xff] %v8683
      %8759 = vst [vmem:[%s8743] ss:$2 sm:$0xff] %v8684
      %8760 = vst [vmem:[%s8745] ss:$2 sm:$0xff] %v8685
      %8761 = vst [vmem:[%s8747] ss:$2 sm:$0xff] %v8686
      %8762 = vst [vmem:[%s8749] ss:$2 sm:$0xff] %v8687
      %v8763 = vld.sshfl [vmem:[#allocation1] sm:$0xff pattern:$0x75316420]
      %v8764 = vld.sshfl [vmem:[#allocation1 + $0x10] sm:$0xff pattern:$0x75316420]
      %v8765 = vld.sshfl [vmem:[#allocation1 + $0x20] sm:$0xff pattern:$0x75316420]
      %v8766 = vld.sshfl [vmem:[#allocation1 + $0x30] sm:$0xff pattern:$0x75316420]
      %8767 = vst [vmem:[#allocation1] ss:$2 sm:$0xff] %v8688
      %8768 = vst [vmem:[%s8737] ss:$2 sm:$0xff] %v8689
      %8769 = vst [vmem:[%s8739] ss:$2 sm:$0xff] %v8690
      %8770 = vst [vmem:[%s8741] ss:$2 sm:$0xff] %v8691
      %8771 = vst [vmem:[%s8743] ss:$2 sm:$0xff] %v8692
      %8772 = vst [vmem:[%s8745] ss:$2 sm:$0xff] %v8693
      %8773 = vst [vmem:[%s8747] ss:$2 sm:$0xff] %v8694
      %8774 = vst [vmem:[%s8749] ss:$2 sm:$0xff] %v8695
      %v8775 = vld.sshfl [vmem:[#allocation1] sm:$0xff pattern:$0x75316420]
      %v8776 = vld.sshfl [vmem:[#allocation1 + $0x10] sm:$0xff pattern:$0x75316420]
      %v8777 = vld.sshfl [vmem:[#allocation1 + $0x20] sm:$0xff pattern:$0x75316420]
      %v8778 = vld.sshfl [vmem:[#allocation1 + $0x30] sm:$0xff pattern:$0x75316420]
      %8779 = vst [vmem:[#allocation1] ss:$2 sm:$0xff] %v8696
      %8780 = vst [vmem:[%s8737] ss:$2 sm:$0xff] %v8697
      %8781 = vst [vmem:[%s8739] ss:$2 sm:$0xff] %v8698
      %8782 = vst [vmem:[%s8741] ss:$2 sm:$0xff] %v8699
      %8783 = vst [vmem:[%s8743] ss:$2 sm:$0xff] %v8700
      %8784 = vst [vmem:[%s8745] ss:$2 sm:$0xff] %v8701
      %8785 = vst [vmem:[%s8747] ss:$2 sm:$0xff] %v8702
      %8786 = vst [vmem:[%s8749] ss:$2 sm:$0xff] %v8703
      %v8787 = vld.sshfl [vmem:[#allocation1] sm:$0xff pattern:$0x75316420]
      %v8788 = vld.sshfl [vmem:[#allocation1 + $0x10] sm:$0xff pattern:$0x75316420]
      %v8789 = vld.sshfl [vmem:[#allocation1 + $0x20] sm:$0xff pattern:$0x75316420]
      %v8790 = vld.sshfl [vmem:[#allocation1 + $0x30] sm:$0xff pattern:$0x75316420]
      %v8807 = vpack.c.bf16 %v8752, %v8751
      %v8808 = vpack.c.bf16 %v8754, %v8753
      %v8809 = vpack.c.bf16 %v8764, %v8763
      %v8810 = vpack.c.bf16 %v8766, %v8765
      %v8811 = vpack.c.bf16 %v8776, %v8775
      %v8812 = vpack.c.bf16 %v8778, %v8777
      %v8813 = vpack.c.bf16 %v8788, %v8787
      %v8814 = vpack.c.bf16 %v8790, %v8789
      %s8815 = scalar_lea.vmem %s7, 16
      %v8816 = vld [vmem:[%s8815] sm:$0xf]
      %v8817 = vld [vmem:[%s8815 + $0x4] sm:$0xf]
      %v8818 = vld [vmem:[%s8815 + $0x8] sm:$0xf]
      %v8819 = vld [vmem:[%s8815 + $0xc] sm:$0xf]
      %v8824 = vunpack.c.l.b16 %v8816
      %v8825 = vunpack.c.l.b16 %v8817
      %v8826 = vunpack.c.l.b16 %v8818
      %v8827 = vunpack.c.l.b16 %v8819
      %v8828 = vpack.c.b16 %v8825, %v8824
      %v8829 = vpack.c.b16 %v8827, %v8826
      %v8833 = vsel %vm8184, %v8807, 0
      %v8836 = vsel %vm8184, %v8808, 0
      %v8839 = vsel %vm8184, %v8809, 0
      %v8842 = vsel %vm8184, %v8810, 0
      %v8845 = vsel %vm8184, %v8811, 0
      %v8848 = vsel %vm8184, %v8812, 0
      %v8851 = vsel %vm8184, %v8813, 0
      %v8854 = vsel %vm8184, %v8814, 0
      %8856 = vmatpush.bf16.msra.mxu0 0
      %8857 = vmatpush.bf16.msra.mxu0 0
      %8858 = vmatpush.bf16.msra.mxu0 0
      %8859 = vmatpush.bf16.msra.mxu0 0
      %8860 = vmatpush.bf16.msra.mxu0 0
      %8861 = vmatpush.bf16.msra.mxu0 0
      %8862 = vmatpush.bf16.msra.mxu0 %v8829
      %8863 = vmatpush.bf16.msra.mxu0 %v8828
      %8864 = vmatmul.bf16.gmra.mxu0 %v8833
      %v8865 = vpop.f32.mrf.mxu0
      %v8866 = vadd.f32 0.0, %v8865
      %v8867 = vpop.f32.mrf.mxu0
      %v8868 = vadd.f32 0.0, %v8867
      %8869 = vmatmul.bf16.gmra.mxu0 %v8836
      %v8870 = vpop.f32.mrf.mxu0
      %v8871 = vadd.f32 0.0, %v8870
      %v8872 = vpop.f32.mrf.mxu0
      %v8873 = vadd.f32 0.0, %v8872
      %8874 = vmatmul.bf16.gmra.mxu0 %v8839
      %v8875 = vpop.f32.mrf.mxu0
      %v8876 = vadd.f32 0.0, %v8875
      %v8877 = vpop.f32.mrf.mxu0
      %v8878 = vadd.f32 0.0, %v8877
      %8879 = vmatmul.bf16.gmra.mxu0 %v8842
      %v8880 = vpop.f32.mrf.mxu0
      %v8881 = vadd.f32 0.0, %v8880
      %v8882 = vpop.f32.mrf.mxu0
      %v8883 = vadd.f32 0.0, %v8882
      %8884 = vmatmul.bf16.gmra.mxu0 %v8845
      %v8885 = vpop.f32.mrf.mxu0
      %v8886 = vadd.f32 0.0, %v8885
      %v8887 = vpop.f32.mrf.mxu0
      %v8888 = vadd.f32 0.0, %v8887
      %8889 = vmatmul.bf16.gmra.mxu0 %v8848
      %v8890 = vpop.f32.mrf.mxu0
      %v8891 = vadd.f32 0.0, %v8890
      %v8892 = vpop.f32.mrf.mxu0
      %v8893 = vadd.f32 0.0, %v8892
      %8894 = vmatmul.bf16.gmra.mxu0 %v8851
      %v8895 = vpop.f32.mrf.mxu0
      %v8896 = vadd.f32 0.0, %v8895
      %v8897 = vpop.f32.mrf.mxu0
      %v8898 = vadd.f32 0.0, %v8897
      %8899 = vmatmul.bf16.gmra.mxu0 %v8854
      %v8900 = vpop.f32.mrf.mxu0
      %v8901 = vadd.f32 0.0, %v8900
      %v8902 = vpop.f32.mrf.mxu0
      %v8903 = vadd.f32 0.0, %v8902
      %8904 = vdwg.mxu0
      %v8909 = vunpack.c.l.b16 %v8668
      %v8910 = vunpack.c.l.b16 %v8669
      %v8911 = vunpack.c.l.b16 %v8670
      %v8912 = vunpack.c.l.b16 %v8671
      %v8913 = vpack.c.b16 %v8910, %v8909
      %v8914 = vpack.c.b16 %v8912, %v8911
      %v8918 = vsel %vm8184, %v8660, 0
      %v8921 = vsel %vm8184, %v8661, 0
      %v8924 = vsel %vm8184, %v8662, 0
      %v8927 = vsel %vm8184, %v8663, 0
      %v8930 = vsel %vm8184, %v8664, 0
      %v8933 = vsel %vm8184, %v8665, 0
      %v8936 = vsel %vm8184, %v8666, 0
      %v8939 = vsel %vm8184, %v8667, 0
      %8941 = vmatpush.bf16.msra.mxu0 0
      %8942 = vmatpush.bf16.msra.mxu0 0
      %8943 = vmatpush.bf16.msra.mxu0 0
      %8944 = vmatpush.bf16.msra.mxu0 0
      %8945 = vmatpush.bf16.msra.mxu0 0
      %8946 = vmatpush.bf16.msra.mxu0 0
      %8947 = vmatpush.bf16.msra.mxu0 %v8914
      %8948 = vmatpush.bf16.msra.mxu0 %v8913
      %8949 = vmatmul.bf16.gmra.mxu0 %v8918
      %v8950 = vpop.f32.mrf.mxu0
      %v8951 = vadd.f32 %v8866, %v8950
      %v8952 = vpop.f32.mrf.mxu0
      %v8953 = vadd.f32 %v8868, %v8952
      %8954 = vmatmul.bf16.gmra.mxu0 %v8921
      %v8955 = vpop.f32.mrf.mxu0
      %v8956 = vadd.f32 %v8871, %v8955
      %v8957 = vpop.f32.mrf.mxu0
      %v8958 = vadd.f32 %v8873, %v8957
      %8959 = vmatmul.bf16.gmra.mxu0 %v8924
      %v8960 = vpop.f32.mrf.mxu0
      %v8961 = vadd.f32 %v8876, %v8960
      %v8962 = vpop.f32.mrf.mxu0
      %v8963 = vadd.f32 %v8878, %v8962
      %8964 = vmatmul.bf16.gmra.mxu0 %v8927
      %v8965 = vpop.f32.mrf.mxu0
      %v8966 = vadd.f32 %v8881, %v8965
      %v8967 = vpop.f32.mrf.mxu0
      %v8968 = vadd.f32 %v8883, %v8967
      %8969 = vmatmul.bf16.gmra.mxu0 %v8930
      %v8970 = vpop.f32.mrf.mxu0
      %v8971 = vadd.f32 %v8886, %v8970
      %v8972 = vpop.f32.mrf.mxu0
      %v8973 = vadd.f32 %v8888, %v8972
      %8974 = vmatmul.bf16.gmra.mxu0 %v8933
      %v8975 = vpop.f32.mrf.mxu0
      %v8976 = vadd.f32 %v8891, %v8975
      %v8977 = vpop.f32.mrf.mxu0
      %v8978 = vadd.f32 %v8893, %v8977
      %8979 = vmatmul.bf16.gmra.mxu0 %v8936
      %v8980 = vpop.f32.mrf.mxu0
      %v8981 = vadd.f32 %v8896, %v8980
      %v8982 = vpop.f32.mrf.mxu0
      %v8983 = vadd.f32 %v8898, %v8982
      %8984 = vmatmul.bf16.gmra.mxu0 %v8939
      %v8985 = vpop.f32.mrf.mxu0
      %v8986 = vadd.f32 %v8901, %v8985
      %v8987 = vpop.f32.mrf.mxu0
      %v8988 = vadd.f32 %v8903, %v8987
      %8989 = vdwg.mxu0
      %v8990 = vld [vmem:[#allocation5 + $0x2] sm:$0xf]
      %v8991 = vld [vmem:[#allocation5 + $0xa] sm:$0xf]
      %v8992 = vld [vmem:[#allocation5 + $0x12] sm:$0xf]
      %v8993 = vld [vmem:[#allocation5 + $0x1a] sm:$0xf]
      %v8994 = vld [vmem:[#allocation5 + $0x32] sm:$0xf]
      %v8995 = vld [vmem:[#allocation5 + $0x3a] sm:$0xf]
      %v8996 = vld [vmem:[#allocation5 + $0x42] sm:$0xf]
      %v8997 = vld [vmem:[#allocation5 + $0x4a] sm:$0xf]
      %v8998 = vld [vmem:[#allocation5 + $0x62] sm:$0xf]
      %v8999 = vld [vmem:[#allocation5 + $0x6a] sm:$0xf]
      %v9000 = vld [vmem:[#allocation5 + $0x72] sm:$0xf]
      %v9001 = vld [vmem:[#allocation5 + $0x7a] sm:$0xf]
      %v9002 = vld [vmem:[#allocation5 + $0x92] sm:$0xf]
      %v9003 = vld [vmem:[#allocation5 + $0x9a] sm:$0xf]
      %v9004 = vld [vmem:[#allocation5 + $0xa2] sm:$0xf]
      %v9005 = vld [vmem:[#allocation5 + $0xaa] sm:$0xf]
      %v9006 = vld [vmem:[#allocation5 + $0xc2] sm:$0xf]
      %v9007 = vld [vmem:[#allocation5 + $0xca] sm:$0xf]
      %v9008 = vld [vmem:[#allocation5 + $0xd2] sm:$0xf]
      %v9009 = vld [vmem:[#allocation5 + $0xda] sm:$0xf]
      %v9010 = vld [vmem:[#allocation5 + $0xf2] sm:$0xf]
      %v9011 = vld [vmem:[#allocation5 + $0xfa] sm:$0xf]
      %v9012 = vld [vmem:[#allocation5 + $0x102] sm:$0xf]
      %v9013 = vld [vmem:[#allocation5 + $0x10a] sm:$0xf]
      %v9014 = vld [vmem:[#allocation5 + $0x122] sm:$0xf]
      %v9015 = vld [vmem:[#allocation5 + $0x12a] sm:$0xf]
      %v9016 = vld [vmem:[#allocation5 + $0x132] sm:$0xf]
      %v9017 = vld [vmem:[#allocation5 + $0x13a] sm:$0xf]
      %v9018 = vld [vmem:[#allocation5 + $0x152] sm:$0xf]
      %v9019 = vld [vmem:[#allocation5 + $0x15a] sm:$0xf]
      %v9020 = vld [vmem:[#allocation5 + $0x162] sm:$0xf]
      %v9021 = vld [vmem:[#allocation5 + $0x16a] sm:$0xf]
      %9054 = vst [vmem:[#allocation1] ss:$2 sm:$0xff] %v8990
      %s9055 = scalar_lea.vmem [#allocation1], 1
      %9056 = vst [vmem:[%s9055] ss:$2 sm:$0xff] %v8991
      %s9057 = scalar_lea.vmem [#allocation1], 16
      %9058 = vst [vmem:[%s9057] ss:$2 sm:$0xff] %v8992
      %s9059 = scalar_lea.vmem [#allocation1], 17
      %9060 = vst [vmem:[%s9059] ss:$2 sm:$0xff] %v8993
      %s9061 = scalar_lea.vmem [#allocation1], 32
      %9062 = vst [vmem:[%s9061] ss:$2 sm:$0xff] %v8994
      %s9063 = scalar_lea.vmem [#allocation1], 33
      %9064 = vst [vmem:[%s9063] ss:$2 sm:$0xff] %v8995
      %s9065 = scalar_lea.vmem [#allocation1], 48
      %9066 = vst [vmem:[%s9065] ss:$2 sm:$0xff] %v8996
      %s9067 = scalar_lea.vmem [#allocation1], 49
      %9068 = vst [vmem:[%s9067] ss:$2 sm:$0xff] %v8997
      %v9069 = vld.sshfl [vmem:[#allocation1] sm:$0xff pattern:$0x75316420]
      %v9070 = vld.sshfl [vmem:[#allocation1 + $0x10] sm:$0xff pattern:$0x75316420]
      %v9071 = vld.sshfl [vmem:[#allocation1 + $0x20] sm:$0xff pattern:$0x75316420]
      %v9072 = vld.sshfl [vmem:[#allocation1 + $0x30] sm:$0xff pattern:$0x75316420]
      %9073 = vst [vmem:[#allocation1] ss:$2 sm:$0xff] %v8998
      %9074 = vst [vmem:[%s9055] ss:$2 sm:$0xff] %v8999
      %9075 = vst [vmem:[%s9057] ss:$2 sm:$0xff] %v9000
      %9076 = vst [vmem:[%s9059] ss:$2 sm:$0xff] %v9001
      %9077 = vst [vmem:[%s9061] ss:$2 sm:$0xff] %v9002
      %9078 = vst [vmem:[%s9063] ss:$2 sm:$0xff] %v9003
      %9079 = vst [vmem:[%s9065] ss:$2 sm:$0xff] %v9004
      %9080 = vst [vmem:[%s9067] ss:$2 sm:$0xff] %v9005
      %v9081 = vld.sshfl [vmem:[#allocation1] sm:$0xff pattern:$0x75316420]
      %v9082 = vld.sshfl [vmem:[#allocation1 + $0x10] sm:$0xff pattern:$0x75316420]
      %v9083 = vld.sshfl [vmem:[#allocation1 + $0x20] sm:$0xff pattern:$0x75316420]
      %v9084 = vld.sshfl [vmem:[#allocation1 + $0x30] sm:$0xff pattern:$0x75316420]
      %9085 = vst [vmem:[#allocation1] ss:$2 sm:$0xff] %v9006
      %9086 = vst [vmem:[%s9055] ss:$2 sm:$0xff] %v9007
      %9087 = vst [vmem:[%s9057] ss:$2 sm:$0xff] %v9008
      %9088 = vst [vmem:[%s9059] ss:$2 sm:$0xff] %v9009
      %9089 = vst [vmem:[%s9061] ss:$2 sm:$0xff] %v9010
      %9090 = vst [vmem:[%s9063] ss:$2 sm:$0xff] %v9011
      %9091 = vst [vmem:[%s9065] ss:$2 sm:$0xff] %v9012
      %9092 = vst [vmem:[%s9067] ss:$2 sm:$0xff] %v9013
      %v9093 = vld.sshfl [vmem:[#allocation1] sm:$0xff pattern:$0x75316420]
      %v9094 = vld.sshfl [vmem:[#allocation1 + $0x10] sm:$0xff pattern:$0x75316420]
      %v9095 = vld.sshfl [vmem:[#allocation1 + $0x20] sm:$0xff pattern:$0x75316420]
      %v9096 = vld.sshfl [vmem:[#allocation1 + $0x30] sm:$0xff pattern:$0x75316420]
      %9097 = vst [vmem:[#allocation1] ss:$2 sm:$0xff] %v9014
      %9098 = vst [vmem:[%s9055] ss:$2 sm:$0xff] %v9015
      %9099 = vst [vmem:[%s9057] ss:$2 sm:$0xff] %v9016
      %9100 = vst [vmem:[%s9059] ss:$2 sm:$0xff] %v9017
      %9101 = vst [vmem:[%s9061] ss:$2 sm:$0xff] %v9018
      %9102 = vst [vmem:[%s9063] ss:$2 sm:$0xff] %v9019
      %9103 = vst [vmem:[%s9065] ss:$2 sm:$0xff] %v9020
      %9104 = vst [vmem:[%s9067] ss:$2 sm:$0xff] %v9021
      %v9105 = vld.sshfl [vmem:[#allocation1] sm:$0xff pattern:$0x75316420]
      %v9106 = vld.sshfl [vmem:[#allocation1 + $0x10] sm:$0xff pattern:$0x75316420]
      %v9107 = vld.sshfl [vmem:[#allocation1 + $0x20] sm:$0xff pattern:$0x75316420]
      %v9108 = vld.sshfl [vmem:[#allocation1 + $0x30] sm:$0xff pattern:$0x75316420]
      %v9125 = vpack.c.bf16 %v9070, %v9069
      %v9126 = vpack.c.bf16 %v9072, %v9071
      %v9127 = vpack.c.bf16 %v9082, %v9081
      %v9128 = vpack.c.bf16 %v9084, %v9083
      %v9129 = vpack.c.bf16 %v9094, %v9093
      %v9130 = vpack.c.bf16 %v9096, %v9095
      %v9131 = vpack.c.bf16 %v9106, %v9105
      %v9132 = vpack.c.bf16 %v9108, %v9107
      %s9133 = scalar_lea.vmem %s7, 32
      %v9134 = vld [vmem:[%s9133] sm:$0xf]
      %v9135 = vld [vmem:[%s9133 + $0x4] sm:$0xf]
      %v9136 = vld [vmem:[%s9133 + $0x8] sm:$0xf]
      %v9137 = vld [vmem:[%s9133 + $0xc] sm:$0xf]
      %v9142 = vunpack.c.l.b16 %v9134
      %v9143 = vunpack.c.l.b16 %v9135
      %v9144 = vunpack.c.l.b16 %v9136
      %v9145 = vunpack.c.l.b16 %v9137
      %v9146 = vpack.c.b16 %v9143, %v9142
      %v9147 = vpack.c.b16 %v9145, %v9144
      %v9151 = vsel %vm8184, %v9125, 0
      %v9154 = vsel %vm8184, %v9126, 0
      %v9157 = vsel %vm8184, %v9127, 0
      %v9160 = vsel %vm8184, %v9128, 0
      %v9163 = vsel %vm8184, %v9129, 0
      %v9166 = vsel %vm8184, %v9130, 0
      %v9169 = vsel %vm8184, %v9131, 0
      %v9172 = vsel %vm8184, %v9132, 0
      %9174 = vmatpush.bf16.msra.mxu0 0
      %9175 = vmatpush.bf16.msra.mxu0 0
      %9176 = vmatpush.bf16.msra.mxu0 0
      %9177 = vmatpush.bf16.msra.mxu0 0
      %9178 = vmatpush.bf16.msra.mxu0 0
      %9179 = vmatpush.bf16.msra.mxu0 0
      %9180 = vmatpush.bf16.msra.mxu0 %v9147
      %9181 = vmatpush.bf16.msra.mxu0 %v9146
      %9182 = vmatmul.bf16.gmra.mxu0 %v9151
      %v9183 = vpop.f32.mrf.mxu0
      %v9184 = vadd.f32 0.0, %v9183
      %v9185 = vpop.f32.mrf.mxu0
      %v9186 = vadd.f32 0.0, %v9185
      %9187 = vmatmul.bf16.gmra.mxu0 %v9154
      %v9188 = vpop.f32.mrf.mxu0
      %v9189 = vadd.f32 0.0, %v9188
      %v9190 = vpop.f32.mrf.mxu0
      %v9191 = vadd.f32 0.0, %v9190
      %9192 = vmatmul.bf16.gmra.mxu0 %v9157
      %v9193 = vpop.f32.mrf.mxu0
      %v9194 = vadd.f32 0.0, %v9193
      %v9195 = vpop.f32.mrf.mxu0
      %v9196 = vadd.f32 0.0, %v9195
      %9197 = vmatmul.bf16.gmra.mxu0 %v9160
      %v9198 = vpop.f32.mrf.mxu0
      %v9199 = vadd.f32 0.0, %v9198
      %v9200 = vpop.f32.mrf.mxu0
      %v9201 = vadd.f32 0.0, %v9200
      %9202 = vmatmul.bf16.gmra.mxu0 %v9163
      %v9203 = vpop.f32.mrf.mxu0
      %v9204 = vadd.f32 0.0, %v9203
      %v9205 = vpop.f32.mrf.mxu0
      %v9206 = vadd.f32 0.0, %v9205
      %9207 = vmatmul.bf16.gmra.mxu0 %v9166
      %v9208 = vpop.f32.mrf.mxu0
      %v9209 = vadd.f32 0.0, %v9208
      %v9210 = vpop.f32.mrf.mxu0
      %v9211 = vadd.f32 0.0, %v9210
      %9212 = vmatmul.bf16.gmra.mxu0 %v9169
      %v9213 = vpop.f32.mrf.mxu0
      %v9214 = vadd.f32 0.0, %v9213
      %v9215 = vpop.f32.mrf.mxu0
      %v9216 = vadd.f32 0.0, %v9215
      %9217 = vmatmul.bf16.gmra.mxu0 %v9172
      %v9218 = vpop.f32.mrf.mxu0
      %v9219 = vadd.f32 0.0, %v9218
      %v9220 = vpop.f32.mrf.mxu0
      %v9221 = vadd.f32 0.0, %v9220
      %9222 = vdwg.mxu0
      %v9223 = vadd.f32 %v8951, %v9184
      %v9224 = vadd.f32 %v8953, %v9186
      %v9225 = vadd.f32 %v8956, %v9189
      %v9226 = vadd.f32 %v8958, %v9191
      %v9227 = vadd.f32 %v8961, %v9194
      %v9228 = vadd.f32 %v8963, %v9196
      %v9229 = vadd.f32 %v8966, %v9199
      %v9230 = vadd.f32 %v8968, %v9201
      %v9231 = vadd.f32 %v8971, %v9204
      %v9232 = vadd.f32 %v8973, %v9206
      %v9233 = vadd.f32 %v8976, %v9209
      %v9234 = vadd.f32 %v8978, %v9211
      %v9235 = vadd.f32 %v8981, %v9214
      %v9236 = vadd.f32 %v8983, %v9216
      %v9237 = vadd.f32 %v8986, %v9219
      %v9238 = vadd.f32 %v8988, %v9221
      %v9239 = vld [vmem:[%s8491] sm:$0xf]
      %v9240 = vld [vmem:[%s8491 + $0x8] sm:$0xf]
      %v9241 = vld [vmem:[%s8491 + $0x10] sm:$0xf]
      %v9242 = vld [vmem:[%s8491 + $0x18] sm:$0xf]
      %v9243 = vld [vmem:[%s8491 + $0x30] sm:$0xf]
      %v9244 = vld [vmem:[%s8491 + $0x38] sm:$0xf]
      %v9245 = vld [vmem:[%s8491 + $0x40] sm:$0xf]
      %v9246 = vld [vmem:[%s8491 + $0x48] sm:$0xf]
      %v9247 = vld [vmem:[%s8491 + $0x60] sm:$0xf]
      %v9248 = vld [vmem:[%s8491 + $0x68] sm:$0xf]
      %v9249 = vld [vmem:[%s8491 + $0x70] sm:$0xf]
      %v9250 = vld [vmem:[%s8491 + $0x78] sm:$0xf]
      %v9251 = vld [vmem:[%s8491 + $0x90] sm:$0xf]
      %v9252 = vld [vmem:[%s8491 + $0x98] sm:$0xf]
      %v9253 = vld [vmem:[%s8491 + $0xa0] sm:$0xf]
      %v9254 = vld [vmem:[%s8491 + $0xa8] sm:$0xf]
      %v9255 = vld [vmem:[%s8491 + $0xc0] sm:$0xf]
      %v9256 = vld [vmem:[%s8491 + $0xc8] sm:$0xf]
      %v9257 = vld [vmem:[%s8491 + $0xd0] sm:$0xf]
      %v9258 = vld [vmem:[%s8491 + $0xd8] sm:$0xf]
      %v9259 = vld [vmem:[%s8491 + $0xf0] sm:$0xf]
      %v9260 = vld [vmem:[%s8491 + $0xf8] sm:$0xf]
      %v9261 = vld [vmem:[%s8491 + $0x100] sm:$0xf]
      %v9262 = vld [vmem:[%s8491 + $0x108] sm:$0xf]
      %v9263 = vld [vmem:[%s8491 + $0x120] sm:$0xf]
      %v9264 = vld [vmem:[%s8491 + $0x128] sm:$0xf]
      %v9265 = vld [vmem:[%s8491 + $0x130] sm:$0xf]
      %v9266 = vld [vmem:[%s8491 + $0x138] sm:$0xf]
      %v9267 = vld [vmem:[%s8491 + $0x150] sm:$0xf]
      %v9268 = vld [vmem:[%s8491 + $0x158] sm:$0xf]
      %v9269 = vld [vmem:[%s8491 + $0x160] sm:$0xf]
      %v9270 = vld [vmem:[%s8491 + $0x168] sm:$0xf]
      %9303 = vst [vmem:[#allocation1] ss:$2 sm:$0xff] %v9239
      %s9304 = scalar_lea.vmem [#allocation1], 1
      %9305 = vst [vmem:[%s9304] ss:$2 sm:$0xff] %v9240
      %s9306 = scalar_lea.vmem [#allocation1], 16
      %9307 = vst [vmem:[%s9306] ss:$2 sm:$0xff] %v9241
      %s9308 = scalar_lea.vmem [#allocation1], 17
      %9309 = vst [vmem:[%s9308] ss:$2 sm:$0xff] %v9242
      %s9310 = scalar_lea.vmem [#allocation1], 32
      %9311 = vst [vmem:[%s9310] ss:$2 sm:$0xff] %v9243
      %s9312 = scalar_lea.vmem [#allocation1], 33
      %9313 = vst [vmem:[%s9312] ss:$2 sm:$0xff] %v9244
      %s9314 = scalar_lea.vmem [#allocation1], 48
      %9315 = vst [vmem:[%s9314] ss:$2 sm:$0xff] %v9245
      %s9316 = scalar_lea.vmem [#allocation1], 49
      %9317 = vst [vmem:[%s9316] ss:$2 sm:$0xff] %v9246
      %v9318 = vld.sshfl [vmem:[#allocation1] sm:$0xff pattern:$0x75316420]
      %v9319 = vld.sshfl [vmem:[#allocation1 + $0x10] sm:$0xff pattern:$0x75316420]
      %v9320 = vld.sshfl [vmem:[#allocation1 + $0x20] sm:$0xff pattern:$0x75316420]
      %v9321 = vld.sshfl [vmem:[#allocation1 + $0x30] sm:$0xff pattern:$0x75316420]
      %9322 = vst [vmem:[#allocation1] ss:$2 sm:$0xff] %v9247
      %9323 = vst [vmem:[%s9304] ss:$2 sm:$0xff] %v9248
      %9324 = vst [vmem:[%s9306] ss:$2 sm:$0xff] %v9249
      %9325 = vst [vmem:[%s9308] ss:$2 sm:$0xff] %v9250
      %9326 = vst [vmem:[%s9310] ss:$2 sm:$0xff] %v9251
      %9327 = vst [vmem:[%s9312] ss:$2 sm:$0xff] %v9252
      %9328 = vst [vmem:[%s9314] ss:$2 sm:$0xff] %v9253
      %9329 = vst [vmem:[%s9316] ss:$2 sm:$0xff] %v9254
      %v9330 = vld.sshfl [vmem:[#allocation1] sm:$0xff pattern:$0x75316420]
      %v9331 = vld.sshfl [vmem:[#allocation1 + $0x10] sm:$0xff pattern:$0x75316420]
      %v9332 = vld.sshfl [vmem:[#allocation1 + $0x20] sm:$0xff pattern:$0x75316420]
      %v9333 = vld.sshfl [vmem:[#allocation1 + $0x30] sm:$0xff pattern:$0x75316420]
      %9334 = vst [vmem:[#allocation1] ss:$2 sm:$0xff] %v9255
      %9335 = vst [vmem:[%s9304] ss:$2 sm:$0xff] %v9256
      %9336 = vst [vmem:[%s9306] ss:$2 sm:$0xff] %v9257
      %9337 = vst [vmem:[%s9308] ss:$2 sm:$0xff] %v9258
      %9338 = vst [vmem:[%s9310] ss:$2 sm:$0xff] %v9259
      %9339 = vst [vmem:[%s9312] ss:$2 sm:$0xff] %v9260
      %9340 = vst [vmem:[%s9314] ss:$2 sm:$0xff] %v9261
      %9341 = vst [vmem:[%s9316] ss:$2 sm:$0xff] %v9262
      %v9342 = vld.sshfl [vmem:[#allocation1] sm:$0xff pattern:$0x75316420]
      %v9343 = vld.sshfl [vmem:[#allocation1 + $0x10] sm:$0xff pattern:$0x75316420]
      %v9344 = vld.sshfl [vmem:[#allocation1 + $0x20] sm:$0xff pattern:$0x75316420]
      %v9345 = vld.sshfl [vmem:[#allocation1 + $0x30] sm:$0xff pattern:$0x75316420]
      %9346 = vst [vmem:[#allocation1] ss:$2 sm:$0xff] %v9263
      %9347 = vst [vmem:[%s9304] ss:$2 sm:$0xff] %v9264
      %9348 = vst [vmem:[%s9306] ss:$2 sm:$0xff] %v9265
      %9349 = vst [vmem:[%s9308] ss:$2 sm:$0xff] %v9266
      %9350 = vst [vmem:[%s9310] ss:$2 sm:$0xff] %v9267
      %9351 = vst [vmem:[%s9312] ss:$2 sm:$0xff] %v9268
      %9352 = vst [vmem:[%s9314] ss:$2 sm:$0xff] %v9269
      %9353 = vst [vmem:[%s9316] ss:$2 sm:$0xff] %v9270
      %v9354 = vld.sshfl [vmem:[#allocation1] sm:$0xff pattern:$0x75316420]
      %v9355 = vld.sshfl [vmem:[#allocation1 + $0x10] sm:$0xff pattern:$0x75316420]
      %v9356 = vld.sshfl [vmem:[#allocation1 + $0x20] sm:$0xff pattern:$0x75316420]
      %v9357 = vld.sshfl [vmem:[#allocation1 + $0x30] sm:$0xff pattern:$0x75316420]
      %v9374 = vpack.c.bf16 %v9319, %v9318
      %v9375 = vpack.c.bf16 %v9321, %v9320
      %v9376 = vpack.c.bf16 %v9331, %v9330
      %v9377 = vpack.c.bf16 %v9333, %v9332
      %v9378 = vpack.c.bf16 %v9343, %v9342
      %v9379 = vpack.c.bf16 %v9345, %v9344
      %v9380 = vpack.c.bf16 %v9355, %v9354
      %v9381 = vpack.c.bf16 %v9357, %v9356
      %s9382 = scalar_lea.vmem %s7, 48
      %v9383 = vld [vmem:[%s9382] sm:$0xf]
      %v9384 = vld [vmem:[%s9382 + $0x4] sm:$0xf]
      %v9385 = vld [vmem:[%s9382 + $0x8] sm:$0xf]
      %v9386 = vld [vmem:[%s9382 + $0xc] sm:$0xf]
      %v9391 = vunpack.c.l.b16 %v9383
      %v9392 = vunpack.c.l.b16 %v9384
      %v9393 = vunpack.c.l.b16 %v9385
      %v9394 = vunpack.c.l.b16 %v9386
      %v9395 = vpack.c.b16 %v9392, %v9391
      %v9396 = vpack.c.b16 %v9394, %v9393
      %v9400 = vsel %vm8184, %v9374, 0
      %v9403 = vsel %vm8184, %v9375, 0
      %v9406 = vsel %vm8184, %v9376, 0
      %v9409 = vsel %vm8184, %v9377, 0
      %v9412 = vsel %vm8184, %v9378, 0
      %v9415 = vsel %vm8184, %v9379, 0
      %v9418 = vsel %vm8184, %v9380, 0
      %v9421 = vsel %vm8184, %v9381, 0
      %9423 = vmatpush.bf16.msra.mxu0 0
      %9424 = vmatpush.bf16.msra.mxu0 0
      %9425 = vmatpush.bf16.msra.mxu0 0
      %9426 = vmatpush.bf16.msra.mxu0 0
      %9427 = vmatpush.bf16.msra.mxu0 0
      %9428 = vmatpush.bf16.msra.mxu0 0
      %9429 = vmatpush.bf16.msra.mxu0 %v9396
      %9430 = vmatpush.bf16.msra.mxu0 %v9395
      %9431 = vmatmul.bf16.gmra.mxu0 %v9400
      %v9432 = vpop.f32.mrf.mxu0
      %v9433 = vadd.f32 0.0, %v9432
      %v9434 = vpop.f32.mrf.mxu0
      %v9435 = vadd.f32 0.0, %v9434
      %9436 = vmatmul.bf16.gmra.mxu0 %v9403
      %v9437 = vpop.f32.mrf.mxu0
      %v9438 = vadd.f32 0.0, %v9437
      %v9439 = vpop.f32.mrf.mxu0
      %v9440 = vadd.f32 0.0, %v9439
      %9441 = vmatmul.bf16.gmra.mxu0 %v9406
      %v9442 = vpop.f32.mrf.mxu0
      %v9443 = vadd.f32 0.0, %v9442
      %v9444 = vpop.f32.mrf.mxu0
      %v9445 = vadd.f32 0.0, %v9444
      %9446 = vmatmul.bf16.gmra.mxu0 %v9409
      %v9447 = vpop.f32.mrf.mxu0
      %v9448 = vadd.f32 0.0, %v9447
      %v9449 = vpop.f32.mrf.mxu0
      %v9450 = vadd.f32 0.0, %v9449
      %9451 = vmatmul.bf16.gmra.mxu0 %v9412
      %v9452 = vpop.f32.mrf.mxu0
      %v9453 = vadd.f32 0.0, %v9452
      %v9454 = vpop.f32.mrf.mxu0
      %v9455 = vadd.f32 0.0, %v9454
      %9456 = vmatmul.bf16.gmra.mxu0 %v9415
      %v9457 = vpop.f32.mrf.mxu0
      %v9458 = vadd.f32 0.0, %v9457
      %v9459 = vpop.f32.mrf.mxu0
      %v9460 = vadd.f32 0.0, %v9459
      %9461 = vmatmul.bf16.gmra.mxu0 %v9418
      %v9462 = vpop.f32.mrf.mxu0
      %v9463 = vadd.f32 0.0, %v9462
      %v9464 = vpop.f32.mrf.mxu0
      %v9465 = vadd.f32 0.0, %v9464
      %9466 = vmatmul.bf16.gmra.mxu0 %v9421
      %v9467 = vpop.f32.mrf.mxu0
      %v9468 = vadd.f32 0.0, %v9467
      %v9469 = vpop.f32.mrf.mxu0
      %v9470 = vadd.f32 0.0, %v9469
      %9471 = vdwg.mxu0
      %v9472 = vadd.f32 %v9223, %v9433
      %v9473 = vadd.f32 %v9224, %v9435
      %v9474 = vadd.f32 %v9225, %v9438
      %v9475 = vadd.f32 %v9226, %v9440
      %v9476 = vadd.f32 %v9227, %v9443
      %v9477 = vadd.f32 %v9228, %v9445
      %v9478 = vadd.f32 %v9229, %v9448
      %v9479 = vadd.f32 %v9230, %v9450
      %v9480 = vadd.f32 %v9231, %v9453
      %v9481 = vadd.f32 %v9232, %v9455
      %v9482 = vadd.f32 %v9233, %v9458
      %v9483 = vadd.f32 %v9234, %v9460
      %v9484 = vadd.f32 %v9235, %v9463
      %v9485 = vadd.f32 %v9236, %v9465
      %v9486 = vadd.f32 %v9237, %v9468
      %v9487 = vadd.f32 %v9238, %v9470
      %v9488 = vld [vmem:[%s8491 + $0x1] sm:$0xf]
      %v9489 = vld [vmem:[%s8491 + $0x9] sm:$0xf]
      %v9490 = vld [vmem:[%s8491 + $0x11] sm:$0xf]
      %v9491 = vld [vmem:[%s8491 + $0x19] sm:$0xf]
      %v9492 = vld [vmem:[%s8491 + $0x31] sm:$0xf]
      %v9493 = vld [vmem:[%s8491 + $0x39] sm:$0xf]
      %v9494 = vld [vmem:[%s8491 + $0x41] sm:$0xf]
      %v9495 = vld [vmem:[%s8491 + $0x49] sm:$0xf]
      %v9496 = vld [vmem:[%s8491 + $0x61] sm:$0xf]
      %v9497 = vld [vmem:[%s8491 + $0x69] sm:$0xf]
      %v9498 = vld [vmem:[%s8491 + $0x71] sm:$0xf]
      %v9499 = vld [vmem:[%s8491 + $0x79] sm:$0xf]
      %v9500 = vld [vmem:[%s8491 + $0x91] sm:$0xf]
      %v9501 = vld [vmem:[%s8491 + $0x99] sm:$0xf]
      %v9502 = vld [vmem:[%s8491 + $0xa1] sm:$0xf]
      %v9503 = vld [vmem:[%s8491 + $0xa9] sm:$0xf]
      %v9504 = vld [vmem:[%s8491 + $0xc1] sm:$0xf]
      %v9505 = vld [vmem:[%s8491 + $0xc9] sm:$0xf]
      %v9506 = vld [vmem:[%s8491 + $0xd1] sm:$0xf]
      %v9507 = vld [vmem:[%s8491 + $0xd9] sm:$0xf]
      %v9508 = vld [vmem:[%s8491 + $0xf1] sm:$0xf]
      %v9509 = vld [vmem:[%s8491 + $0xf9] sm:$0xf]
      %v9510 = vld [vmem:[%s8491 + $0x101] sm:$0xf]
      %v9511 = vld [vmem:[%s8491 + $0x109] sm:$0xf]
      %v9512 = vld [vmem:[%s8491 + $0x121] sm:$0xf]
      %v9513 = vld [vmem:[%s8491 + $0x129] sm:$0xf]
      %v9514 = vld [vmem:[%s8491 + $0x131] sm:$0xf]
      %v9515 = vld [vmem:[%s8491 + $0x139] sm:$0xf]
      %v9516 = vld [vmem:[%s8491 + $0x151] sm:$0xf]
      %v9517 = vld [vmem:[%s8491 + $0x159] sm:$0xf]
      %v9518 = vld [vmem:[%s8491 + $0x161] sm:$0xf]
      %v9519 = vld [vmem:[%s8491 + $0x169] sm:$0xf]
      %9552 = vst [vmem:[#allocation1] ss:$2 sm:$0xff] %v9488
      %s9553 = scalar_lea.vmem [#allocation1], 1
      %9554 = vst [vmem:[%s9553] ss:$2 sm:$0xff] %v9489
      %s9555 = scalar_lea.vmem [#allocation1], 16
      %9556 = vst [vmem:[%s9555] ss:$2 sm:$0xff] %v9490
      %s9557 = scalar_lea.vmem [#allocation1], 17
      %9558 = vst [vmem:[%s9557] ss:$2 sm:$0xff] %v9491
      %s9559 = scalar_lea.vmem [#allocation1], 32
      %9560 = vst [vmem:[%s9559] ss:$2 sm:$0xff] %v9492
      %s9561 = scalar_lea.vmem [#allocation1], 33
      %9562 = vst [vmem:[%s9561] ss:$2 sm:$0xff] %v9493
      %s9563 = scalar_lea.vmem [#allocation1], 48
      %9564 = vst [vmem:[%s9563] ss:$2 sm:$0xff] %v9494
      %s9565 = scalar_lea.vmem [#allocation1], 49
      %9566 = vst [vmem:[%s9565] ss:$2 sm:$0xff] %v9495
      %v9567 = vld.sshfl [vmem:[#allocation1] sm:$0xff pattern:$0x75316420]
      %v9568 = vld.sshfl [vmem:[#allocation1 + $0x10] sm:$0xff pattern:$0x75316420]
      %v9569 = vld.sshfl [vmem:[#allocation1 + $0x20] sm:$0xff pattern:$0x75316420]
      %v9570 = vld.sshfl [vmem:[#allocation1 + $0x30] sm:$0xff pattern:$0x75316420]
      %9571 = vst [vmem:[#allocation1] ss:$2 sm:$0xff] %v9496
      %9572 = vst [vmem:[%s9553] ss:$2 sm:$0xff] %v9497
      %9573 = vst [vmem:[%s9555] ss:$2 sm:$0xff] %v9498
      %9574 = vst [vmem:[%s9557] ss:$2 sm:$0xff] %v9499
      %9575 = vst [vmem:[%s9559] ss:$2 sm:$0xff] %v9500
      %9576 = vst [vmem:[%s9561] ss:$2 sm:$0xff] %v9501
      %9577 = vst [vmem:[%s9563] ss:$2 sm:$0xff] %v9502
      %9578 = vst [vmem:[%s9565] ss:$2 sm:$0xff] %v9503
      %v9579 = vld.sshfl [vmem:[#allocation1] sm:$0xff pattern:$0x75316420]
      %v9580 = vld.sshfl [vmem:[#allocation1 + $0x10] sm:$0xff pattern:$0x75316420]
      %v9581 = vld.sshfl [vmem:[#allocation1 + $0x20] sm:$0xff pattern:$0x75316420]
      %v9582 = vld.sshfl [vmem:[#allocation1 + $0x30] sm:$0xff pattern:$0x75316420]
      %9583 = vst [vmem:[#allocation1] ss:$2 sm:$0xff] %v9504
      %9584 = vst [vmem:[%s9553] ss:$2 sm:$0xff] %v9505
      %9585 = vst [vmem:[%s9555] ss:$2 sm:$0xff] %v9506
      %9586 = vst [vmem:[%s9557] ss:$2 sm:$0xff] %v9507
      %9587 = vst [vmem:[%s9559] ss:$2 sm:$0xff] %v9508
      %9588 = vst [vmem:[%s9561] ss:$2 sm:$0xff] %v9509
      %9589 = vst [vmem:[%s9563] ss:$2 sm:$0xff] %v9510
      %9590 = vst [vmem:[%s9565] ss:$2 sm:$0xff] %v9511
      %v9591 = vld.sshfl [vmem:[#allocation1] sm:$0xff pattern:$0x75316420]
      %v9592 = vld.sshfl [vmem:[#allocation1 + $0x10] sm:$0xff pattern:$0x75316420]
      %v9593 = vld.sshfl [vmem:[#allocation1 + $0x20] sm:$0xff pattern:$0x75316420]
      %v9594 = vld.sshfl [vmem:[#allocation1 + $0x30] sm:$0xff pattern:$0x75316420]
      %9595 = vst [vmem:[#allocation1] ss:$2 sm:$0xff] %v9512
      %9596 = vst [vmem:[%s9553] ss:$2 sm:$0xff] %v9513
      %9597 = vst [vmem:[%s9555] ss:$2 sm:$0xff] %v9514
      %9598 = vst [vmem:[%s9557] ss:$2 sm:$0xff] %v9515
      %9599 = vst [vmem:[%s9559] ss:$2 sm:$0xff] %v9516
      %9600 = vst [vmem:[%s9561] ss:$2 sm:$0xff] %v9517
      %9601 = vst [vmem:[%s9563] ss:$2 sm:$0xff] %v9518
      %9602 = vst [vmem:[%s9565] ss:$2 sm:$0xff] %v9519
      %v9603 = vld.sshfl [vmem:[#allocation1] sm:$0xff pattern:$0x75316420]
      %v9604 = vld.sshfl [vmem:[#allocation1 + $0x10] sm:$0xff pattern:$0x75316420]
      %v9605 = vld.sshfl [vmem:[#allocation1 + $0x20] sm:$0xff pattern:$0x75316420]
      %v9606 = vld.sshfl [vmem:[#allocation1 + $0x30] sm:$0xff pattern:$0x75316420]
      %v9623 = vpack.c.bf16 %v9568, %v9567
      %v9624 = vpack.c.bf16 %v9570, %v9569
      %v9625 = vpack.c.bf16 %v9580, %v9579
      %v9626 = vpack.c.bf16 %v9582, %v9581
      %v9627 = vpack.c.bf16 %v9592, %v9591
      %v9628 = vpack.c.bf16 %v9594, %v9593
      %v9629 = vpack.c.bf16 %v9604, %v9603
      %v9630 = vpack.c.bf16 %v9606, %v9605
      %s9631 = scalar_lea.vmem %s7, 64
      %v9632 = vld [vmem:[%s9631] sm:$0xf]
      %v9633 = vld [vmem:[%s9631 + $0x4] sm:$0xf]
      %v9634 = vld [vmem:[%s9631 + $0x8] sm:$0xf]
      %v9635 = vld [vmem:[%s9631 + $0xc] sm:$0xf]
      %v9640 = vunpack.c.l.b16 %v9632
      %v9641 = vunpack.c.l.b16 %v9633
      %v9642 = vunpack.c.l.b16 %v9634
      %v9643 = vunpack.c.l.b16 %v9635
      %v9644 = vpack.c.b16 %v9641, %v9640
      %v9645 = vpack.c.b16 %v9643, %v9642
      %v9649 = vsel %vm8184, %v9623, 0
      %v9652 = vsel %vm8184, %v9624, 0
      %v9655 = vsel %vm8184, %v9625, 0
      %v9658 = vsel %vm8184, %v9626, 0
      %v9661 = vsel %vm8184, %v9627, 0
      %v9664 = vsel %vm8184, %v9628, 0
      %v9667 = vsel %vm8184, %v9629, 0
      %v9670 = vsel %vm8184, %v9630, 0
      %9672 = vmatpush.bf16.msra.mxu0 0
      %9673 = vmatpush.bf16.msra.mxu0 0
      %9674 = vmatpush.bf16.msra.mxu0 0
      %9675 = vmatpush.bf16.msra.mxu0 0
      %9676 = vmatpush.bf16.msra.mxu0 0
      %9677 = vmatpush.bf16.msra.mxu0 0
      %9678 = vmatpush.bf16.msra.mxu0 %v9645
      %9679 = vmatpush.bf16.msra.mxu0 %v9644
      %9680 = vmatmul.bf16.gmra.mxu0 %v9649
      %v9681 = vpop.f32.mrf.mxu0
      %v9682 = vadd.f32 0.0, %v9681
      %v9683 = vpop.f32.mrf.mxu0
      %v9684 = vadd.f32 0.0, %v9683
      %9685 = vmatmul.bf16.gmra.mxu0 %v9652
      %v9686 = vpop.f32.mrf.mxu0
      %v9687 = vadd.f32 0.0, %v9686
      %v9688 = vpop.f32.mrf.mxu0
      %v9689 = vadd.f32 0.0, %v9688
      %9690 = vmatmul.bf16.gmra.mxu0 %v9655
      %v9691 = vpop.f32.mrf.mxu0
      %v9692 = vadd.f32 0.0, %v9691
      %v9693 = vpop.f32.mrf.mxu0
      %v9694 = vadd.f32 0.0, %v9693
      %9695 = vmatmul.bf16.gmra.mxu0 %v9658
      %v9696 = vpop.f32.mrf.mxu0
      %v9697 = vadd.f32 0.0, %v9696
      %v9698 = vpop.f32.mrf.mxu0
      %v9699 = vadd.f32 0.0, %v9698
      %9700 = vmatmul.bf16.gmra.mxu0 %v9661
      %v9701 = vpop.f32.mrf.mxu0
      %v9702 = vadd.f32 0.0, %v9701
      %v9703 = vpop.f32.mrf.mxu0
      %v9704 = vadd.f32 0.0, %v9703
      %9705 = vmatmul.bf16.gmra.mxu0 %v9664
      %v9706 = vpop.f32.mrf.mxu0
      %v9707 = vadd.f32 0.0, %v9706
      %v9708 = vpop.f32.mrf.mxu0
      %v9709 = vadd.f32 0.0, %v9708
      %9710 = vmatmul.bf16.gmra.mxu0 %v9667
      %v9711 = vpop.f32.mrf.mxu0
      %v9712 = vadd.f32 0.0, %v9711
      %v9713 = vpop.f32.mrf.mxu0
      %v9714 = vadd.f32 0.0, %v9713
      %9715 = vmatmul.bf16.gmra.mxu0 %v9670
      %v9716 = vpop.f32.mrf.mxu0
      %v9717 = vadd.f32 0.0, %v9716
      %v9718 = vpop.f32.mrf.mxu0
      %v9719 = vadd.f32 0.0, %v9718
      %9720 = vdwg.mxu0
      %v9721 = vadd.f32 %v9472, %v9682
      %v9722 = vadd.f32 %v9473, %v9684
      %v9723 = vadd.f32 %v9474, %v9687
      %v9724 = vadd.f32 %v9475, %v9689
      %v9725 = vadd.f32 %v9476, %v9692
      %v9726 = vadd.f32 %v9477, %v9694
      %v9727 = vadd.f32 %v9478, %v9697
      %v9728 = vadd.f32 %v9479, %v9699
      %v9729 = vadd.f32 %v9480, %v9702
      %v9730 = vadd.f32 %v9481, %v9704
      %v9731 = vadd.f32 %v9482, %v9707
      %v9732 = vadd.f32 %v9483, %v9709
      %v9733 = vadd.f32 %v9484, %v9712
      %v9734 = vadd.f32 %v9485, %v9714
      %v9735 = vadd.f32 %v9486, %v9717
      %v9736 = vadd.f32 %v9487, %v9719
      %v9737 = vld [vmem:[%s8491 + $0x2] sm:$0xf]
      %v9738 = vld [vmem:[%s8491 + $0xa] sm:$0xf]
      %v9739 = vld [vmem:[%s8491 + $0x12] sm:$0xf]
      %v9740 = vld [vmem:[%s8491 + $0x1a] sm:$0xf]
      %v9741 = vld [vmem:[%s8491 + $0x32] sm:$0xf]
      %v9742 = vld [vmem:[%s8491 + $0x3a] sm:$0xf]
      %v9743 = vld [vmem:[%s8491 + $0x42] sm:$0xf]
      %v9744 = vld [vmem:[%s8491 + $0x4a] sm:$0xf]
      %v9745 = vld [vmem:[%s8491 + $0x62] sm:$0xf]
      %v9746 = vld [vmem:[%s8491 + $0x6a] sm:$0xf]
      %v9747 = vld [vmem:[%s8491 + $0x72] sm:$0xf]
      %v9748 = vld [vmem:[%s8491 + $0x7a] sm:$0xf]
      %v9749 = vld [vmem:[%s8491 + $0x92] sm:$0xf]
      %v9750 = vld [vmem:[%s8491 + $0x9a] sm:$0xf]
      %v9751 = vld [vmem:[%s8491 + $0xa2] sm:$0xf]
      %v9752 = vld [vmem:[%s8491 + $0xaa] sm:$0xf]
      %v9753 = vld [vmem:[%s8491 + $0xc2] sm:$0xf]
      %v9754 = vld [vmem:[%s8491 + $0xca] sm:$0xf]
      %v9755 = vld [vmem:[%s8491 + $0xd2] sm:$0xf]
      %v9756 = vld [vmem:[%s8491 + $0xda] sm:$0xf]
      %v9757 = vld [vmem:[%s8491 + $0xf2] sm:$0xf]
      %v9758 = vld [vmem:[%s8491 + $0xfa] sm:$0xf]
      %v9759 = vld [vmem:[%s8491 + $0x102] sm:$0xf]
      %v9760 = vld [vmem:[%s8491 + $0x10a] sm:$0xf]
      %v9761 = vld [vmem:[%s8491 + $0x122] sm:$0xf]
      %v9762 = vld [vmem:[%s8491 + $0x12a] sm:$0xf]
      %v9763 = vld [vmem:[%s8491 + $0x132] sm:$0xf]
      %v9764 = vld [vmem:[%s8491 + $0x13a] sm:$0xf]
      %v9765 = vld [vmem:[%s8491 + $0x152] sm:$0xf]
      %v9766 = vld [vmem:[%s8491 + $0x15a] sm:$0xf]
      %v9767 = vld [vmem:[%s8491 + $0x162] sm:$0xf]
      %v9768 = vld [vmem:[%s8491 + $0x16a] sm:$0xf]
      %9801 = vst [vmem:[#allocation1] ss:$2 sm:$0xff] %v9737
      %s9802 = scalar_lea.vmem [#allocation1], 1
      %9803 = vst [vmem:[%s9802] ss:$2 sm:$0xff] %v9738
      %s9804 = scalar_lea.vmem [#allocation1], 16
      %9805 = vst [vmem:[%s9804] ss:$2 sm:$0xff] %v9739
      %s9806 = scalar_lea.vmem [#allocation1], 17
      %9807 = vst [vmem:[%s9806] ss:$2 sm:$0xff] %v9740
      %s9808 = scalar_lea.vmem [#allocation1], 32
      %9809 = vst [vmem:[%s9808] ss:$2 sm:$0xff] %v9741
      %s9810 = scalar_lea.vmem [#allocation1], 33
      %9811 = vst [vmem:[%s9810] ss:$2 sm:$0xff] %v9742
      %s9812 = scalar_lea.vmem [#allocation1], 48
      %9813 = vst [vmem:[%s9812] ss:$2 sm:$0xff] %v9743
      %s9814 = scalar_lea.vmem [#allocation1], 49
      %9815 = vst [vmem:[%s9814] ss:$2 sm:$0xff] %v9744
      %v9816 = vld.sshfl [vmem:[#allocation1] sm:$0xff pattern:$0x75316420]
      %v9817 = vld.sshfl [vmem:[#allocation1 + $0x10] sm:$0xff pattern:$0x75316420]
      %v9818 = vld.sshfl [vmem:[#allocation1 + $0x20] sm:$0xff pattern:$0x75316420]
      %v9819 = vld.sshfl [vmem:[#allocation1 + $0x30] sm:$0xff pattern:$0x75316420]
      %9820 = vst [vmem:[#allocation1] ss:$2 sm:$0xff] %v9745
      %9821 = vst [vmem:[%s9802] ss:$2 sm:$0xff] %v9746
      %9822 = vst [vmem:[%s9804] ss:$2 sm:$0xff] %v9747
      %9823 = vst [vmem:[%s9806] ss:$2 sm:$0xff] %v9748
      %9824 = vst [vmem:[%s9808] ss:$2 sm:$0xff] %v9749
      %9825 = vst [vmem:[%s9810] ss:$2 sm:$0xff] %v9750
      %9826 = vst [vmem:[%s9812] ss:$2 sm:$0xff] %v9751
      %9827 = vst [vmem:[%s9814] ss:$2 sm:$0xff] %v9752
      %v9828 = vld.sshfl [vmem:[#allocation1] sm:$0xff pattern:$0x75316420]
      %v9829 = vld.sshfl [vmem:[#allocation1 + $0x10] sm:$0xff pattern:$0x75316420]
      %v9830 = vld.sshfl [vmem:[#allocation1 + $0x20] sm:$0xff pattern:$0x75316420]
      %v9831 = vld.sshfl [vmem:[#allocation1 + $0x30] sm:$0xff pattern:$0x75316420]
      %9832 = vst [vmem:[#allocation1] ss:$2 sm:$0xff] %v9753
      %9833 = vst [vmem:[%s9802] ss:$2 sm:$0xff] %v9754
      %9834 = vst [vmem:[%s9804] ss:$2 sm:$0xff] %v9755
      %9835 = vst [vmem:[%s9806] ss:$2 sm:$0xff] %v9756
      %9836 = vst [vmem:[%s9808] ss:$2 sm:$0xff] %v9757
      %9837 = vst [vmem:[%s9810] ss:$2 sm:$0xff] %v9758
      %9838 = vst [vmem:[%s9812] ss:$2 sm:$0xff] %v9759
      %9839 = vst [vmem:[%s9814] ss:$2 sm:$0xff] %v9760
      %v9840 = vld.sshfl [vmem:[#allocation1] sm:$0xff pattern:$0x75316420]
      %v9841 = vld.sshfl [vmem:[#allocation1 + $0x10] sm:$0xff pattern:$0x75316420]
      %v9842 = vld.sshfl [vmem:[#allocation1 + $0x20] sm:$0xff pattern:$0x75316420]
      %v9843 = vld.sshfl [vmem:[#allocation1 + $0x30] sm:$0xff pattern:$0x75316420]
      %9844 = vst [vmem:[#allocation1] ss:$2 sm:$0xff] %v9761
      %9845 = vst [vmem:[%s9802] ss:$2 sm:$0xff] %v9762
      %9846 = vst [vmem:[%s9804] ss:$2 sm:$0xff] %v9763
      %9847 = vst [vmem:[%s9806] ss:$2 sm:$0xff] %v9764
      %9848 = vst [vmem:[%s9808] ss:$2 sm:$0xff] %v9765
      %9849 = vst [vmem:[%s9810] ss:$2 sm:$0xff] %v9766
      %9850 = vst [vmem:[%s9812] ss:$2 sm:$0xff] %v9767
      %9851 = vst [vmem:[%s9814] ss:$2 sm:$0xff] %v9768
      %v9852 = vld.sshfl [vmem:[#allocation1] sm:$0xff pattern:$0x75316420]
      %v9853 = vld.sshfl [vmem:[#allocation1 + $0x10] sm:$0xff pattern:$0x75316420]
      %v9854 = vld.sshfl [vmem:[#allocation1 + $0x20] sm:$0xff pattern:$0x75316420]
      %v9855 = vld.sshfl [vmem:[#allocation1 + $0x30] sm:$0xff pattern:$0x75316420]
      %v9872 = vpack.c.bf16 %v9817, %v9816
      %v9873 = vpack.c.bf16 %v9819, %v9818
      %v9874 = vpack.c.bf16 %v9829, %v9828
      %v9875 = vpack.c.bf16 %v9831, %v9830
      %v9876 = vpack.c.bf16 %v9841, %v9840
      %v9877 = vpack.c.bf16 %v9843, %v9842
      %v9878 = vpack.c.bf16 %v9853, %v9852
      %v9879 = vpack.c.bf16 %v9855, %v9854
      %s9880 = scalar_lea.vmem %s7, 80
      %v9881 = vld [vmem:[%s9880] sm:$0xf]
      %v9882 = vld [vmem:[%s9880 + $0x4] sm:$0xf]
      %v9883 = vld [vmem:[%s9880 + $0x8] sm:$0xf]
      %v9884 = vld [vmem:[%s9880 + $0xc] sm:$0xf]
      %v9889 = vunpack.c.l.b16 %v9881
      %v9890 = vunpack.c.l.b16 %v9882
      %v9891 = vunpack.c.l.b16 %v9883
      %v9892 = vunpack.c.l.b16 %v9884
      %v9893 = vpack.c.b16 %v9890, %v9889
      %v9894 = vpack.c.b16 %v9892, %v9891
      %v9898 = vsel %vm8184, %v9872, 0
      %v9901 = vsel %vm8184, %v9873, 0
      %v9904 = vsel %vm8184, %v9874, 0
      %v9907 = vsel %vm8184, %v9875, 0
      %v9910 = vsel %vm8184, %v9876, 0
      %v9913 = vsel %vm8184, %v9877, 0
      %v9916 = vsel %vm8184, %v9878, 0
      %v9919 = vsel %vm8184, %v9879, 0
      %9921 = vmatpush.bf16.msra.mxu0 0
      %9922 = vmatpush.bf16.msra.mxu0 0
      %9923 = vmatpush.bf16.msra.mxu0 0
      %9924 = vmatpush.bf16.msra.mxu0 0
      %9925 = vmatpush.bf16.msra.mxu0 0
      %9926 = vmatpush.bf16.msra.mxu0 0
      %9927 = vmatpush.bf16.msra.mxu0 %v9894
      %9928 = vmatpush.bf16.msra.mxu0 %v9893
      %9929 = vmatmul.bf16.gmra.mxu0 %v9898
      %v9930 = vpop.f32.mrf.mxu0
      %v9931 = vadd.f32 0.0, %v9930
      %v9932 = vpop.f32.mrf.mxu0
      %v9933 = vadd.f32 0.0, %v9932
      %9934 = vmatmul.bf16.gmra.mxu0 %v9901
      %v9935 = vpop.f32.mrf.mxu0
      %v9936 = vadd.f32 0.0, %v9935
      %v9937 = vpop.f32.mrf.mxu0
      %v9938 = vadd.f32 0.0, %v9937
      %9939 = vmatmul.bf16.gmra.mxu0 %v9904
      %v9940 = vpop.f32.mrf.mxu0
      %v9941 = vadd.f32 0.0, %v9940
      %v9942 = vpop.f32.mrf.mxu0
      %v9943 = vadd.f32 0.0, %v9942
      %9944 = vmatmul.bf16.gmra.mxu0 %v9907
      %v9945 = vpop.f32.mrf.mxu0
      %v9946 = vadd.f32 0.0, %v9945
      %v9947 = vpop.f32.mrf.mxu0
      %v9948 = vadd.f32 0.0, %v9947
      %9949 = vmatmul.bf16.gmra.mxu0 %v9910
      %v9950 = vpop.f32.mrf.mxu0
      %v9951 = vadd.f32 0.0, %v9950
      %v9952 = vpop.f32.mrf.mxu0
      %v9953 = vadd.f32 0.0, %v9952
      %9954 = vmatmul.bf16.gmra.mxu0 %v9913
      %v9955 = vpop.f32.mrf.mxu0
      %v9956 = vadd.f32 0.0, %v9955
      %v9957 = vpop.f32.mrf.mxu0
      %v9958 = vadd.f32 0.0, %v9957
      %9959 = vmatmul.bf16.gmra.mxu0 %v9916
      %v9960 = vpop.f32.mrf.mxu0
      %v9961 = vadd.f32 0.0, %v9960
      %v9962 = vpop.f32.mrf.mxu0
      %v9963 = vadd.f32 0.0, %v9962
      %9964 = vmatmul.bf16.gmra.mxu0 %v9919
      %v9965 = vpop.f32.mrf.mxu0
      %v9966 = vadd.f32 0.0, %v9965
      %v9967 = vpop.f32.mrf.mxu0
      %v9968 = vadd.f32 0.0, %v9967
      %9969 = vdwg.mxu0
      %v9970 = vadd.f32 %v9721, %v9931
      %v9971 = vadd.f32 %v9722, %v9933
      %v9972 = vadd.f32 %v9723, %v9936
      %v9973 = vadd.f32 %v9724, %v9938
      %v9974 = vadd.f32 %v9725, %v9941
      %v9975 = vadd.f32 %v9726, %v9943
      %v9976 = vadd.f32 %v9727, %v9946
      %v9977 = vadd.f32 %v9728, %v9948
      %v9978 = vadd.f32 %v9729, %v9951
      %v9979 = vadd.f32 %v9730, %v9953
      %v9980 = vadd.f32 %v9731, %v9956
      %v9981 = vadd.f32 %v9732, %v9958
      %v9982 = vadd.f32 %v9733, %v9961
      %v9983 = vadd.f32 %v9734, %v9963
      %v9984 = vadd.f32 %v9735, %v9966
      %v9985 = vadd.f32 %v9736, %v9968
      %s9986 = scalar_lea.vmem [#allocation5], 16
      %v9987 = vld [vmem:[%s9986] sm:$0xf]
      %v9988 = vld [vmem:[%s9986 + $0x8] sm:$0xf]
      %v9989 = vld [vmem:[%s9986 + $0x10] sm:$0xf]
      %v9990 = vld [vmem:[%s9986 + $0x18] sm:$0xf]
      %v9991 = vld [vmem:[%s9986 + $0x30] sm:$0xf]
      %v9992 = vld [vmem:[%s9986 + $0x38] sm:$0xf]
      %v9993 = vld [vmem:[%s9986 + $0x40] sm:$0xf]
      %v9994 = vld [vmem:[%s9986 + $0x48] sm:$0xf]
      %v9995 = vld [vmem:[%s9986 + $0x60] sm:$0xf]
      %v9996 = vld [vmem:[%s9986 + $0x68] sm:$0xf]
      %v9997 = vld [vmem:[%s9986 + $0x70] sm:$0xf]
      %v9998 = vld [vmem:[%s9986 + $0x78] sm:$0xf]
      %v9999 = vld [vmem:[%s9986 + $0x90] sm:$0xf]
      %v10000 = vld [vmem:[%s9986 + $0x98] sm:$0xf]
      %v10001 = vld [vmem:[%s9986 + $0xa0] sm:$0xf]
      %v10002 = vld [vmem:[%s9986 + $0xa8] sm:$0xf]
      %v10003 = vld [vmem:[%s9986 + $0xc0] sm:$0xf]
      %v10004 = vld [vmem:[%s9986 + $0xc8] sm:$0xf]
      %v10005 = vld [vmem:[%s9986 + $0xd0] sm:$0xf]
      %v10006 = vld [vmem:[%s9986 + $0xd8] sm:$0xf]
      %v10007 = vld [vmem:[%s9986 + $0xf0] sm:$0xf]
      %v10008 = vld [vmem:[%s9986 + $0xf8] sm:$0xf]
      %v10009 = vld [vmem:[%s9986 + $0x100] sm:$0xf]
      %v10010 = vld [vmem:[%s9986 + $0x108] sm:$0xf]
      %v10011 = vld [vmem:[%s9986 + $0x120] sm:$0xf]
      %v10012 = vld [vmem:[%s9986 + $0x128] sm:$0xf]
      %v10013 = vld [vmem:[%s9986 + $0x130] sm:$0xf]
      %v10014 = vld [vmem:[%s9986 + $0x138] sm:$0xf]
      %v10015 = vld [vmem:[%s9986 + $0x150] sm:$0xf]
      %v10016 = vld [vmem:[%s9986 + $0x158] sm:$0xf]
      %v10017 = vld [vmem:[%s9986 + $0x160] sm:$0xf]
      %v10018 = vld [vmem:[%s9986 + $0x168] sm:$0xf]
      %10051 = vst [vmem:[#allocation1] ss:$2 sm:$0xff] %v9987
      %s10052 = scalar_lea.vmem [#allocation1], 1
      %10053 = vst [vmem:[%s10052] ss:$2 sm:$0xff] %v9988
      %s10054 = scalar_lea.vmem [#allocation1], 16
      %10055 = vst [vmem:[%s10054] ss:$2 sm:$0xff] %v9989
      %s10056 = scalar_lea.vmem [#allocation1], 17
      %10057 = vst [vmem:[%s10056] ss:$2 sm:$0xff] %v9990
      %s10058 = scalar_lea.vmem [#allocation1], 32
      %10059 = vst [vmem:[%s10058] ss:$2 sm:$0xff] %v9991
      %s10060 = scalar_lea.vmem [#allocation1], 33
      %10061 = vst [vmem:[%s10060] ss:$2 sm:$0xff] %v9992
      %s10062 = scalar_lea.vmem [#allocation1], 48
      %10063 = vst [vmem:[%s10062] ss:$2 sm:$0xff] %v9993
      %s10064 = scalar_lea.vmem [#allocation1], 49
      %10065 = vst [vmem:[%s10064] ss:$2 sm:$0xff] %v9994
      %v10066 = vld.sshfl [vmem:[#allocation1] sm:$0xff pattern:$0x75316420]
      %v10067 = vld.sshfl [vmem:[#allocation1 + $0x10] sm:$0xff pattern:$0x75316420]
      %v10068 = vld.sshfl [vmem:[#allocation1 + $0x20] sm:$0xff pattern:$0x75316420]
      %v10069 = vld.sshfl [vmem:[#allocation1 + $0x30] sm:$0xff pattern:$0x75316420]
      %10070 = vst [vmem:[#allocation1] ss:$2 sm:$0xff] %v9995
      %10071 = vst [vmem:[%s10052] ss:$2 sm:$0xff] %v9996
      %10072 = vst [vmem:[%s10054] ss:$2 sm:$0xff] %v9997
      %10073 = vst [vmem:[%s10056] ss:$2 sm:$0xff] %v9998
      %10074 = vst [vmem:[%s10058] ss:$2 sm:$0xff] %v9999
      %10075 = vst [vmem:[%s10060] ss:$2 sm:$0xff] %v10000
      %10076 = vst [vmem:[%s10062] ss:$2 sm:$0xff] %v10001
      %10077 = vst [vmem:[%s10064] ss:$2 sm:$0xff] %v10002
      %v10078 = vld.sshfl [vmem:[#allocation1] sm:$0xff pattern:$0x75316420]
      %v10079 = vld.sshfl [vmem:[#allocation1 + $0x10] sm:$0xff pattern:$0x75316420]
      %v10080 = vld.sshfl [vmem:[#allocation1 + $0x20] sm:$0xff pattern:$0x75316420]
      %v10081 = vld.sshfl [vmem:[#allocation1 + $0x30] sm:$0xff pattern:$0x75316420]
      %10082 = vst [vmem:[#allocation1] ss:$2 sm:$0xff] %v10003
      %10083 = vst [vmem:[%s10052] ss:$2 sm:$0xff] %v10004
      %10084 = vst [vmem:[%s10054] ss:$2 sm:$0xff] %v10005
      %10085 = vst [vmem:[%s10056] ss:$2 sm:$0xff] %v10006
      %10086 = vst [vmem:[%s10058] ss:$2 sm:$0xff] %v10007
      %10087 = vst [vmem:[%s10060] ss:$2 sm:$0xff] %v10008
      %10088 = vst [vmem:[%s10062] ss:$2 sm:$0xff] %v10009
      %10089 = vst [vmem:[%s10064] ss:$2 sm:$0xff] %v10010
      %v10090 = vld.sshfl [vmem:[#allocation1] sm:$0xff pattern:$0x75316420]
      %v10091 = vld.sshfl [vmem:[#allocation1 + $0x10] sm:$0xff pattern:$0x75316420]
      %v10092 = vld.sshfl [vmem:[#allocation1 + $0x20] sm:$0xff pattern:$0x75316420]
      %v10093 = vld.sshfl [vmem:[#allocation1 + $0x30] sm:$0xff pattern:$0x75316420]
      %10094 = vst [vmem:[#allocation1] ss:$2 sm:$0xff] %v10011
      %10095 = vst [vmem:[%s10052] ss:$2 sm:$0xff] %v10012
      %10096 = vst [vmem:[%s10054] ss:$2 sm:$0xff] %v10013
      %10097 = vst [vmem:[%s10056] ss:$2 sm:$0xff] %v10014
      %10098 = vst [vmem:[%s10058] ss:$2 sm:$0xff] %v10015
      %10099 = vst [vmem:[%s10060] ss:$2 sm:$0xff] %v10016
      %10100 = vst [vmem:[%s10062] ss:$2 sm:$0xff] %v10017
      %10101 = vst [vmem:[%s10064] ss:$2 sm:$0xff] %v10018
      %v10102 = vld.sshfl [vmem:[#allocation1] sm:$0xff pattern:$0x75316420]
      %v10103 = vld.sshfl [vmem:[#allocation1 + $0x10] sm:$0xff pattern:$0x75316420]
      %v10104 = vld.sshfl [vmem:[#allocation1 + $0x20] sm:$0xff pattern:$0x75316420]
      %v10105 = vld.sshfl [vmem:[#allocation1 + $0x30] sm:$0xff pattern:$0x75316420]
      %v10122 = vpack.c.bf16 %v10067, %v10066
      %v10123 = vpack.c.bf16 %v10069, %v10068
      %v10124 = vpack.c.bf16 %v10079, %v10078
      %v10125 = vpack.c.bf16 %v10081, %v10080
      %v10126 = vpack.c.bf16 %v10091, %v10090
      %v10127 = vpack.c.bf16 %v10093, %v10092
      %v10128 = vpack.c.bf16 %v10103, %v10102
      %v10129 = vpack.c.bf16 %v10105, %v10104
      %s10130 = scalar_lea.vmem %s7, 96
      %v10131 = vld [vmem:[%s10130] sm:$0xf]
      %v10132 = vld [vmem:[%s10130 + $0x4] sm:$0xf]
      %v10133 = vld [vmem:[%s10130 + $0x8] sm:$0xf]
      %v10134 = vld [vmem:[%s10130 + $0xc] sm:$0xf]
      %v10139 = vunpack.c.l.b16 %v10131
      %v10140 = vunpack.c.l.b16 %v10132
      %v10141 = vunpack.c.l.b16 %v10133
      %v10142 = vunpack.c.l.b16 %v10134
      %v10143 = vpack.c.b16 %v10140, %v10139
      %v10144 = vpack.c.b16 %v10142, %v10141
      %v10148 = vsel %vm8184, %v10122, 0
      %v10151 = vsel %vm8184, %v10123, 0
      %v10154 = vsel %vm8184, %v10124, 0
      %v10157 = vsel %vm8184, %v10125, 0
      %v10160 = vsel %vm8184, %v10126, 0
      %v10163 = vsel %vm8184, %v10127, 0
      %v10166 = vsel %vm8184, %v10128, 0
      %v10169 = vsel %vm8184, %v10129, 0
      %10171 = vmatpush.bf16.msra.mxu0 0
      %10172 = vmatpush.bf16.msra.mxu0 0
      %10173 = vmatpush.bf16.msra.mxu0 0
      %10174 = vmatpush.bf16.msra.mxu0 0
      %10175 = vmatpush.bf16.msra.mxu0 0
      %10176 = vmatpush.bf16.msra.mxu0 0
      %10177 = vmatpush.bf16.msra.mxu0 %v10144
      %10178 = vmatpush.bf16.msra.mxu0 %v10143
      %10179 = vmatmul.bf16.gmra.mxu0 %v10148
      %v10180 = vpop.f32.mrf.mxu0
      %v10181 = vadd.f32 0.0, %v10180
      %v10182 = vpop.f32.mrf.mxu0
      %v10183 = vadd.f32 0.0, %v10182
      %10184 = vmatmul.bf16.gmra.mxu0 %v10151
      %v10185 = vpop.f32.mrf.mxu0
      %v10186 = vadd.f32 0.0, %v10185
      %v10187 = vpop.f32.mrf.mxu0
      %v10188 = vadd.f32 0.0, %v10187
      %10189 = vmatmul.bf16.gmra.mxu0 %v10154
      %v10190 = vpop.f32.mrf.mxu0
      %v10191 = vadd.f32 0.0, %v10190
      %v10192 = vpop.f32.mrf.mxu0
      %v10193 = vadd.f32 0.0, %v10192
      %10194 = vmatmul.bf16.gmra.mxu0 %v10157
      %v10195 = vpop.f32.mrf.mxu0
      %v10196 = vadd.f32 0.0, %v10195
      %v10197 = vpop.f32.mrf.mxu0
      %v10198 = vadd.f32 0.0, %v10197
      %10199 = vmatmul.bf16.gmra.mxu0 %v10160
      %v10200 = vpop.f32.mrf.mxu0
      %v10201 = vadd.f32 0.0, %v10200
      %v10202 = vpop.f32.mrf.mxu0
      %v10203 = vadd.f32 0.0, %v10202
      %10204 = vmatmul.bf16.gmra.mxu0 %v10163
      %v10205 = vpop.f32.mrf.mxu0
      %v10206 = vadd.f32 0.0, %v10205
      %v10207 = vpop.f32.mrf.mxu0
      %v10208 = vadd.f32 0.0, %v10207
      %10209 = vmatmul.bf16.gmra.mxu0 %v10166
      %v10210 = vpop.f32.mrf.mxu0
      %v10211 = vadd.f32 0.0, %v10210
      %v10212 = vpop.f32.mrf.mxu0
      %v10213 = vadd.f32 0.0, %v10212
      %10214 = vmatmul.bf16.gmra.mxu0 %v10169
      %v10215 = vpop.f32.mrf.mxu0
      %v10216 = vadd.f32 0.0, %v10215
      %v10217 = vpop.f32.mrf.mxu0
      %v10218 = vadd.f32 0.0, %v10217
      %10219 = vdwg.mxu0
      %v10220 = vadd.f32 %v9970, %v10181
      %v10221 = vadd.f32 %v9971, %v10183
      %v10222 = vadd.f32 %v9972, %v10186
      %v10223 = vadd.f32 %v9973, %v10188
      %v10224 = vadd.f32 %v9974, %v10191
      %v10225 = vadd.f32 %v9975, %v10193
      %v10226 = vadd.f32 %v9976, %v10196
      %v10227 = vadd.f32 %v9977, %v10198
      %v10228 = vadd.f32 %v9978, %v10201
      %v10229 = vadd.f32 %v9979, %v10203
      %v10230 = vadd.f32 %v9980, %v10206
      %v10231 = vadd.f32 %v9981, %v10208
      %v10232 = vadd.f32 %v9982, %v10211
      %v10233 = vadd.f32 %v9983, %v10213
      %v10234 = vadd.f32 %v9984, %v10216
      %v10235 = vadd.f32 %v9985, %v10218
      %v10236 = vld [vmem:[%s9986 + $0x1] sm:$0xf]
      %v10237 = vld [vmem:[%s9986 + $0x9] sm:$0xf]
      %v10238 = vld [vmem:[%s9986 + $0x11] sm:$0xf]
      %v10239 = vld [vmem:[%s9986 + $0x19] sm:$0xf]
      %v10240 = vld [vmem:[%s9986 + $0x31] sm:$0xf]
      %v10241 = vld [vmem:[%s9986 + $0x39] sm:$0xf]
      %v10242 = vld [vmem:[%s9986 + $0x41] sm:$0xf]
      %v10243 = vld [vmem:[%s9986 + $0x49] sm:$0xf]
      %v10244 = vld [vmem:[%s9986 + $0x61] sm:$0xf]
      %v10245 = vld [vmem:[%s9986 + $0x69] sm:$0xf]
      %v10246 = vld [vmem:[%s9986 + $0x71] sm:$0xf]
      %v10247 = vld [vmem:[%s9986 + $0x79] sm:$0xf]
      %v10248 = vld [vmem:[%s9986 + $0x91] sm:$0xf]
      %v10249 = vld [vmem:[%s9986 + $0x99] sm:$0xf]
      %v10250 = vld [vmem:[%s9986 + $0xa1] sm:$0xf]
      %v10251 = vld [vmem:[%s9986 + $0xa9] sm:$0xf]
      %v10252 = vld [vmem:[%s9986 + $0xc1] sm:$0xf]
      %v10253 = vld [vmem:[%s9986 + $0xc9] sm:$0xf]
      %v10254 = vld [vmem:[%s9986 + $0xd1] sm:$0xf]
      %v10255 = vld [vmem:[%s9986 + $0xd9] sm:$0xf]
      %v10256 = vld [vmem:[%s9986 + $0xf1] sm:$0xf]
      %v10257 = vld [vmem:[%s9986 + $0xf9] sm:$0xf]
      %v10258 = vld [vmem:[%s9986 + $0x101] sm:$0xf]
      %v10259 = vld [vmem:[%s9986 + $0x109] sm:$0xf]
      %v10260 = vld [vmem:[%s9986 + $0x121] sm:$0xf]
      %v10261 = vld [vmem:[%s9986 + $0x129] sm:$0xf]
      %v10262 = vld [vmem:[%s9986 + $0x131] sm:$0xf]
      %v10263 = vld [vmem:[%s9986 + $0x139] sm:$0xf]
      %v10264 = vld [vmem:[%s9986 + $0x151] sm:$0xf]
      %v10265 = vld [vmem:[%s9986 + $0x159] sm:$0xf]
      %v10266 = vld [vmem:[%s9986 + $0x161] sm:$0xf]
      %v10267 = vld [vmem:[%s9986 + $0x169] sm:$0xf]
      %10300 = vst [vmem:[#allocation1] ss:$2 sm:$0xff] %v10236
      %s10301 = scalar_lea.vmem [#allocation1], 1
      %10302 = vst [vmem:[%s10301] ss:$2 sm:$0xff] %v10237
      %s10303 = scalar_lea.vmem [#allocation1], 16
      %10304 = vst [vmem:[%s10303] ss:$2 sm:$0xff] %v10238
      %s10305 = scalar_lea.vmem [#allocation1], 17
      %10306 = vst [vmem:[%s10305] ss:$2 sm:$0xff] %v10239
      %s10307 = scalar_lea.vmem [#allocation1], 32
      %10308 = vst [vmem:[%s10307] ss:$2 sm:$0xff] %v10240
      %s10309 = scalar_lea.vmem [#allocation1], 33
      %10310 = vst [vmem:[%s10309] ss:$2 sm:$0xff] %v10241
      %s10311 = scalar_lea.vmem [#allocation1], 48
      %10312 = vst [vmem:[%s10311] ss:$2 sm:$0xff] %v10242
      %s10313 = scalar_lea.vmem [#allocation1], 49
      %10314 = vst [vmem:[%s10313] ss:$2 sm:$0xff] %v10243
      %v10315 = vld.sshfl [vmem:[#allocation1] sm:$0xff pattern:$0x75316420]
      %v10316 = vld.sshfl [vmem:[#allocation1 + $0x10] sm:$0xff pattern:$0x75316420]
      %v10317 = vld.sshfl [vmem:[#allocation1 + $0x20] sm:$0xff pattern:$0x75316420]
      %v10318 = vld.sshfl [vmem:[#allocation1 + $0x30] sm:$0xff pattern:$0x75316420]
      %10319 = vst [vmem:[#allocation1] ss:$2 sm:$0xff] %v10244
      %10320 = vst [vmem:[%s10301] ss:$2 sm:$0xff] %v10245
      %10321 = vst [vmem:[%s10303] ss:$2 sm:$0xff] %v10246
      %10322 = vst [vmem:[%s10305] ss:$2 sm:$0xff] %v10247
      %10323 = vst [vmem:[%s10307] ss:$2 sm:$0xff] %v10248
      %10324 = vst [vmem:[%s10309] ss:$2 sm:$0xff] %v10249
      %10325 = vst [vmem:[%s10311] ss:$2 sm:$0xff] %v10250
      %10326 = vst [vmem:[%s10313] ss:$2 sm:$0xff] %v10251
      %v10327 = vld.sshfl [vmem:[#allocation1] sm:$0xff pattern:$0x75316420]
      %v10328 = vld.sshfl [vmem:[#allocation1 + $0x10] sm:$0xff pattern:$0x75316420]
      %v10329 = vld.sshfl [vmem:[#allocation1 + $0x20] sm:$0xff pattern:$0x75316420]
      %v10330 = vld.sshfl [vmem:[#allocation1 + $0x30] sm:$0xff pattern:$0x75316420]
      %10331 = vst [vmem:[#allocation1] ss:$2 sm:$0xff] %v10252
      %10332 = vst [vmem:[%s10301] ss:$2 sm:$0xff] %v10253
      %10333 = vst [vmem:[%s10303] ss:$2 sm:$0xff] %v10254
      %10334 = vst [vmem:[%s10305] ss:$2 sm:$0xff] %v10255
      %10335 = vst [vmem:[%s10307] ss:$2 sm:$0xff] %v10256
      %10336 = vst [vmem:[%s10309] ss:$2 sm:$0xff] %v10257
      %10337 = vst [vmem:[%s10311] ss:$2 sm:$0xff] %v10258
      %10338 = vst [vmem:[%s10313] ss:$2 sm:$0xff] %v10259
      %v10339 = vld.sshfl [vmem:[#allocation1] sm:$0xff pattern:$0x75316420]
      %v10340 = vld.sshfl [vmem:[#allocation1 + $0x10] sm:$0xff pattern:$0x75316420]
      %v10341 = vld.sshfl [vmem:[#allocation1 + $0x20] sm:$0xff pattern:$0x75316420]
      %v10342 = vld.sshfl [vmem:[#allocation1 + $0x30] sm:$0xff pattern:$0x75316420]
      %10343 = vst [vmem:[#allocation1] ss:$2 sm:$0xff] %v10260
      %10344 = vst [vmem:[%s10301] ss:$2 sm:$0xff] %v10261
      %10345 = vst [vmem:[%s10303] ss:$2 sm:$0xff] %v10262
      %10346 = vst [vmem:[%s10305] ss:$2 sm:$0xff] %v10263
      %10347 = vst [vmem:[%s10307] ss:$2 sm:$0xff] %v10264
      %10348 = vst [vmem:[%s10309] ss:$2 sm:$0xff] %v10265
      %10349 = vst [vmem:[%s10311] ss:$2 sm:$0xff] %v10266
      %10350 = vst [vmem:[%s10313] ss:$2 sm:$0xff] %v10267
      %v10351 = vld.sshfl [vmem:[#allocation1] sm:$0xff pattern:$0x75316420]
      %v10352 = vld.sshfl [vmem:[#allocation1 + $0x10] sm:$0xff pattern:$0x75316420]
      %v10353 = vld.sshfl [vmem:[#allocation1 + $0x20] sm:$0xff pattern:$0x75316420]
      %v10354 = vld.sshfl [vmem:[#allocation1 + $0x30] sm:$0xff pattern:$0x75316420]
      %v10371 = vpack.c.bf16 %v10316, %v10315
      %v10372 = vpack.c.bf16 %v10318, %v10317
      %v10373 = vpack.c.bf16 %v10328, %v10327
      %v10374 = vpack.c.bf16 %v10330, %v10329
      %v10375 = vpack.c.bf16 %v10340, %v10339
      %v10376 = vpack.c.bf16 %v10342, %v10341
      %v10377 = vpack.c.bf16 %v10352, %v10351
      %v10378 = vpack.c.bf16 %v10354, %v10353
      %s10379 = scalar_lea.vmem %s7, 112
      %v10380 = vld [vmem:[%s10379] sm:$0xf]
      %v10381 = vld [vmem:[%s10379 + $0x4] sm:$0xf]
      %v10382 = vld [vmem:[%s10379 + $0x8] sm:$0xf]
      %v10383 = vld [vmem:[%s10379 + $0xc] sm:$0xf]
      %v10388 = vunpack.c.l.b16 %v10380
      %v10389 = vunpack.c.l.b16 %v10381
      %v10390 = vunpack.c.l.b16 %v10382
      %v10391 = vunpack.c.l.b16 %v10383
      %v10392 = vpack.c.b16 %v10389, %v10388
      %v10393 = vpack.c.b16 %v10391, %v10390
      %v10397 = vsel %vm8184, %v10371, 0
      %v10400 = vsel %vm8184, %v10372, 0
      %v10403 = vsel %vm8184, %v10373, 0
      %v10406 = vsel %vm8184, %v10374, 0
      %v10409 = vsel %vm8184, %v10375, 0
      %v10412 = vsel %vm8184, %v10376, 0
      %v10415 = vsel %vm8184, %v10377, 0
      %v10418 = vsel %vm8184, %v10378, 0
      %10420 = vmatpush.bf16.msra.mxu0 0
      %10421 = vmatpush.bf16.msra.mxu0 0
      %10422 = vmatpush.bf16.msra.mxu0 0
      %10423 = vmatpush.bf16.msra.mxu0 0
      %10424 = vmatpush.bf16.msra.mxu0 0
      %10425 = vmatpush.bf16.msra.mxu0 0
      %10426 = vmatpush.bf16.msra.mxu0 %v10393
      %10427 = vmatpush.bf16.msra.mxu0 %v10392
      %10428 = vmatmul.bf16.gmra.mxu0 %v10397
      %v10429 = vpop.f32.mrf.mxu0
      %v10430 = vadd.f32 0.0, %v10429
      %v10431 = vpop.f32.mrf.mxu0
      %v10432 = vadd.f32 0.0, %v10431
      %10433 = vmatmul.bf16.gmra.mxu0 %v10400
      %v10434 = vpop.f32.mrf.mxu0
      %v10435 = vadd.f32 0.0, %v10434
      %v10436 = vpop.f32.mrf.mxu0
      %v10437 = vadd.f32 0.0, %v10436
      %10438 = vmatmul.bf16.gmra.mxu0 %v10403
      %v10439 = vpop.f32.mrf.mxu0
      %v10440 = vadd.f32 0.0, %v10439
      %v10441 = vpop.f32.mrf.mxu0
      %v10442 = vadd.f32 0.0, %v10441
      %10443 = vmatmul.bf16.gmra.mxu0 %v10406
      %v10444 = vpop.f32.mrf.mxu0
      %v10445 = vadd.f32 0.0, %v10444
      %v10446 = vpop.f32.mrf.mxu0
      %v10447 = vadd.f32 0.0, %v10446
      %10448 = vmatmul.bf16.gmra.mxu0 %v10409
      %v10449 = vpop.f32.mrf.mxu0
      %v10450 = vadd.f32 0.0, %v10449
      %v10451 = vpop.f32.mrf.mxu0
      %v10452 = vadd.f32 0.0, %v10451
      %10453 = vmatmul.bf16.gmra.mxu0 %v10412
      %v10454 = vpop.f32.mrf.mxu0
      %v10455 = vadd.f32 0.0, %v10454
      %v10456 = vpop.f32.mrf.mxu0
      %v10457 = vadd.f32 0.0, %v10456
      %10458 = vmatmul.bf16.gmra.mxu0 %v10415
      %v10459 = vpop.f32.mrf.mxu0
      %v10460 = vadd.f32 0.0, %v10459
      %v10461 = vpop.f32.mrf.mxu0
      %v10462 = vadd.f32 0.0, %v10461
      %10463 = vmatmul.bf16.gmra.mxu0 %v10418
      %v10464 = vpop.f32.mrf.mxu0
      %v10465 = vadd.f32 0.0, %v10464
      %v10466 = vpop.f32.mrf.mxu0
      %v10467 = vadd.f32 0.0, %v10466
      %10468 = vdwg.mxu0
      %v10469 = vadd.f32 %v10220, %v10430
      %v10470 = vadd.f32 %v10221, %v10432
      %v10471 = vadd.f32 %v10222, %v10435
      %v10472 = vadd.f32 %v10223, %v10437
      %v10473 = vadd.f32 %v10224, %v10440
      %v10474 = vadd.f32 %v10225, %v10442
      %v10475 = vadd.f32 %v10226, %v10445
      %v10476 = vadd.f32 %v10227, %v10447
      %v10477 = vadd.f32 %v10228, %v10450
      %v10478 = vadd.f32 %v10229, %v10452
      %v10479 = vadd.f32 %v10230, %v10455
      %v10480 = vadd.f32 %v10231, %v10457
      %v10481 = vadd.f32 %v10232, %v10460
      %v10482 = vadd.f32 %v10233, %v10462
      %v10483 = vadd.f32 %v10234, %v10465
      %v10484 = vadd.f32 %v10235, %v10467
      %v10485 = vld [vmem:[%s9986 + $0x2] sm:$0xf]
      %v10486 = vld [vmem:[%s9986 + $0xa] sm:$0xf]
      %v10487 = vld [vmem:[%s9986 + $0x12] sm:$0xf]
      %v10488 = vld [vmem:[%s9986 + $0x1a] sm:$0xf]
      %v10489 = vld [vmem:[%s9986 + $0x32] sm:$0xf]
      %v10490 = vld [vmem:[%s9986 + $0x3a] sm:$0xf]
      %v10491 = vld [vmem:[%s9986 + $0x42] sm:$0xf]
      %v10492 = vld [vmem:[%s9986 + $0x4a] sm:$0xf]
      %v10493 = vld [vmem:[%s9986 + $0x62] sm:$0xf]
      %v10494 = vld [vmem:[%s9986 + $0x6a] sm:$0xf]
      %v10495 = vld [vmem:[%s9986 + $0x72] sm:$0xf]
      %v10496 = vld [vmem:[%s9986 + $0x7a] sm:$0xf]
      %v10497 = vld [vmem:[%s9986 + $0x92] sm:$0xf]
      %v10498 = vld [vmem:[%s9986 + $0x9a] sm:$0xf]
      %v10499 = vld [vmem:[%s9986 + $0xa2] sm:$0xf]
      %v10500 = vld [vmem:[%s9986 + $0xaa] sm:$0xf]
      %v10501 = vld [vmem:[%s9986 + $0xc2] sm:$0xf]
      %v10502 = vld [vmem:[%s9986 + $0xca] sm:$0xf]
      %v10503 = vld [vmem:[%s9986 + $0xd2] sm:$0xf]
      %v10504 = vld [vmem:[%s9986 + $0xda] sm:$0xf]
      %v10505 = vld [vmem:[%s9986 + $0xf2] sm:$0xf]
      %v10506 = vld [vmem:[%s9986 + $0xfa] sm:$0xf]
      %v10507 = vld [vmem:[%s9986 + $0x102] sm:$0xf]
      %v10508 = vld [vmem:[%s9986 + $0x10a] sm:$0xf]
      %v10509 = vld [vmem:[%s9986 + $0x122] sm:$0xf]
      %v10510 = vld [vmem:[%s9986 + $0x12a] sm:$0xf]
      %v10511 = vld [vmem:[%s9986 + $0x132] sm:$0xf]
      %v10512 = vld [vmem:[%s9986 + $0x13a] sm:$0xf]
      %v10513 = vld [vmem:[%s9986 + $0x152] sm:$0xf]
      %v10514 = vld [vmem:[%s9986 + $0x15a] sm:$0xf]
      %v10515 = vld [vmem:[%s9986 + $0x162] sm:$0xf]
      %v10516 = vld [vmem:[%s9986 + $0x16a] sm:$0xf]
      %10549 = vst [vmem:[#allocation1] ss:$2 sm:$0xff] %v10485
      %s10550 = scalar_lea.vmem [#allocation1], 1
      %10551 = vst [vmem:[%s10550] ss:$2 sm:$0xff] %v10486
      %s10552 = scalar_lea.vmem [#allocation1], 16
      %10553 = vst [vmem:[%s10552] ss:$2 sm:$0xff] %v10487
      %s10554 = scalar_lea.vmem [#allocation1], 17
      %10555 = vst [vmem:[%s10554] ss:$2 sm:$0xff] %v10488
      %s10556 = scalar_lea.vmem [#allocation1], 32
      %10557 = vst [vmem:[%s10556] ss:$2 sm:$0xff] %v10489
      %s10558 = scalar_lea.vmem [#allocation1], 33
      %10559 = vst [vmem:[%s10558] ss:$2 sm:$0xff] %v10490
      %s10560 = scalar_lea.vmem [#allocation1], 48
      %10561 = vst [vmem:[%s10560] ss:$2 sm:$0xff] %v10491
      %s10562 = scalar_lea.vmem [#allocation1], 49
      %10563 = vst [vmem:[%s10562] ss:$2 sm:$0xff] %v10492
      %v10564 = vld.sshfl [vmem:[#allocation1] sm:$0xff pattern:$0x75316420]
      %v10565 = vld.sshfl [vmem:[#allocation1 + $0x10] sm:$0xff pattern:$0x75316420]
      %v10566 = vld.sshfl [vmem:[#allocation1 + $0x20] sm:$0xff pattern:$0x75316420]
      %v10567 = vld.sshfl [vmem:[#allocation1 + $0x30] sm:$0xff pattern:$0x75316420]
      %10568 = vst [vmem:[#allocation1] ss:$2 sm:$0xff] %v10493
      %10569 = vst [vmem:[%s10550] ss:$2 sm:$0xff] %v10494
      %10570 = vst [vmem:[%s10552] ss:$2 sm:$0xff] %v10495
      %10571 = vst [vmem:[%s10554] ss:$2 sm:$0xff] %v10496
      %10572 = vst [vmem:[%s10556] ss:$2 sm:$0xff] %v10497
      %10573 = vst [vmem:[%s10558] ss:$2 sm:$0xff] %v10498
      %10574 = vst [vmem:[%s10560] ss:$2 sm:$0xff] %v10499
      %10575 = vst [vmem:[%s10562] ss:$2 sm:$0xff] %v10500
      %v10576 = vld.sshfl [vmem:[#allocation1] sm:$0xff pattern:$0x75316420]
      %v10577 = vld.sshfl [vmem:[#allocation1 + $0x10] sm:$0xff pattern:$0x75316420]
      %v10578 = vld.sshfl [vmem:[#allocation1 + $0x20] sm:$0xff pattern:$0x75316420]
      %v10579 = vld.sshfl [vmem:[#allocation1 + $0x30] sm:$0xff pattern:$0x75316420]
      %10580 = vst [vmem:[#allocation1] ss:$2 sm:$0xff] %v10501
      %10581 = vst [vmem:[%s10550] ss:$2 sm:$0xff] %v10502
      %10582 = vst [vmem:[%s10552] ss:$2 sm:$0xff] %v10503
      %10583 = vst [vmem:[%s10554] ss:$2 sm:$0xff] %v10504
      %10584 = vst [vmem:[%s10556] ss:$2 sm:$0xff] %v10505
      %10585 = vst [vmem:[%s10558] ss:$2 sm:$0xff] %v10506
      %10586 = vst [vmem:[%s10560] ss:$2 sm:$0xff] %v10507
      %10587 = vst [vmem:[%s10562] ss:$2 sm:$0xff] %v10508
      %v10588 = vld.sshfl [vmem:[#allocation1] sm:$0xff pattern:$0x75316420]
      %v10589 = vld.sshfl [vmem:[#allocation1 + $0x10] sm:$0xff pattern:$0x75316420]
      %v10590 = vld.sshfl [vmem:[#allocation1 + $0x20] sm:$0xff pattern:$0x75316420]
      %v10591 = vld.sshfl [vmem:[#allocation1 + $0x30] sm:$0xff pattern:$0x75316420]
      %10592 = vst [vmem:[#allocation1] ss:$2 sm:$0xff] %v10509
      %10593 = vst [vmem:[%s10550] ss:$2 sm:$0xff] %v10510
      %10594 = vst [vmem:[%s10552] ss:$2 sm:$0xff] %v10511
      %10595 = vst [vmem:[%s10554] ss:$2 sm:$0xff] %v10512
      %10596 = vst [vmem:[%s10556] ss:$2 sm:$0xff] %v10513
      %10597 = vst [vmem:[%s10558] ss:$2 sm:$0xff] %v10514
      %10598 = vst [vmem:[%s10560] ss:$2 sm:$0xff] %v10515
      %10599 = vst [vmem:[%s10562] ss:$2 sm:$0xff] %v10516
      %v10600 = vld.sshfl [vmem:[#allocation1] sm:$0xff pattern:$0x75316420]
      %v10601 = vld.sshfl [vmem:[#allocation1 + $0x10] sm:$0xff pattern:$0x75316420]
      %v10602 = vld.sshfl [vmem:[#allocation1 + $0x20] sm:$0xff pattern:$0x75316420]
      %v10603 = vld.sshfl [vmem:[#allocation1 + $0x30] sm:$0xff pattern:$0x75316420]
      %v10620 = vpack.c.bf16 %v10565, %v10564
      %v10621 = vpack.c.bf16 %v10567, %v10566
      %v10622 = vpack.c.bf16 %v10577, %v10576
      %v10623 = vpack.c.bf16 %v10579, %v10578
      %v10624 = vpack.c.bf16 %v10589, %v10588
      %v10625 = vpack.c.bf16 %v10591, %v10590
      %v10626 = vpack.c.bf16 %v10601, %v10600
      %v10627 = vpack.c.bf16 %v10603, %v10602
      %s10628 = scalar_lea.vmem %s7, 128
      %v10629 = vld [vmem:[%s10628] sm:$0xf]
      %v10630 = vld [vmem:[%s10628 + $0x4] sm:$0xf]
      %v10631 = vld [vmem:[%s10628 + $0x8] sm:$0xf]
      %v10632 = vld [vmem:[%s10628 + $0xc] sm:$0xf]
      %v10637 = vunpack.c.l.b16 %v10629
      %v10638 = vunpack.c.l.b16 %v10630
      %v10639 = vunpack.c.l.b16 %v10631
      %v10640 = vunpack.c.l.b16 %v10632
      %v10641 = vpack.c.b16 %v10638, %v10637
      %v10642 = vpack.c.b16 %v10640, %v10639
      %v10646 = vsel %vm8184, %v10620, 0
      %v10649 = vsel %vm8184, %v10621, 0
      %v10652 = vsel %vm8184, %v10622, 0
      %v10655 = vsel %vm8184, %v10623, 0
      %v10658 = vsel %vm8184, %v10624, 0
      %v10661 = vsel %vm8184, %v10625, 0
      %v10664 = vsel %vm8184, %v10626, 0
      %v10667 = vsel %vm8184, %v10627, 0
      %10669 = vmatpush.bf16.msra.mxu0 0
      %10670 = vmatpush.bf16.msra.mxu0 0
      %10671 = vmatpush.bf16.msra.mxu0 0
      %10672 = vmatpush.bf16.msra.mxu0 0
      %10673 = vmatpush.bf16.msra.mxu0 0
      %10674 = vmatpush.bf16.msra.mxu0 0
      %10675 = vmatpush.bf16.msra.mxu0 %v10642
      %10676 = vmatpush.bf16.msra.mxu0 %v10641
      %10677 = vmatmul.bf16.gmra.mxu0 %v10646
      %v10678 = vpop.f32.mrf.mxu0
      %v10679 = vadd.f32 0.0, %v10678
      %v10680 = vpop.f32.mrf.mxu0
      %v10681 = vadd.f32 0.0, %v10680
      %10682 = vmatmul.bf16.gmra.mxu0 %v10649
      %v10683 = vpop.f32.mrf.mxu0
      %v10684 = vadd.f32 0.0, %v10683
      %v10685 = vpop.f32.mrf.mxu0
      %v10686 = vadd.f32 0.0, %v10685
      %10687 = vmatmul.bf16.gmra.mxu0 %v10652
      %v10688 = vpop.f32.mrf.mxu0
      %v10689 = vadd.f32 0.0, %v10688
      %v10690 = vpop.f32.mrf.mxu0
      %v10691 = vadd.f32 0.0, %v10690
      %10692 = vmatmul.bf16.gmra.mxu0 %v10655
      %v10693 = vpop.f32.mrf.mxu0
      %v10694 = vadd.f32 0.0, %v10693
      %v10695 = vpop.f32.mrf.mxu0
      %v10696 = vadd.f32 0.0, %v10695
      %10697 = vmatmul.bf16.gmra.mxu0 %v10658
      %v10698 = vpop.f32.mrf.mxu0
      %v10699 = vadd.f32 0.0, %v10698
      %v10700 = vpop.f32.mrf.mxu0
      %v10701 = vadd.f32 0.0, %v10700
      %10702 = vmatmul.bf16.gmra.mxu0 %v10661
      %v10703 = vpop.f32.mrf.mxu0
      %v10704 = vadd.f32 0.0, %v10703
      %v10705 = vpop.f32.mrf.mxu0
      %v10706 = vadd.f32 0.0, %v10705
      %10707 = vmatmul.bf16.gmra.mxu0 %v10664
      %v10708 = vpop.f32.mrf.mxu0
      %v10709 = vadd.f32 0.0, %v10708
      %v10710 = vpop.f32.mrf.mxu0
      %v10711 = vadd.f32 0.0, %v10710
      %10712 = vmatmul.bf16.gmra.mxu0 %v10667
      %v10713 = vpop.f32.mrf.mxu0
      %v10714 = vadd.f32 0.0, %v10713
      %v10715 = vpop.f32.mrf.mxu0
      %v10716 = vadd.f32 0.0, %v10715
      %10717 = vdwg.mxu0
      %v10718 = vadd.f32 %v10469, %v10679
      %v10719 = vadd.f32 %v10470, %v10681
      %v10720 = vadd.f32 %v10471, %v10684
      %v10721 = vadd.f32 %v10472, %v10686
      %v10722 = vadd.f32 %v10473, %v10689
      %v10723 = vadd.f32 %v10474, %v10691
      %v10724 = vadd.f32 %v10475, %v10694
      %v10725 = vadd.f32 %v10476, %v10696
      %v10726 = vadd.f32 %v10477, %v10699
      %v10727 = vadd.f32 %v10478, %v10701
      %v10728 = vadd.f32 %v10479, %v10704
      %v10729 = vadd.f32 %v10480, %v10706
      %v10730 = vadd.f32 %v10481, %v10709
      %v10731 = vadd.f32 %v10482, %v10711
      %v10732 = vadd.f32 %v10483, %v10714
      %v10733 = vadd.f32 %v10484, %v10716
      %v10734 = vld [vmem:[%s8] sm:$0x1]
      %v10736 = vperm.slane %v10734, 0
      %v10738 = vmul.f32 %v10718, %v10736
      %v10739 = vmul.f32 %v10719, %v10736
      %v10740 = vmul.f32 %v10720, %v10736
      %v10741 = vmul.f32 %v10721, %v10736
      %v10742 = vmul.f32 %v10722, %v10736
      %v10743 = vmul.f32 %v10723, %v10736
      %v10744 = vmul.f32 %v10724, %v10736
      %v10745 = vmul.f32 %v10725, %v10736
      %v10746 = vmul.f32 %v10726, %v10736
      %v10747 = vmul.f32 %v10727, %v10736
      %v10748 = vmul.f32 %v10728, %v10736
      %v10749 = vmul.f32 %v10729, %v10736
      %v10750 = vmul.f32 %v10730, %v10736
      %v10751 = vmul.f32 %v10731, %v10736
      %v10752 = vmul.f32 %v10732, %v10736
      %v10753 = vmul.f32 %v10733, %v10736
      %v10754 = vld [vmem:[%s9] sm:$0x1]
      %v10756 = vperm.slane %v10754, 0
      %v10758 = vadd.f32 %v10738, %v10756
      %v10759 = vadd.f32 %v10739, %v10756
      %v10760 = vadd.f32 %v10740, %v10756
      %v10761 = vadd.f32 %v10741, %v10756
      %v10762 = vadd.f32 %v10742, %v10756
      %v10763 = vadd.f32 %v10743, %v10756
      %v10764 = vadd.f32 %v10744, %v10756
      %v10765 = vadd.f32 %v10745, %v10756
      %v10766 = vadd.f32 %v10746, %v10756
      %v10767 = vadd.f32 %v10747, %v10756
      %v10768 = vadd.f32 %v10748, %v10756
      %v10769 = vadd.f32 %v10749, %v10756
      %v10770 = vadd.f32 %v10750, %v10756
      %v10771 = vadd.f32 %v10751, %v10756
      %v10772 = vadd.f32 %v10752, %v10756
      %v10773 = vadd.f32 %v10753, %v10756
      %v10774 = vmax.f32 %v10758, 0.0
      %v10775 = vmax.f32 %v10759, 0.0
      %v10776 = vmax.f32 %v10760, 0.0
      %v10777 = vmax.f32 %v10761, 0.0
      %v10778 = vmax.f32 %v10762, 0.0
      %v10779 = vmax.f32 %v10763, 0.0
      %v10780 = vmax.f32 %v10764, 0.0
      %v10781 = vmax.f32 %v10765, 0.0
      %v10782 = vmax.f32 %v10766, 0.0
      %v10783 = vmax.f32 %v10767, 0.0
      %v10784 = vmax.f32 %v10768, 0.0
      %v10785 = vmax.f32 %v10769, 0.0
      %v10786 = vmax.f32 %v10770, 0.0
      %v10787 = vmax.f32 %v10771, 0.0
      %v10788 = vmax.f32 %v10772, 0.0
      %v10789 = vmax.f32 %v10773, 0.0
      %vm10790 = vcmask 523264
      %v10791 = vsel %vm10790, %v10774, 0.0
      %v10792 = vsel %vm10790, %v10775, 0.0
      %v10793 = vadd.f32 %v10791, %v10792
      %v10794 = vrot.slane %v10793, 4
      %v10795 = vadd.f32 %v10793, %v10794
      %v10796 = vrot.slane %v10795, 2
      %v10797 = vadd.f32 %v10795, %v10796
      %v10798 = vrot.slane %v10797, 1
      %v10799 = vadd.f32 %v10797, %v10798
      %v10800 = vsel %vm10790, %v10776, 0.0
      %v10801 = vsel %vm10790, %v10777, 0.0
      %v10802 = vadd.f32 %v10800, %v10801
      %v10803 = vrot.slane %v10802, 4
      %v10804 = vadd.f32 %v10802, %v10803
      %v10805 = vrot.slane %v10804, 2
      %v10806 = vadd.f32 %v10804, %v10805
      %v10807 = vrot.slane %v10806, 1
      %v10808 = vadd.f32 %v10806, %v10807
      %v10809 = vsel %vm10790, %v10778, 0.0
      %v10810 = vsel %vm10790, %v10779, 0.0
      %v10811 = vadd.f32 %v10809, %v10810
      %v10812 = vrot.slane %v10811, 4
      %v10813 = vadd.f32 %v10811, %v10812
      %v10814 = vrot.slane %v10813, 2
      %v10815 = vadd.f32 %v10813, %v10814
      %v10816 = vrot.slane %v10815, 1
      %v10817 = vadd.f32 %v10815, %v10816
      %v10818 = vsel %vm10790, %v10780, 0.0
      %v10819 = vsel %vm10790, %v10781, 0.0
      %v10820 = vadd.f32 %v10818, %v10819
      %v10821 = vrot.slane %v10820, 4
      %v10822 = vadd.f32 %v10820, %v10821
      %v10823 = vrot.slane %v10822, 2
      %v10824 = vadd.f32 %v10822, %v10823
      %v10825 = vrot.slane %v10824, 1
      %v10826 = vadd.f32 %v10824, %v10825
      %v10827 = vsel %vm10790, %v10782, 0.0
      %v10828 = vsel %vm10790, %v10783, 0.0
      %v10829 = vadd.f32 %v10827, %v10828
      %v10830 = vrot.slane %v10829, 4
      %v10831 = vadd.f32 %v10829, %v10830
      %v10832 = vrot.slane %v10831, 2
      %v10833 = vadd.f32 %v10831, %v10832
      %v10834 = vrot.slane %v10833, 1
      %v10835 = vadd.f32 %v10833, %v10834
      %v10836 = vsel %vm10790, %v10784, 0.0
      %v10837 = vsel %vm10790, %v10785, 0.0
      %v10838 = vadd.f32 %v10836, %v10837
      %v10839 = vrot.slane %v10838, 4
      %v10840 = vadd.f32 %v10838, %v10839
      %v10841 = vrot.slane %v10840, 2
      %v10842 = vadd.f32 %v10840, %v10841
      %v10843 = vrot.slane %v10842, 1
      %v10844 = vadd.f32 %v10842, %v10843
      %v10845 = vsel %vm10790, %v10786, 0.0
      %v10846 = vsel %vm10790, %v10787, 0.0
      %v10847 = vadd.f32 %v10845, %v10846
      %v10848 = vrot.slane %v10847, 4
      %v10849 = vadd.f32 %v10847, %v10848
      %v10850 = vrot.slane %v10849, 2
      %v10851 = vadd.f32 %v10849, %v10850
      %v10852 = vrot.slane %v10851, 1
      %v10853 = vadd.f32 %v10851, %v10852
      %v10854 = vsel %vm10790, %v10788, 0.0
      %v10855 = vsel %vm10790, %v10789, 0.0
      %v10856 = vadd.f32 %v10854, %v10855
      %v10857 = vrot.slane %v10856, 4
      %v10858 = vadd.f32 %v10856, %v10857
      %v10859 = vrot.slane %v10858, 2
      %v10860 = vadd.f32 %v10858, %v10859
      %v10861 = vrot.slane %v10860, 1
      %v10862 = vadd.f32 %v10860, %v10861
      %v10863 = vrcp.pop 16.0
      %v10864 = vmul.f32 16.0, %v10863
      %v10865 = vsub.f32 1.0, %v10864
      %v10866 = vmul.f32 %v10863, %v10865
      %v10867 = vadd.f32 %v10863, %v10866
      %vm10868 = vweird.f32 %v10863
      %v10869 = vsel %vm10868, %v10863, %v10867
      %v10870 = vmul.f32 %v10799, %v10869
      %v10871 = vmul.f32 %v10808, %v10869
      %v10872 = vmul.f32 %v10817, %v10869
      %v10873 = vmul.f32 %v10826, %v10869
      %v10874 = vmul.f32 %v10835, %v10869
      %v10875 = vmul.f32 %v10844, %v10869
      %v10876 = vmul.f32 %v10853, %v10869
      %v10877 = vmul.f32 %v10862, %v10869
      %v10878 = vpack.c.bf16 %v10870, %v10870
      %v10879 = vpack.c.bf16 %v10871, %v10871
      %v10880 = vpack.c.bf16 %v10872, %v10872
      %v10881 = vpack.c.bf16 %v10873, %v10873
      %v10882 = vpack.c.bf16 %v10874, %v10874
      %v10883 = vpack.c.bf16 %v10875, %v10875
      %v10884 = vpack.c.bf16 %v10876, %v10876
      %v10885 = vpack.c.bf16 %v10877, %v10877
      %v10886 = vld [vmem:[%s10] sm:$0xf]
      %v10887 = vld [vmem:[%s10 + $0x4] sm:$0xf]
      %v10888 = vld [vmem:[%s10 + $0x8] sm:$0xf]
      %v10889 = vld [vmem:[%s10 + $0xc] sm:$0xf]
      %v10890 = vld [vmem:[%s10 + $0x10] sm:$0xf]
      %v10891 = vld [vmem:[%s10 + $0x14] sm:$0xf]
      %v10892 = vld [vmem:[%s10 + $0x18] sm:$0xf]
      %v10893 = vld [vmem:[%s10 + $0x1c] sm:$0xf]
      %v10894 = vld [vmem:[%s11] sm:$0x1]
      %v10896 = vperm.slane %v10894, 0
      %v10906 = vunpack.c.l.b16 %v10878
      %v10907 = vunpack.c.l.b16 %v10879
      %v10908 = vunpack.c.l.b16 %v10880
      %v10909 = vunpack.c.l.b16 %v10881
      %v10910 = vunpack.c.l.b16 %v10882
      %v10911 = vunpack.c.l.b16 %v10883
      %v10912 = vunpack.c.l.b16 %v10884
      %v10913 = vunpack.c.l.b16 %v10885
      %vm10914 = vcmask 1041409
      %v10915 = vsel %vm10914, %v10907, %v10906
      %vm10916 = vcmask 1042434
      %v10917 = vsel %vm10916, %v10908, %v10915
      %vm10918 = vcmask 1043459
      %v10919 = vsel %vm10918, %v10909, %v10917
      %vm10920 = vcmask 1044484
      %v10921 = vsel %vm10920, %v10910, %v10919
      %vm10922 = vcmask 1045509
      %v10923 = vsel %vm10922, %v10911, %v10921
      %vm10924 = vcmask 1046534
      %v10925 = vsel %vm10924, %v10912, %v10923
      %vm10926 = vcmask 1047559
      %v10927 = vsel %vm10926, %v10913, %v10925
      %v10928 = vpack.c.b16 %v10927, %v10927
      %v10937 = vunpack.c.l.b16 %v10886
      %v10938 = vunpack.c.l.b16 %v10887
      %v10939 = vunpack.c.l.b16 %v10888
      %v10940 = vunpack.c.l.b16 %v10889
      %v10941 = vunpack.c.l.b16 %v10890
      %v10942 = vunpack.c.l.b16 %v10891
      %v10943 = vunpack.c.l.b16 %v10892
      %v10944 = vunpack.c.l.b16 %v10893
      %v10945 = vpack.c.b16 %v10938, %v10937
      %v10946 = vpack.c.b16 %v10940, %v10939
      %v10947 = vpack.c.b16 %v10942, %v10941
      %v10948 = vpack.c.b16 %v10944, %v10943
      %v10954 = vsel %vm10790, %v10928, 0
      %10956 = vmatpush.bf16.msra.mxu0 0
      %10957 = vmatpush.bf16.msra.mxu0 0
      %10958 = vmatpush.bf16.msra.mxu0 0
      %10959 = vmatpush.bf16.msra.mxu0 0
      %10960 = vmatpush.bf16.msra.mxu0 %v10948
      %10961 = vmatpush.bf16.msra.mxu0 %v10947
      %10962 = vmatpush.bf16.msra.mxu0 %v10946
      %10963 = vmatpush.bf16.msra.mxu0 %v10945
      %10964 = vmatmul.bf16.gmra.mxu0 %v10954
      %v10965 = vpop.f32.mrf.mxu0
      %v10966 = vadd.f32 %v10896, %v10965
      %v10967 = vpop.f32.mrf.mxu0
      %10968 = vdwg.mxu0
      %v10969 = vmax.f32 %v10966, 0.0
      %v10970 = vpack.c.bf16 %v10969, %v10969
      %v10971 = vld [vmem:[%s12] sm:$0xf]
      %v10972 = vld [vmem:[%s12 + $0x4] sm:$0xf]
      %v10973 = vld [vmem:[%s12 + $0x8] sm:$0xf]
      %v10974 = vld [vmem:[%s12 + $0xc] sm:$0xf]
      %v10975 = vld [vmem:[%s13] sm:$0x1]
      %v10977 = vperm.slane %v10975, 0
      %v10983 = vunpack.c.l.b16 %v10971
      %v10984 = vunpack.c.l.b16 %v10972
      %v10985 = vunpack.c.l.b16 %v10973
      %v10986 = vunpack.c.l.b16 %v10974
      %v10987 = vpack.c.b16 %v10984, %v10983
      %v10988 = vpack.c.b16 %v10986, %v10985
      %v10992 = vsel %vm8184, %v10970, 0
      %10994 = vmatpush.bf16.msra.mxu0 0
      %10995 = vmatpush.bf16.msra.mxu0 0
      %10996 = vmatpush.bf16.msra.mxu0 0
      %10997 = vmatpush.bf16.msra.mxu0 0
      %10998 = vmatpush.bf16.msra.mxu0 0
      %10999 = vmatpush.bf16.msra.mxu0 0
      %11000 = vmatpush.bf16.msra.mxu0 %v10988
      %11001 = vmatpush.bf16.msra.mxu0 %v10987
      %11002 = vmatmul.bf16.gmra.mxu0 %v10992
      %v11003 = vpop.f32.mrf.mxu0
      %v11004 = vadd.f32 %v10977, %v11003
      %v11005 = vpop.f32.mrf.mxu0
      %11006 = vdwg.mxu0
      %vm11007 = vcmask 56320
      %11008 = vst.msk [vmem:[%s612] sm:$0xff] %vm11007, %v11004
      %v11009 = vld [vmem:[%s14] sm:$0xf]
      %v11010 = vld [vmem:[%s14 + $0x4] sm:$0xf]
      %v11011 = vld [vmem:[%s14 + $0x8] sm:$0xf]
      %v11012 = vld [vmem:[%s14 + $0xc] sm:$0xf]
      %v11013 = vld [vmem:[%s14 + $0x10] sm:$0xf]
      %v11014 = vld [vmem:[%s14 + $0x14] sm:$0xf]
      %v11015 = vld [vmem:[%s14 + $0x18] sm:$0xf]
      %v11016 = vld [vmem:[%s14 + $0x1c] sm:$0xf]
      %v11017 = vld [vmem:[%s15] sm:$0x1]
      %v11019 = vperm.slane %v11017, 0
      %v11029 = vunpack.c.l.b16 %v11009
      %v11030 = vunpack.c.l.b16 %v11010
      %v11031 = vunpack.c.l.b16 %v11011
      %v11032 = vunpack.c.l.b16 %v11012
      %v11033 = vunpack.c.l.b16 %v11013
      %v11034 = vunpack.c.l.b16 %v11014
      %v11035 = vunpack.c.l.b16 %v11015
      %v11036 = vunpack.c.l.b16 %v11016
      %v11037 = vpack.c.b16 %v11030, %v11029
      %v11038 = vpack.c.b16 %v11032, %v11031
      %v11039 = vpack.c.b16 %v11034, %v11033
      %v11040 = vpack.c.b16 %v11036, %v11035
      %11045 = vmatpush.bf16.msra.mxu0 0
      %11046 = vmatpush.bf16.msra.mxu0 0
      %11047 = vmatpush.bf16.msra.mxu0 0
      %11048 = vmatpush.bf16.msra.mxu0 0
      %11049 = vmatpush.bf16.msra.mxu0 %v11040
      %11050 = vmatpush.bf16.msra.mxu0 %v11039
      %11051 = vmatpush.bf16.msra.mxu0 %v11038
      %11052 = vmatpush.bf16.msra.mxu0 %v11037
      %11053 = vmatmul.bf16.gmra.mxu0 %v10954
      %v11054 = vpop.f32.mrf.mxu0
      %v11055 = vadd.f32 %v11019, %v11054
      %v11056 = vpop.f32.mrf.mxu0
      %11057 = vdwg.mxu0
      %v11058 = vmax.f32 %v11055, 0.0
      %v11059 = vpack.c.bf16 %v11058, %v11058
      %v11060 = vld [vmem:[%s16] sm:$0xf]
      %v11061 = vld [vmem:[%s16 + $0x4] sm:$0xf]
      %v11062 = vld [vmem:[%s16 + $0x8] sm:$0xf]
      %v11063 = vld [vmem:[%s16 + $0xc] sm:$0xf]
      %v11064 = vld [vmem:[%s16 + $0x10] sm:$0xf]
      %v11065 = vld [vmem:[%s16 + $0x14] sm:$0xf]
      %v11066 = vld [vmem:[%s16 + $0x18] sm:$0xf]
      %v11067 = vld [vmem:[%s16 + $0x1c] sm:$0xf]
      %v11068 = vld [vmem:[%s17] sm:$0x1]
      %v11070 = vperm.slane %v11068, 0
      %v11080 = vunpack.c.l.b16 %v11060
      %v11081 = vunpack.c.l.b16 %v11061
      %v11082 = vunpack.c.l.b16 %v11062
      %v11083 = vunpack.c.l.b16 %v11063
      %v11084 = vunpack.c.l.b16 %v11064
      %v11085 = vunpack.c.l.b16 %v11065
      %v11086 = vunpack.c.l.b16 %v11066
      %v11087 = vunpack.c.l.b16 %v11067
      %v11088 = vpack.c.b16 %v11081, %v11080
      %v11089 = vpack.c.b16 %v11083, %v11082
      %v11090 = vpack.c.b16 %v11085, %v11084
      %v11091 = vpack.c.b16 %v11087, %v11086
      %v11097 = vsel %vm10790, %v11059, 0
      %11099 = vmatpush.bf16.msra.mxu0 0
      %11100 = vmatpush.bf16.msra.mxu0 0
      %11101 = vmatpush.bf16.msra.mxu0 0
      %11102 = vmatpush.bf16.msra.mxu0 0
      %11103 = vmatpush.bf16.msra.mxu0 %v11091
      %11104 = vmatpush.bf16.msra.mxu0 %v11090
      %11105 = vmatpush.bf16.msra.mxu0 %v11089
      %11106 = vmatpush.bf16.msra.mxu0 %v11088
      %11107 = vmatmul.bf16.gmra.mxu0 %v11097
      %v11108 = vpop.f32.mrf.mxu0
      %v11109 = vadd.f32 %v11070, %v11108
      %v11110 = vpop.f32.mrf.mxu0
      %11111 = vdwg.mxu0
      %vm11112 = vcmask 64512
      %v11113 = vsel %vm11112, %v11109, -inf
      %11114 = vmax.xlane.f32.xlu0 %v11113
      %v11115 = vpop.xlane.xlu0 %11114
      %v11116 = vsub.f32 %v11109, %v11115
      %v11117 = vmul.f32 %v11116, 1.442695
      %v11118 = vpow.pop %v11117
      %v11119 = vsel %vm11112, %v11118, 0.0
      %11120 = vadd.xlane.f32.xlu0 %v11119
      %v11121 = vpop.xlane.xlu0 %11120
      %v11122 = vrcp.pop %v11121
      %v11123 = vmul.f32 %v11121, %v11122
      %v11124 = vsub.f32 1.0, %v11123
      %v11125 = vmul.f32 %v11122, %v11124
      %v11126 = vadd.f32 %v11122, %v11125
      %vm11127 = vweird.f32 %v11121
      %vm11128 = vweird.f32 %v11122
      %vm11129 = vmor %vm11127, %vm11128
      %v11130 = vsel %vm11129, %v11122, %v11126
      %v11131 = vand.u32 2147483647, %v11121
      %vm11132 = vcmp.eq.f32.partialorder %v11131, 8.507059e+37
      %v11133 = vand.u32 %v11121, 2147483648
      %v11134 = vor.u32 1.1754944e-38, %v11133
      %v11135 = vsel %vm11132, %v11134, %v11130
      %v11136 = vmul.f32 %v11118, %v11135
      %11137 = vst.msk [vmem:[%s616] sm:$0xff] %vm11112, %v11136
      %p11138 = scmp.lt.s32.totalorder %s31, 1
      %s11139 = scalar_select %p11138, %s31, 1
      %s11140 = smul.addr %s11139, 8
      %s11141 = scalar_lea.vmem %s18, %s11140
      %p11142 = scmp.lt.s32.totalorder %s31, 1
      %s11143 = scalar_select %p11142, %s31, 1
      %s11144 = smul.addr %s11143, 8
      %s11145 = scalar_lea.vmem %s19, %s11144
      // Predicated region
      $region93: #{tpu_custom_call.1} parent=91 // pred_check
        %p11146 = pneg %p432
      $region94: #{tpu_custom_call.1} parent=91 // pred_check_branch
        %11148 = sbr.rel (%p11146) target = $region96
      $region95: #{tpu_custom_call.1} parent=91 // pred_region
        _
      $region96: #{tpu_custom_call.1} parent=91 // pred_fallthru
        _
      // Predicated region
      $region97: #{tpu_custom_call.1} parent=91 // pred_check
        %p11149 = pneg %p458
      $region98: #{tpu_custom_call.1} parent=91 // pred_check_branch
        %11151 = sbr.rel (%p11149) target = $region100
      $region99: #{tpu_custom_call.1} parent=91 // pred_region
        _
      $region100: #{tpu_custom_call.1} parent=91 // pred_fallthru
        _
    $region92: #{tpu_custom_call.1} parent=5 // pred_fallthru
      _
    %p11152 = scmp.le.s32.totalorder 2, %s26
    // Predicated region
    $region101: #{tpu_custom_call.1} parent=5 // pred_check
      %p11153 = pneg %p11152
    $region102: #{tpu_custom_call.1} parent=5 // pred_check_branch
      %11155 = sbr.rel (%p11153) target = $region104
    $region103: #{tpu_custom_call.1} parent=5 // pred_region
      %s11156 = ssub.s32 %s26, 2
      // Predicated region
      $region105: #{tpu_custom_call.1} parent=103 // pred_check
        %p11157 = pneg %p438
      $region106: #{tpu_custom_call.1} parent=103 // pred_check_branch
        %11159 = sbr.rel (%p11157) target = $region108
      $region107: #{tpu_custom_call.1} parent=103 // pred_region
        %p11160 = scmp.lt.s32.totalorder %s32, 1
        %s11161 = scalar_select %p11160, %s32, 1
        %s11162 = smul.addr %s11161, 8
        %s11163 = scalar_lea.vmem %s18, %s11162
      $region108: #{tpu_custom_call.1} parent=103 // pred_fallthru
        _
      // Predicated region
      $region109: #{tpu_custom_call.1} parent=103 // pred_check
        %p11164 = pneg %p464
      $region110: #{tpu_custom_call.1} parent=103 // pred_check_branch
        %11166 = sbr.rel (%p11164) target = $region112
      $region111: #{tpu_custom_call.1} parent=103 // pred_region
        %p11167 = scmp.lt.s32.totalorder %s32, 1
        %s11168 = scalar_select %p11167, %s32, 1
        %s11169 = smul.addr %s11168, 8
        %s11170 = scalar_lea.vmem %s19, %s11169
      $region112: #{tpu_custom_call.1} parent=103 // pred_fallthru
        _
    $region104: #{tpu_custom_call.1} parent=5 // pred_fallthru
      _
  $region6: #{tpu_custom_call.1} parent=0 // loop_footer
    %s30 = sadd.s32 1, %s26
  $region7: #{tpu_custom_call.1} parent=0 // loop_footer_branch
    %25 = sbr.rel target = $region3
  $region8: #{tpu_custom_call.1} parent=0 // loop_exit
    _

</llo_original>
